<compile_context>
chip_gen: v5e
topology: v5e:2x2
jax: 0.10.0
libtpu: 0.0.40
codegen_flags: <defaults>
</compile_context>

<pallas_src>
import functools

import jax
import jax.numpy as jnp
from jax import lax
from jax.experimental import pallas as pl
from jax.experimental.pallas import tpu as pltpu

LANE = 128
CHUNK = 512          # flat-row (sublane) chunk per matmul+epilogue step


def _round_up(n, m):
    return ((n + m - 1) // m) * m


def _pad_axis(a, axis, target):
    if a.shape[axis] == target:
        return a
    pads = [(0, 0)] * a.ndim
    pads[axis] = (0, target - a.shape[axis])
    return jnp.pad(a, pads)


# ----------------------------------------------------------------------------
# In-kernel helpers
# ----------------------------------------------------------------------------
def _keep_mask_chunk(a, sz, width, r0, r1, c0, c1, need_row):
    """Keep-mask (sz, 1) bool for flat indices [a, a+sz) of a row-major
    (rows, width) grid: True inside rows [r0,r1) x cols [c0,c1).

    Column index is derived with an f32 floor-division (pos + 0.5 guards the
    exact-multiple rounding case); exact for any flat index << 2^22, which is
    far beyond the per-image buffers used here.  Avoids integer div/mod on the
    VPU entirely.
    """
    pos = (lax.broadcasted_iota(jnp.int32, (sz, 1), 0) + a).astype(jnp.float32)
    row = jnp.floor((pos + 0.5) * (1.0 / float(width)))
    col = pos - row * float(width)              # exact integer in f32
    keep = (col >= float(c0)) & (col < float(c1))
    if need_row:
        keep = keep & (pos >= float(r0 * width)) & (pos < float(r1 * width))
    return keep


def _conv3x3_chunk(src_ref, w_ref, a, sz, width, stride):
    """One output chunk (flat output rows [a, a+sz)) of a dense 3x3 conv over
    a spatially padded, row-major flattened image held in `src_ref`.

    Tap (ky, kx) for flat output index p reads source flat index
    ky*width + kx + stride*p, i.e. a plain (possibly strided) sublane-offset
    slice feeding a lane-dense MXU matmul with f32 accumulation.  The 9 taps
    are kept as 3 row-partials to shorten the serial accumulate chain.
    """
    row_parts = []
    for ky in range(3):
        acc = None
        for kx in range(3):
            off = ky * width + kx + stride * a
            if stride == 1:
                blk = src_ref[pl.ds(off, sz), :]
            else:
                blk = src_ref[pl.ds(off, sz, stride=stride), :]
            p = jnp.dot(blk, w_ref[ky, kx], preferred_element_type=jnp.float32)
            acc = p if acc is None else acc + p
        row_parts.append(acc)
    return (row_parts[0] + row_parts[1]) + row_parts[2]


# ----------------------------------------------------------------------------
# Fused kernel: 1x1 conv -> 3x3 (stride s) -> 3x3 ('same'), BN/ReLU folded
# ----------------------------------------------------------------------------
def _bottleneck_kernel(geom, has_expand, stride, chunk, *refs):
    (H, W, Ho, Wo, halo, He, g2, g3, We) = geom
    if has_expand:
        (x_ref, w1_ref, s1_ref, w2_ref, s2_ref, w3_ref, s3_ref,
         o_ref, e_scr, d_scr) = refs
    else:
        (x_ref, w2_ref, s2_ref, w3_ref, s3_ref, o_ref, d_scr) = refs

    # ---- stage 1: 1x1 conv (BN folded into w1) + shift + ReLU --------------
    if has_expand:
        n1, r0, r1, c0, c1 = He * We, halo, halo + H, halo, halo + W
        for a in range(0, n1, chunk):
            sz = min(chunk, n1 - a)
            if a + sz <= r0 * We or a >= r1 * We:
                # Guaranteed-zero halo rows: vst-only, no MXU/VPU work.
                e_scr[pl.ds(a, sz), :] = jnp.zeros((sz, e_scr.shape[1]),
                                                   e_scr.dtype)
            else:
                h = jnp.dot(x_ref[pl.ds(a, sz), :], w1_ref[...],
                            preferred_element_type=jnp.float32)
                h = jnp.maximum(h + s1_ref[...], 0.0)
                # Halo positions must stay 0 (they act as stage-2 zero pad);
                # zero input would otherwise produce ReLU(shift).
                need_row = not (a >= r0 * We and a + sz <= r1 * We)
                keep = _keep_mask_chunk(a, sz, We, r0, r1, c0, c1, need_row)
                h = jnp.where(keep, h, 0.0)
                e_scr[pl.ds(a, sz), :] = h.astype(e_scr.dtype)
        src2 = e_scr
    else:
        # expansion == 1: the input is already zero-padded in HBM; the 3x3
        # stage reads it directly (no copy, no scratch, no mask DMA).
        src2 = x_ref

    # ---- stage 2: dense 3x3, stride s (conv bias + BN folded) + ReLU -------
    n2, r0, r1, c0, c1 = g2 * We, 1, Ho + 1, 1, Wo + 1
    for a in range(0, n2, chunk):
        sz = min(chunk, n2 - a)
        if a + sz <= r0 * We or a >= r1 * We:
            d_scr[pl.ds(a, sz), :] = jnp.zeros((sz, d_scr.shape[1]),
                                               d_scr.dtype)
        else:
            acc = _conv3x3_chunk(src2, w2_ref, a, sz, We, stride)
            h = jnp.maximum(acc + s2_ref[...], 0.0)
            need_row = not (a >= r0 * We and a + sz <= r1 * We)
            keep = _keep_mask_chunk(a, sz, We, r0, r1, c0, c1, need_row)
            h = jnp.where(keep, h, 0.0)
            d_scr[pl.ds(a, sz), :] = h.astype(d_scr.dtype)

    # ---- stage 3: dense 3x3, stride 1, padding 'same' (BN folded) + ReLU ---
    n3 = g3 * We
    for a in range(0, n3, chunk):
        sz = min(chunk, n3 - a)
        acc = _conv3x3_chunk(d_scr, w3_ref, a, sz, We, 1)
        h = jnp.maximum(acc + s3_ref[...], 0.0)
        o_ref[pl.ds(a, sz), :] = h.astype(o_ref.dtype)


# ----------------------------------------------------------------------------
# Module (parameters initialized deterministically in-script)
# ----------------------------------------------------------------------------
class BottleneckPallas:
    def __init__(self, key, in_size, out_size, expansion, stride=1):
        self.in_size, self.out_size = in_size, out_size
        self.expansion, self.stride = expansion, stride
        exp_size = expansion * in_size
        ks = jax.random.split(key, 7)

        def bn_params(k, c):
            k1, k2, k3, k4 = jax.random.split(k, 4)
            gamma = jax.random.uniform(k1, (c,), jnp.float32, 0.5, 1.5)
            beta = jax.random.normal(k2, (c,), jnp.float32) * 0.1
            mean = jax.random.normal(k3, (c,), jnp.float32) * 0.1
            var = jax.random.uniform(k4, (c,), jnp.float32, 0.5, 1.5)
            return gamma, beta, mean, var

        # conv1: 1x1, in -> exp, no bias (stored as (Cin, Cout)).
        self.w1 = jax.random.normal(ks[0], (in_size, exp_size), jnp.float32) * 0.1
        self.bn1 = bn_params(ks[1], exp_size)
        # "depthwise": dense 3x3 (no groups in the PyTorch module), with bias (HWIO).
        self.w_dw = jax.random.normal(ks[2], (3, 3, exp_size, exp_size), jnp.float32) * 0.1
        self.b_dw = jax.random.normal(ks[3], (exp_size,), jnp.float32) * 0.1
        self.bn_dw = bn_params(ks[4], exp_size)
        # "pointwise": dense 3x3, exp -> out, padding='same', no bias (HWIO).
        self.w_pw = jax.random.normal(ks[5], (3, 3, exp_size, out_size), jnp.float32) * 0.1
        self.bn_pw = bn_params(ks[6], out_size)

        self._prepare_kernel_params()

    # Fold eval-mode BN (and conv bias) into weights/shift, pad channels to the
    # 128-lane boundary, cast matmul operands to bf16 (shifts stay f32).
    def _prepare_kernel_params(self, eps=1e-5):
        exp_size = self.expansion * self.in_size
        self.cin_p = _round_up(self.in_size, LANE)
        self.ce_p = _round_up(exp_size, LANE)
        self.co_p = _round_up(self.out_size, LANE)

        def fold(w, bn, conv_bias=None):
            gamma, beta, mean, var = bn
            scale = gamma / jnp.sqrt(var + eps)
            bias = conv_bias if conv_bias is not None else jnp.zeros_like(mean)
            shift = (bias - mean) * scale + beta
            return w * scale, shift.reshape(1, -1)   # scale folds into out-channels

        if self.expansion != 1:
            w1f, s1 = fold(self.w1, self.bn1)
            self.w1_p = _pad_axis(_pad_axis(w1f, 0, self.cin_p), 1,
                                  self.ce_p).astype(jnp.bfloat16)
            self.s1_p = _pad_axis(s1, 1, self.ce_p).astype(jnp.float32)
        w2f, s2 = fold(self.w_dw, self.bn_dw, conv_bias=self.b_dw)
        self.w2_p = _pad_axis(_pad_axis(w2f, 2, self.ce_p), 3,
                              self.ce_p).astype(jnp.bfloat16)
        self.s2_p = _pad_axis(s2, 1, self.ce_p).astype(jnp.float32)
        w3f, s3 = fold(self.w_pw, self.bn_pw)
        self.w3_p = _pad_axis(_pad_axis(w3f, 2, self.ce_p), 3,
                              self.co_p).astype(jnp.bfloat16)
        self.s3_p = _pad_axis(s3, 1, self.co_p).astype(jnp.float32)

    def __call__(self, x_nchw):
        N, C, H, W = x_nchw.shape
        assert C == self.in_size
        s = self.stride
        halo = s + 1                       # halo of the expanded-activation buffer
        Ho = (H - 1) // s + 1
        Wo = (W - 1) // s + 1
        We = W + 2 * halo                  # flat row-major width of ALL buffers
        He = H + 4 * s + 2                 # top halo + H + deep bottom zero pad
        g2 = Ho + 3                        # stage-2 grid rows (1 + Ho + 2 junk)
        g3 = Ho                            # stage-3 grid rows

        # Layout glue on the (small) raw input only: NCHW->NHWC, lane-pad the
        # channels, spatial zero halo, flatten (H, W) row-major, cast to bf16.
        x = jnp.transpose(x_nchw, (0, 2, 3, 1))
        x = _pad_axis(x, 3, self.cin_p)
        x = jnp.pad(x, ((0, 0), (halo, He - H - halo), (halo, We - W - halo), (0, 0)))
        x = x.reshape(N, He * We, self.cin_p).astype(jnp.bfloat16)

        has_expand = self.expansion != 1
        args = [x]
        in_specs = [pl.BlockSpec((pl.Squeezed(), He * We, self.cin_p),
                                 lambda n: (n, 0, 0))]
        if has_expand:
            args += [self.w1_p, self.s1_p]
            in_specs += [
                pl.BlockSpec((self.cin_p, self.ce_p), lambda n: (0, 0)),
                pl.BlockSpec((1, self.ce_p), lambda n: (0, 0)),
            ]
        args += [self.w2_p, self.s2_p, self.w3_p, self.s3_p]
        in_specs += [
            pl.BlockSpec((3, 3, self.ce_p, self.ce_p), lambda n: (0, 0, 0, 0)),
            pl.BlockSpec((1, self.ce_p), lambda n: (0, 0)),
            pl.BlockSpec((3, 3, self.ce_p, self.co_p), lambda n: (0, 0, 0, 0)),
            pl.BlockSpec((1, self.co_p), lambda n: (0, 0)),
        ]

        scratch = [pltpu.VMEM((g2 * We, self.ce_p), jnp.bfloat16)]       # depthwise out
        if has_expand:
            scratch = [pltpu.VMEM((He * We, self.ce_p), jnp.bfloat16)] + scratch

        geom = (H, W, Ho, Wo, halo, He, g2, g3, We)
        out = pl.pallas_call(
            functools.partial(_bottleneck_kernel, geom, has_expand, s, CHUNK),
            out_shape=jax.ShapeDtypeStruct((N, g3 * We, self.co_p), jnp.bfloat16),
            grid=(N,),
            in_specs=in_specs,
            out_specs=pl.BlockSpec((pl.Squeezed(), g3 * We, self.co_p),
                                   lambda n: (n, 0, 0)),
            scratch_shapes=scratch,
            compiler_params=pltpu.CompilerParams(
                dimension_semantics=("parallel",),
                vmem_limit_bytes=48 * 1024 * 1024),   # fits v7x (64 MiB) with headroom
        )(*args)

        # Un-flatten, drop the lane/width padding, back to NCHW, f32 (one XLA pass).
        y = out.reshape(N, g3, We, self.co_p)[:, :, :Wo, :self.out_size]
        return jnp.transpose(y, (0, 3, 1, 2)).astype(jnp.float32)


# ----------------------------------------------------------------------------
# Pure-JAX reference (lax.conv, f32, unfolded params) for correctness checks
# ----------------------------------------------------------------------------
def _ref_conv_bn_relu(x, w_hwio, conv_bias, gamma, beta, mean, var,
                      stride, padding, eps=1e-5):
    y = lax.conv_general_dilated(
        x, w_hwio, window_strides=(stride, stride), padding=padding,
        dimension_numbers=("NHWC", "HWIO", "NHWC"))
    if conv_bias is not None:
        y = y + conv_bias.reshape(1, 1, 1, -1)
    y = (y - mean) / jnp.sqrt(var + eps) * gamma + beta
    return jnp.maximum(y, 0.0)


def reference_forward(m, x_nchw):
    x = jnp.transpose(x_nchw, (0, 2, 3, 1))
    if m.expansion != 1:
        g, b, mu, v = m.bn1
        w = m.w1.reshape(1, 1, *m.w1.shape)
        x = _ref_conv_bn_relu(x, w, None, g, b, mu, v, 1, "VALID")
    g, b, mu, v = m.bn_dw
    x = _ref_conv_bn_relu(x, m.w_dw, m.b_dw, g, b, mu, v,
                          m.stride, ((1, 1), (1, 1)))
    g, b, mu, v = m.bn_pw
    x = _ref_conv_bn_relu(x, m.w_pw, None, g, b, mu, v, 1, ((1, 1), (1, 1)))
    return jnp.transpose(x, (0, 3, 1, 2))


def _check(key, *, N, in_size, H, W, out_size, expansion, stride):
    kp, kx = jax.random.split(key)
    model = BottleneckPallas(kp, in_size, out_size, expansion, stride)
    x = jax.random.normal(kx, (N, in_size, H, W), jnp.float32)
    y = model(x)
    jax.block_until_ready(y)
    y_ref = reference_forward(model, x)
    Ho = (H - 1) // stride + 1
    Wo = (W - 1) // stride + 1
    assert y.shape == (N, out_size, Ho, Wo), y.shape
    # Tolerance accounts for bf16 MXU operands / bf16 inter-stage activations
    # and bf16 output store (f32 accumulation) vs a pure-f32 reference.
    err = float(jnp.max(jnp.abs(y - y_ref)))
    assert jnp.allclose(y, y_ref, rtol=5e-2, atol=5e-2), (expansion, stride, err)


if __name__ == "__main__":
    key = jax.random.PRNGKey(0)
    k1, k2, k3 = jax.random.split(key, 3)

    # Primary config (expansion path, stride 1).
    _check(k1, N=2, in_size=4, H=16, W=16, out_size=8, expansion=2, stride=1)
    # Strided depthwise stage on an odd spatial size (exercises the
    # pl.ds(stride=2) tap loads and the strided halo geometry).
    _check(k2, N=2, in_size=4, H=15, W=15, out_size=8, expansion=2, stride=2)
    # expansion == 1 path (conv1 skipped; 3x3 stage reads the input directly).
    _check(k3, N=2, in_size=4, H=16, W=16, out_size=8, expansion=1, stride=1)

    print("KERNEL_OK")
</pallas_src>

<mosaic_0001>
module attributes {stable_mosaic.version = 11 : i64} {
  func.func @_bottleneck_kernel(%arg0: i32, %arg1: memref<1x440x128xbf16, #tpu.memory_space<vmem>>, %arg2: memref<128x128xbf16, #tpu.memory_space<vmem>>, %arg3: memref<1x128xf32, #tpu.memory_space<vmem>>, %arg4: memref<3x3x128x128xbf16, #tpu.memory_space<vmem>>, %arg5: memref<1x128xf32, #tpu.memory_space<vmem>>, %arg6: memref<3x3x128x128xbf16, #tpu.memory_space<vmem>>, %arg7: memref<1x128xf32, #tpu.memory_space<vmem>>, %arg8: memref<1x320x128xbf16, #tpu.memory_space<vmem>>, %arg9: memref<440x128xbf16, #tpu.memory_space<vmem>>, %arg10: memref<380x128xbf16, #tpu.memory_space<vmem>>) attributes {dimension_semantics = [#tpu.dimension_semantics<parallel>], iteration_bounds = array<i64: 2>, scalar_prefetch = 0 : i64, scratch_operands = 2 : i64, tpu.core_type = #tpu.core_type<tc>, window_params = [{transform_indices = @transform_0, window_bounds = array<i64: 1, 440, 128>}, {pipeline_mode = #tpu.pipeline_mode<synchronous>, transform_indices = @transform_1, window_bounds = array<i64: 128, 128>}, {pipeline_mode = #tpu.pipeline_mode<synchronous>, transform_indices = @transform_2, window_bounds = array<i64: 1, 128>}, {pipeline_mode = #tpu.pipeline_mode<synchronous>, transform_indices = @transform_3, window_bounds = array<i64: 3, 3, 128, 128>}, {pipeline_mode = #tpu.pipeline_mode<synchronous>, transform_indices = @transform_4, window_bounds = array<i64: 1, 128>}, {pipeline_mode = #tpu.pipeline_mode<synchronous>, transform_indices = @transform_5, window_bounds = array<i64: 3, 3, 128, 128>}, {pipeline_mode = #tpu.pipeline_mode<synchronous>, transform_indices = @transform_6, window_bounds = array<i64: 1, 128>}, {transform_indices = @transform_7, window_bounds = array<i64: 1, 320, 128>}]} {
    %c0 = arith.constant 0 : index
    %c0_0 = arith.constant 0 : index
    %c0_1 = arith.constant 0 : index
    %0 = vector.load %arg1[%c0, %c0_0, %c0_1] : memref<1x440x128xbf16, #tpu.memory_space<vmem>>, vector<1x440x128xbf16>
    %1 = vector.shape_cast %0 : vector<1x440x128xbf16> to vector<440x128xbf16>
    %c0_2 = arith.constant 0 : index
    %c0_3 = arith.constant 0 : index
    %2 = vector.load %arg2[%c0_2, %c0_3] : memref<128x128xbf16, #tpu.memory_space<vmem>>, vector<128x128xbf16>
    %cst = arith.constant dense<0.000000e+00> : vector<440x128xf32>
    %3 = tpu.matmul %1, %2, %cst {dimension_numbers = #tpu.dot_dimension_numbers<[1], [0], [0], [1], [0, 0, 1, 1], [], []>} : vector<440x128xbf16>, vector<128x128xbf16>, vector<440x128xf32> -> vector<440x128xf32>
    %c0_4 = arith.constant 0 : index
    %c0_5 = arith.constant 0 : index
    %4 = vector.load %arg3[%c0_4, %c0_5] : memref<1x128xf32, #tpu.memory_space<vmem>>, vector<1x128xf32>
    %5 = vector.broadcast %4 : vector<1x128xf32> to vector<440x128xf32>
    %6 = arith.addf %3, %5 : vector<440x128xf32>
    %cst_6 = arith.constant 0.000000e+00 : f32
    %7 = vector.broadcast %cst_6 : f32 to vector<440x128xf32>
    %8 = arith.maximumf %6, %7 : vector<440x128xf32>
    %9 = tpu.iota {dimensions = array<i32: 0>} : vector<440x1xi32>
    %c0_i32 = arith.constant 0 : i32
    %10 = vector.broadcast %c0_i32 : i32 to vector<440x1xi32>
    %11 = arith.addi %9, %10 : vector<440x1xi32>
    %12 = arith.sitofp %11 : vector<440x1xi32> to vector<440x1xf32>
    %cst_7 = arith.constant 5.000000e-01 : f32
    %13 = vector.broadcast %cst_7 : f32 to vector<440x1xf32>
    %14 = arith.addf %12, %13 : vector<440x1xf32>
    %cst_8 = arith.constant 5.000000e-02 : f32
    %15 = vector.broadcast %cst_8 : f32 to vector<440x1xf32>
    %16 = arith.mulf %14, %15 : vector<440x1xf32>
    %17 = math.floor %16 : vector<440x1xf32>
    %cst_9 = arith.constant 2.000000e+01 : f32
    %18 = vector.broadcast %cst_9 : f32 to vector<440x1xf32>
    %19 = arith.mulf %17, %18 : vector<440x1xf32>
    %20 = arith.subf %12, %19 : vector<440x1xf32>
    %cst_10 = arith.constant 2.000000e+00 : f32
    %21 = vector.broadcast %cst_10 : f32 to vector<440x1xf32>
    %22 = arith.cmpf oge, %20, %21 : vector<440x1xf32>
    %cst_11 = arith.constant 1.800000e+01 : f32
    %23 = vector.broadcast %cst_11 : f32 to vector<440x1xf32>
    %24 = arith.cmpf olt, %20, %23 : vector<440x1xf32>
    %25 = arith.andi %22, %24 : vector<440x1xi1>
    %cst_12 = arith.constant 4.000000e+01 : f32
    %26 = vector.broadcast %cst_12 : f32 to vector<440x1xf32>
    %27 = arith.cmpf oge, %12, %26 : vector<440x1xf32>
    %28 = arith.andi %25, %27 : vector<440x1xi1>
    %cst_13 = arith.constant 3.600000e+02 : f32
    %29 = vector.broadcast %cst_13 : f32 to vector<440x1xf32>
    %30 = arith.cmpf olt, %12, %29 : vector<440x1xf32>
    %31 = arith.andi %28, %30 : vector<440x1xi1>
    %cst_14 = arith.constant 0.000000e+00 : f32
    %32 = vector.shape_cast %31 : vector<440x1xi1> to vector<440x1xi1>
    %33 = vector.broadcast %32 : vector<440x1xi1> to vector<440x128xi1>
    %34 = vector.broadcast %cst_14 : f32 to vector<440x128xf32>
    %35 = arith.select %33, %8, %34 : vector<440x128xi1>, vector<440x128xf32>
    %36 = arith.truncf %35 : vector<440x128xf32> to vector<440x128xbf16>
    %c0_15 = arith.constant 0 : index
    %c0_16 = arith.constant 0 : index
    %37 = vector.load %arg9[%c0_15, %c0_16] : memref<440x128xbf16, #tpu.memory_space<vmem>>, vector<440x128xbf16>
    tpu.vector_store %arg9[%c0_15, %c0_16], %36 {strides = array<i32>} : memref<440x128xbf16, #tpu.memory_space<vmem>>, vector<440x128xbf16>,
    %c0_17 = arith.constant 0 : index
    %c0_18 = arith.constant 0 : index
    %38 = vector.load %arg9[%c0_17, %c0_18] : memref<440x128xbf16, #tpu.memory_space<vmem>>, vector<380x128xbf16>
    %c0_19 = arith.constant 0 : index
    %c0_20 = arith.constant 0 : index
    %c0_21 = arith.constant 0 : index
    %c0_22 = arith.constant 0 : index
    %39 = vector.load %arg4[%c0_19, %c0_20, %c0_21, %c0_22] : memref<3x3x128x128xbf16, #tpu.memory_space<vmem>>, vector<1x1x128x128xbf16>
    %40 = vector.shape_cast %39 : vector<1x1x128x128xbf16> to vector<128x128xbf16>
    %cst_23 = arith.constant dense<0.000000e+00> : vector<380x128xf32>
    %41 = tpu.matmul %38, %40, %cst_23 {dimension_numbers = #tpu.dot_dimension_numbers<[1], [0], [0], [1], [0, 0, 1, 1], [], []>} : vector<380x128xbf16>, vector<128x128xbf16>, vector<380x128xf32> -> vector<380x128xf32>
    %c1 = arith.constant 1 : index
    %c0_24 = arith.constant 0 : index
    %42 = vector.load %arg9[%c1, %c0_24] : memref<440x128xbf16, #tpu.memory_space<vmem>>, vector<380x128xbf16>
    %c0_25 = arith.constant 0 : index
    %c1_26 = arith.constant 1 : index
    %c0_27 = arith.constant 0 : index
    %c0_28 = arith.constant 0 : index
    %43 = vector.load %arg4[%c0_25, %c1_26, %c0_27, %c0_28] : memref<3x3x128x128xbf16, #tpu.memory_space<vmem>>, vector<1x1x128x128xbf16>
    %44 = vector.shape_cast %43 : vector<1x1x128x128xbf16> to vector<128x128xbf16>
    %cst_29 = arith.constant dense<0.000000e+00> : vector<380x128xf32>
    %45 = tpu.matmul %42, %44, %cst_29 {dimension_numbers = #tpu.dot_dimension_numbers<[1], [0], [0], [1], [0, 0, 1, 1], [], []>} : vector<380x128xbf16>, vector<128x128xbf16>, vector<380x128xf32> -> vector<380x128xf32>
    %46 = arith.addf %41, %45 : vector<380x128xf32>
    %c2 = arith.constant 2 : index
    %c0_30 = arith.constant 0 : index
    %47 = vector.load %arg9[%c2, %c0_30] : memref<440x128xbf16, #tpu.memory_space<vmem>>, vector<380x128xbf16>
    %c0_31 = arith.constant 0 : index
    %c2_32 = arith.constant 2 : index
    %c0_33 = arith.constant 0 : index
    %c0_34 = arith.constant 0 : index
    %48 = vector.load %arg4[%c0_31, %c2_32, %c0_33, %c0_34] : memref<3x3x128x128xbf16, #tpu.memory_space<vmem>>, vector<1x1x128x128xbf16>
    %49 = vector.shape_cast %48 : vector<1x1x128x128xbf16> to vector<128x128xbf16>
    %cst_35 = arith.constant dense<0.000000e+00> : vector<380x128xf32>
    %50 = tpu.matmul %47, %49, %cst_35 {dimension_numbers = #tpu.dot_dimension_numbers<[1], [0], [0], [1], [0, 0, 1, 1], [], []>} : vector<380x128xbf16>, vector<128x128xbf16>, vector<380x128xf32> -> vector<380x128xf32>
    %51 = arith.addf %46, %50 : vector<380x128xf32>
    %c20 = arith.constant 20 : index
    %c0_36 = arith.constant 0 : index
    %52 = vector.load %arg9[%c20, %c0_36] : memref<440x128xbf16, #tpu.memory_space<vmem>>, vector<380x128xbf16>
    %c1_37 = arith.constant 1 : index
    %c0_38 = arith.constant 0 : index
    %c0_39 = arith.constant 0 : index
    %c0_40 = arith.constant 0 : index
    %53 = vector.load %arg4[%c1_37, %c0_38, %c0_39, %c0_40] : memref<3x3x128x128xbf16, #tpu.memory_space<vmem>>, vector<1x1x128x128xbf16>
    %54 = vector.shape_cast %53 : vector<1x1x128x128xbf16> to vector<128x128xbf16>
    %cst_41 = arith.constant dense<0.000000e+00> : vector<380x128xf32>
    %55 = tpu.matmul %52, %54, %cst_41 {dimension_numbers = #tpu.dot_dimension_numbers<[1], [0], [0], [1], [0, 0, 1, 1], [], []>} : vector<380x128xbf16>, vector<128x128xbf16>, vector<380x128xf32> -> vector<380x128xf32>
    %c21 = arith.constant 21 : index
    %c0_42 = arith.constant 0 : index
    %56 = vector.load %arg9[%c21, %c0_42] : memref<440x128xbf16, #tpu.memory_space<vmem>>, vector<380x128xbf16>
    %c1_43 = arith.constant 1 : index
    %c1_44 = arith.constant 1 : index
    %c0_45 = arith.constant 0 : index
    %c0_46 = arith.constant 0 : index
    %57 = vector.load %arg4[%c1_43, %c1_44, %c0_45, %c0_46] : memref<3x3x128x128xbf16, #tpu.memory_space<vmem>>, vector<1x1x128x128xbf16>
    %58 = vector.shape_cast %57 : vector<1x1x128x128xbf16> to vector<128x128xbf16>
    %cst_47 = arith.constant dense<0.000000e+00> : vector<380x128xf32>
    %59 = tpu.matmul %56, %58, %cst_47 {dimension_numbers = #tpu.dot_dimension_numbers<[1], [0], [0], [1], [0, 0, 1, 1], [], []>} : vector<380x128xbf16>, vector<128x128xbf16>, vector<380x128xf32> -> vector<380x128xf32>
    %60 = arith.addf %55, %59 : vector<380x128xf32>
    %c22 = arith.constant 22 : index
    %c0_48 = arith.constant 0 : index
    %61 = vector.load %arg9[%c22, %c0_48] : memref<440x128xbf16, #tpu.memory_space<vmem>>, vector<380x128xbf16>
    %c1_49 = arith.constant 1 : index
    %c2_50 = arith.constant 2 : index
    %c0_51 = arith.constant 0 : index
    %c0_52 = arith.constant 0 : index
    %62 = vector.load %arg4[%c1_49, %c2_50, %c0_51, %c0_52] : memref<3x3x128x128xbf16, #tpu.memory_space<vmem>>, vector<1x1x128x128xbf16>
    %63 = vector.shape_cast %62 : vector<1x1x128x128xbf16> to vector<128x128xbf16>
    %cst_53 = arith.constant dense<0.000000e+00> : vector<380x128xf32>
    %64 = tpu.matmul %61, %63, %cst_53 {dimension_numbers = #tpu.dot_dimension_numbers<[1], [0], [0], [1], [0, 0, 1, 1], [], []>} : vector<380x128xbf16>, vector<128x128xbf16>, vector<380x128xf32> -> vector<380x128xf32>
    %65 = arith.addf %60, %64 : vector<380x128xf32>
    %c40 = arith.constant 40 : index
    %c0_54 = arith.constant 0 : index
    %66 = vector.load %arg9[%c40, %c0_54] : memref<440x128xbf16, #tpu.memory_space<vmem>>, vector<380x128xbf16>
    %c2_55 = arith.constant 2 : index
    %c0_56 = arith.constant 0 : index
    %c0_57 = arith.constant 0 : index
    %c0_58 = arith.constant 0 : index
    %67 = vector.load %arg4[%c2_55, %c0_56, %c0_57, %c0_58] : memref<3x3x128x128xbf16, #tpu.memory_space<vmem>>, vector<1x1x128x128xbf16>
    %68 = vector.shape_cast %67 : vector<1x1x128x128xbf16> to vector<128x128xbf16>
    %cst_59 = arith.constant dense<0.000000e+00> : vector<380x128xf32>
    %69 = tpu.matmul %66, %68, %cst_59 {dimension_numbers = #tpu.dot_dimension_numbers<[1], [0], [0], [1], [0, 0, 1, 1], [], []>} : vector<380x128xbf16>, vector<128x128xbf16>, vector<380x128xf32> -> vector<380x128xf32>
    %c41 = arith.constant 41 : index
    %c0_60 = arith.constant 0 : index
    %70 = vector.load %arg9[%c41, %c0_60] : memref<440x128xbf16, #tpu.memory_space<vmem>>, vector<380x128xbf16>
    %c2_61 = arith.constant 2 : index
    %c1_62 = arith.constant 1 : index
    %c0_63 = arith.constant 0 : index
    %c0_64 = arith.constant 0 : index
    %71 = vector.load %arg4[%c2_61, %c1_62, %c0_63, %c0_64] : memref<3x3x128x128xbf16, #tpu.memory_space<vmem>>, vector<1x1x128x128xbf16>
    %72 = vector.shape_cast %71 : vector<1x1x128x128xbf16> to vector<128x128xbf16>
    %cst_65 = arith.constant dense<0.000000e+00> : vector<380x128xf32>
    %73 = tpu.matmul %70, %72, %cst_65 {dimension_numbers = #tpu.dot_dimension_numbers<[1], [0], [0], [1], [0, 0, 1, 1], [], []>} : vector<380x128xbf16>, vector<128x128xbf16>, vector<380x128xf32> -> vector<380x128xf32>
    %74 = arith.addf %69, %73 : vector<380x128xf32>
    %c42 = arith.constant 42 : index
    %c0_66 = arith.constant 0 : index
    %75 = vector.load %arg9[%c42, %c0_66] : memref<440x128xbf16, #tpu.memory_space<vmem>>, vector<380x128xbf16>
    %c2_67 = arith.constant 2 : index
    %c2_68 = arith.constant 2 : index
    %c0_69 = arith.constant 0 : index
    %c0_70 = arith.constant 0 : index
    %76 = vector.load %arg4[%c2_67, %c2_68, %c0_69, %c0_70] : memref<3x3x128x128xbf16, #tpu.memory_space<vmem>>, vector<1x1x128x128xbf16>
    %77 = vector.shape_cast %76 : vector<1x1x128x128xbf16> to vector<128x128xbf16>
    %cst_71 = arith.constant dense<0.000000e+00> : vector<380x128xf32>
    %78 = tpu.matmul %75, %77, %cst_71 {dimension_numbers = #tpu.dot_dimension_numbers<[1], [0], [0], [1], [0, 0, 1, 1], [], []>} : vector<380x128xbf16>, vector<128x128xbf16>, vector<380x128xf32> -> vector<380x128xf32>
    %79 = arith.addf %74, %78 : vector<380x128xf32>
    %80 = arith.addf %51, %65 : vector<380x128xf32>
    %81 = arith.addf %80, %79 : vector<380x128xf32>
    %c0_72 = arith.constant 0 : index
    %c0_73 = arith.constant 0 : index
    %82 = vector.load %arg5[%c0_72, %c0_73] : memref<1x128xf32, #tpu.memory_space<vmem>>, vector<1x128xf32>
    %83 = vector.broadcast %82 : vector<1x128xf32> to vector<380x128xf32>
    %84 = arith.addf %81, %83 : vector<380x128xf32>
    %cst_74 = arith.constant 0.000000e+00 : f32
    %85 = vector.broadcast %cst_74 : f32 to vector<380x128xf32>
    %86 = arith.maximumf %84, %85 : vector<380x128xf32>
    %87 = tpu.iota {dimensions = array<i32: 0>} : vector<380x1xi32>
    %c0_i32_75 = arith.constant 0 : i32
    %88 = vector.broadcast %c0_i32_75 : i32 to vector<380x1xi32>
    %89 = arith.addi %87, %88 : vector<380x1xi32>
    %90 = arith.sitofp %89 : vector<380x1xi32> to vector<380x1xf32>
    %cst_76 = arith.constant 5.000000e-01 : f32
    %91 = vector.broadcast %cst_76 : f32 to vector<380x1xf32>
    %92 = arith.addf %90, %91 : vector<380x1xf32>
    %cst_77 = arith.constant 5.000000e-02 : f32
    %93 = vector.broadcast %cst_77 : f32 to vector<380x1xf32>
    %94 = arith.mulf %92, %93 : vector<380x1xf32>
    %95 = math.floor %94 : vector<380x1xf32>
    %cst_78 = arith.constant 2.000000e+01 : f32
    %96 = vector.broadcast %cst_78 : f32 to vector<380x1xf32>
    %97 = arith.mulf %95, %96 : vector<380x1xf32>
    %98 = arith.subf %90, %97 : vector<380x1xf32>
    %cst_79 = arith.constant 1.000000e+00 : f32
    %99 = vector.broadcast %cst_79 : f32 to vector<380x1xf32>
    %100 = arith.cmpf oge, %98, %99 : vector<380x1xf32>
    %cst_80 = arith.constant 1.700000e+01 : f32
    %101 = vector.broadcast %cst_80 : f32 to vector<380x1xf32>
    %102 = arith.cmpf olt, %98, %101 : vector<380x1xf32>
    %103 = arith.andi %100, %102 : vector<380x1xi1>
    %cst_81 = arith.constant 2.000000e+01 : f32
    %104 = vector.broadcast %cst_81 : f32 to vector<380x1xf32>
    %105 = arith.cmpf oge, %90, %104 : vector<380x1xf32>
    %106 = arith.andi %103, %105 : vector<380x1xi1>
    %cst_82 = arith.constant 3.400000e+02 : f32
    %107 = vector.broadcast %cst_82 : f32 to vector<380x1xf32>
    %108 = arith.cmpf olt, %90, %107 : vector<380x1xf32>
    %109 = arith.andi %106, %108 : vector<380x1xi1>
    %cst_83 = arith.constant 0.000000e+00 : f32
    %110 = vector.shape_cast %109 : vector<380x1xi1> to vector<380x1xi1>
    %111 = vector.broadcast %110 : vector<380x1xi1> to vector<380x128xi1>
    %112 = vector.broadcast %cst_83 : f32 to vector<380x128xf32>
    %113 = arith.select %111, %86, %112 : vector<380x128xi1>, vector<380x128xf32>
    %114 = arith.truncf %113 : vector<380x128xf32> to vector<380x128xbf16>
    %c0_84 = arith.constant 0 : index
    %c0_85 = arith.constant 0 : index
    %115 = vector.load %arg10[%c0_84, %c0_85] : memref<380x128xbf16, #tpu.memory_space<vmem>>, vector<380x128xbf16>
    tpu.vector_store %arg10[%c0_84, %c0_85], %114 {strides = array<i32>} : memref<380x128xbf16, #tpu.memory_space<vmem>>, vector<380x128xbf16>,
    %c0_86 = arith.constant 0 : index
    %c0_87 = arith.constant 0 : index
    %116 = vector.load %arg10[%c0_86, %c0_87] : memref<380x128xbf16, #tpu.memory_space<vmem>>, vector<320x128xbf16>
    %c0_88 = arith.constant 0 : index
    %c0_89 = arith.constant 0 : index
    %c0_90 = arith.constant 0 : index
    %c0_91 = arith.constant 0 : index
    %117 = vector.load %arg6[%c0_88, %c0_89, %c0_90, %c0_91] : memref<3x3x128x128xbf16, #tpu.memory_space<vmem>>, vector<1x1x128x128xbf16>
    %118 = vector.shape_cast %117 : vector<1x1x128x128xbf16> to vector<128x128xbf16>
    %cst_92 = arith.constant dense<0.000000e+00> : vector<320x128xf32>
    %119 = tpu.matmul %116, %118, %cst_92 {dimension_numbers = #tpu.dot_dimension_numbers<[1], [0], [0], [1], [0, 0, 1, 1], [], []>} : vector<320x128xbf16>, vector<128x128xbf16>, vector<320x128xf32> -> vector<320x128xf32>
    %c1_93 = arith.constant 1 : index
    %c0_94 = arith.constant 0 : index
    %120 = vector.load %arg10[%c1_93, %c0_94] : memref<380x128xbf16, #tpu.memory_space<vmem>>, vector<320x128xbf16>
    %c0_95 = arith.constant 0 : index
    %c1_96 = arith.constant 1 : index
    %c0_97 = arith.constant 0 : index
    %c0_98 = arith.constant 0 : index
    %121 = vector.load %arg6[%c0_95, %c1_96, %c0_97, %c0_98] : memref<3x3x128x128xbf16, #tpu.memory_space<vmem>>, vector<1x1x128x128xbf16>
    %122 = vector.shape_cast %121 : vector<1x1x128x128xbf16> to vector<128x128xbf16>
    %cst_99 = arith.constant dense<0.000000e+00> : vector<320x128xf32>
    %123 = tpu.matmul %120, %122, %cst_99 {dimension_numbers = #tpu.dot_dimension_numbers<[1], [0], [0], [1], [0, 0, 1, 1], [], []>} : vector<320x128xbf16>, vector<128x128xbf16>, vector<320x128xf32> -> vector<320x128xf32>
    %124 = arith.addf %119, %123 : vector<320x128xf32>
    %c2_100 = arith.constant 2 : index
    %c0_101 = arith.constant 0 : index
    %125 = vector.load %arg10[%c2_100, %c0_101] : memref<380x128xbf16, #tpu.memory_space<vmem>>, vector<320x128xbf16>
    %c0_102 = arith.constant 0 : index
    %c2_103 = arith.constant 2 : index
    %c0_104 = arith.constant 0 : index
    %c0_105 = arith.constant 0 : index
    %126 = vector.load %arg6[%c0_102, %c2_103, %c0_104, %c0_105] : memref<3x3x128x128xbf16, #tpu.memory_space<vmem>>, vector<1x1x128x128xbf16>
    %127 = vector.shape_cast %126 : vector<1x1x128x128xbf16> to vector<128x128xbf16>
    %cst_106 = arith.constant dense<0.000000e+00> : vector<320x128xf32>
    %128 = tpu.matmul %125, %127, %cst_106 {dimension_numbers = #tpu.dot_dimension_numbers<[1], [0], [0], [1], [0, 0, 1, 1], [], []>} : vector<320x128xbf16>, vector<128x128xbf16>, vector<320x128xf32> -> vector<320x128xf32>
    %129 = arith.addf %124, %128 : vector<320x128xf32>
    %c20_107 = arith.constant 20 : index
    %c0_108 = arith.constant 0 : index
    %130 = vector.load %arg10[%c20_107, %c0_108] : memref<380x128xbf16, #tpu.memory_space<vmem>>, vector<320x128xbf16>
    %c1_109 = arith.constant 1 : index
    %c0_110 = arith.constant 0 : index
    %c0_111 = arith.constant 0 : index
    %c0_112 = arith.constant 0 : index
    %131 = vector.load %arg6[%c1_109, %c0_110, %c0_111, %c0_112] : memref<3x3x128x128xbf16, #tpu.memory_space<vmem>>, vector<1x1x128x128xbf16>
    %132 = vector.shape_cast %131 : vector<1x1x128x128xbf16> to vector<128x128xbf16>
    %cst_113 = arith.constant dense<0.000000e+00> : vector<320x128xf32>
    %133 = tpu.matmul %130, %132, %cst_113 {dimension_numbers = #tpu.dot_dimension_numbers<[1], [0], [0], [1], [0, 0, 1, 1], [], []>} : vector<320x128xbf16>, vector<128x128xbf16>, vector<320x128xf32> -> vector<320x128xf32>
    %c21_114 = arith.constant 21 : index
    %c0_115 = arith.constant 0 : index
    %134 = vector.load %arg10[%c21_114, %c0_115] : memref<380x128xbf16, #tpu.memory_space<vmem>>, vector<320x128xbf16>
    %c1_116 = arith.constant 1 : index
    %c1_117 = arith.constant 1 : index
    %c0_118 = arith.constant 0 : index
    %c0_119 = arith.constant 0 : index
    %135 = vector.load %arg6[%c1_116, %c1_117, %c0_118, %c0_119] : memref<3x3x128x128xbf16, #tpu.memory_space<vmem>>, vector<1x1x128x128xbf16>
    %136 = vector.shape_cast %135 : vector<1x1x128x128xbf16> to vector<128x128xbf16>
    %cst_120 = arith.constant dense<0.000000e+00> : vector<320x128xf32>
    %137 = tpu.matmul %134, %136, %cst_120 {dimension_numbers = #tpu.dot_dimension_numbers<[1], [0], [0], [1], [0, 0, 1, 1], [], []>} : vector<320x128xbf16>, vector<128x128xbf16>, vector<320x128xf32> -> vector<320x128xf32>
    %138 = arith.addf %133, %137 : vector<320x128xf32>
    %c22_121 = arith.constant 22 : index
    %c0_122 = arith.constant 0 : index
    %139 = vector.load %arg10[%c22_121, %c0_122] : memref<380x128xbf16, #tpu.memory_space<vmem>>, vector<320x128xbf16>
    %c1_123 = arith.constant 1 : index
    %c2_124 = arith.constant 2 : index
    %c0_125 = arith.constant 0 : index
    %c0_126 = arith.constant 0 : index
    %140 = vector.load %arg6[%c1_123, %c2_124, %c0_125, %c0_126] : memref<3x3x128x128xbf16, #tpu.memory_space<vmem>>, vector<1x1x128x128xbf16>
    %141 = vector.shape_cast %140 : vector<1x1x128x128xbf16> to vector<128x128xbf16>
    %cst_127 = arith.constant dense<0.000000e+00> : vector<320x128xf32>
    %142 = tpu.matmul %139, %141, %cst_127 {dimension_numbers = #tpu.dot_dimension_numbers<[1], [0], [0], [1], [0, 0, 1, 1], [], []>} : vector<320x128xbf16>, vector<128x128xbf16>, vector<320x128xf32> -> vector<320x128xf32>
    %143 = arith.addf %138, %142 : vector<320x128xf32>
    %c40_128 = arith.constant 40 : index
    %c0_129 = arith.constant 0 : index
    %144 = vector.load %arg10[%c40_128, %c0_129] : memref<380x128xbf16, #tpu.memory_space<vmem>>, vector<320x128xbf16>
    %c2_130 = arith.constant 2 : index
    %c0_131 = arith.constant 0 : index
    %c0_132 = arith.constant 0 : index
    %c0_133 = arith.constant 0 : index
    %145 = vector.load %arg6[%c2_130, %c0_131, %c0_132, %c0_133] : memref<3x3x128x128xbf16, #tpu.memory_space<vmem>>, vector<1x1x128x128xbf16>
    %146 = vector.shape_cast %145 : vector<1x1x128x128xbf16> to vector<128x128xbf16>
    %cst_134 = arith.constant dense<0.000000e+00> : vector<320x128xf32>
    %147 = tpu.matmul %144, %146, %cst_134 {dimension_numbers = #tpu.dot_dimension_numbers<[1], [0], [0], [1], [0, 0, 1, 1], [], []>} : vector<320x128xbf16>, vector<128x128xbf16>, vector<320x128xf32> -> vector<320x128xf32>
    %c41_135 = arith.constant 41 : index
    %c0_136 = arith.constant 0 : index
    %148 = vector.load %arg10[%c41_135, %c0_136] : memref<380x128xbf16, #tpu.memory_space<vmem>>, vector<320x128xbf16>
    %c2_137 = arith.constant 2 : index
    %c1_138 = arith.constant 1 : index
    %c0_139 = arith.constant 0 : index
    %c0_140 = arith.constant 0 : index
    %149 = vector.load %arg6[%c2_137, %c1_138, %c0_139, %c0_140] : memref<3x3x128x128xbf16, #tpu.memory_space<vmem>>, vector<1x1x128x128xbf16>
    %150 = vector.shape_cast %149 : vector<1x1x128x128xbf16> to vector<128x128xbf16>
    %cst_141 = arith.constant dense<0.000000e+00> : vector<320x128xf32>
    %151 = tpu.matmul %148, %150, %cst_141 {dimension_numbers = #tpu.dot_dimension_numbers<[1], [0], [0], [1], [0, 0, 1, 1], [], []>} : vector<320x128xbf16>, vector<128x128xbf16>, vector<320x128xf32> -> vector<320x128xf32>
    %152 = arith.addf %147, %151 : vector<320x128xf32>
    %c42_142 = arith.constant 42 : index
    %c0_143 = arith.constant 0 : index
    %153 = vector.load %arg10[%c42_142, %c0_143] : memref<380x128xbf16, #tpu.memory_space<vmem>>, vector<320x128xbf16>
    %c2_144 = arith.constant 2 : index
    %c2_145 = arith.constant 2 : index
    %c0_146 = arith.constant 0 : index
    %c0_147 = arith.constant 0 : index
    %154 = vector.load %arg6[%c2_144, %c2_145, %c0_146, %c0_147] : memref<3x3x128x128xbf16, #tpu.memory_space<vmem>>, vector<1x1x128x128xbf16>
    %155 = vector.shape_cast %154 : vector<1x1x128x128xbf16> to vector<128x128xbf16>
    %cst_148 = arith.constant dense<0.000000e+00> : vector<320x128xf32>
    %156 = tpu.matmul %153, %155, %cst_148 {dimension_numbers = #tpu.dot_dimension_numbers<[1], [0], [0], [1], [0, 0, 1, 1], [], []>} : vector<320x128xbf16>, vector<128x128xbf16>, vector<320x128xf32> -> vector<320x128xf32>
    %157 = arith.addf %152, %156 : vector<320x128xf32>
    %158 = arith.addf %129, %143 : vector<320x128xf32>
    %159 = arith.addf %158, %157 : vector<320x128xf32>
    %c0_149 = arith.constant 0 : index
    %c0_150 = arith.constant 0 : index
    %160 = vector.load %arg7[%c0_149, %c0_150] : memref<1x128xf32, #tpu.memory_space<vmem>>, vector<1x128xf32>
    %161 = vector.broadcast %160 : vector<1x128xf32> to vector<320x128xf32>
    %162 = arith.addf %159, %161 : vector<320x128xf32>
    %cst_151 = arith.constant 0.000000e+00 : f32
    %163 = vector.broadcast %cst_151 : f32 to vector<320x128xf32>
    %164 = arith.maximumf %162, %163 : vector<320x128xf32>
    %165 = arith.truncf %164 : vector<320x128xf32> to vector<320x128xbf16>
    %c0_152 = arith.constant 0 : index
    %c0_153 = arith.constant 0 : index
    %c0_154 = arith.constant 0 : index
    %166 = vector.load %arg8[%c0_152, %c0_153, %c0_154] : memref<1x320x128xbf16, #tpu.memory_space<vmem>>, vector<1x320x128xbf16>
    %167 = vector.shape_cast %166 : vector<1x320x128xbf16> to vector<320x128xbf16>
    %168 = vector.shape_cast %165 : vector<320x128xbf16> to vector<1x320x128xbf16>
    tpu.vector_store %arg8[%c0_152, %c0_153, %c0_154], %168 {strides = array<i32>} : memref<1x320x128xbf16, #tpu.memory_space<vmem>>, vector<1x320x128xbf16>,
    return
  }
  func.func @transform_0(%arg0: i32) -> (i32, i32, i32) {
    %c0_i32 = arith.constant 0 : i32
    %c0_i32_0 = arith.constant 0 : i32
    %c0_i32_1 = arith.constant 0 : i32
    return %arg0, %c0_i32, %c0_i32_0 : i32, i32, i32
  }
  func.func @transform_1(%arg0: i32) -> (i32, i32) {
    %c0_i32 = arith.constant 0 : i32
    %c0_i32_0 = arith.constant 0 : i32
    %c0_i32_1 = arith.constant 0 : i32
    return %c0_i32, %c0_i32_0 : i32, i32
  }
  func.func @transform_2(%arg0: i32) -> (i32, i32) {
    %c0_i32 = arith.constant 0 : i32
    %c0_i32_0 = arith.constant 0 : i32
    %c0_i32_1 = arith.constant 0 : i32
    return %c0_i32, %c0_i32_0 : i32, i32
  }
  func.func @transform_3(%arg0: i32) -> (i32, i32, i32, i32) {
    %c0_i32 = arith.constant 0 : i32
    %c0_i32_0 = arith.constant 0 : i32
    %c0_i32_1 = arith.constant 0 : i32
    %c0_i32_2 = arith.constant 0 : i32
    %c0_i32_3 = arith.constant 0 : i32
    return %c0_i32, %c0_i32_0, %c0_i32_1, %c0_i32_2 : i32, i32, i32, i32
  }
  func.func @transform_4(%arg0: i32) -> (i32, i32) {
    %c0_i32 = arith.constant 0 : i32
    %c0_i32_0 = arith.constant 0 : i32
    %c0_i32_1 = arith.constant 0 : i32
    return %c0_i32, %c0_i32_0 : i32, i32
  }
  func.func @transform_5(%arg0: i32) -> (i32, i32, i32, i32) {
    %c0_i32 = arith.constant 0 : i32
    %c0_i32_0 = arith.constant 0 : i32
    %c0_i32_1 = arith.constant 0 : i32
    %c0_i32_2 = arith.constant 0 : i32
    %c0_i32_3 = arith.constant 0 : i32
    return %c0_i32, %c0_i32_0, %c0_i32_1, %c0_i32_2 : i32, i32, i32, i32
  }
  func.func @transform_6(%arg0: i32) -> (i32, i32) {
    %c0_i32 = arith.constant 0 : i32
    %c0_i32_0 = arith.constant 0 : i32
    %c0_i32_1 = arith.constant 0 : i32
    return %c0_i32, %c0_i32_0 : i32, i32
  }
  func.func @transform_7(%arg0: i32) -> (i32, i32, i32) {
    %c0_i32 = arith.constant 0 : i32
    %c0_i32_0 = arith.constant 0 : i32
    %c0_i32_1 = arith.constant 0 : i32
    return %arg0, %c0_i32, %c0_i32_0 : i32, i32, i32
  }
}

</mosaic_0001>

<llo_original>
// kernel: tpu_custom_call.1
$region0: #{tpu_custom_call.1}
  #allocation0 [shape = 'u32[]', space=smem, size = 0x4, offset = 0x4, fixed_abs, tag = 'smem constant byte address 0x4 - core index']
  #allocation1 [shape = 'u32[72,128]{1,0:T(1,128)}', space=vmem, size = 0x9000, scoped, tag = 'internal scratch']
  #allocation2 [shape = 'bf16[440,128]{1,0:T(8,128)(2,1)}', space=vmem, size = 0x1b800, scoped, tag = 'scratch operand']
  #allocation3 [shape = 'bf16[380,128]{1,0:T(8,128)(2,1)}', space=vmem, size = 0x18000, scoped, tag = 'scratch operand']
  %s0 = inlined_call_operand.hbm [shape: bf16[2,440,128], index: 0, kind: input, shape index: {}]
  %s1 = inlined_call_operand.hbm [shape: bf16[128,128], index: 1, kind: input, shape index: {}]
  %s2 = inlined_call_operand.vmem [shape: f32[1,128], index: 2, kind: input, shape index: {}]
  %s3 = inlined_call_operand.hbm [shape: bf16[3,3,128,128], index: 3, kind: input, shape index: {}]
  %s4 = inlined_call_operand.vmem [shape: f32[1,128], index: 4, kind: input, shape index: {}]
  %s5 = inlined_call_operand.hbm [shape: bf16[3,3,128,128], index: 5, kind: input, shape index: {}]
  %s6 = inlined_call_operand.vmem [shape: f32[1,128], index: 6, kind: input, shape index: {}]
  %s7 = inlined_call_operand.hbm [shape: bf16[2,320,128], index: 7, kind: output, shape index: {}]
  %s8 = sld [smem:[#allocation0]]
  $region77: #{tpu_custom_call.1} parent=0
    _
  %s10 = ssub.s32 1, %s8
  %s11 = scalar_select 0, %s10, %s8
  $region1: #{tpu_custom_call.1} parent=0
    #allocation4 [shape = 'u8[225280]{0}', space=vmem, size = 0x37000, scoped, tag = 'input window, operand 0']
    #allocation5 [shape = 's32[2]{0}', space=sflag, size = 0x8, scoped, tag = 'scoped memory for tpu_custom_call.1']
    #allocation6 [shape = 's32[2]{0}', space=sflag, size = 0x8, scoped, tag = 'scoped memory for tpu_custom_call.1']
    #allocation7 [shape = 'u8[32768]{0}', space=vmem, size = 0x8000, scoped, tag = 'input window, operand 1, single buffered']
    #allocation8 [shape = 's32[1]{0}', space=sflag, size = 0x4, scoped, tag = 'scoped memory for tpu_custom_call.1']
    #allocation9 [shape = 'u8[294912]{0}', space=vmem, size = 0x48000, scoped, tag = 'input window, operand 3, single buffered']
    #allocation10 [shape = 'u8[294912]{0}', space=vmem, size = 0x48000, scoped, tag = 'input window, operand 5, single buffered']
    #allocation11 [shape = 's32[1]{0}', space=sflag, size = 0x4, scoped, tag = 'scoped memory for tpu_custom_call.1']
    #allocation12 [shape = 'u8[163840]{0}', space=vmem, size = 0x28000, scoped, tag = 'output window, operand 0']
    %12 = vsyncpa [#allocation5], 0
    %s13 = scalar_lea.sflag [#allocation5], 1
    %14 = vsyncpa %s13, 0
    %15 = vsyncpa [#allocation8], 0
    %16 = vsyncpa [#allocation11], 0
    %17 = vsyncpa [#allocation6], 0
    %s18 = scalar_lea.sflag [#allocation6], 1
    %19 = vsyncpa %s18, 0
    loop: start=0, step=1, limit=4
    $region2: #{tpu_custom_call.1} parent=1 // loop_pre_header
      _
    $region3: #{tpu_custom_call.1} parent=1 // loop_header
      %s21 = sphi 0, %s25
      %p22 = scmp.ge.s32.totalorder %s21, 4
      %s31 = sphi 0, %s33
      %s34 = sphi 0, %s31
      %s35 = sphi 0, %s34
      %s51 = sphi 0, %s35
      %s55 = sphi 0, %s55
      %s57 = sphi 0, %s55
      %s58 = sphi 0, %s57
      %s72 = sphi 0, %s58
      %s76 = sphi 0, %s76
      %s78 = sphi 0, %s76
      %s79 = sphi 0, %s78
      %s93 = sphi 0, %s79
      %s97 = sphi 0, %s97
      %s99 = sphi 0, %s97
      %s100 = sphi 0, %s99
      %s114 = sphi 0, %s100
      %s118 = sphi 0, %s118
      %s120 = sphi 0, %s118
      %s121 = sphi 0, %s120
      %s135 = sphi 0, %s121
      %s139 = sphi 0, %s139
      %s141 = sphi 0, %s139
      %s142 = sphi 0, %s141
      %s156 = sphi 0, %s142
      %s160 = sphi 0, %s160
      %s162 = sphi 0, %s160
      %s163 = sphi 0, %s162
      %s177 = sphi 0, %s163
      %s183 = sphi 0, %s185
      %s186 = sphi 0, %s183
      %s187 = sphi 0, %s186
      %s203 = sphi 0, %s187
    $region4: #{tpu_custom_call.1} parent=1 // loop_header_branch
      %24 = sbr.rel (%p22) target = $region8
    $region5: #{tpu_custom_call.1} parent=1 // loop_body
      %s26 = ssub.s32 %s21, 1
      %s27 = ssub.s32 %s21, 2
      %s28 = sadd.s32 %s21, 1
      %s29 = ssub.s32 %s21, %s28
      %p30 = scmp.eq.s32.totalorder %s29, 0
      %s32 = sadd.s32 %s31, 1
      %s33 = scalar_select %p30, %s31, %s32
      %p36 = pneg %p30
      %p37 = scmp.eq.s32.totalorder %s21, 1
      %p38 = por %p36, %p37
      %p39 = scmp.ne.s32.totalorder %s31, %s34
      %p40 = scmp.eq.s32.totalorder %s21, 0
      %p41 = por %p39, %p40
      %p42 = scmp.ne.s32.totalorder %s31, %s34
      %p43 = scmp.eq.s32.totalorder %s26, 1
      %p44 = por %p42, %p43
      %p45 = scmp.ne.s32.totalorder %s34, %s35
      %p46 = scmp.eq.s32.totalorder %s26, 0
      %p47 = por %p45, %p46
      %p48 = scmp.ne.s32.totalorder %s34, %s35
      %p49 = scmp.eq.s32.totalorder %s27, 1
      %p50 = por %p48, %p49
      %p52 = scmp.ne.s32.totalorder %s35, %s51
      %p53 = scmp.eq.s32.totalorder %s27, 0
      %p54 = por %p52, %p53
      %s56 = sadd.s32 %s55, 1
      %p59 = scmp.eq.s32.totalorder %s21, 1
      %p60 = scmp.ne.s32.totalorder %s55, %s57
      %p61 = scmp.eq.s32.totalorder %s21, 0
      %p62 = por %p60, %p61
      %p63 = scmp.ne.s32.totalorder %s55, %s57
      %p64 = scmp.eq.s32.totalorder %s26, 1
      %p65 = por %p63, %p64
      %p66 = scmp.ne.s32.totalorder %s57, %s58
      %p67 = scmp.eq.s32.totalorder %s26, 0
      %p68 = por %p66, %p67
      %p69 = scmp.ne.s32.totalorder %s57, %s58
      %p70 = scmp.eq.s32.totalorder %s27, 1
      %p71 = por %p69, %p70
      %p73 = scmp.ne.s32.totalorder %s58, %s72
      %p74 = scmp.eq.s32.totalorder %s27, 0
      %p75 = por %p73, %p74
      %s77 = sadd.s32 %s76, 1
      %p80 = scmp.eq.s32.totalorder %s21, 1
      %p81 = scmp.ne.s32.totalorder %s76, %s78
      %p82 = scmp.eq.s32.totalorder %s21, 0
      %p83 = por %p81, %p82
      %p84 = scmp.ne.s32.totalorder %s76, %s78
      %p85 = scmp.eq.s32.totalorder %s26, 1
      %p86 = por %p84, %p85
      %p87 = scmp.ne.s32.totalorder %s78, %s79
      %p88 = scmp.eq.s32.totalorder %s26, 0
      %p89 = por %p87, %p88
      %p90 = scmp.ne.s32.totalorder %s78, %s79
      %p91 = scmp.eq.s32.totalorder %s27, 1
      %p92 = por %p90, %p91
      %p94 = scmp.ne.s32.totalorder %s79, %s93
      %p95 = scmp.eq.s32.totalorder %s27, 0
      %p96 = por %p94, %p95
      %s98 = sadd.s32 %s97, 1
      %p101 = scmp.eq.s32.totalorder %s21, 1
      %p102 = scmp.ne.s32.totalorder %s97, %s99
      %p103 = scmp.eq.s32.totalorder %s21, 0
      %p104 = por %p102, %p103
      %p105 = scmp.ne.s32.totalorder %s97, %s99
      %p106 = scmp.eq.s32.totalorder %s26, 1
      %p107 = por %p105, %p106
      %p108 = scmp.ne.s32.totalorder %s99, %s100
      %p109 = scmp.eq.s32.totalorder %s26, 0
      %p110 = por %p108, %p109
      %p111 = scmp.ne.s32.totalorder %s99, %s100
      %p112 = scmp.eq.s32.totalorder %s27, 1
      %p113 = por %p111, %p112
      %p115 = scmp.ne.s32.totalorder %s100, %s114
      %p116 = scmp.eq.s32.totalorder %s27, 0
      %p117 = por %p115, %p116
      %s119 = sadd.s32 %s118, 1
      %p122 = scmp.eq.s32.totalorder %s21, 1
      %p123 = scmp.ne.s32.totalorder %s118, %s120
      %p124 = scmp.eq.s32.totalorder %s21, 0
      %p125 = por %p123, %p124
      %p126 = scmp.ne.s32.totalorder %s118, %s120
      %p127 = scmp.eq.s32.totalorder %s26, 1
      %p128 = por %p126, %p127
      %p129 = scmp.ne.s32.totalorder %s120, %s121
      %p130 = scmp.eq.s32.totalorder %s26, 0
      %p131 = por %p129, %p130
      %p132 = scmp.ne.s32.totalorder %s120, %s121
      %p133 = scmp.eq.s32.totalorder %s27, 1
      %p134 = por %p132, %p133
      %p136 = scmp.ne.s32.totalorder %s121, %s135
      %p137 = scmp.eq.s32.totalorder %s27, 0
      %p138 = por %p136, %p137
      %s140 = sadd.s32 %s139, 1
      %p143 = scmp.eq.s32.totalorder %s21, 1
      %p144 = scmp.ne.s32.totalorder %s139, %s141
      %p145 = scmp.eq.s32.totalorder %s21, 0
      %p146 = por %p144, %p145
      %p147 = scmp.ne.s32.totalorder %s139, %s141
      %p148 = scmp.eq.s32.totalorder %s26, 1
      %p149 = por %p147, %p148
      %p150 = scmp.ne.s32.totalorder %s141, %s142
      %p151 = scmp.eq.s32.totalorder %s26, 0
      %p152 = por %p150, %p151
      %p153 = scmp.ne.s32.totalorder %s141, %s142
      %p154 = scmp.eq.s32.totalorder %s27, 1
      %p155 = por %p153, %p154
      %p157 = scmp.ne.s32.totalorder %s142, %s156
      %p158 = scmp.eq.s32.totalorder %s27, 0
      %p159 = por %p157, %p158
      %s161 = sadd.s32 %s160, 1
      %p164 = scmp.eq.s32.totalorder %s21, 1
      %p165 = scmp.ne.s32.totalorder %s160, %s162
      %p166 = scmp.eq.s32.totalorder %s21, 0
      %p167 = por %p165, %p166
      %p168 = scmp.ne.s32.totalorder %s160, %s162
      %p169 = scmp.eq.s32.totalorder %s26, 1
      %p170 = por %p168, %p169
      %p171 = scmp.ne.s32.totalorder %s162, %s163
      %p172 = scmp.eq.s32.totalorder %s26, 0
      %p173 = por %p171, %p172
      %p174 = scmp.ne.s32.totalorder %s162, %s163
      %p175 = scmp.eq.s32.totalorder %s27, 1
      %p176 = por %p174, %p175
      %p178 = scmp.ne.s32.totalorder %s163, %s177
      %p179 = scmp.eq.s32.totalorder %s27, 0
      %p180 = por %p178, %p179
      %s181 = ssub.s32 %s21, %s28
      %p182 = scmp.eq.s32.totalorder %s181, 0
      %s184 = sadd.s32 %s183, 1
      %s185 = scalar_select %p182, %s183, %s184
      %p188 = pneg %p182
      %p189 = scmp.eq.s32.totalorder %s21, 1
      %p190 = por %p188, %p189
      %p191 = scmp.ne.s32.totalorder %s183, %s186
      %p192 = scmp.eq.s32.totalorder %s21, 0
      %p193 = por %p191, %p192
      %p194 = scmp.ne.s32.totalorder %s183, %s186
      %p195 = scmp.eq.s32.totalorder %s26, 1
      %p196 = por %p194, %p195
      %p197 = scmp.ne.s32.totalorder %s186, %s187
      %p198 = scmp.eq.s32.totalorder %s26, 0
      %p199 = por %p197, %p198
      %p200 = scmp.ne.s32.totalorder %s186, %s187
      %p201 = scmp.eq.s32.totalorder %s27, 1
      %p202 = por %p200, %p201
      %p204 = scmp.ne.s32.totalorder %s187, %s203
      %p205 = scmp.eq.s32.totalorder %s27, 0
      %p206 = por %p204, %p205
      %p207 = scmp.le.s32.totalorder 1, %s21
      %p208 = scmp.lt.s32.totalorder %s21, 3
      %p209 = pnand %p207, %p208
      %p210 = pneg %p209
      // Predicated region
      $region9: #{tpu_custom_call.1} parent=5 // pred_check
        _
      $region10: #{tpu_custom_call.1} parent=5 // pred_check_branch
        %212 = sbr.rel (%p209) target = $region12
      $region11: #{tpu_custom_call.1} parent=5 // pred_region
        %s213 = ssub.s32 %s21, 1
        // Predicated region
        $region13: #{tpu_custom_call.1} parent=11 // pred_check
          %p214 = pneg %p68
        $region14: #{tpu_custom_call.1} parent=11 // pred_check_branch
          %216 = sbr.rel (%p214) target = $region16
        $region15: #{tpu_custom_call.1} parent=11 // pred_region
          %218 = vsyncadd [#allocation8], 0
          %s219 = sshll.u32 %s1, 4
          %s220 = int_to_ptr.hbm [resolvable:$true] %s219
          %s221 = sshll.u32 [#allocation7], 4
          %s222 = int_to_ptr.vmem [resolvable:$true] %s221
          %227 = dma.hbm_to_vmem [thread:$0]  %s220, 1024, %s222, [#allocation8], 64, 64, 4
        $region16: #{tpu_custom_call.1} parent=11 // pred_fallthru
          _
        // Predicated region
        $region17: #{tpu_custom_call.1} parent=11 // pred_check
          %p228 = pneg %p89
        $region18: #{tpu_custom_call.1} parent=11 // pred_check_branch
          %230 = sbr.rel (%p228) target = $region20
        $region19: #{tpu_custom_call.1} parent=11 // pred_region
          _
        $region20: #{tpu_custom_call.1} parent=11 // pred_fallthru
          _
        // Predicated region
        $region21: #{tpu_custom_call.1} parent=11 // pred_check
          %p231 = pneg %p110
        $region22: #{tpu_custom_call.1} parent=11 // pred_check_branch
          %233 = sbr.rel (%p231) target = $region24
        $region23: #{tpu_custom_call.1} parent=11 // pred_region
          %235 = vsyncadd [#allocation8], 0
          %s236 = sshll.u32 %s3, 4
          %s237 = int_to_ptr.hbm [resolvable:$true] %s236
          %s238 = sshll.u32 [#allocation9], 4
          %s239 = int_to_ptr.vmem [resolvable:$true] %s238
          %244 = dma.hbm_to_vmem [thread:$0]  %s237, 9216, %s239, [#allocation8], 64, 64, 4
        $region24: #{tpu_custom_call.1} parent=11 // pred_fallthru
          _
        // Predicated region
        $region25: #{tpu_custom_call.1} parent=11 // pred_check
          %p245 = pneg %p131
        $region26: #{tpu_custom_call.1} parent=11 // pred_check_branch
          %247 = sbr.rel (%p245) target = $region28
        $region27: #{tpu_custom_call.1} parent=11 // pred_region
          _
        $region28: #{tpu_custom_call.1} parent=11 // pred_fallthru
          _
        // Predicated region
        $region29: #{tpu_custom_call.1} parent=11 // pred_check
          %p248 = pneg %p152
        $region30: #{tpu_custom_call.1} parent=11 // pred_check_branch
          %250 = sbr.rel (%p248) target = $region32
        $region31: #{tpu_custom_call.1} parent=11 // pred_region
          %252 = vsyncadd [#allocation11], 0
          %s253 = sshll.u32 %s5, 4
          %s254 = int_to_ptr.hbm [resolvable:$true] %s253
          %s255 = sshll.u32 [#allocation10], 4
          %s256 = int_to_ptr.vmem [resolvable:$true] %s255
          %261 = dma.hbm_to_vmem [thread:$0]  %s254, 9216, %s256, [#allocation11], 64, 64, 4
        $region32: #{tpu_custom_call.1} parent=11 // pred_fallthru
          _
        // Predicated region
        $region33: #{tpu_custom_call.1} parent=11 // pred_check
          %p262 = pneg %p173
        $region34: #{tpu_custom_call.1} parent=11 // pred_check_branch
          %264 = sbr.rel (%p262) target = $region36
        $region35: #{tpu_custom_call.1} parent=11 // pred_region
          _
        $region36: #{tpu_custom_call.1} parent=11 // pred_fallthru
          _
      $region12: #{tpu_custom_call.1} parent=5 // pred_fallthru
        _
      %p265 = scmp.lt.s32.totalorder %s21, 2
      // Predicated region
      $region37: #{tpu_custom_call.1} parent=5 // pred_check
        %p266 = pneg %p265
      $region38: #{tpu_custom_call.1} parent=5 // pred_check_branch
        %268 = sbr.rel (%p266) target = $region40
      $region39: #{tpu_custom_call.1} parent=5 // pred_region
        // Predicated region
        $region41: #{tpu_custom_call.1} parent=39 // pred_check
          %p269 = pneg %p41
        $region42: #{tpu_custom_call.1} parent=39 // pred_check_branch
          %271 = sbr.rel (%p269) target = $region44
        $region43: #{tpu_custom_call.1} parent=39 // pred_region
          %s272 = sand.u32 %s31, 1
          %s273 = scalar_lea.sflag [#allocation5], %s272
          %s274 = sand.u32 %s31, 1
          %s275 = smul.addr %s274, 220
          %s276 = scalar_lea.vmem [#allocation4], %s275
          %278 = vsyncadd %s273, 0
          %s279 = smul.addr %s21, 55
          %s280 = smul.addr %s279, 4
          %s281 = scalar_lea.hbm %s0, %s280
          %s282 = sshll.u32 %s281, 4
          %s283 = int_to_ptr.hbm [resolvable:$true] %s282
          %s284 = sshll.u32 %s276, 4
          %s285 = int_to_ptr.vmem [resolvable:$true] %s284
          %290 = dma.hbm_to_vmem [thread:$0]  %s283, 3520, %s285, %s273, 64, 64, 4
        $region44: #{tpu_custom_call.1} parent=39 // pred_fallthru
          _
      $region40: #{tpu_custom_call.1} parent=5 // pred_fallthru
        _
      %p291 = scmp.le.s32.totalorder 1, %s21
      %p292 = scmp.lt.s32.totalorder %s21, 3
      %p293 = pnand %p291, %p292
      %p294 = pneg %p293
      // Predicated region
      $region45: #{tpu_custom_call.1} parent=5 // pred_check
        _
      $region46: #{tpu_custom_call.1} parent=5 // pred_check_branch
        %296 = sbr.rel (%p293) target = $region48
      $region47: #{tpu_custom_call.1} parent=5 // pred_region
        %s297 = ssub.s32 %s21, 1
        %s298 = sand.u32 %s34, 1
        %s299 = scalar_lea.sflag [#allocation5], %s298
        %s300 = sand.u32 %s34, 1
        %s301 = smul.addr %s300, 220
        %s302 = scalar_lea.vmem [#allocation4], %s301
        // Predicated region
        $region49: #{tpu_custom_call.1} parent=47 // pred_check
          %p303 = pneg %p47
        $region50: #{tpu_custom_call.1} parent=47 // pred_check_branch
          %305 = sbr.rel (%p303) target = $region52
        $region51: #{tpu_custom_call.1} parent=47 // pred_region
          %307 = dma.done %s299, 3520
        $region52: #{tpu_custom_call.1} parent=47 // pred_fallthru
          _
        // Predicated region
        $region53: #{tpu_custom_call.1} parent=47 // pred_check
          %p308 = pneg %p68
        $region54: #{tpu_custom_call.1} parent=47 // pred_check_branch
          %310 = sbr.rel (%p308) target = $region56
        $region55: #{tpu_custom_call.1} parent=47 // pred_region
          %312 = dma.done [#allocation8], 1024
        $region56: #{tpu_custom_call.1} parent=47 // pred_fallthru
          _
        // Predicated region
        $region57: #{tpu_custom_call.1} parent=47 // pred_check
          %p313 = pneg %p110
        $region58: #{tpu_custom_call.1} parent=47 // pred_check_branch
          %315 = sbr.rel (%p313) target = $region60
        $region59: #{tpu_custom_call.1} parent=47 // pred_region
          %317 = dma.done [#allocation8], 9216
        $region60: #{tpu_custom_call.1} parent=47 // pred_fallthru
          _
        // Predicated region
        $region61: #{tpu_custom_call.1} parent=47 // pred_check
          %p318 = pneg %p152
        $region62: #{tpu_custom_call.1} parent=47 // pred_check_branch
          %320 = sbr.rel (%p318) target = $region64
        $region63: #{tpu_custom_call.1} parent=47 // pred_region
          %322 = dma.done [#allocation11], 9216
        $region64: #{tpu_custom_call.1} parent=47 // pred_fallthru
          _
        %s323 = sand.u32 %s34, 1
        %s324 = scalar_lea.sflag [#allocation5], %s323
        %s325 = sand.u32 %s34, 1
        %s326 = smul.addr %s325, 220
        %s327 = scalar_lea.vmem [#allocation4], %s326
        %p328 = pneg %p47
        %p329 = pneg %p44
        %p330 = pneg %p68
        %p331 = pneg %p65
        %p332 = pneg %p89
        %p333 = pneg %p86
        %p334 = pneg %p110
        %p335 = pneg %p107
        %p336 = pneg %p131
        %p337 = pneg %p128
        %p338 = pneg %p152
        %p339 = pneg %p149
        %p340 = pneg %p173
        %p341 = pneg %p170
        %p342 = pneg %p199
        %p343 = pneg %p196
        %s344 = sand.u32 %s186, 1
        %s345 = scalar_lea.sflag [#allocation6], %s344
        %s346 = sand.u32 %s186, 1
        %s347 = smul.addr %s346, 160
        %s348 = scalar_lea.vmem [#allocation12], %s347
        %v349 = vld [vmem:[%s302] sm:$0xf]
        %v350 = vld [vmem:[%s302 + $0x4] sm:$0xf]
        %v351 = vld [vmem:[%s302 + $0x8] sm:$0xf]
        %v352 = vld [vmem:[%s302 + $0xc] sm:$0xf]
        %v353 = vld [vmem:[%s302 + $0x10] sm:$0xf]
        %v354 = vld [vmem:[%s302 + $0x14] sm:$0xf]
        %v355 = vld [vmem:[%s302 + $0x18] sm:$0xf]
        %v356 = vld [vmem:[%s302 + $0x1c] sm:$0xf]
        %v357 = vld [vmem:[%s302 + $0x20] sm:$0xf]
        %v358 = vld [vmem:[%s302 + $0x24] sm:$0xf]
        %v359 = vld [vmem:[%s302 + $0x28] sm:$0xf]
        %v360 = vld [vmem:[%s302 + $0x2c] sm:$0xf]
        %v361 = vld [vmem:[%s302 + $0x30] sm:$0xf]
        %v362 = vld [vmem:[%s302 + $0x34] sm:$0xf]
        %v363 = vld [vmem:[%s302 + $0x38] sm:$0xf]
        %v364 = vld [vmem:[%s302 + $0x3c] sm:$0xf]
        %v365 = vld [vmem:[%s302 + $0x40] sm:$0xf]
        %v366 = vld [vmem:[%s302 + $0x44] sm:$0xf]
        %v367 = vld [vmem:[%s302 + $0x48] sm:$0xf]
        %v368 = vld [vmem:[%s302 + $0x4c] sm:$0xf]
        %v369 = vld [vmem:[%s302 + $0x50] sm:$0xf]
        %v370 = vld [vmem:[%s302 + $0x54] sm:$0xf]
        %v371 = vld [vmem:[%s302 + $0x58] sm:$0xf]
        %v372 = vld [vmem:[%s302 + $0x5c] sm:$0xf]
        %v373 = vld [vmem:[%s302 + $0x60] sm:$0xf]
        %v374 = vld [vmem:[%s302 + $0x64] sm:$0xf]
        %v375 = vld [vmem:[%s302 + $0x68] sm:$0xf]
        %v376 = vld [vmem:[%s302 + $0x6c] sm:$0xf]
        %v377 = vld [vmem:[%s302 + $0x70] sm:$0xf]
        %v378 = vld [vmem:[%s302 + $0x74] sm:$0xf]
        %v379 = vld [vmem:[%s302 + $0x78] sm:$0xf]
        %v380 = vld [vmem:[%s302 + $0x7c] sm:$0xf]
        %v381 = vld [vmem:[%s302 + $0x80] sm:$0xf]
        %v382 = vld [vmem:[%s302 + $0x84] sm:$0xf]
        %v383 = vld [vmem:[%s302 + $0x88] sm:$0xf]
        %v384 = vld [vmem:[%s302 + $0x8c] sm:$0xf]
        %v385 = vld [vmem:[%s302 + $0x90] sm:$0xf]
        %v386 = vld [vmem:[%s302 + $0x94] sm:$0xf]
        %v387 = vld [vmem:[%s302 + $0x98] sm:$0xf]
        %v388 = vld [vmem:[%s302 + $0x9c] sm:$0xf]
        %v389 = vld [vmem:[%s302 + $0xa0] sm:$0xf]
        %v390 = vld [vmem:[%s302 + $0xa4] sm:$0xf]
        %v391 = vld [vmem:[%s302 + $0xa8] sm:$0xf]
        %v392 = vld [vmem:[%s302 + $0xac] sm:$0xf]
        %v393 = vld [vmem:[%s302 + $0xb0] sm:$0xf]
        %v394 = vld [vmem:[%s302 + $0xb4] sm:$0xf]
        %v395 = vld [vmem:[%s302 + $0xb8] sm:$0xf]
        %v396 = vld [vmem:[%s302 + $0xbc] sm:$0xf]
        %v397 = vld [vmem:[%s302 + $0xc0] sm:$0xf]
        %v398 = vld [vmem:[%s302 + $0xc4] sm:$0xf]
        %v399 = vld [vmem:[%s302 + $0xc8] sm:$0xf]
        %v400 = vld [vmem:[%s302 + $0xcc] sm:$0xf]
        %v401 = vld [vmem:[%s302 + $0xd0] sm:$0xf]
        %v402 = vld [vmem:[%s302 + $0xd4] sm:$0xf]
        %v403 = vld [vmem:[%s302 + $0xd8] sm:$0xf]
        %v404 = vld [vmem:[#allocation7] sm:$0xf]
        %v405 = vld [vmem:[#allocation7 + $0x4] sm:$0xf]
        %v406 = vld [vmem:[#allocation7 + $0x8] sm:$0xf]
        %v407 = vld [vmem:[#allocation7 + $0xc] sm:$0xf]
        %v408 = vld [vmem:[#allocation7 + $0x10] sm:$0xf]
        %v409 = vld [vmem:[#allocation7 + $0x14] sm:$0xf]
        %v410 = vld [vmem:[#allocation7 + $0x18] sm:$0xf]
        %v411 = vld [vmem:[#allocation7 + $0x1c] sm:$0xf]
        %v412 = vld [vmem:[#allocation7 + $0x20] sm:$0xf]
        %v413 = vld [vmem:[#allocation7 + $0x24] sm:$0xf]
        %v414 = vld [vmem:[#allocation7 + $0x28] sm:$0xf]
        %v415 = vld [vmem:[#allocation7 + $0x2c] sm:$0xf]
        %v416 = vld [vmem:[#allocation7 + $0x30] sm:$0xf]
        %v417 = vld [vmem:[#allocation7 + $0x34] sm:$0xf]
        %v418 = vld [vmem:[#allocation7 + $0x38] sm:$0xf]
        %v419 = vld [vmem:[#allocation7 + $0x3c] sm:$0xf]
        %v420 = vld [vmem:[%s2] sm:$0x1]
        %v422 = vperm.slane %v420, 0
        %v479 = vunpack.c.l.b16 %v349
        %v480 = vunpack.c.l.b16 %v350
        %v481 = vunpack.c.l.b16 %v351
        %v482 = vunpack.c.l.b16 %v352
        %v483 = vunpack.c.l.b16 %v353
        %v484 = vunpack.c.l.b16 %v354
        %v485 = vunpack.c.l.b16 %v355
        %v486 = vunpack.c.l.b16 %v356
        %v487 = vunpack.c.l.b16 %v357
        %v488 = vunpack.c.l.b16 %v358
        %v489 = vunpack.c.l.b16 %v359
        %v490 = vunpack.c.l.b16 %v360
        %v491 = vunpack.c.l.b16 %v361
        %v492 = vunpack.c.l.b16 %v362
        %v493 = vunpack.c.l.b16 %v363
        %v494 = vunpack.c.l.b16 %v364
        %v495 = vunpack.c.l.b16 %v365
        %v496 = vunpack.c.l.b16 %v366
        %v497 = vunpack.c.l.b16 %v367
        %v498 = vunpack.c.l.b16 %v368
        %v499 = vunpack.c.l.b16 %v369
        %v500 = vunpack.c.l.b16 %v370
        %v501 = vunpack.c.l.b16 %v371
        %v502 = vunpack.c.l.b16 %v372
        %v503 = vunpack.c.l.b16 %v373
        %v504 = vunpack.c.l.b16 %v374
        %v505 = vunpack.c.l.b16 %v375
        %v506 = vunpack.c.l.b16 %v376
        %v507 = vunpack.c.l.b16 %v377
        %v508 = vunpack.c.l.b16 %v378
        %v509 = vunpack.c.l.b16 %v379
        %v510 = vunpack.c.l.b16 %v380
        %v511 = vunpack.c.l.b16 %v381
        %v512 = vunpack.c.l.b16 %v382
        %v513 = vunpack.c.l.b16 %v383
        %v514 = vunpack.c.l.b16 %v384
        %v515 = vunpack.c.l.b16 %v385
        %v516 = vunpack.c.l.b16 %v386
        %v517 = vunpack.c.l.b16 %v387
        %v518 = vunpack.c.l.b16 %v388
        %v519 = vunpack.c.l.b16 %v389
        %v520 = vunpack.c.l.b16 %v390
        %v521 = vunpack.c.l.b16 %v391
        %v522 = vunpack.c.l.b16 %v392
        %v523 = vunpack.c.l.b16 %v393
        %v524 = vunpack.c.l.b16 %v394
        %v525 = vunpack.c.l.b16 %v395
        %v526 = vunpack.c.l.b16 %v396
        %v527 = vunpack.c.l.b16 %v397
        %v528 = vunpack.c.l.b16 %v398
        %v529 = vunpack.c.l.b16 %v399
        %v530 = vunpack.c.l.b16 %v400
        %v531 = vunpack.c.l.b16 %v401
        %v532 = vunpack.c.l.b16 %v402
        %v533 = vunpack.c.l.b16 %v403
        %v534 = vpack.c.b16 %v480, %v479
        %v535 = vpack.c.b16 %v482, %v481
        %v536 = vpack.c.b16 %v484, %v483
        %v537 = vpack.c.b16 %v486, %v485
        %v538 = vpack.c.b16 %v488, %v487
        %v539 = vpack.c.b16 %v490, %v489
        %v540 = vpack.c.b16 %v492, %v491
        %v541 = vpack.c.b16 %v494, %v493
        %v542 = vpack.c.b16 %v496, %v495
        %v543 = vpack.c.b16 %v498, %v497
        %v544 = vpack.c.b16 %v500, %v499
        %v545 = vpack.c.b16 %v502, %v501
        %v546 = vpack.c.b16 %v504, %v503
        %v547 = vpack.c.b16 %v506, %v505
        %v548 = vpack.c.b16 %v508, %v507
        %v549 = vpack.c.b16 %v510, %v509
        %v550 = vpack.c.b16 %v512, %v511
        %v551 = vpack.c.b16 %v514, %v513
        %v552 = vpack.c.b16 %v516, %v515
        %v553 = vpack.c.b16 %v518, %v517
        %v554 = vpack.c.b16 %v520, %v519
        %v555 = vpack.c.b16 %v522, %v521
        %v556 = vpack.c.b16 %v524, %v523
        %v557 = vpack.c.b16 %v526, %v525
        %v558 = vpack.c.b16 %v528, %v527
        %v559 = vpack.c.b16 %v530, %v529
        %v560 = vpack.c.b16 %v532, %v531
        %v561 = vpack.c.b16 %v533, %v533
        %v606 = vunpack.c.l.b16 %v404
        %v607 = vunpack.c.l.b16 %v405
        %v608 = vunpack.c.l.b16 %v406
        %v609 = vunpack.c.l.b16 %v407
        %v610 = vunpack.c.l.b16 %v408
        %v611 = vunpack.c.l.b16 %v409
        %v612 = vunpack.c.l.b16 %v410
        %v613 = vunpack.c.l.b16 %v411
        %v614 = vunpack.c.l.b16 %v412
        %v615 = vunpack.c.l.b16 %v413
        %v616 = vunpack.c.l.b16 %v414
        %v617 = vunpack.c.l.b16 %v415
        %v618 = vunpack.c.l.b16 %v416
        %v619 = vunpack.c.l.b16 %v417
        %v620 = vunpack.c.l.b16 %v418
        %v621 = vunpack.c.l.b16 %v419
        %v622 = vpack.c.b16 %v607, %v606
        %v623 = vpack.c.b16 %v609, %v608
        %v624 = vpack.c.b16 %v611, %v610
        %v625 = vpack.c.b16 %v613, %v612
        %v626 = vpack.c.b16 %v615, %v614
        %v627 = vpack.c.b16 %v617, %v616
        %v628 = vpack.c.b16 %v619, %v618
        %v629 = vpack.c.b16 %v621, %v620
        %638 = vmatpush.bf16.msra.mxu0 %v629
        %639 = vmatpush.bf16.msra.mxu0 %v628
        %640 = vmatpush.bf16.msra.mxu0 %v627
        %641 = vmatpush.bf16.msra.mxu0 %v626
        %642 = vmatpush.bf16.msra.mxu0 %v625
        %643 = vmatpush.bf16.msra.mxu0 %v624
        %644 = vmatpush.bf16.msra.mxu0 %v623
        %645 = vmatpush.bf16.msra.mxu0 %v622
        %646 = vmatmul.bf16.gmra.mxu0 %v534
        %v647 = vpop.f32.mrf.mxu0
        %v648 = vadd.f32 %v422, %v647
        %v649 = vpop.f32.mrf.mxu0
        %v650 = vadd.f32 %v422, %v649
        %651 = vmatmul.bf16.gmra.mxu0 %v535
        %v652 = vpop.f32.mrf.mxu0
        %v653 = vadd.f32 %v422, %v652
        %v654 = vpop.f32.mrf.mxu0
        %v655 = vadd.f32 %v422, %v654
        %656 = vmatmul.bf16.gmra.mxu0 %v536
        %v657 = vpop.f32.mrf.mxu0
        %v658 = vadd.f32 %v422, %v657
        %v659 = vpop.f32.mrf.mxu0
        %v660 = vadd.f32 %v422, %v659
        %661 = vmatmul.bf16.gmra.mxu0 %v537
        %v662 = vpop.f32.mrf.mxu0
        %v663 = vadd.f32 %v422, %v662
        %v664 = vpop.f32.mrf.mxu0
        %v665 = vadd.f32 %v422, %v664
        %666 = vmatmul.bf16.gmra.mxu0 %v538
        %v667 = vpop.f32.mrf.mxu0
        %v668 = vadd.f32 %v422, %v667
        %v669 = vpop.f32.mrf.mxu0
        %v670 = vadd.f32 %v422, %v669
        %671 = vmatmul.bf16.gmra.mxu0 %v539
        %v672 = vpop.f32.mrf.mxu0
        %v673 = vadd.f32 %v422, %v672
        %v674 = vpop.f32.mrf.mxu0
        %v675 = vadd.f32 %v422, %v674
        %676 = vmatmul.bf16.gmra.mxu0 %v540
        %v677 = vpop.f32.mrf.mxu0
        %v678 = vadd.f32 %v422, %v677
        %v679 = vpop.f32.mrf.mxu0
        %v680 = vadd.f32 %v422, %v679
        %681 = vmatmul.bf16.gmra.mxu0 %v541
        %v682 = vpop.f32.mrf.mxu0
        %v683 = vadd.f32 %v422, %v682
        %v684 = vpop.f32.mrf.mxu0
        %v685 = vadd.f32 %v422, %v684
        %686 = vmatmul.bf16.gmra.mxu0 %v542
        %v687 = vpop.f32.mrf.mxu0
        %v688 = vadd.f32 %v422, %v687
        %v689 = vpop.f32.mrf.mxu0
        %v690 = vadd.f32 %v422, %v689
        %691 = vmatmul.bf16.gmra.mxu0 %v543
        %v692 = vpop.f32.mrf.mxu0
        %v693 = vadd.f32 %v422, %v692
        %v694 = vpop.f32.mrf.mxu0
        %v695 = vadd.f32 %v422, %v694
        %696 = vmatmul.bf16.gmra.mxu0 %v544
        %v697 = vpop.f32.mrf.mxu0
        %v698 = vadd.f32 %v422, %v697
        %v699 = vpop.f32.mrf.mxu0
        %v700 = vadd.f32 %v422, %v699
        %701 = vmatmul.bf16.gmra.mxu0 %v545
        %v702 = vpop.f32.mrf.mxu0
        %v703 = vadd.f32 %v422, %v702
        %v704 = vpop.f32.mrf.mxu0
        %v705 = vadd.f32 %v422, %v704
        %706 = vmatmul.bf16.gmra.mxu0 %v546
        %v707 = vpop.f32.mrf.mxu0
        %v708 = vadd.f32 %v422, %v707
        %v709 = vpop.f32.mrf.mxu0
        %v710 = vadd.f32 %v422, %v709
        %711 = vmatmul.bf16.gmra.mxu0 %v547
        %v712 = vpop.f32.mrf.mxu0
        %v713 = vadd.f32 %v422, %v712
        %v714 = vpop.f32.mrf.mxu0
        %v715 = vadd.f32 %v422, %v714
        %716 = vmatmul.bf16.gmra.mxu0 %v548
        %v717 = vpop.f32.mrf.mxu0
        %v718 = vadd.f32 %v422, %v717
        %v719 = vpop.f32.mrf.mxu0
        %v720 = vadd.f32 %v422, %v719
        %721 = vmatmul.bf16.gmra.mxu0 %v549
        %v722 = vpop.f32.mrf.mxu0
        %v723 = vadd.f32 %v422, %v722
        %v724 = vpop.f32.mrf.mxu0
        %v725 = vadd.f32 %v422, %v724
        %726 = vmatmul.bf16.gmra.mxu0 %v550
        %v727 = vpop.f32.mrf.mxu0
        %v728 = vadd.f32 %v422, %v727
        %v729 = vpop.f32.mrf.mxu0
        %v730 = vadd.f32 %v422, %v729
        %731 = vmatmul.bf16.gmra.mxu0 %v551
        %v732 = vpop.f32.mrf.mxu0
        %v733 = vadd.f32 %v422, %v732
        %v734 = vpop.f32.mrf.mxu0
        %v735 = vadd.f32 %v422, %v734
        %736 = vmatmul.bf16.gmra.mxu0 %v552
        %v737 = vpop.f32.mrf.mxu0
        %v738 = vadd.f32 %v422, %v737
        %v739 = vpop.f32.mrf.mxu0
        %v740 = vadd.f32 %v422, %v739
        %741 = vmatmul.bf16.gmra.mxu0 %v553
        %v742 = vpop.f32.mrf.mxu0
        %v743 = vadd.f32 %v422, %v742
        %v744 = vpop.f32.mrf.mxu0
        %v745 = vadd.f32 %v422, %v744
        %746 = vmatmul.bf16.gmra.mxu0 %v554
        %v747 = vpop.f32.mrf.mxu0
        %v748 = vadd.f32 %v422, %v747
        %v749 = vpop.f32.mrf.mxu0
        %v750 = vadd.f32 %v422, %v749
        %751 = vmatmul.bf16.gmra.mxu0 %v555
        %v752 = vpop.f32.mrf.mxu0
        %v753 = vadd.f32 %v422, %v752
        %v754 = vpop.f32.mrf.mxu0
        %v755 = vadd.f32 %v422, %v754
        %756 = vmatmul.bf16.gmra.mxu0 %v556
        %v757 = vpop.f32.mrf.mxu0
        %v758 = vadd.f32 %v422, %v757
        %v759 = vpop.f32.mrf.mxu0
        %v760 = vadd.f32 %v422, %v759
        %761 = vmatmul.bf16.gmra.mxu0 %v557
        %v762 = vpop.f32.mrf.mxu0
        %v763 = vadd.f32 %v422, %v762
        %v764 = vpop.f32.mrf.mxu0
        %v765 = vadd.f32 %v422, %v764
        %766 = vmatmul.bf16.gmra.mxu0 %v558
        %v767 = vpop.f32.mrf.mxu0
        %v768 = vadd.f32 %v422, %v767
        %v769 = vpop.f32.mrf.mxu0
        %v770 = vadd.f32 %v422, %v769
        %771 = vmatmul.bf16.gmra.mxu0 %v559
        %v772 = vpop.f32.mrf.mxu0
        %v773 = vadd.f32 %v422, %v772
        %v774 = vpop.f32.mrf.mxu0
        %v775 = vadd.f32 %v422, %v774
        %776 = vmatmul.bf16.gmra.mxu0 %v560
        %v777 = vpop.f32.mrf.mxu0
        %v778 = vadd.f32 %v422, %v777
        %v779 = vpop.f32.mrf.mxu0
        %v780 = vadd.f32 %v422, %v779
        %781 = vmatmul.bf16.gmra.mxu0 %v561
        %v782 = vpop.f32.mrf.mxu0
        %v783 = vadd.f32 %v422, %v782
        %v784 = vpop.f32.mrf.mxu0
        %785 = vdwg.mxu0
        %v786 = vmax.f32 %v648, 0.0
        %v787 = vmax.f32 %v650, 0.0
        %v788 = vmax.f32 %v653, 0.0
        %v789 = vmax.f32 %v655, 0.0
        %v790 = vmax.f32 %v658, 0.0
        %v791 = vmax.f32 %v660, 0.0
        %v792 = vmax.f32 %v663, 0.0
        %v793 = vmax.f32 %v665, 0.0
        %v794 = vmax.f32 %v668, 0.0
        %v795 = vmax.f32 %v670, 0.0
        %v796 = vmax.f32 %v673, 0.0
        %v797 = vmax.f32 %v675, 0.0
        %v798 = vmax.f32 %v678, 0.0
        %v799 = vmax.f32 %v680, 0.0
        %v800 = vmax.f32 %v683, 0.0
        %v801 = vmax.f32 %v685, 0.0
        %v802 = vmax.f32 %v688, 0.0
        %v803 = vmax.f32 %v690, 0.0
        %v804 = vmax.f32 %v693, 0.0
        %v805 = vmax.f32 %v695, 0.0
        %v806 = vmax.f32 %v698, 0.0
        %v807 = vmax.f32 %v700, 0.0
        %v808 = vmax.f32 %v703, 0.0
        %v809 = vmax.f32 %v705, 0.0
        %v810 = vmax.f32 %v708, 0.0
        %v811 = vmax.f32 %v710, 0.0
        %v812 = vmax.f32 %v713, 0.0
        %v813 = vmax.f32 %v715, 0.0
        %v814 = vmax.f32 %v718, 0.0
        %v815 = vmax.f32 %v720, 0.0
        %v816 = vmax.f32 %v723, 0.0
        %v817 = vmax.f32 %v725, 0.0
        %v818 = vmax.f32 %v728, 0.0
        %v819 = vmax.f32 %v730, 0.0
        %v820 = vmax.f32 %v733, 0.0
        %v821 = vmax.f32 %v735, 0.0
        %v822 = vmax.f32 %v738, 0.0
        %v823 = vmax.f32 %v740, 0.0
        %v824 = vmax.f32 %v743, 0.0
        %v825 = vmax.f32 %v745, 0.0
        %v826 = vmax.f32 %v748, 0.0
        %v827 = vmax.f32 %v750, 0.0
        %v828 = vmax.f32 %v753, 0.0
        %v829 = vmax.f32 %v755, 0.0
        %v830 = vmax.f32 %v758, 0.0
        %v831 = vmax.f32 %v760, 0.0
        %v832 = vmax.f32 %v763, 0.0
        %v833 = vmax.f32 %v765, 0.0
        %v834 = vmax.f32 %v768, 0.0
        %v835 = vmax.f32 %v770, 0.0
        %v836 = vmax.f32 %v773, 0.0
        %v837 = vmax.f32 %v775, 0.0
        %v838 = vmax.f32 %v778, 0.0
        %v839 = vmax.f32 %v780, 0.0
        %v840 = vmax.f32 %v783, 0.0
        %v841 = vlaneseq
        %v842 = vshrl.u32 %v841, 7
        %v843 = vadd.s32 %v842, 8
        %v844 = vadd.s32 %v842, 16
        %v845 = vadd.s32 %v842, 24
        %v846 = vadd.s32 %v842, 32
        %v847 = vadd.s32 %v842, 40
        %v848 = vadd.s32 %v842, 48
        %v849 = vadd.s32 %v842, 56
        %v850 = vadd.s32 %v842, 64
        %v851 = vadd.s32 %v842, 72
        %v852 = vadd.s32 %v842, 80
        %v853 = vadd.s32 %v842, 88
        %v854 = vadd.s32 %v842, 96
        %v855 = vadd.s32 %v842, 104
        %v856 = vadd.s32 %v842, 112
        %v857 = vadd.s32 %v842, 120
        %v858 = vadd.s32 %v842, 128
        %v859 = vadd.s32 %v842, 136
        %v860 = vadd.s32 %v842, 144
        %v861 = vadd.s32 %v842, 152
        %v862 = vadd.s32 %v842, 160
        %v863 = vadd.s32 %v842, 168
        %v864 = vadd.s32 %v842, 176
        %v865 = vadd.s32 %v842, 184
        %v866 = vadd.s32 %v842, 192
        %v867 = vadd.s32 %v842, 200
        %v868 = vadd.s32 %v842, 208
        %v869 = vadd.s32 %v842, 216
        %v870 = vadd.s32 %v842, 224
        %v871 = vadd.s32 %v842, 232
        %v872 = vadd.s32 %v842, 240
        %v873 = vadd.s32 %v842, 248
        %v874 = vadd.s32 %v842, 256
        %v875 = vadd.s32 %v842, 264
        %v876 = vadd.s32 %v842, 272
        %v877 = vadd.s32 %v842, 280
        %v878 = vadd.s32 %v842, 288
        %v879 = vadd.s32 %v842, 296
        %v880 = vadd.s32 %v842, 304
        %v881 = vadd.s32 %v842, 312
        %v882 = vadd.s32 %v842, 320
        %v883 = vadd.s32 %v842, 328
        %v884 = vadd.s32 %v842, 336
        %v885 = vadd.s32 %v842, 344
        %v886 = vadd.s32 %v842, 352
        %v887 = vadd.s32 %v842, 360
        %v888 = vadd.s32 %v842, 368
        %v889 = vadd.s32 %v842, 376
        %v890 = vadd.s32 %v842, 384
        %v891 = vadd.s32 %v842, 392
        %v892 = vadd.s32 %v842, 400
        %v893 = vadd.s32 %v842, 408
        %v894 = vadd.s32 %v842, 416
        %v895 = vadd.s32 %v842, 424
        %v896 = vadd.s32 %v842, 432
        %v897 = vcvt.s32.f32 %v842
        %v898 = vcvt.s32.f32 %v843
        %v899 = vcvt.s32.f32 %v844
        %v900 = vcvt.s32.f32 %v845
        %v901 = vcvt.s32.f32 %v846
        %v902 = vcvt.s32.f32 %v847
        %v903 = vcvt.s32.f32 %v848
        %v904 = vcvt.s32.f32 %v849
        %v905 = vcvt.s32.f32 %v850
        %v906 = vcvt.s32.f32 %v851
        %v907 = vcvt.s32.f32 %v852
        %v908 = vcvt.s32.f32 %v853
        %v909 = vcvt.s32.f32 %v854
        %v910 = vcvt.s32.f32 %v855
        %v911 = vcvt.s32.f32 %v856
        %v912 = vcvt.s32.f32 %v857
        %v913 = vcvt.s32.f32 %v858
        %v914 = vcvt.s32.f32 %v859
        %v915 = vcvt.s32.f32 %v860
        %v916 = vcvt.s32.f32 %v861
        %v917 = vcvt.s32.f32 %v862
        %v918 = vcvt.s32.f32 %v863
        %v919 = vcvt.s32.f32 %v864
        %v920 = vcvt.s32.f32 %v865
        %v921 = vcvt.s32.f32 %v866
        %v922 = vcvt.s32.f32 %v867
        %v923 = vcvt.s32.f32 %v868
        %v924 = vcvt.s32.f32 %v869
        %v925 = vcvt.s32.f32 %v870
        %v926 = vcvt.s32.f32 %v871
        %v927 = vcvt.s32.f32 %v872
        %v928 = vcvt.s32.f32 %v873
        %v929 = vcvt.s32.f32 %v874
        %v930 = vcvt.s32.f32 %v875
        %v931 = vcvt.s32.f32 %v876
        %v932 = vcvt.s32.f32 %v877
        %v933 = vcvt.s32.f32 %v878
        %v934 = vcvt.s32.f32 %v879
        %v935 = vcvt.s32.f32 %v880
        %v936 = vcvt.s32.f32 %v881
        %v937 = vcvt.s32.f32 %v882
        %v938 = vcvt.s32.f32 %v883
        %v939 = vcvt.s32.f32 %v884
        %v940 = vcvt.s32.f32 %v885
        %v941 = vcvt.s32.f32 %v886
        %v942 = vcvt.s32.f32 %v887
        %v943 = vcvt.s32.f32 %v888
        %v944 = vcvt.s32.f32 %v889
        %v945 = vcvt.s32.f32 %v890
        %v946 = vcvt.s32.f32 %v891
        %v947 = vcvt.s32.f32 %v892
        %v948 = vcvt.s32.f32 %v893
        %v949 = vcvt.s32.f32 %v894
        %v950 = vcvt.s32.f32 %v895
        %v951 = vcvt.s32.f32 %v896
        %v952 = vadd.f32 %v897, 0.5
        %v953 = vadd.f32 %v898, 0.5
        %v954 = vadd.f32 %v899, 0.5
        %v955 = vadd.f32 %v900, 0.5
        %v956 = vadd.f32 %v901, 0.5
        %v957 = vadd.f32 %v902, 0.5
        %v958 = vadd.f32 %v903, 0.5
        %v959 = vadd.f32 %v904, 0.5
        %v960 = vadd.f32 %v905, 0.5
        %v961 = vadd.f32 %v906, 0.5
        %v962 = vadd.f32 %v907, 0.5
        %v963 = vadd.f32 %v908, 0.5
        %v964 = vadd.f32 %v909, 0.5
        %v965 = vadd.f32 %v910, 0.5
        %v966 = vadd.f32 %v911, 0.5
        %v967 = vadd.f32 %v912, 0.5
        %v968 = vadd.f32 %v913, 0.5
        %v969 = vadd.f32 %v914, 0.5
        %v970 = vadd.f32 %v915, 0.5
        %v971 = vadd.f32 %v916, 0.5
        %v972 = vadd.f32 %v917, 0.5
        %v973 = vadd.f32 %v918, 0.5
        %v974 = vadd.f32 %v919, 0.5
        %v975 = vadd.f32 %v920, 0.5
        %v976 = vadd.f32 %v921, 0.5
        %v977 = vadd.f32 %v922, 0.5
        %v978 = vadd.f32 %v923, 0.5
        %v979 = vadd.f32 %v924, 0.5
        %v980 = vadd.f32 %v925, 0.5
        %v981 = vadd.f32 %v926, 0.5
        %v982 = vadd.f32 %v927, 0.5
        %v983 = vadd.f32 %v928, 0.5
        %v984 = vadd.f32 %v929, 0.5
        %v985 = vadd.f32 %v930, 0.5
        %v986 = vadd.f32 %v931, 0.5
        %v987 = vadd.f32 %v932, 0.5
        %v988 = vadd.f32 %v933, 0.5
        %v989 = vadd.f32 %v934, 0.5
        %v990 = vadd.f32 %v935, 0.5
        %v991 = vadd.f32 %v936, 0.5
        %v992 = vadd.f32 %v937, 0.5
        %v993 = vadd.f32 %v938, 0.5
        %v994 = vadd.f32 %v939, 0.5
        %v995 = vadd.f32 %v940, 0.5
        %v996 = vadd.f32 %v941, 0.5
        %v997 = vadd.f32 %v942, 0.5
        %v998 = vadd.f32 %v943, 0.5
        %v999 = vadd.f32 %v944, 0.5
        %v1000 = vadd.f32 %v945, 0.5
        %v1001 = vadd.f32 %v946, 0.5
        %v1002 = vadd.f32 %v947, 0.5
        %v1003 = vadd.f32 %v948, 0.5
        %v1004 = vadd.f32 %v949, 0.5
        %v1005 = vadd.f32 %v950, 0.5
        %v1006 = vadd.f32 %v951, 0.5
        %v1007 = vmul.f32 %v952, 0.05
        %v1008 = vmul.f32 %v953, 0.05
        %v1009 = vmul.f32 %v954, 0.05
        %v1010 = vmul.f32 %v955, 0.05
        %v1011 = vmul.f32 %v956, 0.05
        %v1012 = vmul.f32 %v957, 0.05
        %v1013 = vmul.f32 %v958, 0.05
        %v1014 = vmul.f32 %v959, 0.05
        %v1015 = vmul.f32 %v960, 0.05
        %v1016 = vmul.f32 %v961, 0.05
        %v1017 = vmul.f32 %v962, 0.05
        %v1018 = vmul.f32 %v963, 0.05
        %v1019 = vmul.f32 %v964, 0.05
        %v1020 = vmul.f32 %v965, 0.05
        %v1021 = vmul.f32 %v966, 0.05
        %v1022 = vmul.f32 %v967, 0.05
        %v1023 = vmul.f32 %v968, 0.05
        %v1024 = vmul.f32 %v969, 0.05
        %v1025 = vmul.f32 %v970, 0.05
        %v1026 = vmul.f32 %v971, 0.05
        %v1027 = vmul.f32 %v972, 0.05
        %v1028 = vmul.f32 %v973, 0.05
        %v1029 = vmul.f32 %v974, 0.05
        %v1030 = vmul.f32 %v975, 0.05
        %v1031 = vmul.f32 %v976, 0.05
        %v1032 = vmul.f32 %v977, 0.05
        %v1033 = vmul.f32 %v978, 0.05
        %v1034 = vmul.f32 %v979, 0.05
        %v1035 = vmul.f32 %v980, 0.05
        %v1036 = vmul.f32 %v981, 0.05
        %v1037 = vmul.f32 %v982, 0.05
        %v1038 = vmul.f32 %v983, 0.05
        %v1039 = vmul.f32 %v984, 0.05
        %v1040 = vmul.f32 %v985, 0.05
        %v1041 = vmul.f32 %v986, 0.05
        %v1042 = vmul.f32 %v987, 0.05
        %v1043 = vmul.f32 %v988, 0.05
        %v1044 = vmul.f32 %v989, 0.05
        %v1045 = vmul.f32 %v990, 0.05
        %v1046 = vmul.f32 %v991, 0.05
        %v1047 = vmul.f32 %v992, 0.05
        %v1048 = vmul.f32 %v993, 0.05
        %v1049 = vmul.f32 %v994, 0.05
        %v1050 = vmul.f32 %v995, 0.05
        %v1051 = vmul.f32 %v996, 0.05
        %v1052 = vmul.f32 %v997, 0.05
        %v1053 = vmul.f32 %v998, 0.05
        %v1054 = vmul.f32 %v999, 0.05
        %v1055 = vmul.f32 %v1000, 0.05
        %v1056 = vmul.f32 %v1001, 0.05
        %v1057 = vmul.f32 %v1002, 0.05
        %v1058 = vmul.f32 %v1003, 0.05
        %v1059 = vmul.f32 %v1004, 0.05
        %v1060 = vmul.f32 %v1005, 0.05
        %v1061 = vmul.f32 %v1006, 0.05
        %v1062 = vfloor.f32 %v1007
        %v1063 = vfloor.f32 %v1008
        %v1064 = vfloor.f32 %v1009
        %v1065 = vfloor.f32 %v1010
        %v1066 = vfloor.f32 %v1011
        %v1067 = vfloor.f32 %v1012
        %v1068 = vfloor.f32 %v1013
        %v1069 = vfloor.f32 %v1014
        %v1070 = vfloor.f32 %v1015
        %v1071 = vfloor.f32 %v1016
        %v1072 = vfloor.f32 %v1017
        %v1073 = vfloor.f32 %v1018
        %v1074 = vfloor.f32 %v1019
        %v1075 = vfloor.f32 %v1020
        %v1076 = vfloor.f32 %v1021
        %v1077 = vfloor.f32 %v1022
        %v1078 = vfloor.f32 %v1023
        %v1079 = vfloor.f32 %v1024
        %v1080 = vfloor.f32 %v1025
        %v1081 = vfloor.f32 %v1026
        %v1082 = vfloor.f32 %v1027
        %v1083 = vfloor.f32 %v1028
        %v1084 = vfloor.f32 %v1029
        %v1085 = vfloor.f32 %v1030
        %v1086 = vfloor.f32 %v1031
        %v1087 = vfloor.f32 %v1032
        %v1088 = vfloor.f32 %v1033
        %v1089 = vfloor.f32 %v1034
        %v1090 = vfloor.f32 %v1035
        %v1091 = vfloor.f32 %v1036
        %v1092 = vfloor.f32 %v1037
        %v1093 = vfloor.f32 %v1038
        %v1094 = vfloor.f32 %v1039
        %v1095 = vfloor.f32 %v1040
        %v1096 = vfloor.f32 %v1041
        %v1097 = vfloor.f32 %v1042
        %v1098 = vfloor.f32 %v1043
        %v1099 = vfloor.f32 %v1044
        %v1100 = vfloor.f32 %v1045
        %v1101 = vfloor.f32 %v1046
        %v1102 = vfloor.f32 %v1047
        %v1103 = vfloor.f32 %v1048
        %v1104 = vfloor.f32 %v1049
        %v1105 = vfloor.f32 %v1050
        %v1106 = vfloor.f32 %v1051
        %v1107 = vfloor.f32 %v1052
        %v1108 = vfloor.f32 %v1053
        %v1109 = vfloor.f32 %v1054
        %v1110 = vfloor.f32 %v1055
        %v1111 = vfloor.f32 %v1056
        %v1112 = vfloor.f32 %v1057
        %v1113 = vfloor.f32 %v1058
        %v1114 = vfloor.f32 %v1059
        %v1115 = vfloor.f32 %v1060
        %v1116 = vfloor.f32 %v1061
        %v1117 = vmul.f32 %v1062, 20.0
        %v1118 = vmul.f32 %v1063, 20.0
        %v1119 = vmul.f32 %v1064, 20.0
        %v1120 = vmul.f32 %v1065, 20.0
        %v1121 = vmul.f32 %v1066, 20.0
        %v1122 = vmul.f32 %v1067, 20.0
        %v1123 = vmul.f32 %v1068, 20.0
        %v1124 = vmul.f32 %v1069, 20.0
        %v1125 = vmul.f32 %v1070, 20.0
        %v1126 = vmul.f32 %v1071, 20.0
        %v1127 = vmul.f32 %v1072, 20.0
        %v1128 = vmul.f32 %v1073, 20.0
        %v1129 = vmul.f32 %v1074, 20.0
        %v1130 = vmul.f32 %v1075, 20.0
        %v1131 = vmul.f32 %v1076, 20.0
        %v1132 = vmul.f32 %v1077, 20.0
        %v1133 = vmul.f32 %v1078, 20.0
        %v1134 = vmul.f32 %v1079, 20.0
        %v1135 = vmul.f32 %v1080, 20.0
        %v1136 = vmul.f32 %v1081, 20.0
        %v1137 = vmul.f32 %v1082, 20.0
        %v1138 = vmul.f32 %v1083, 20.0
        %v1139 = vmul.f32 %v1084, 20.0
        %v1140 = vmul.f32 %v1085, 20.0
        %v1141 = vmul.f32 %v1086, 20.0
        %v1142 = vmul.f32 %v1087, 20.0
        %v1143 = vmul.f32 %v1088, 20.0
        %v1144 = vmul.f32 %v1089, 20.0
        %v1145 = vmul.f32 %v1090, 20.0
        %v1146 = vmul.f32 %v1091, 20.0
        %v1147 = vmul.f32 %v1092, 20.0
        %v1148 = vmul.f32 %v1093, 20.0
        %v1149 = vmul.f32 %v1094, 20.0
        %v1150 = vmul.f32 %v1095, 20.0
        %v1151 = vmul.f32 %v1096, 20.0
        %v1152 = vmul.f32 %v1097, 20.0
        %v1153 = vmul.f32 %v1098, 20.0
        %v1154 = vmul.f32 %v1099, 20.0
        %v1155 = vmul.f32 %v1100, 20.0
        %v1156 = vmul.f32 %v1101, 20.0
        %v1157 = vmul.f32 %v1102, 20.0
        %v1158 = vmul.f32 %v1103, 20.0
        %v1159 = vmul.f32 %v1104, 20.0
        %v1160 = vmul.f32 %v1105, 20.0
        %v1161 = vmul.f32 %v1106, 20.0
        %v1162 = vmul.f32 %v1107, 20.0
        %v1163 = vmul.f32 %v1108, 20.0
        %v1164 = vmul.f32 %v1109, 20.0
        %v1165 = vmul.f32 %v1110, 20.0
        %v1166 = vmul.f32 %v1111, 20.0
        %v1167 = vmul.f32 %v1112, 20.0
        %v1168 = vmul.f32 %v1113, 20.0
        %v1169 = vmul.f32 %v1114, 20.0
        %v1170 = vmul.f32 %v1115, 20.0
        %v1171 = vmul.f32 %v1116, 20.0
        %v1172 = vsub.f32 %v897, %v1117
        %v1173 = vsub.f32 %v898, %v1118
        %v1174 = vsub.f32 %v899, %v1119
        %v1175 = vsub.f32 %v900, %v1120
        %v1176 = vsub.f32 %v901, %v1121
        %v1177 = vsub.f32 %v902, %v1122
        %v1178 = vsub.f32 %v903, %v1123
        %v1179 = vsub.f32 %v904, %v1124
        %v1180 = vsub.f32 %v905, %v1125
        %v1181 = vsub.f32 %v906, %v1126
        %v1182 = vsub.f32 %v907, %v1127
        %v1183 = vsub.f32 %v908, %v1128
        %v1184 = vsub.f32 %v909, %v1129
        %v1185 = vsub.f32 %v910, %v1130
        %v1186 = vsub.f32 %v911, %v1131
        %v1187 = vsub.f32 %v912, %v1132
        %v1188 = vsub.f32 %v913, %v1133
        %v1189 = vsub.f32 %v914, %v1134
        %v1190 = vsub.f32 %v915, %v1135
        %v1191 = vsub.f32 %v916, %v1136
        %v1192 = vsub.f32 %v917, %v1137
        %v1193 = vsub.f32 %v918, %v1138
        %v1194 = vsub.f32 %v919, %v1139
        %v1195 = vsub.f32 %v920, %v1140
        %v1196 = vsub.f32 %v921, %v1141
        %v1197 = vsub.f32 %v922, %v1142
        %v1198 = vsub.f32 %v923, %v1143
        %v1199 = vsub.f32 %v924, %v1144
        %v1200 = vsub.f32 %v925, %v1145
        %v1201 = vsub.f32 %v926, %v1146
        %v1202 = vsub.f32 %v927, %v1147
        %v1203 = vsub.f32 %v928, %v1148
        %v1204 = vsub.f32 %v929, %v1149
        %v1205 = vsub.f32 %v930, %v1150
        %v1206 = vsub.f32 %v931, %v1151
        %v1207 = vsub.f32 %v932, %v1152
        %v1208 = vsub.f32 %v933, %v1153
        %v1209 = vsub.f32 %v934, %v1154
        %v1210 = vsub.f32 %v935, %v1155
        %v1211 = vsub.f32 %v936, %v1156
        %v1212 = vsub.f32 %v937, %v1157
        %v1213 = vsub.f32 %v938, %v1158
        %v1214 = vsub.f32 %v939, %v1159
        %v1215 = vsub.f32 %v940, %v1160
        %v1216 = vsub.f32 %v941, %v1161
        %v1217 = vsub.f32 %v942, %v1162
        %v1218 = vsub.f32 %v943, %v1163
        %v1219 = vsub.f32 %v944, %v1164
        %v1220 = vsub.f32 %v945, %v1165
        %v1221 = vsub.f32 %v946, %v1166
        %v1222 = vsub.f32 %v947, %v1167
        %v1223 = vsub.f32 %v948, %v1168
        %v1224 = vsub.f32 %v949, %v1169
        %v1225 = vsub.f32 %v950, %v1170
        %v1226 = vsub.f32 %v951, %v1171
        %vm1227 = vcmp.ge.f32.partialorder %v1172, 2.0
        %vm1228 = vcmp.ge.f32.partialorder %v1173, 2.0
        %vm1229 = vcmp.ge.f32.partialorder %v1174, 2.0
        %vm1230 = vcmp.ge.f32.partialorder %v1175, 2.0
        %vm1231 = vcmp.ge.f32.partialorder %v1176, 2.0
        %vm1232 = vcmp.ge.f32.partialorder %v1177, 2.0
        %vm1233 = vcmp.ge.f32.partialorder %v1178, 2.0
        %vm1234 = vcmp.ge.f32.partialorder %v1179, 2.0
        %vm1235 = vcmp.ge.f32.partialorder %v1180, 2.0
        %vm1236 = vcmp.ge.f32.partialorder %v1181, 2.0
        %vm1237 = vcmp.ge.f32.partialorder %v1182, 2.0
        %vm1238 = vcmp.ge.f32.partialorder %v1183, 2.0
        %vm1239 = vcmp.ge.f32.partialorder %v1184, 2.0
        %vm1240 = vcmp.ge.f32.partialorder %v1185, 2.0
        %vm1241 = vcmp.ge.f32.partialorder %v1186, 2.0
        %vm1242 = vcmp.ge.f32.partialorder %v1187, 2.0
        %vm1243 = vcmp.ge.f32.partialorder %v1188, 2.0
        %vm1244 = vcmp.ge.f32.partialorder %v1189, 2.0
        %vm1245 = vcmp.ge.f32.partialorder %v1190, 2.0
        %vm1246 = vcmp.ge.f32.partialorder %v1191, 2.0
        %vm1247 = vcmp.ge.f32.partialorder %v1192, 2.0
        %vm1248 = vcmp.ge.f32.partialorder %v1193, 2.0
        %vm1249 = vcmp.ge.f32.partialorder %v1194, 2.0
        %vm1250 = vcmp.ge.f32.partialorder %v1195, 2.0
        %vm1251 = vcmp.ge.f32.partialorder %v1196, 2.0
        %vm1252 = vcmp.ge.f32.partialorder %v1197, 2.0
        %vm1253 = vcmp.ge.f32.partialorder %v1198, 2.0
        %vm1254 = vcmp.ge.f32.partialorder %v1199, 2.0
        %vm1255 = vcmp.ge.f32.partialorder %v1200, 2.0
        %vm1256 = vcmp.ge.f32.partialorder %v1201, 2.0
        %vm1257 = vcmp.ge.f32.partialorder %v1202, 2.0
        %vm1258 = vcmp.ge.f32.partialorder %v1203, 2.0
        %vm1259 = vcmp.ge.f32.partialorder %v1204, 2.0
        %vm1260 = vcmp.ge.f32.partialorder %v1205, 2.0
        %vm1261 = vcmp.ge.f32.partialorder %v1206, 2.0
        %vm1262 = vcmp.ge.f32.partialorder %v1207, 2.0
        %vm1263 = vcmp.ge.f32.partialorder %v1208, 2.0
        %vm1264 = vcmp.ge.f32.partialorder %v1209, 2.0
        %vm1265 = vcmp.ge.f32.partialorder %v1210, 2.0
        %vm1266 = vcmp.ge.f32.partialorder %v1211, 2.0
        %vm1267 = vcmp.ge.f32.partialorder %v1212, 2.0
        %vm1268 = vcmp.ge.f32.partialorder %v1213, 2.0
        %vm1269 = vcmp.ge.f32.partialorder %v1214, 2.0
        %vm1270 = vcmp.ge.f32.partialorder %v1215, 2.0
        %vm1271 = vcmp.ge.f32.partialorder %v1216, 2.0
        %vm1272 = vcmp.ge.f32.partialorder %v1217, 2.0
        %vm1273 = vcmp.ge.f32.partialorder %v1218, 2.0
        %vm1274 = vcmp.ge.f32.partialorder %v1219, 2.0
        %vm1275 = vcmp.ge.f32.partialorder %v1220, 2.0
        %vm1276 = vcmp.ge.f32.partialorder %v1221, 2.0
        %vm1277 = vcmp.ge.f32.partialorder %v1222, 2.0
        %vm1278 = vcmp.ge.f32.partialorder %v1223, 2.0
        %vm1279 = vcmp.ge.f32.partialorder %v1224, 2.0
        %vm1280 = vcmp.ge.f32.partialorder %v1225, 2.0
        %vm1281 = vcmp.ge.f32.partialorder %v1226, 2.0
        %vm1282 = vcmp.lt.f32.partialorder %v1172, 18.0
        %vm1283 = vcmp.lt.f32.partialorder %v1173, 18.0
        %vm1284 = vcmp.lt.f32.partialorder %v1174, 18.0
        %vm1285 = vcmp.lt.f32.partialorder %v1175, 18.0
        %vm1286 = vcmp.lt.f32.partialorder %v1176, 18.0
        %vm1287 = vcmp.lt.f32.partialorder %v1177, 18.0
        %vm1288 = vcmp.lt.f32.partialorder %v1178, 18.0
        %vm1289 = vcmp.lt.f32.partialorder %v1179, 18.0
        %vm1290 = vcmp.lt.f32.partialorder %v1180, 18.0
        %vm1291 = vcmp.lt.f32.partialorder %v1181, 18.0
        %vm1292 = vcmp.lt.f32.partialorder %v1182, 18.0
        %vm1293 = vcmp.lt.f32.partialorder %v1183, 18.0
        %vm1294 = vcmp.lt.f32.partialorder %v1184, 18.0
        %vm1295 = vcmp.lt.f32.partialorder %v1185, 18.0
        %vm1296 = vcmp.lt.f32.partialorder %v1186, 18.0
        %vm1297 = vcmp.lt.f32.partialorder %v1187, 18.0
        %vm1298 = vcmp.lt.f32.partialorder %v1188, 18.0
        %vm1299 = vcmp.lt.f32.partialorder %v1189, 18.0
        %vm1300 = vcmp.lt.f32.partialorder %v1190, 18.0
        %vm1301 = vcmp.lt.f32.partialorder %v1191, 18.0
        %vm1302 = vcmp.lt.f32.partialorder %v1192, 18.0
        %vm1303 = vcmp.lt.f32.partialorder %v1193, 18.0
        %vm1304 = vcmp.lt.f32.partialorder %v1194, 18.0
        %vm1305 = vcmp.lt.f32.partialorder %v1195, 18.0
        %vm1306 = vcmp.lt.f32.partialorder %v1196, 18.0
        %vm1307 = vcmp.lt.f32.partialorder %v1197, 18.0
        %vm1308 = vcmp.lt.f32.partialorder %v1198, 18.0
        %vm1309 = vcmp.lt.f32.partialorder %v1199, 18.0
        %vm1310 = vcmp.lt.f32.partialorder %v1200, 18.0
        %vm1311 = vcmp.lt.f32.partialorder %v1201, 18.0
        %vm1312 = vcmp.lt.f32.partialorder %v1202, 18.0
        %vm1313 = vcmp.lt.f32.partialorder %v1203, 18.0
        %vm1314 = vcmp.lt.f32.partialorder %v1204, 18.0
        %vm1315 = vcmp.lt.f32.partialorder %v1205, 18.0
        %vm1316 = vcmp.lt.f32.partialorder %v1206, 18.0
        %vm1317 = vcmp.lt.f32.partialorder %v1207, 18.0
        %vm1318 = vcmp.lt.f32.partialorder %v1208, 18.0
        %vm1319 = vcmp.lt.f32.partialorder %v1209, 18.0
        %vm1320 = vcmp.lt.f32.partialorder %v1210, 18.0
        %vm1321 = vcmp.lt.f32.partialorder %v1211, 18.0
        %vm1322 = vcmp.lt.f32.partialorder %v1212, 18.0
        %vm1323 = vcmp.lt.f32.partialorder %v1213, 18.0
        %vm1324 = vcmp.lt.f32.partialorder %v1214, 18.0
        %vm1325 = vcmp.lt.f32.partialorder %v1215, 18.0
        %vm1326 = vcmp.lt.f32.partialorder %v1216, 18.0
        %vm1327 = vcmp.lt.f32.partialorder %v1217, 18.0
        %vm1328 = vcmp.lt.f32.partialorder %v1218, 18.0
        %vm1329 = vcmp.lt.f32.partialorder %v1219, 18.0
        %vm1330 = vcmp.lt.f32.partialorder %v1220, 18.0
        %vm1331 = vcmp.lt.f32.partialorder %v1221, 18.0
        %vm1332 = vcmp.lt.f32.partialorder %v1222, 18.0
        %vm1333 = vcmp.lt.f32.partialorder %v1223, 18.0
        %vm1334 = vcmp.lt.f32.partialorder %v1224, 18.0
        %vm1335 = vcmp.lt.f32.partialorder %v1225, 18.0
        %vm1336 = vcmp.lt.f32.partialorder %v1226, 18.0
        %vm1337 = vmand %vm1227, %vm1282
        %vm1338 = vmand %vm1228, %vm1283
        %vm1339 = vmand %vm1229, %vm1284
        %vm1340 = vmand %vm1230, %vm1285
        %vm1341 = vmand %vm1231, %vm1286
        %vm1342 = vmand %vm1232, %vm1287
        %vm1343 = vmand %vm1233, %vm1288
        %vm1344 = vmand %vm1234, %vm1289
        %vm1345 = vmand %vm1235, %vm1290
        %vm1346 = vmand %vm1236, %vm1291
        %vm1347 = vmand %vm1237, %vm1292
        %vm1348 = vmand %vm1238, %vm1293
        %vm1349 = vmand %vm1239, %vm1294
        %vm1350 = vmand %vm1240, %vm1295
        %vm1351 = vmand %vm1241, %vm1296
        %vm1352 = vmand %vm1242, %vm1297
        %vm1353 = vmand %vm1243, %vm1298
        %vm1354 = vmand %vm1244, %vm1299
        %vm1355 = vmand %vm1245, %vm1300
        %vm1356 = vmand %vm1246, %vm1301
        %vm1357 = vmand %vm1247, %vm1302
        %vm1358 = vmand %vm1248, %vm1303
        %vm1359 = vmand %vm1249, %vm1304
        %vm1360 = vmand %vm1250, %vm1305
        %vm1361 = vmand %vm1251, %vm1306
        %vm1362 = vmand %vm1252, %vm1307
        %vm1363 = vmand %vm1253, %vm1308
        %vm1364 = vmand %vm1254, %vm1309
        %vm1365 = vmand %vm1255, %vm1310
        %vm1366 = vmand %vm1256, %vm1311
        %vm1367 = vmand %vm1257, %vm1312
        %vm1368 = vmand %vm1258, %vm1313
        %vm1369 = vmand %vm1259, %vm1314
        %vm1370 = vmand %vm1260, %vm1315
        %vm1371 = vmand %vm1261, %vm1316
        %vm1372 = vmand %vm1262, %vm1317
        %vm1373 = vmand %vm1263, %vm1318
        %vm1374 = vmand %vm1264, %vm1319
        %vm1375 = vmand %vm1265, %vm1320
        %vm1376 = vmand %vm1266, %vm1321
        %vm1377 = vmand %vm1267, %vm1322
        %vm1378 = vmand %vm1268, %vm1323
        %vm1379 = vmand %vm1269, %vm1324
        %vm1380 = vmand %vm1270, %vm1325
        %vm1381 = vmand %vm1271, %vm1326
        %vm1382 = vmand %vm1272, %vm1327
        %vm1383 = vmand %vm1273, %vm1328
        %vm1384 = vmand %vm1274, %vm1329
        %vm1385 = vmand %vm1275, %vm1330
        %vm1386 = vmand %vm1276, %vm1331
        %vm1387 = vmand %vm1277, %vm1332
        %vm1388 = vmand %vm1278, %vm1333
        %vm1389 = vmand %vm1279, %vm1334
        %vm1390 = vmand %vm1280, %vm1335
        %vm1391 = vmand %vm1281, %vm1336
        %vm1392 = vcmp.ge.f32.partialorder %v897, 40.0
        %vm1393 = vcmp.ge.f32.partialorder %v898, 40.0
        %vm1394 = vcmp.ge.f32.partialorder %v899, 40.0
        %vm1395 = vcmp.ge.f32.partialorder %v900, 40.0
        %vm1396 = vcmp.ge.f32.partialorder %v901, 40.0
        %vm1397 = vcmp.ge.f32.partialorder %v902, 40.0
        %vm1398 = vcmp.ge.f32.partialorder %v903, 40.0
        %vm1399 = vcmp.ge.f32.partialorder %v904, 40.0
        %vm1400 = vcmp.ge.f32.partialorder %v905, 40.0
        %vm1401 = vcmp.ge.f32.partialorder %v906, 40.0
        %vm1402 = vcmp.ge.f32.partialorder %v907, 40.0
        %vm1403 = vcmp.ge.f32.partialorder %v908, 40.0
        %vm1404 = vcmp.ge.f32.partialorder %v909, 40.0
        %vm1405 = vcmp.ge.f32.partialorder %v910, 40.0
        %vm1406 = vcmp.ge.f32.partialorder %v911, 40.0
        %vm1407 = vcmp.ge.f32.partialorder %v912, 40.0
        %vm1408 = vcmp.ge.f32.partialorder %v913, 40.0
        %vm1409 = vcmp.ge.f32.partialorder %v914, 40.0
        %vm1410 = vcmp.ge.f32.partialorder %v915, 40.0
        %vm1411 = vcmp.ge.f32.partialorder %v916, 40.0
        %vm1412 = vcmp.ge.f32.partialorder %v917, 40.0
        %vm1413 = vcmp.ge.f32.partialorder %v918, 40.0
        %vm1414 = vcmp.ge.f32.partialorder %v919, 40.0
        %vm1415 = vcmp.ge.f32.partialorder %v920, 40.0
        %vm1416 = vcmp.ge.f32.partialorder %v921, 40.0
        %vm1417 = vcmp.ge.f32.partialorder %v922, 40.0
        %vm1418 = vcmp.ge.f32.partialorder %v923, 40.0
        %vm1419 = vcmp.ge.f32.partialorder %v924, 40.0
        %vm1420 = vcmp.ge.f32.partialorder %v925, 40.0
        %vm1421 = vcmp.ge.f32.partialorder %v926, 40.0
        %vm1422 = vcmp.ge.f32.partialorder %v927, 40.0
        %vm1423 = vcmp.ge.f32.partialorder %v928, 40.0
        %vm1424 = vcmp.ge.f32.partialorder %v929, 40.0
        %vm1425 = vcmp.ge.f32.partialorder %v930, 40.0
        %vm1426 = vcmp.ge.f32.partialorder %v931, 40.0
        %vm1427 = vcmp.ge.f32.partialorder %v932, 40.0
        %vm1428 = vcmp.ge.f32.partialorder %v933, 40.0
        %vm1429 = vcmp.ge.f32.partialorder %v934, 40.0
        %vm1430 = vcmp.ge.f32.partialorder %v935, 40.0
        %vm1431 = vcmp.ge.f32.partialorder %v936, 40.0
        %vm1432 = vcmp.ge.f32.partialorder %v937, 40.0
        %vm1433 = vcmp.ge.f32.partialorder %v938, 40.0
        %vm1434 = vcmp.ge.f32.partialorder %v939, 40.0
        %vm1435 = vcmp.ge.f32.partialorder %v940, 40.0
        %vm1436 = vcmp.ge.f32.partialorder %v941, 40.0
        %vm1437 = vcmp.ge.f32.partialorder %v942, 40.0
        %vm1438 = vcmp.ge.f32.partialorder %v943, 40.0
        %vm1439 = vcmp.ge.f32.partialorder %v944, 40.0
        %vm1440 = vcmp.ge.f32.partialorder %v945, 40.0
        %vm1441 = vcmp.ge.f32.partialorder %v946, 40.0
        %vm1442 = vcmp.ge.f32.partialorder %v947, 40.0
        %vm1443 = vcmp.ge.f32.partialorder %v948, 40.0
        %vm1444 = vcmp.ge.f32.partialorder %v949, 40.0
        %vm1445 = vcmp.ge.f32.partialorder %v950, 40.0
        %vm1446 = vcmp.ge.f32.partialorder %v951, 40.0
        %vm1447 = vmand %vm1337, %vm1392
        %vm1448 = vmand %vm1338, %vm1393
        %vm1449 = vmand %vm1339, %vm1394
        %vm1450 = vmand %vm1340, %vm1395
        %vm1451 = vmand %vm1341, %vm1396
        %vm1452 = vmand %vm1342, %vm1397
        %vm1453 = vmand %vm1343, %vm1398
        %vm1454 = vmand %vm1344, %vm1399
        %vm1455 = vmand %vm1345, %vm1400
        %vm1456 = vmand %vm1346, %vm1401
        %vm1457 = vmand %vm1347, %vm1402
        %vm1458 = vmand %vm1348, %vm1403
        %vm1459 = vmand %vm1349, %vm1404
        %vm1460 = vmand %vm1350, %vm1405
        %vm1461 = vmand %vm1351, %vm1406
        %vm1462 = vmand %vm1352, %vm1407
        %vm1463 = vmand %vm1353, %vm1408
        %vm1464 = vmand %vm1354, %vm1409
        %vm1465 = vmand %vm1355, %vm1410
        %vm1466 = vmand %vm1356, %vm1411
        %vm1467 = vmand %vm1357, %vm1412
        %vm1468 = vmand %vm1358, %vm1413
        %vm1469 = vmand %vm1359, %vm1414
        %vm1470 = vmand %vm1360, %vm1415
        %vm1471 = vmand %vm1361, %vm1416
        %vm1472 = vmand %vm1362, %vm1417
        %vm1473 = vmand %vm1363, %vm1418
        %vm1474 = vmand %vm1364, %vm1419
        %vm1475 = vmand %vm1365, %vm1420
        %vm1476 = vmand %vm1366, %vm1421
        %vm1477 = vmand %vm1367, %vm1422
        %vm1478 = vmand %vm1368, %vm1423
        %vm1479 = vmand %vm1369, %vm1424
        %vm1480 = vmand %vm1370, %vm1425
        %vm1481 = vmand %vm1371, %vm1426
        %vm1482 = vmand %vm1372, %vm1427
        %vm1483 = vmand %vm1373, %vm1428
        %vm1484 = vmand %vm1374, %vm1429
        %vm1485 = vmand %vm1375, %vm1430
        %vm1486 = vmand %vm1376, %vm1431
        %vm1487 = vmand %vm1377, %vm1432
        %vm1488 = vmand %vm1378, %vm1433
        %vm1489 = vmand %vm1379, %vm1434
        %vm1490 = vmand %vm1380, %vm1435
        %vm1491 = vmand %vm1381, %vm1436
        %vm1492 = vmand %vm1382, %vm1437
        %vm1493 = vmand %vm1383, %vm1438
        %vm1494 = vmand %vm1384, %vm1439
        %vm1495 = vmand %vm1385, %vm1440
        %vm1496 = vmand %vm1386, %vm1441
        %vm1497 = vmand %vm1387, %vm1442
        %vm1498 = vmand %vm1388, %vm1443
        %vm1499 = vmand %vm1389, %vm1444
        %vm1500 = vmand %vm1390, %vm1445
        %vm1501 = vmand %vm1391, %vm1446
        %vm1502 = vcmp.lt.f32.partialorder %v897, 360.0
        %vm1503 = vcmp.lt.f32.partialorder %v898, 360.0
        %vm1504 = vcmp.lt.f32.partialorder %v899, 360.0
        %vm1505 = vcmp.lt.f32.partialorder %v900, 360.0
        %vm1506 = vcmp.lt.f32.partialorder %v901, 360.0
        %vm1507 = vcmp.lt.f32.partialorder %v902, 360.0
        %vm1508 = vcmp.lt.f32.partialorder %v903, 360.0
        %vm1509 = vcmp.lt.f32.partialorder %v904, 360.0
        %vm1510 = vcmp.lt.f32.partialorder %v905, 360.0
        %vm1511 = vcmp.lt.f32.partialorder %v906, 360.0
        %vm1512 = vcmp.lt.f32.partialorder %v907, 360.0
        %vm1513 = vcmp.lt.f32.partialorder %v908, 360.0
        %vm1514 = vcmp.lt.f32.partialorder %v909, 360.0
        %vm1515 = vcmp.lt.f32.partialorder %v910, 360.0
        %vm1516 = vcmp.lt.f32.partialorder %v911, 360.0
        %vm1517 = vcmp.lt.f32.partialorder %v912, 360.0
        %vm1518 = vcmp.lt.f32.partialorder %v913, 360.0
        %vm1519 = vcmp.lt.f32.partialorder %v914, 360.0
        %vm1520 = vcmp.lt.f32.partialorder %v915, 360.0
        %vm1521 = vcmp.lt.f32.partialorder %v916, 360.0
        %vm1522 = vcmp.lt.f32.partialorder %v917, 360.0
        %vm1523 = vcmp.lt.f32.partialorder %v918, 360.0
        %vm1524 = vcmp.lt.f32.partialorder %v919, 360.0
        %vm1525 = vcmp.lt.f32.partialorder %v920, 360.0
        %vm1526 = vcmp.lt.f32.partialorder %v921, 360.0
        %vm1527 = vcmp.lt.f32.partialorder %v922, 360.0
        %vm1528 = vcmp.lt.f32.partialorder %v923, 360.0
        %vm1529 = vcmp.lt.f32.partialorder %v924, 360.0
        %vm1530 = vcmp.lt.f32.partialorder %v925, 360.0
        %vm1531 = vcmp.lt.f32.partialorder %v926, 360.0
        %vm1532 = vcmp.lt.f32.partialorder %v927, 360.0
        %vm1533 = vcmp.lt.f32.partialorder %v928, 360.0
        %vm1534 = vcmp.lt.f32.partialorder %v929, 360.0
        %vm1535 = vcmp.lt.f32.partialorder %v930, 360.0
        %vm1536 = vcmp.lt.f32.partialorder %v931, 360.0
        %vm1537 = vcmp.lt.f32.partialorder %v932, 360.0
        %vm1538 = vcmp.lt.f32.partialorder %v933, 360.0
        %vm1539 = vcmp.lt.f32.partialorder %v934, 360.0
        %vm1540 = vcmp.lt.f32.partialorder %v935, 360.0
        %vm1541 = vcmp.lt.f32.partialorder %v936, 360.0
        %vm1542 = vcmp.lt.f32.partialorder %v937, 360.0
        %vm1543 = vcmp.lt.f32.partialorder %v938, 360.0
        %vm1544 = vcmp.lt.f32.partialorder %v939, 360.0
        %vm1545 = vcmp.lt.f32.partialorder %v940, 360.0
        %vm1546 = vcmp.lt.f32.partialorder %v941, 360.0
        %vm1547 = vcmp.lt.f32.partialorder %v942, 360.0
        %vm1548 = vcmp.lt.f32.partialorder %v943, 360.0
        %vm1549 = vcmp.lt.f32.partialorder %v944, 360.0
        %vm1550 = vcmp.lt.f32.partialorder %v945, 360.0
        %vm1551 = vcmp.lt.f32.partialorder %v946, 360.0
        %vm1552 = vcmp.lt.f32.partialorder %v947, 360.0
        %vm1553 = vcmp.lt.f32.partialorder %v948, 360.0
        %vm1554 = vcmp.lt.f32.partialorder %v949, 360.0
        %vm1555 = vcmp.lt.f32.partialorder %v950, 360.0
        %vm1556 = vcmp.lt.f32.partialorder %v951, 360.0
        %vm1557 = vmand %vm1447, %vm1502
        %vm1558 = vmand %vm1448, %vm1503
        %vm1559 = vmand %vm1449, %vm1504
        %vm1560 = vmand %vm1450, %vm1505
        %vm1561 = vmand %vm1451, %vm1506
        %vm1562 = vmand %vm1452, %vm1507
        %vm1563 = vmand %vm1453, %vm1508
        %vm1564 = vmand %vm1454, %vm1509
        %vm1565 = vmand %vm1455, %vm1510
        %vm1566 = vmand %vm1456, %vm1511
        %vm1567 = vmand %vm1457, %vm1512
        %vm1568 = vmand %vm1458, %vm1513
        %vm1569 = vmand %vm1459, %vm1514
        %vm1570 = vmand %vm1460, %vm1515
        %vm1571 = vmand %vm1461, %vm1516
        %vm1572 = vmand %vm1462, %vm1517
        %vm1573 = vmand %vm1463, %vm1518
        %vm1574 = vmand %vm1464, %vm1519
        %vm1575 = vmand %vm1465, %vm1520
        %vm1576 = vmand %vm1466, %vm1521
        %vm1577 = vmand %vm1467, %vm1522
        %vm1578 = vmand %vm1468, %vm1523
        %vm1579 = vmand %vm1469, %vm1524
        %vm1580 = vmand %vm1470, %vm1525
        %vm1581 = vmand %vm1471, %vm1526
        %vm1582 = vmand %vm1472, %vm1527
        %vm1583 = vmand %vm1473, %vm1528
        %vm1584 = vmand %vm1474, %vm1529
        %vm1585 = vmand %vm1475, %vm1530
        %vm1586 = vmand %vm1476, %vm1531
        %vm1587 = vmand %vm1477, %vm1532
        %vm1588 = vmand %vm1478, %vm1533
        %vm1589 = vmand %vm1479, %vm1534
        %vm1590 = vmand %vm1480, %vm1535
        %vm1591 = vmand %vm1481, %vm1536
        %vm1592 = vmand %vm1482, %vm1537
        %vm1593 = vmand %vm1483, %vm1538
        %vm1594 = vmand %vm1484, %vm1539
        %vm1595 = vmand %vm1485, %vm1540
        %vm1596 = vmand %vm1486, %vm1541
        %vm1597 = vmand %vm1487, %vm1542
        %vm1598 = vmand %vm1488, %vm1543
        %vm1599 = vmand %vm1489, %vm1544
        %vm1600 = vmand %vm1490, %vm1545
        %vm1601 = vmand %vm1491, %vm1546
        %vm1602 = vmand %vm1492, %vm1547
        %vm1603 = vmand %vm1493, %vm1548
        %vm1604 = vmand %vm1494, %vm1549
        %vm1605 = vmand %vm1495, %vm1550
        %vm1606 = vmand %vm1496, %vm1551
        %vm1607 = vmand %vm1497, %vm1552
        %vm1608 = vmand %vm1498, %vm1553
        %vm1609 = vmand %vm1499, %vm1554
        %vm1610 = vmand %vm1500, %vm1555
        %vm1611 = vmand %vm1501, %vm1556
        %v1612 = vsel %vm1557, 1, 0
        %v1613 = vsel %vm1558, 1, 0
        %v1614 = vsel %vm1559, 1, 0
        %v1615 = vsel %vm1560, 1, 0
        %v1616 = vsel %vm1561, 1, 0
        %v1617 = vsel %vm1562, 1, 0
        %v1618 = vsel %vm1563, 1, 0
        %v1619 = vsel %vm1564, 1, 0
        %v1620 = vsel %vm1565, 1, 0
        %v1621 = vsel %vm1566, 1, 0
        %v1622 = vsel %vm1567, 1, 0
        %v1623 = vsel %vm1568, 1, 0
        %v1624 = vsel %vm1569, 1, 0
        %v1625 = vsel %vm1570, 1, 0
        %v1626 = vsel %vm1571, 1, 0
        %v1627 = vsel %vm1572, 1, 0
        %v1628 = vsel %vm1573, 1, 0
        %v1629 = vsel %vm1574, 1, 0
        %v1630 = vsel %vm1575, 1, 0
        %v1631 = vsel %vm1576, 1, 0
        %v1632 = vsel %vm1577, 1, 0
        %v1633 = vsel %vm1578, 1, 0
        %v1634 = vsel %vm1579, 1, 0
        %v1635 = vsel %vm1580, 1, 0
        %v1636 = vsel %vm1581, 1, 0
        %v1637 = vsel %vm1582, 1, 0
        %v1638 = vsel %vm1583, 1, 0
        %v1639 = vsel %vm1584, 1, 0
        %v1640 = vsel %vm1585, 1, 0
        %v1641 = vsel %vm1586, 1, 0
        %v1642 = vsel %vm1587, 1, 0
        %v1643 = vsel %vm1588, 1, 0
        %v1644 = vsel %vm1589, 1, 0
        %v1645 = vsel %vm1590, 1, 0
        %v1646 = vsel %vm1591, 1, 0
        %v1647 = vsel %vm1592, 1, 0
        %v1648 = vsel %vm1593, 1, 0
        %v1649 = vsel %vm1594, 1, 0
        %v1650 = vsel %vm1595, 1, 0
        %v1651 = vsel %vm1596, 1, 0
        %v1652 = vsel %vm1597, 1, 0
        %v1653 = vsel %vm1598, 1, 0
        %v1654 = vsel %vm1599, 1, 0
        %v1655 = vsel %vm1600, 1, 0
        %v1656 = vsel %vm1601, 1, 0
        %v1657 = vsel %vm1602, 1, 0
        %v1658 = vsel %vm1603, 1, 0
        %v1659 = vsel %vm1604, 1, 0
        %v1660 = vsel %vm1605, 1, 0
        %v1661 = vsel %vm1606, 1, 0
        %v1662 = vsel %vm1607, 1, 0
        %v1663 = vsel %vm1608, 1, 0
        %v1664 = vsel %vm1609, 1, 0
        %v1665 = vsel %vm1610, 1, 0
        %v1666 = vsel %vm1611, 1, 0
        %vm1667 = vcmp.eq.s32.totalorder %v1612, 1
        %vm1668 = vcmp.eq.s32.totalorder %v1613, 1
        %vm1669 = vcmp.eq.s32.totalorder %v1614, 1
        %vm1670 = vcmp.eq.s32.totalorder %v1615, 1
        %vm1671 = vcmp.eq.s32.totalorder %v1616, 1
        %vm1672 = vcmp.eq.s32.totalorder %v1617, 1
        %vm1673 = vcmp.eq.s32.totalorder %v1618, 1
        %vm1674 = vcmp.eq.s32.totalorder %v1619, 1
        %vm1675 = vcmp.eq.s32.totalorder %v1620, 1
        %vm1676 = vcmp.eq.s32.totalorder %v1621, 1
        %vm1677 = vcmp.eq.s32.totalorder %v1622, 1
        %vm1678 = vcmp.eq.s32.totalorder %v1623, 1
        %vm1679 = vcmp.eq.s32.totalorder %v1624, 1
        %vm1680 = vcmp.eq.s32.totalorder %v1625, 1
        %vm1681 = vcmp.eq.s32.totalorder %v1626, 1
        %vm1682 = vcmp.eq.s32.totalorder %v1627, 1
        %vm1683 = vcmp.eq.s32.totalorder %v1628, 1
        %vm1684 = vcmp.eq.s32.totalorder %v1629, 1
        %vm1685 = vcmp.eq.s32.totalorder %v1630, 1
        %vm1686 = vcmp.eq.s32.totalorder %v1631, 1
        %vm1687 = vcmp.eq.s32.totalorder %v1632, 1
        %vm1688 = vcmp.eq.s32.totalorder %v1633, 1
        %vm1689 = vcmp.eq.s32.totalorder %v1634, 1
        %vm1690 = vcmp.eq.s32.totalorder %v1635, 1
        %vm1691 = vcmp.eq.s32.totalorder %v1636, 1
        %vm1692 = vcmp.eq.s32.totalorder %v1637, 1
        %vm1693 = vcmp.eq.s32.totalorder %v1638, 1
        %vm1694 = vcmp.eq.s32.totalorder %v1639, 1
        %vm1695 = vcmp.eq.s32.totalorder %v1640, 1
        %vm1696 = vcmp.eq.s32.totalorder %v1641, 1
        %vm1697 = vcmp.eq.s32.totalorder %v1642, 1
        %vm1698 = vcmp.eq.s32.totalorder %v1643, 1
        %vm1699 = vcmp.eq.s32.totalorder %v1644, 1
        %vm1700 = vcmp.eq.s32.totalorder %v1645, 1
        %vm1701 = vcmp.eq.s32.totalorder %v1646, 1
        %vm1702 = vcmp.eq.s32.totalorder %v1647, 1
        %vm1703 = vcmp.eq.s32.totalorder %v1648, 1
        %vm1704 = vcmp.eq.s32.totalorder %v1649, 1
        %vm1705 = vcmp.eq.s32.totalorder %v1650, 1
        %vm1706 = vcmp.eq.s32.totalorder %v1651, 1
        %vm1707 = vcmp.eq.s32.totalorder %v1652, 1
        %vm1708 = vcmp.eq.s32.totalorder %v1653, 1
        %vm1709 = vcmp.eq.s32.totalorder %v1654, 1
        %vm1710 = vcmp.eq.s32.totalorder %v1655, 1
        %vm1711 = vcmp.eq.s32.totalorder %v1656, 1
        %vm1712 = vcmp.eq.s32.totalorder %v1657, 1
        %vm1713 = vcmp.eq.s32.totalorder %v1658, 1
        %vm1714 = vcmp.eq.s32.totalorder %v1659, 1
        %vm1715 = vcmp.eq.s32.totalorder %v1660, 1
        %vm1716 = vcmp.eq.s32.totalorder %v1661, 1
        %vm1717 = vcmp.eq.s32.totalorder %v1662, 1
        %vm1718 = vcmp.eq.s32.totalorder %v1663, 1
        %vm1719 = vcmp.eq.s32.totalorder %v1664, 1
        %vm1720 = vcmp.eq.s32.totalorder %v1665, 1
        %vm1721 = vcmp.eq.s32.totalorder %v1666, 1
        %v1722 = vsel %vm1667, %v786, 0.0
        %v1723 = vsel %vm1668, %v787, 0.0
        %v1724 = vsel %vm1669, %v788, 0.0
        %v1725 = vsel %vm1670, %v789, 0.0
        %v1726 = vsel %vm1671, %v790, 0.0
        %v1727 = vsel %vm1672, %v791, 0.0
        %v1728 = vsel %vm1673, %v792, 0.0
        %v1729 = vsel %vm1674, %v793, 0.0
        %v1730 = vsel %vm1675, %v794, 0.0
        %v1731 = vsel %vm1676, %v795, 0.0
        %v1732 = vsel %vm1677, %v796, 0.0
        %v1733 = vsel %vm1678, %v797, 0.0
        %v1734 = vsel %vm1679, %v798, 0.0
        %v1735 = vsel %vm1680, %v799, 0.0
        %v1736 = vsel %vm1681, %v800, 0.0
        %v1737 = vsel %vm1682, %v801, 0.0
        %v1738 = vsel %vm1683, %v802, 0.0
        %v1739 = vsel %vm1684, %v803, 0.0
        %v1740 = vsel %vm1685, %v804, 0.0
        %v1741 = vsel %vm1686, %v805, 0.0
        %v1742 = vsel %vm1687, %v806, 0.0
        %v1743 = vsel %vm1688, %v807, 0.0
        %v1744 = vsel %vm1689, %v808, 0.0
        %v1745 = vsel %vm1690, %v809, 0.0
        %v1746 = vsel %vm1691, %v810, 0.0
        %v1747 = vsel %vm1692, %v811, 0.0
        %v1748 = vsel %vm1693, %v812, 0.0
        %v1749 = vsel %vm1694, %v813, 0.0
        %v1750 = vsel %vm1695, %v814, 0.0
        %v1751 = vsel %vm1696, %v815, 0.0
        %v1752 = vsel %vm1697, %v816, 0.0
        %v1753 = vsel %vm1698, %v817, 0.0
        %v1754 = vsel %vm1699, %v818, 0.0
        %v1755 = vsel %vm1700, %v819, 0.0
        %v1756 = vsel %vm1701, %v820, 0.0
        %v1757 = vsel %vm1702, %v821, 0.0
        %v1758 = vsel %vm1703, %v822, 0.0
        %v1759 = vsel %vm1704, %v823, 0.0
        %v1760 = vsel %vm1705, %v824, 0.0
        %v1761 = vsel %vm1706, %v825, 0.0
        %v1762 = vsel %vm1707, %v826, 0.0
        %v1763 = vsel %vm1708, %v827, 0.0
        %v1764 = vsel %vm1709, %v828, 0.0
        %v1765 = vsel %vm1710, %v829, 0.0
        %v1766 = vsel %vm1711, %v830, 0.0
        %v1767 = vsel %vm1712, %v831, 0.0
        %v1768 = vsel %vm1713, %v832, 0.0
        %v1769 = vsel %vm1714, %v833, 0.0
        %v1770 = vsel %vm1715, %v834, 0.0
        %v1771 = vsel %vm1716, %v835, 0.0
        %v1772 = vsel %vm1717, %v836, 0.0
        %v1773 = vsel %vm1718, %v837, 0.0
        %v1774 = vsel %vm1719, %v838, 0.0
        %v1775 = vsel %vm1720, %v839, 0.0
        %v1776 = vsel %vm1721, %v840, 0.0
        %v1777 = vpack.c.bf16 %v1722, %v1722
        %v1778 = vpack.c.bf16 %v1723, %v1723
        %v1779 = vpack.c.bf16 %v1724, %v1724
        %v1780 = vpack.c.bf16 %v1725, %v1725
        %v1781 = vpack.c.bf16 %v1726, %v1726
        %v1782 = vpack.c.bf16 %v1727, %v1727
        %v1783 = vpack.c.bf16 %v1728, %v1728
        %v1784 = vpack.c.bf16 %v1729, %v1729
        %v1785 = vpack.c.bf16 %v1730, %v1730
        %v1786 = vpack.c.bf16 %v1731, %v1731
        %v1787 = vpack.c.bf16 %v1732, %v1732
        %v1788 = vpack.c.bf16 %v1733, %v1733
        %v1789 = vpack.c.bf16 %v1734, %v1734
        %v1790 = vpack.c.bf16 %v1735, %v1735
        %v1791 = vpack.c.bf16 %v1736, %v1736
        %v1792 = vpack.c.bf16 %v1737, %v1737
        %v1793 = vpack.c.bf16 %v1738, %v1738
        %v1794 = vpack.c.bf16 %v1739, %v1739
        %v1795 = vpack.c.bf16 %v1740, %v1740
        %v1796 = vpack.c.bf16 %v1741, %v1741
        %v1797 = vpack.c.bf16 %v1742, %v1742
        %v1798 = vpack.c.bf16 %v1743, %v1743
        %v1799 = vpack.c.bf16 %v1744, %v1744
        %v1800 = vpack.c.bf16 %v1745, %v1745
        %v1801 = vpack.c.bf16 %v1746, %v1746
        %v1802 = vpack.c.bf16 %v1747, %v1747
        %v1803 = vpack.c.bf16 %v1748, %v1748
        %v1804 = vpack.c.bf16 %v1749, %v1749
        %v1805 = vpack.c.bf16 %v1750, %v1750
        %v1806 = vpack.c.bf16 %v1751, %v1751
        %v1807 = vpack.c.bf16 %v1752, %v1752
        %v1808 = vpack.c.bf16 %v1753, %v1753
        %v1809 = vpack.c.bf16 %v1754, %v1754
        %v1810 = vpack.c.bf16 %v1755, %v1755
        %v1811 = vpack.c.bf16 %v1756, %v1756
        %v1812 = vpack.c.bf16 %v1757, %v1757
        %v1813 = vpack.c.bf16 %v1758, %v1758
        %v1814 = vpack.c.bf16 %v1759, %v1759
        %v1815 = vpack.c.bf16 %v1760, %v1760
        %v1816 = vpack.c.bf16 %v1761, %v1761
        %v1817 = vpack.c.bf16 %v1762, %v1762
        %v1818 = vpack.c.bf16 %v1763, %v1763
        %v1819 = vpack.c.bf16 %v1764, %v1764
        %v1820 = vpack.c.bf16 %v1765, %v1765
        %v1821 = vpack.c.bf16 %v1766, %v1766
        %v1822 = vpack.c.bf16 %v1767, %v1767
        %v1823 = vpack.c.bf16 %v1768, %v1768
        %v1824 = vpack.c.bf16 %v1769, %v1769
        %v1825 = vpack.c.bf16 %v1770, %v1770
        %v1826 = vpack.c.bf16 %v1771, %v1771
        %v1827 = vpack.c.bf16 %v1772, %v1772
        %v1828 = vpack.c.bf16 %v1773, %v1773
        %v1829 = vpack.c.bf16 %v1774, %v1774
        %v1830 = vpack.c.bf16 %v1775, %v1775
        %v1831 = vpack.c.bf16 %v1776, %v1776
        %1832 = vst [vmem:[#allocation2] sm:$0xf] %v1777
        %1833 = vst [vmem:[#allocation2 + $0x4] sm:$0xf] %v1778
        %1834 = vst [vmem:[#allocation2 + $0x8] sm:$0xf] %v1779
        %1835 = vst [vmem:[#allocation2 + $0xc] sm:$0xf] %v1780
        %1836 = vst [vmem:[#allocation2 + $0x10] sm:$0xf] %v1781
        %1837 = vst [vmem:[#allocation2 + $0x14] sm:$0xf] %v1782
        %1838 = vst [vmem:[#allocation2 + $0x18] sm:$0xf] %v1783
        %1839 = vst [vmem:[#allocation2 + $0x1c] sm:$0xf] %v1784
        %1840 = vst [vmem:[#allocation2 + $0x20] sm:$0xf] %v1785
        %1841 = vst [vmem:[#allocation2 + $0x24] sm:$0xf] %v1786
        %1842 = vst [vmem:[#allocation2 + $0x28] sm:$0xf] %v1787
        %1843 = vst [vmem:[#allocation2 + $0x2c] sm:$0xf] %v1788
        %1844 = vst [vmem:[#allocation2 + $0x30] sm:$0xf] %v1789
        %1845 = vst [vmem:[#allocation2 + $0x34] sm:$0xf] %v1790
        %1846 = vst [vmem:[#allocation2 + $0x38] sm:$0xf] %v1791
        %1847 = vst [vmem:[#allocation2 + $0x3c] sm:$0xf] %v1792
        %1848 = vst [vmem:[#allocation2 + $0x40] sm:$0xf] %v1793
        %1849 = vst [vmem:[#allocation2 + $0x44] sm:$0xf] %v1794
        %1850 = vst [vmem:[#allocation2 + $0x48] sm:$0xf] %v1795
        %1851 = vst [vmem:[#allocation2 + $0x4c] sm:$0xf] %v1796
        %1852 = vst [vmem:[#allocation2 + $0x50] sm:$0xf] %v1797
        %1853 = vst [vmem:[#allocation2 + $0x54] sm:$0xf] %v1798
        %1854 = vst [vmem:[#allocation2 + $0x58] sm:$0xf] %v1799
        %1855 = vst [vmem:[#allocation2 + $0x5c] sm:$0xf] %v1800
        %1856 = vst [vmem:[#allocation2 + $0x60] sm:$0xf] %v1801
        %1857 = vst [vmem:[#allocation2 + $0x64] sm:$0xf] %v1802
        %1858 = vst [vmem:[#allocation2 + $0x68] sm:$0xf] %v1803
        %1859 = vst [vmem:[#allocation2 + $0x6c] sm:$0xf] %v1804
        %1860 = vst [vmem:[#allocation2 + $0x70] sm:$0xf] %v1805
        %1861 = vst [vmem:[#allocation2 + $0x74] sm:$0xf] %v1806
        %1862 = vst [vmem:[#allocation2 + $0x78] sm:$0xf] %v1807
        %1863 = vst [vmem:[#allocation2 + $0x7c] sm:$0xf] %v1808
        %1864 = vst [vmem:[#allocation2 + $0x80] sm:$0xf] %v1809
        %1865 = vst [vmem:[#allocation2 + $0x84] sm:$0xf] %v1810
        %1866 = vst [vmem:[#allocation2 + $0x88] sm:$0xf] %v1811
        %1867 = vst [vmem:[#allocation2 + $0x8c] sm:$0xf] %v1812
        %1868 = vst [vmem:[#allocation2 + $0x90] sm:$0xf] %v1813
        %1869 = vst [vmem:[#allocation2 + $0x94] sm:$0xf] %v1814
        %1870 = vst [vmem:[#allocation2 + $0x98] sm:$0xf] %v1815
        %1871 = vst [vmem:[#allocation2 + $0x9c] sm:$0xf] %v1816
        %1872 = vst [vmem:[#allocation2 + $0xa0] sm:$0xf] %v1817
        %1873 = vst [vmem:[#allocation2 + $0xa4] sm:$0xf] %v1818
        %1874 = vst [vmem:[#allocation2 + $0xa8] sm:$0xf] %v1819
        %1875 = vst [vmem:[#allocation2 + $0xac] sm:$0xf] %v1820
        %1876 = vst [vmem:[#allocation2 + $0xb0] sm:$0xf] %v1821
        %1877 = vst [vmem:[#allocation2 + $0xb4] sm:$0xf] %v1822
        %1878 = vst [vmem:[#allocation2 + $0xb8] sm:$0xf] %v1823
        %1879 = vst [vmem:[#allocation2 + $0xbc] sm:$0xf] %v1824
        %1880 = vst [vmem:[#allocation2 + $0xc0] sm:$0xf] %v1825
        %1881 = vst [vmem:[#allocation2 + $0xc4] sm:$0xf] %v1826
        %1882 = vst [vmem:[#allocation2 + $0xc8] sm:$0xf] %v1827
        %1883 = vst [vmem:[#allocation2 + $0xcc] sm:$0xf] %v1828
        %1884 = vst [vmem:[#allocation2 + $0xd0] sm:$0xf] %v1829
        %1885 = vst [vmem:[#allocation2 + $0xd4] sm:$0xf] %v1830
        %1886 = vst [vmem:[#allocation2 + $0xd8] sm:$0xf] %v1831
        %v1887 = vld [vmem:[#allocation2] sm:$0xf]
        %v1888 = vld [vmem:[#allocation2 + $0x4] sm:$0xf]
        %v1889 = vld [vmem:[#allocation2 + $0x8] sm:$0xf]
        %v1890 = vld [vmem:[#allocation2 + $0xc] sm:$0xf]
        %v1891 = vld [vmem:[#allocation2 + $0x10] sm:$0xf]
        %v1892 = vld [vmem:[#allocation2 + $0x14] sm:$0xf]
        %v1893 = vld [vmem:[#allocation2 + $0x18] sm:$0xf]
        %v1894 = vld [vmem:[#allocation2 + $0x1c] sm:$0xf]
        %v1895 = vld [vmem:[#allocation2 + $0x20] sm:$0xf]
        %v1896 = vld [vmem:[#allocation2 + $0x24] sm:$0xf]
        %v1897 = vld [vmem:[#allocation2 + $0x28] sm:$0xf]
        %v1898 = vld [vmem:[#allocation2 + $0x2c] sm:$0xf]
        %v1899 = vld [vmem:[#allocation2 + $0x30] sm:$0xf]
        %v1900 = vld [vmem:[#allocation2 + $0x34] sm:$0xf]
        %v1901 = vld [vmem:[#allocation2 + $0x38] sm:$0xf]
        %v1902 = vld [vmem:[#allocation2 + $0x3c] sm:$0xf]
        %v1903 = vld [vmem:[#allocation2 + $0x40] sm:$0xf]
        %v1904 = vld [vmem:[#allocation2 + $0x44] sm:$0xf]
        %v1905 = vld [vmem:[#allocation2 + $0x48] sm:$0xf]
        %v1906 = vld [vmem:[#allocation2 + $0x4c] sm:$0xf]
        %v1907 = vld [vmem:[#allocation2 + $0x50] sm:$0xf]
        %v1908 = vld [vmem:[#allocation2 + $0x54] sm:$0xf]
        %v1909 = vld [vmem:[#allocation2 + $0x58] sm:$0xf]
        %v1910 = vld [vmem:[#allocation2 + $0x5c] sm:$0xf]
        %v1911 = vld [vmem:[#allocation2 + $0x60] sm:$0xf]
        %v1912 = vld [vmem:[#allocation2 + $0x64] sm:$0xf]
        %v1913 = vld [vmem:[#allocation2 + $0x68] sm:$0xf]
        %v1914 = vld [vmem:[#allocation2 + $0x6c] sm:$0xf]
        %v1915 = vld [vmem:[#allocation2 + $0x70] sm:$0xf]
        %v1916 = vld [vmem:[#allocation2 + $0x74] sm:$0xf]
        %v1917 = vld [vmem:[#allocation2 + $0x78] sm:$0xf]
        %v1918 = vld [vmem:[#allocation2 + $0x7c] sm:$0xf]
        %v1919 = vld [vmem:[#allocation2 + $0x80] sm:$0xf]
        %v1920 = vld [vmem:[#allocation2 + $0x84] sm:$0xf]
        %v1921 = vld [vmem:[#allocation2 + $0x88] sm:$0xf]
        %v1922 = vld [vmem:[#allocation2 + $0x8c] sm:$0xf]
        %v1923 = vld [vmem:[#allocation2 + $0x90] sm:$0xf]
        %v1924 = vld [vmem:[#allocation2 + $0x94] sm:$0xf]
        %v1925 = vld [vmem:[#allocation2 + $0x98] sm:$0xf]
        %v1926 = vld [vmem:[#allocation2 + $0x9c] sm:$0xf]
        %v1927 = vld [vmem:[#allocation2 + $0xa0] sm:$0xf]
        %v1928 = vld [vmem:[#allocation2 + $0xa4] sm:$0xf]
        %v1929 = vld [vmem:[#allocation2 + $0xa8] sm:$0xf]
        %v1930 = vld [vmem:[#allocation2 + $0xac] sm:$0xf]
        %v1931 = vld [vmem:[#allocation2 + $0xb0] sm:$0xf]
        %v1932 = vld [vmem:[#allocation2 + $0xb4] sm:$0xf]
        %v1933 = vld [vmem:[#allocation2 + $0xb8] sm:$0xf]
        %v1934 = vld [vmem:[#allocation2 + $0xbc] sm:$0x3]
        %v1935 = vld [vmem:[#allocation9] sm:$0xf]
        %v1936 = vld [vmem:[#allocation9 + $0x4] sm:$0xf]
        %v1937 = vld [vmem:[#allocation9 + $0x8] sm:$0xf]
        %v1938 = vld [vmem:[#allocation9 + $0xc] sm:$0xf]
        %v1939 = vld [vmem:[#allocation9 + $0x10] sm:$0xf]
        %v1940 = vld [vmem:[#allocation9 + $0x14] sm:$0xf]
        %v1941 = vld [vmem:[#allocation9 + $0x18] sm:$0xf]
        %v1942 = vld [vmem:[#allocation9 + $0x1c] sm:$0xf]
        %v1943 = vld [vmem:[#allocation9 + $0x20] sm:$0xf]
        %v1944 = vld [vmem:[#allocation9 + $0x24] sm:$0xf]
        %v1945 = vld [vmem:[#allocation9 + $0x28] sm:$0xf]
        %v1946 = vld [vmem:[#allocation9 + $0x2c] sm:$0xf]
        %v1947 = vld [vmem:[#allocation9 + $0x30] sm:$0xf]
        %v1948 = vld [vmem:[#allocation9 + $0x34] sm:$0xf]
        %v1949 = vld [vmem:[#allocation9 + $0x38] sm:$0xf]
        %v1950 = vld [vmem:[#allocation9 + $0x3c] sm:$0xf]
        %v1951 = vld [vmem:[#allocation2 + $0xbc] sm:$0x7]
        %s1952 = scalar_lea.vmem [#allocation9], 64
        %v1953 = vld [vmem:[%s1952] sm:$0xf]
        %v1954 = vld [vmem:[%s1952 + $0x4] sm:$0xf]
        %v1955 = vld [vmem:[%s1952 + $0x8] sm:$0xf]
        %v1956 = vld [vmem:[%s1952 + $0xc] sm:$0xf]
        %v1957 = vld [vmem:[%s1952 + $0x10] sm:$0xf]
        %v1958 = vld [vmem:[%s1952 + $0x14] sm:$0xf]
        %v1959 = vld [vmem:[%s1952 + $0x18] sm:$0xf]
        %v1960 = vld [vmem:[%s1952 + $0x1c] sm:$0xf]
        %v1961 = vld [vmem:[%s1952 + $0x20] sm:$0xf]
        %v1962 = vld [vmem:[%s1952 + $0x24] sm:$0xf]
        %v1963 = vld [vmem:[%s1952 + $0x28] sm:$0xf]
        %v1964 = vld [vmem:[%s1952 + $0x2c] sm:$0xf]
        %v1965 = vld [vmem:[%s1952 + $0x30] sm:$0xf]
        %v1966 = vld [vmem:[%s1952 + $0x34] sm:$0xf]
        %v1967 = vld [vmem:[%s1952 + $0x38] sm:$0xf]
        %v1968 = vld [vmem:[%s1952 + $0x3c] sm:$0xf]
        %v2017 = vunpack.c.l.b16 %v1887
        %v2018 = vunpack.c.l.b16 %v1888
        %v2019 = vunpack.c.l.b16 %v1889
        %v2020 = vunpack.c.l.b16 %v1890
        %v2021 = vunpack.c.l.b16 %v1891
        %v2022 = vunpack.c.l.b16 %v1892
        %v2023 = vunpack.c.l.b16 %v1893
        %v2024 = vunpack.c.l.b16 %v1894
        %v2025 = vunpack.c.l.b16 %v1895
        %v2026 = vunpack.c.l.b16 %v1896
        %v2027 = vunpack.c.l.b16 %v1897
        %v2028 = vunpack.c.l.b16 %v1898
        %v2029 = vunpack.c.l.b16 %v1899
        %v2030 = vunpack.c.l.b16 %v1900
        %v2031 = vunpack.c.l.b16 %v1901
        %v2032 = vunpack.c.l.b16 %v1902
        %v2033 = vunpack.c.l.b16 %v1903
        %v2034 = vunpack.c.l.b16 %v1904
        %v2035 = vunpack.c.l.b16 %v1905
        %v2036 = vunpack.c.l.b16 %v1906
        %v2037 = vunpack.c.l.b16 %v1907
        %v2038 = vunpack.c.l.b16 %v1908
        %v2039 = vunpack.c.l.b16 %v1909
        %v2040 = vunpack.c.l.b16 %v1910
        %v2041 = vunpack.c.l.b16 %v1911
        %v2042 = vunpack.c.l.b16 %v1912
        %v2043 = vunpack.c.l.b16 %v1913
        %v2044 = vunpack.c.l.b16 %v1914
        %v2045 = vunpack.c.l.b16 %v1915
        %v2046 = vunpack.c.l.b16 %v1916
        %v2047 = vunpack.c.l.b16 %v1917
        %v2048 = vunpack.c.l.b16 %v1918
        %v2049 = vunpack.c.l.b16 %v1919
        %v2050 = vunpack.c.l.b16 %v1920
        %v2051 = vunpack.c.l.b16 %v1921
        %v2052 = vunpack.c.l.b16 %v1922
        %v2053 = vunpack.c.l.b16 %v1923
        %v2054 = vunpack.c.l.b16 %v1924
        %v2055 = vunpack.c.l.b16 %v1925
        %v2056 = vunpack.c.l.b16 %v1926
        %v2057 = vunpack.c.l.b16 %v1927
        %v2058 = vunpack.c.l.b16 %v1928
        %v2059 = vunpack.c.l.b16 %v1929
        %v2060 = vunpack.c.l.b16 %v1930
        %v2061 = vunpack.c.l.b16 %v1931
        %v2062 = vunpack.c.l.b16 %v1932
        %v2063 = vunpack.c.l.b16 %v1933
        %v2064 = vunpack.c.l.b16 %v1951
        %v2065 = vpack.c.b16 %v2018, %v2017
        %v2066 = vpack.c.b16 %v2020, %v2019
        %v2067 = vpack.c.b16 %v2022, %v2021
        %v2068 = vpack.c.b16 %v2024, %v2023
        %v2069 = vpack.c.b16 %v2026, %v2025
        %v2070 = vpack.c.b16 %v2028, %v2027
        %v2071 = vpack.c.b16 %v2030, %v2029
        %v2072 = vpack.c.b16 %v2032, %v2031
        %v2073 = vpack.c.b16 %v2034, %v2033
        %v2074 = vpack.c.b16 %v2036, %v2035
        %v2075 = vpack.c.b16 %v2038, %v2037
        %v2076 = vpack.c.b16 %v2040, %v2039
        %v2077 = vpack.c.b16 %v2042, %v2041
        %v2078 = vpack.c.b16 %v2044, %v2043
        %v2079 = vpack.c.b16 %v2046, %v2045
        %v2080 = vpack.c.b16 %v2048, %v2047
        %v2081 = vpack.c.b16 %v2050, %v2049
        %v2082 = vpack.c.b16 %v2052, %v2051
        %v2083 = vpack.c.b16 %v2054, %v2053
        %v2084 = vpack.c.b16 %v2056, %v2055
        %v2085 = vpack.c.b16 %v2058, %v2057
        %v2086 = vpack.c.b16 %v2060, %v2059
        %v2087 = vpack.c.b16 %v2062, %v2061
        %v2088 = vpack.c.b16 %v2064, %v2063
        %vm2089 = vsmask.f32 7424
        %v2091 = vshrl.u32 %v2065, 16
        %v2093 = vshll.u32 %v2065, 16
        %v2095 = vrot.slane %v2093, 1
        %v2096 = vor.u32 %v2091, %v2095
        %v2098 = vshll.u32 %v2066, 16
        %v2100 = vrot.slane %v2098, 1
        %v2101 = vsel %vm2089, %v2096, %v2100
        %v2102 = vshrl.u32 %v2066, 16
        %v2104 = vor.u32 %v2102, %v2100
        %v2106 = vshll.u32 %v2067, 16
        %v2108 = vrot.slane %v2106, 1
        %v2109 = vsel %vm2089, %v2104, %v2108
        %v2110 = vshrl.u32 %v2067, 16
        %v2112 = vor.u32 %v2110, %v2108
        %v2114 = vshll.u32 %v2068, 16
        %v2116 = vrot.slane %v2114, 1
        %v2117 = vsel %vm2089, %v2112, %v2116
        %v2118 = vshrl.u32 %v2068, 16
        %v2120 = vor.u32 %v2118, %v2116
        %v2122 = vshll.u32 %v2069, 16
        %v2124 = vrot.slane %v2122, 1
        %v2125 = vsel %vm2089, %v2120, %v2124
        %v2126 = vshrl.u32 %v2069, 16
        %v2128 = vor.u32 %v2126, %v2124
        %v2130 = vshll.u32 %v2070, 16
        %v2132 = vrot.slane %v2130, 1
        %v2133 = vsel %vm2089, %v2128, %v2132
        %v2134 = vshrl.u32 %v2070, 16
        %v2136 = vor.u32 %v2134, %v2132
        %v2138 = vshll.u32 %v2071, 16
        %v2140 = vrot.slane %v2138, 1
        %v2141 = vsel %vm2089, %v2136, %v2140
        %v2142 = vshrl.u32 %v2071, 16
        %v2144 = vor.u32 %v2142, %v2140
        %v2146 = vshll.u32 %v2072, 16
        %v2148 = vrot.slane %v2146, 1
        %v2149 = vsel %vm2089, %v2144, %v2148
        %v2150 = vshrl.u32 %v2072, 16
        %v2152 = vor.u32 %v2150, %v2148
        %v2154 = vshll.u32 %v2073, 16
        %v2156 = vrot.slane %v2154, 1
        %v2157 = vsel %vm2089, %v2152, %v2156
        %v2158 = vshrl.u32 %v2073, 16
        %v2160 = vor.u32 %v2158, %v2156
        %v2162 = vshll.u32 %v2074, 16
        %v2164 = vrot.slane %v2162, 1
        %v2165 = vsel %vm2089, %v2160, %v2164
        %v2166 = vshrl.u32 %v2074, 16
        %v2168 = vor.u32 %v2166, %v2164
        %v2170 = vshll.u32 %v2075, 16
        %v2172 = vrot.slane %v2170, 1
        %v2173 = vsel %vm2089, %v2168, %v2172
        %v2174 = vshrl.u32 %v2075, 16
        %v2176 = vor.u32 %v2174, %v2172
        %v2178 = vshll.u32 %v2076, 16
        %v2180 = vrot.slane %v2178, 1
        %v2181 = vsel %vm2089, %v2176, %v2180
        %v2182 = vshrl.u32 %v2076, 16
        %v2184 = vor.u32 %v2182, %v2180
        %v2186 = vshll.u32 %v2077, 16
        %v2188 = vrot.slane %v2186, 1
        %v2189 = vsel %vm2089, %v2184, %v2188
        %v2190 = vshrl.u32 %v2077, 16
        %v2192 = vor.u32 %v2190, %v2188
        %v2194 = vshll.u32 %v2078, 16
        %v2196 = vrot.slane %v2194, 1
        %v2197 = vsel %vm2089, %v2192, %v2196
        %v2198 = vshrl.u32 %v2078, 16
        %v2200 = vor.u32 %v2198, %v2196
        %v2202 = vshll.u32 %v2079, 16
        %v2204 = vrot.slane %v2202, 1
        %v2205 = vsel %vm2089, %v2200, %v2204
        %v2206 = vshrl.u32 %v2079, 16
        %v2208 = vor.u32 %v2206, %v2204
        %v2210 = vshll.u32 %v2080, 16
        %v2212 = vrot.slane %v2210, 1
        %v2213 = vsel %vm2089, %v2208, %v2212
        %v2214 = vshrl.u32 %v2080, 16
        %v2216 = vor.u32 %v2214, %v2212
        %v2218 = vshll.u32 %v2081, 16
        %v2220 = vrot.slane %v2218, 1
        %v2221 = vsel %vm2089, %v2216, %v2220
        %v2222 = vshrl.u32 %v2081, 16
        %v2224 = vor.u32 %v2222, %v2220
        %v2226 = vshll.u32 %v2082, 16
        %v2228 = vrot.slane %v2226, 1
        %v2229 = vsel %vm2089, %v2224, %v2228
        %v2230 = vshrl.u32 %v2082, 16
        %v2232 = vor.u32 %v2230, %v2228
        %v2234 = vshll.u32 %v2083, 16
        %v2236 = vrot.slane %v2234, 1
        %v2237 = vsel %vm2089, %v2232, %v2236
        %v2238 = vshrl.u32 %v2083, 16
        %v2240 = vor.u32 %v2238, %v2236
        %v2242 = vshll.u32 %v2084, 16
        %v2244 = vrot.slane %v2242, 1
        %v2245 = vsel %vm2089, %v2240, %v2244
        %v2246 = vshrl.u32 %v2084, 16
        %v2248 = vor.u32 %v2246, %v2244
        %v2250 = vshll.u32 %v2085, 16
        %v2252 = vrot.slane %v2250, 1
        %v2253 = vsel %vm2089, %v2248, %v2252
        %v2254 = vshrl.u32 %v2085, 16
        %v2256 = vor.u32 %v2254, %v2252
        %v2258 = vshll.u32 %v2086, 16
        %v2260 = vrot.slane %v2258, 1
        %v2261 = vsel %vm2089, %v2256, %v2260
        %v2262 = vshrl.u32 %v2086, 16
        %v2264 = vor.u32 %v2262, %v2260
        %v2266 = vshll.u32 %v2087, 16
        %v2268 = vrot.slane %v2266, 1
        %v2269 = vsel %vm2089, %v2264, %v2268
        %v2270 = vshrl.u32 %v2087, 16
        %v2272 = vor.u32 %v2270, %v2268
        %v2274 = vshll.u32 %v2088, 16
        %v2276 = vrot.slane %v2274, 1
        %v2277 = vsel %vm2089, %v2272, %v2276
        %v2278 = vshrl.u32 %v2088, 16
        %v2280 = vor.u32 %v2278, %v2276
        %v2321 = vunpack.c.l.b16 %v1953
        %v2322 = vunpack.c.l.b16 %v1954
        %v2323 = vunpack.c.l.b16 %v1955
        %v2324 = vunpack.c.l.b16 %v1956
        %v2325 = vunpack.c.l.b16 %v1957
        %v2326 = vunpack.c.l.b16 %v1958
        %v2327 = vunpack.c.l.b16 %v1959
        %v2328 = vunpack.c.l.b16 %v1960
        %v2329 = vunpack.c.l.b16 %v1961
        %v2330 = vunpack.c.l.b16 %v1962
        %v2331 = vunpack.c.l.b16 %v1963
        %v2332 = vunpack.c.l.b16 %v1964
        %v2333 = vunpack.c.l.b16 %v1965
        %v2334 = vunpack.c.l.b16 %v1966
        %v2335 = vunpack.c.l.b16 %v1967
        %v2336 = vunpack.c.l.b16 %v1968
        %v2337 = vpack.c.b16 %v2322, %v2321
        %v2338 = vpack.c.b16 %v2324, %v2323
        %v2339 = vpack.c.b16 %v2326, %v2325
        %v2340 = vpack.c.b16 %v2328, %v2327
        %v2341 = vpack.c.b16 %v2330, %v2329
        %v2342 = vpack.c.b16 %v2332, %v2331
        %v2343 = vpack.c.b16 %v2334, %v2333
        %v2344 = vpack.c.b16 %v2336, %v2335
        %2353 = vmatpush.bf16.msra.mxu0 %v2344
        %2354 = vmatpush.bf16.msra.mxu0 %v2343
        %2355 = vmatpush.bf16.msra.mxu0 %v2342
        %2356 = vmatpush.bf16.msra.mxu0 %v2341
        %2357 = vmatpush.bf16.msra.mxu0 %v2340
        %2358 = vmatpush.bf16.msra.mxu0 %v2339
        %2359 = vmatpush.bf16.msra.mxu0 %v2338
        %2360 = vmatpush.bf16.msra.mxu0 %v2337
        %2361 = vmatmul.bf16.gmra.mxu0 %v2101
        %v2362 = vpop.f32.mrf.mxu0
        %v2363 = vadd.f32 0.0, %v2362
        %v2364 = vpop.f32.mrf.mxu0
        %v2365 = vadd.f32 0.0, %v2364
        %2366 = vmatmul.bf16.gmra.mxu0 %v2109
        %v2367 = vpop.f32.mrf.mxu0
        %v2368 = vadd.f32 0.0, %v2367
        %v2369 = vpop.f32.mrf.mxu0
        %v2370 = vadd.f32 0.0, %v2369
        %2371 = vmatmul.bf16.gmra.mxu0 %v2117
        %v2372 = vpop.f32.mrf.mxu0
        %v2373 = vadd.f32 0.0, %v2372
        %v2374 = vpop.f32.mrf.mxu0
        %v2375 = vadd.f32 0.0, %v2374
        %2376 = vmatmul.bf16.gmra.mxu0 %v2125
        %v2377 = vpop.f32.mrf.mxu0
        %v2378 = vadd.f32 0.0, %v2377
        %v2379 = vpop.f32.mrf.mxu0
        %v2380 = vadd.f32 0.0, %v2379
        %2381 = vmatmul.bf16.gmra.mxu0 %v2133
        %v2382 = vpop.f32.mrf.mxu0
        %v2383 = vadd.f32 0.0, %v2382
        %v2384 = vpop.f32.mrf.mxu0
        %v2385 = vadd.f32 0.0, %v2384
        %2386 = vmatmul.bf16.gmra.mxu0 %v2141
        %v2387 = vpop.f32.mrf.mxu0
        %v2388 = vadd.f32 0.0, %v2387
        %v2389 = vpop.f32.mrf.mxu0
        %v2390 = vadd.f32 0.0, %v2389
        %2391 = vmatmul.bf16.gmra.mxu0 %v2149
        %v2392 = vpop.f32.mrf.mxu0
        %v2393 = vadd.f32 0.0, %v2392
        %v2394 = vpop.f32.mrf.mxu0
        %v2395 = vadd.f32 0.0, %v2394
        %2396 = vmatmul.bf16.gmra.mxu0 %v2157
        %v2397 = vpop.f32.mrf.mxu0
        %v2398 = vadd.f32 0.0, %v2397
        %v2399 = vpop.f32.mrf.mxu0
        %v2400 = vadd.f32 0.0, %v2399
        %2401 = vmatmul.bf16.gmra.mxu0 %v2165
        %v2402 = vpop.f32.mrf.mxu0
        %v2403 = vadd.f32 0.0, %v2402
        %v2404 = vpop.f32.mrf.mxu0
        %v2405 = vadd.f32 0.0, %v2404
        %2406 = vmatmul.bf16.gmra.mxu0 %v2173
        %v2407 = vpop.f32.mrf.mxu0
        %v2408 = vadd.f32 0.0, %v2407
        %v2409 = vpop.f32.mrf.mxu0
        %v2410 = vadd.f32 0.0, %v2409
        %2411 = vmatmul.bf16.gmra.mxu0 %v2181
        %v2412 = vpop.f32.mrf.mxu0
        %v2413 = vadd.f32 0.0, %v2412
        %v2414 = vpop.f32.mrf.mxu0
        %v2415 = vadd.f32 0.0, %v2414
        %2416 = vmatmul.bf16.gmra.mxu0 %v2189
        %v2417 = vpop.f32.mrf.mxu0
        %v2418 = vadd.f32 0.0, %v2417
        %v2419 = vpop.f32.mrf.mxu0
        %v2420 = vadd.f32 0.0, %v2419
        %2421 = vmatmul.bf16.gmra.mxu0 %v2197
        %v2422 = vpop.f32.mrf.mxu0
        %v2423 = vadd.f32 0.0, %v2422
        %v2424 = vpop.f32.mrf.mxu0
        %v2425 = vadd.f32 0.0, %v2424
        %2426 = vmatmul.bf16.gmra.mxu0 %v2205
        %v2427 = vpop.f32.mrf.mxu0
        %v2428 = vadd.f32 0.0, %v2427
        %v2429 = vpop.f32.mrf.mxu0
        %v2430 = vadd.f32 0.0, %v2429
        %2431 = vmatmul.bf16.gmra.mxu0 %v2213
        %v2432 = vpop.f32.mrf.mxu0
        %v2433 = vadd.f32 0.0, %v2432
        %v2434 = vpop.f32.mrf.mxu0
        %v2435 = vadd.f32 0.0, %v2434
        %2436 = vmatmul.bf16.gmra.mxu0 %v2221
        %v2437 = vpop.f32.mrf.mxu0
        %v2438 = vadd.f32 0.0, %v2437
        %v2439 = vpop.f32.mrf.mxu0
        %v2440 = vadd.f32 0.0, %v2439
        %2441 = vmatmul.bf16.gmra.mxu0 %v2229
        %v2442 = vpop.f32.mrf.mxu0
        %v2443 = vadd.f32 0.0, %v2442
        %v2444 = vpop.f32.mrf.mxu0
        %v2445 = vadd.f32 0.0, %v2444
        %2446 = vmatmul.bf16.gmra.mxu0 %v2237
        %v2447 = vpop.f32.mrf.mxu0
        %v2448 = vadd.f32 0.0, %v2447
        %v2449 = vpop.f32.mrf.mxu0
        %v2450 = vadd.f32 0.0, %v2449
        %2451 = vmatmul.bf16.gmra.mxu0 %v2245
        %v2452 = vpop.f32.mrf.mxu0
        %v2453 = vadd.f32 0.0, %v2452
        %v2454 = vpop.f32.mrf.mxu0
        %v2455 = vadd.f32 0.0, %v2454
        %2456 = vmatmul.bf16.gmra.mxu0 %v2253
        %v2457 = vpop.f32.mrf.mxu0
        %v2458 = vadd.f32 0.0, %v2457
        %v2459 = vpop.f32.mrf.mxu0
        %v2460 = vadd.f32 0.0, %v2459
        %2461 = vmatmul.bf16.gmra.mxu0 %v2261
        %v2462 = vpop.f32.mrf.mxu0
        %v2463 = vadd.f32 0.0, %v2462
        %v2464 = vpop.f32.mrf.mxu0
        %v2465 = vadd.f32 0.0, %v2464
        %2466 = vmatmul.bf16.gmra.mxu0 %v2269
        %v2467 = vpop.f32.mrf.mxu0
        %v2468 = vadd.f32 0.0, %v2467
        %v2469 = vpop.f32.mrf.mxu0
        %v2470 = vadd.f32 0.0, %v2469
        %2471 = vmatmul.bf16.gmra.mxu0 %v2277
        %v2472 = vpop.f32.mrf.mxu0
        %v2473 = vadd.f32 0.0, %v2472
        %v2474 = vpop.f32.mrf.mxu0
        %v2475 = vadd.f32 0.0, %v2474
        %2476 = vmatmul.bf16.gmra.mxu0 %v2280
        %v2477 = vpop.f32.mrf.mxu0
        %v2478 = vadd.f32 0.0, %v2477
        %v2479 = vpop.f32.mrf.mxu0
        %v2480 = vadd.f32 0.0, %v2479
        %2481 = vdwg.mxu0
        %v2483 = vunpack.c.l.b16 %v1934
        %v2484 = vpack.c.b16 %v2483, %v2063
        %v2525 = vunpack.c.l.b16 %v1935
        %v2526 = vunpack.c.l.b16 %v1936
        %v2527 = vunpack.c.l.b16 %v1937
        %v2528 = vunpack.c.l.b16 %v1938
        %v2529 = vunpack.c.l.b16 %v1939
        %v2530 = vunpack.c.l.b16 %v1940
        %v2531 = vunpack.c.l.b16 %v1941
        %v2532 = vunpack.c.l.b16 %v1942
        %v2533 = vunpack.c.l.b16 %v1943
        %v2534 = vunpack.c.l.b16 %v1944
        %v2535 = vunpack.c.l.b16 %v1945
        %v2536 = vunpack.c.l.b16 %v1946
        %v2537 = vunpack.c.l.b16 %v1947
        %v2538 = vunpack.c.l.b16 %v1948
        %v2539 = vunpack.c.l.b16 %v1949
        %v2540 = vunpack.c.l.b16 %v1950
        %v2541 = vpack.c.b16 %v2526, %v2525
        %v2542 = vpack.c.b16 %v2528, %v2527
        %v2543 = vpack.c.b16 %v2530, %v2529
        %v2544 = vpack.c.b16 %v2532, %v2531
        %v2545 = vpack.c.b16 %v2534, %v2533
        %v2546 = vpack.c.b16 %v2536, %v2535
        %v2547 = vpack.c.b16 %v2538, %v2537
        %v2548 = vpack.c.b16 %v2540, %v2539
        %2557 = vmatpush.bf16.msra.mxu0 %v2548
        %2558 = vmatpush.bf16.msra.mxu0 %v2547
        %2559 = vmatpush.bf16.msra.mxu0 %v2546
        %2560 = vmatpush.bf16.msra.mxu0 %v2545
        %2561 = vmatpush.bf16.msra.mxu0 %v2544
        %2562 = vmatpush.bf16.msra.mxu0 %v2543
        %2563 = vmatpush.bf16.msra.mxu0 %v2542
        %2564 = vmatpush.bf16.msra.mxu0 %v2541
        %2565 = vmatmul.bf16.gmra.mxu0 %v2065
        %v2566 = vpop.f32.mrf.mxu0
        %v2567 = vadd.f32 %v2363, %v2566
        %v2568 = vpop.f32.mrf.mxu0
        %v2569 = vadd.f32 %v2365, %v2568
        %2570 = vmatmul.bf16.gmra.mxu0 %v2066
        %v2571 = vpop.f32.mrf.mxu0
        %v2572 = vadd.f32 %v2368, %v2571
        %v2573 = vpop.f32.mrf.mxu0
        %v2574 = vadd.f32 %v2370, %v2573
        %2575 = vmatmul.bf16.gmra.mxu0 %v2067
        %v2576 = vpop.f32.mrf.mxu0
        %v2577 = vadd.f32 %v2373, %v2576
        %v2578 = vpop.f32.mrf.mxu0
        %v2579 = vadd.f32 %v2375, %v2578
        %2580 = vmatmul.bf16.gmra.mxu0 %v2068
        %v2581 = vpop.f32.mrf.mxu0
        %v2582 = vadd.f32 %v2378, %v2581
        %v2583 = vpop.f32.mrf.mxu0
        %v2584 = vadd.f32 %v2380, %v2583
        %2585 = vmatmul.bf16.gmra.mxu0 %v2069
        %v2586 = vpop.f32.mrf.mxu0
        %v2587 = vadd.f32 %v2383, %v2586
        %v2588 = vpop.f32.mrf.mxu0
        %v2589 = vadd.f32 %v2385, %v2588
        %2590 = vmatmul.bf16.gmra.mxu0 %v2070
        %v2591 = vpop.f32.mrf.mxu0
        %v2592 = vadd.f32 %v2388, %v2591
        %v2593 = vpop.f32.mrf.mxu0
        %v2594 = vadd.f32 %v2390, %v2593
        %2595 = vmatmul.bf16.gmra.mxu0 %v2071
        %v2596 = vpop.f32.mrf.mxu0
        %v2597 = vadd.f32 %v2393, %v2596
        %v2598 = vpop.f32.mrf.mxu0
        %v2599 = vadd.f32 %v2395, %v2598
        %2600 = vmatmul.bf16.gmra.mxu0 %v2072
        %v2601 = vpop.f32.mrf.mxu0
        %v2602 = vadd.f32 %v2398, %v2601
        %v2603 = vpop.f32.mrf.mxu0
        %v2604 = vadd.f32 %v2400, %v2603
        %2605 = vmatmul.bf16.gmra.mxu0 %v2073
        %v2606 = vpop.f32.mrf.mxu0
        %v2607 = vadd.f32 %v2403, %v2606
        %v2608 = vpop.f32.mrf.mxu0
        %v2609 = vadd.f32 %v2405, %v2608
        %2610 = vmatmul.bf16.gmra.mxu0 %v2074
        %v2611 = vpop.f32.mrf.mxu0
        %v2612 = vadd.f32 %v2408, %v2611
        %v2613 = vpop.f32.mrf.mxu0
        %v2614 = vadd.f32 %v2410, %v2613
        %2615 = vmatmul.bf16.gmra.mxu0 %v2075
        %v2616 = vpop.f32.mrf.mxu0
        %v2617 = vadd.f32 %v2413, %v2616
        %v2618 = vpop.f32.mrf.mxu0
        %v2619 = vadd.f32 %v2415, %v2618
        %2620 = vmatmul.bf16.gmra.mxu0 %v2076
        %v2621 = vpop.f32.mrf.mxu0
        %v2622 = vadd.f32 %v2418, %v2621
        %v2623 = vpop.f32.mrf.mxu0
        %v2624 = vadd.f32 %v2420, %v2623
        %2625 = vmatmul.bf16.gmra.mxu0 %v2077
        %v2626 = vpop.f32.mrf.mxu0
        %v2627 = vadd.f32 %v2423, %v2626
        %v2628 = vpop.f32.mrf.mxu0
        %v2629 = vadd.f32 %v2425, %v2628
        %2630 = vmatmul.bf16.gmra.mxu0 %v2078
        %v2631 = vpop.f32.mrf.mxu0
        %v2632 = vadd.f32 %v2428, %v2631
        %v2633 = vpop.f32.mrf.mxu0
        %v2634 = vadd.f32 %v2430, %v2633
        %2635 = vmatmul.bf16.gmra.mxu0 %v2079
        %v2636 = vpop.f32.mrf.mxu0
        %v2637 = vadd.f32 %v2433, %v2636
        %v2638 = vpop.f32.mrf.mxu0
        %v2639 = vadd.f32 %v2435, %v2638
        %2640 = vmatmul.bf16.gmra.mxu0 %v2080
        %v2641 = vpop.f32.mrf.mxu0
        %v2642 = vadd.f32 %v2438, %v2641
        %v2643 = vpop.f32.mrf.mxu0
        %v2644 = vadd.f32 %v2440, %v2643
        %2645 = vmatmul.bf16.gmra.mxu0 %v2081
        %v2646 = vpop.f32.mrf.mxu0
        %v2647 = vadd.f32 %v2443, %v2646
        %v2648 = vpop.f32.mrf.mxu0
        %v2649 = vadd.f32 %v2445, %v2648
        %2650 = vmatmul.bf16.gmra.mxu0 %v2082
        %v2651 = vpop.f32.mrf.mxu0
        %v2652 = vadd.f32 %v2448, %v2651
        %v2653 = vpop.f32.mrf.mxu0
        %v2654 = vadd.f32 %v2450, %v2653
        %2655 = vmatmul.bf16.gmra.mxu0 %v2083
        %v2656 = vpop.f32.mrf.mxu0
        %v2657 = vadd.f32 %v2453, %v2656
        %v2658 = vpop.f32.mrf.mxu0
        %v2659 = vadd.f32 %v2455, %v2658
        %2660 = vmatmul.bf16.gmra.mxu0 %v2084
        %v2661 = vpop.f32.mrf.mxu0
        %v2662 = vadd.f32 %v2458, %v2661
        %v2663 = vpop.f32.mrf.mxu0
        %v2664 = vadd.f32 %v2460, %v2663
        %2665 = vmatmul.bf16.gmra.mxu0 %v2085
        %v2666 = vpop.f32.mrf.mxu0
        %v2667 = vadd.f32 %v2463, %v2666
        %v2668 = vpop.f32.mrf.mxu0
        %v2669 = vadd.f32 %v2465, %v2668
        %2670 = vmatmul.bf16.gmra.mxu0 %v2086
        %v2671 = vpop.f32.mrf.mxu0
        %v2672 = vadd.f32 %v2468, %v2671
        %v2673 = vpop.f32.mrf.mxu0
        %v2674 = vadd.f32 %v2470, %v2673
        %2675 = vmatmul.bf16.gmra.mxu0 %v2087
        %v2676 = vpop.f32.mrf.mxu0
        %v2677 = vadd.f32 %v2473, %v2676
        %v2678 = vpop.f32.mrf.mxu0
        %v2679 = vadd.f32 %v2475, %v2678
        %2680 = vmatmul.bf16.gmra.mxu0 %v2484
        %v2681 = vpop.f32.mrf.mxu0
        %v2682 = vadd.f32 %v2478, %v2681
        %v2683 = vpop.f32.mrf.mxu0
        %v2684 = vadd.f32 %v2480, %v2683
        %2685 = vdwg.mxu0
        %v2686 = vld [vmem:[#allocation2] sm:$0xe]
        %s2687 = scalar_lea.vmem [#allocation9], 128
        %v2688 = vld [vmem:[%s2687] sm:$0xf]
        %v2689 = vld [vmem:[%s2687 + $0x4] sm:$0xf]
        %v2690 = vld [vmem:[%s2687 + $0x8] sm:$0xf]
        %v2691 = vld [vmem:[%s2687 + $0xc] sm:$0xf]
        %v2692 = vld [vmem:[%s2687 + $0x10] sm:$0xf]
        %v2693 = vld [vmem:[%s2687 + $0x14] sm:$0xf]
        %v2694 = vld [vmem:[%s2687 + $0x18] sm:$0xf]
        %v2695 = vld [vmem:[%s2687 + $0x1c] sm:$0xf]
        %v2696 = vld [vmem:[%s2687 + $0x20] sm:$0xf]
        %v2697 = vld [vmem:[%s2687 + $0x24] sm:$0xf]
        %v2698 = vld [vmem:[%s2687 + $0x28] sm:$0xf]
        %v2699 = vld [vmem:[%s2687 + $0x2c] sm:$0xf]
        %v2700 = vld [vmem:[%s2687 + $0x30] sm:$0xf]
        %v2701 = vld [vmem:[%s2687 + $0x34] sm:$0xf]
        %v2702 = vld [vmem:[%s2687 + $0x38] sm:$0xf]
        %v2703 = vld [vmem:[%s2687 + $0x3c] sm:$0xf]
        %v2705 = vunpack.c.l.b16 %v2686
        %v2706 = vpack.c.b16 %v2018, %v2705
        %vm2707 = vcmask 1046528
        %v2708 = vrot.slane %v2706, 1
        %v2709 = vrot.slane %v2066, 1
        %v2710 = vsel %vm2707, %v2708, %v2709
        %v2711 = vrot.slane %v2067, 1
        %v2712 = vsel %vm2707, %v2709, %v2711
        %v2713 = vrot.slane %v2068, 1
        %v2714 = vsel %vm2707, %v2711, %v2713
        %v2715 = vrot.slane %v2069, 1
        %v2716 = vsel %vm2707, %v2713, %v2715
        %v2717 = vrot.slane %v2070, 1
        %v2718 = vsel %vm2707, %v2715, %v2717
        %v2719 = vrot.slane %v2071, 1
        %v2720 = vsel %vm2707, %v2717, %v2719
        %v2721 = vrot.slane %v2072, 1
        %v2722 = vsel %vm2707, %v2719, %v2721
        %v2723 = vrot.slane %v2073, 1
        %v2724 = vsel %vm2707, %v2721, %v2723
        %v2725 = vrot.slane %v2074, 1
        %v2726 = vsel %vm2707, %v2723, %v2725
        %v2727 = vrot.slane %v2075, 1
        %v2728 = vsel %vm2707, %v2725, %v2727
        %v2729 = vrot.slane %v2076, 1
        %v2730 = vsel %vm2707, %v2727, %v2729
        %v2731 = vrot.slane %v2077, 1
        %v2732 = vsel %vm2707, %v2729, %v2731
        %v2733 = vrot.slane %v2078, 1
        %v2734 = vsel %vm2707, %v2731, %v2733
        %v2735 = vrot.slane %v2079, 1
        %v2736 = vsel %vm2707, %v2733, %v2735
        %v2737 = vrot.slane %v2080, 1
        %v2738 = vsel %vm2707, %v2735, %v2737
        %v2739 = vrot.slane %v2081, 1
        %v2740 = vsel %vm2707, %v2737, %v2739
        %v2741 = vrot.slane %v2082, 1
        %v2742 = vsel %vm2707, %v2739, %v2741
        %v2743 = vrot.slane %v2083, 1
        %v2744 = vsel %vm2707, %v2741, %v2743
        %v2745 = vrot.slane %v2084, 1
        %v2746 = vsel %vm2707, %v2743, %v2745
        %v2747 = vrot.slane %v2085, 1
        %v2748 = vsel %vm2707, %v2745, %v2747
        %v2749 = vrot.slane %v2086, 1
        %v2750 = vsel %vm2707, %v2747, %v2749
        %v2751 = vrot.slane %v2087, 1
        %v2752 = vsel %vm2707, %v2749, %v2751
        %v2753 = vrot.slane %v2088, 1
        %v2754 = vsel %vm2707, %v2751, %v2753
        %v2795 = vunpack.c.l.b16 %v2688
        %v2796 = vunpack.c.l.b16 %v2689
        %v2797 = vunpack.c.l.b16 %v2690
        %v2798 = vunpack.c.l.b16 %v2691
        %v2799 = vunpack.c.l.b16 %v2692
        %v2800 = vunpack.c.l.b16 %v2693
        %v2801 = vunpack.c.l.b16 %v2694
        %v2802 = vunpack.c.l.b16 %v2695
        %v2803 = vunpack.c.l.b16 %v2696
        %v2804 = vunpack.c.l.b16 %v2697
        %v2805 = vunpack.c.l.b16 %v2698
        %v2806 = vunpack.c.l.b16 %v2699
        %v2807 = vunpack.c.l.b16 %v2700
        %v2808 = vunpack.c.l.b16 %v2701
        %v2809 = vunpack.c.l.b16 %v2702
        %v2810 = vunpack.c.l.b16 %v2703
        %v2811 = vpack.c.b16 %v2796, %v2795
        %v2812 = vpack.c.b16 %v2798, %v2797
        %v2813 = vpack.c.b16 %v2800, %v2799
        %v2814 = vpack.c.b16 %v2802, %v2801
        %v2815 = vpack.c.b16 %v2804, %v2803
        %v2816 = vpack.c.b16 %v2806, %v2805
        %v2817 = vpack.c.b16 %v2808, %v2807
        %v2818 = vpack.c.b16 %v2810, %v2809
        %2827 = vmatpush.bf16.msra.mxu0 %v2818
        %2828 = vmatpush.bf16.msra.mxu0 %v2817
        %2829 = vmatpush.bf16.msra.mxu0 %v2816
        %2830 = vmatpush.bf16.msra.mxu0 %v2815
        %2831 = vmatpush.bf16.msra.mxu0 %v2814
        %2832 = vmatpush.bf16.msra.mxu0 %v2813
        %2833 = vmatpush.bf16.msra.mxu0 %v2812
        %2834 = vmatpush.bf16.msra.mxu0 %v2811
        %2835 = vmatmul.bf16.gmra.mxu0 %v2710
        %v2836 = vpop.f32.mrf.mxu0
        %v2837 = vadd.f32 0.0, %v2836
        %v2838 = vpop.f32.mrf.mxu0
        %v2839 = vadd.f32 0.0, %v2838
        %2840 = vmatmul.bf16.gmra.mxu0 %v2712
        %v2841 = vpop.f32.mrf.mxu0
        %v2842 = vadd.f32 0.0, %v2841
        %v2843 = vpop.f32.mrf.mxu0
        %v2844 = vadd.f32 0.0, %v2843
        %2845 = vmatmul.bf16.gmra.mxu0 %v2714
        %v2846 = vpop.f32.mrf.mxu0
        %v2847 = vadd.f32 0.0, %v2846
        %v2848 = vpop.f32.mrf.mxu0
        %v2849 = vadd.f32 0.0, %v2848
        %2850 = vmatmul.bf16.gmra.mxu0 %v2716
        %v2851 = vpop.f32.mrf.mxu0
        %v2852 = vadd.f32 0.0, %v2851
        %v2853 = vpop.f32.mrf.mxu0
        %v2854 = vadd.f32 0.0, %v2853
        %2855 = vmatmul.bf16.gmra.mxu0 %v2718
        %v2856 = vpop.f32.mrf.mxu0
        %v2857 = vadd.f32 0.0, %v2856
        %v2858 = vpop.f32.mrf.mxu0
        %v2859 = vadd.f32 0.0, %v2858
        %2860 = vmatmul.bf16.gmra.mxu0 %v2720
        %v2861 = vpop.f32.mrf.mxu0
        %v2862 = vadd.f32 0.0, %v2861
        %v2863 = vpop.f32.mrf.mxu0
        %v2864 = vadd.f32 0.0, %v2863
        %2865 = vmatmul.bf16.gmra.mxu0 %v2722
        %v2866 = vpop.f32.mrf.mxu0
        %v2867 = vadd.f32 0.0, %v2866
        %v2868 = vpop.f32.mrf.mxu0
        %v2869 = vadd.f32 0.0, %v2868
        %2870 = vmatmul.bf16.gmra.mxu0 %v2724
        %v2871 = vpop.f32.mrf.mxu0
        %v2872 = vadd.f32 0.0, %v2871
        %v2873 = vpop.f32.mrf.mxu0
        %v2874 = vadd.f32 0.0, %v2873
        %2875 = vmatmul.bf16.gmra.mxu0 %v2726
        %v2876 = vpop.f32.mrf.mxu0
        %v2877 = vadd.f32 0.0, %v2876
        %v2878 = vpop.f32.mrf.mxu0
        %v2879 = vadd.f32 0.0, %v2878
        %2880 = vmatmul.bf16.gmra.mxu0 %v2728
        %v2881 = vpop.f32.mrf.mxu0
        %v2882 = vadd.f32 0.0, %v2881
        %v2883 = vpop.f32.mrf.mxu0
        %v2884 = vadd.f32 0.0, %v2883
        %2885 = vmatmul.bf16.gmra.mxu0 %v2730
        %v2886 = vpop.f32.mrf.mxu0
        %v2887 = vadd.f32 0.0, %v2886
        %v2888 = vpop.f32.mrf.mxu0
        %v2889 = vadd.f32 0.0, %v2888
        %2890 = vmatmul.bf16.gmra.mxu0 %v2732
        %v2891 = vpop.f32.mrf.mxu0
        %v2892 = vadd.f32 0.0, %v2891
        %v2893 = vpop.f32.mrf.mxu0
        %v2894 = vadd.f32 0.0, %v2893
        %2895 = vmatmul.bf16.gmra.mxu0 %v2734
        %v2896 = vpop.f32.mrf.mxu0
        %v2897 = vadd.f32 0.0, %v2896
        %v2898 = vpop.f32.mrf.mxu0
        %v2899 = vadd.f32 0.0, %v2898
        %2900 = vmatmul.bf16.gmra.mxu0 %v2736
        %v2901 = vpop.f32.mrf.mxu0
        %v2902 = vadd.f32 0.0, %v2901
        %v2903 = vpop.f32.mrf.mxu0
        %v2904 = vadd.f32 0.0, %v2903
        %2905 = vmatmul.bf16.gmra.mxu0 %v2738
        %v2906 = vpop.f32.mrf.mxu0
        %v2907 = vadd.f32 0.0, %v2906
        %v2908 = vpop.f32.mrf.mxu0
        %v2909 = vadd.f32 0.0, %v2908
        %2910 = vmatmul.bf16.gmra.mxu0 %v2740
        %v2911 = vpop.f32.mrf.mxu0
        %v2912 = vadd.f32 0.0, %v2911
        %v2913 = vpop.f32.mrf.mxu0
        %v2914 = vadd.f32 0.0, %v2913
        %2915 = vmatmul.bf16.gmra.mxu0 %v2742
        %v2916 = vpop.f32.mrf.mxu0
        %v2917 = vadd.f32 0.0, %v2916
        %v2918 = vpop.f32.mrf.mxu0
        %v2919 = vadd.f32 0.0, %v2918
        %2920 = vmatmul.bf16.gmra.mxu0 %v2744
        %v2921 = vpop.f32.mrf.mxu0
        %v2922 = vadd.f32 0.0, %v2921
        %v2923 = vpop.f32.mrf.mxu0
        %v2924 = vadd.f32 0.0, %v2923
        %2925 = vmatmul.bf16.gmra.mxu0 %v2746
        %v2926 = vpop.f32.mrf.mxu0
        %v2927 = vadd.f32 0.0, %v2926
        %v2928 = vpop.f32.mrf.mxu0
        %v2929 = vadd.f32 0.0, %v2928
        %2930 = vmatmul.bf16.gmra.mxu0 %v2748
        %v2931 = vpop.f32.mrf.mxu0
        %v2932 = vadd.f32 0.0, %v2931
        %v2933 = vpop.f32.mrf.mxu0
        %v2934 = vadd.f32 0.0, %v2933
        %2935 = vmatmul.bf16.gmra.mxu0 %v2750
        %v2936 = vpop.f32.mrf.mxu0
        %v2937 = vadd.f32 0.0, %v2936
        %v2938 = vpop.f32.mrf.mxu0
        %v2939 = vadd.f32 0.0, %v2938
        %2940 = vmatmul.bf16.gmra.mxu0 %v2752
        %v2941 = vpop.f32.mrf.mxu0
        %v2942 = vadd.f32 0.0, %v2941
        %v2943 = vpop.f32.mrf.mxu0
        %v2944 = vadd.f32 0.0, %v2943
        %2945 = vmatmul.bf16.gmra.mxu0 %v2754
        %v2946 = vpop.f32.mrf.mxu0
        %v2947 = vadd.f32 0.0, %v2946
        %v2948 = vpop.f32.mrf.mxu0
        %v2949 = vadd.f32 0.0, %v2948
        %2950 = vmatmul.bf16.gmra.mxu0 %v2753
        %v2951 = vpop.f32.mrf.mxu0
        %v2952 = vadd.f32 0.0, %v2951
        %v2953 = vpop.f32.mrf.mxu0
        %v2954 = vadd.f32 0.0, %v2953
        %2955 = vdwg.mxu0
        %v2956 = vadd.f32 %v2567, %v2837
        %v2957 = vadd.f32 %v2569, %v2839
        %v2958 = vadd.f32 %v2572, %v2842
        %v2959 = vadd.f32 %v2574, %v2844
        %v2960 = vadd.f32 %v2577, %v2847
        %v2961 = vadd.f32 %v2579, %v2849
        %v2962 = vadd.f32 %v2582, %v2852
        %v2963 = vadd.f32 %v2584, %v2854
        %v2964 = vadd.f32 %v2587, %v2857
        %v2965 = vadd.f32 %v2589, %v2859
        %v2966 = vadd.f32 %v2592, %v2862
        %v2967 = vadd.f32 %v2594, %v2864
        %v2968 = vadd.f32 %v2597, %v2867
        %v2969 = vadd.f32 %v2599, %v2869
        %v2970 = vadd.f32 %v2602, %v2872
        %v2971 = vadd.f32 %v2604, %v2874
        %v2972 = vadd.f32 %v2607, %v2877
        %v2973 = vadd.f32 %v2609, %v2879
        %v2974 = vadd.f32 %v2612, %v2882
        %v2975 = vadd.f32 %v2614, %v2884
        %v2976 = vadd.f32 %v2617, %v2887
        %v2977 = vadd.f32 %v2619, %v2889
        %v2978 = vadd.f32 %v2622, %v2892
        %v2979 = vadd.f32 %v2624, %v2894
        %v2980 = vadd.f32 %v2627, %v2897
        %v2981 = vadd.f32 %v2629, %v2899
        %v2982 = vadd.f32 %v2632, %v2902
        %v2983 = vadd.f32 %v2634, %v2904
        %v2984 = vadd.f32 %v2637, %v2907
        %v2985 = vadd.f32 %v2639, %v2909
        %v2986 = vadd.f32 %v2642, %v2912
        %v2987 = vadd.f32 %v2644, %v2914
        %v2988 = vadd.f32 %v2647, %v2917
        %v2989 = vadd.f32 %v2649, %v2919
        %v2990 = vadd.f32 %v2652, %v2922
        %v2991 = vadd.f32 %v2654, %v2924
        %v2992 = vadd.f32 %v2657, %v2927
        %v2993 = vadd.f32 %v2659, %v2929
        %v2994 = vadd.f32 %v2662, %v2932
        %v2995 = vadd.f32 %v2664, %v2934
        %v2996 = vadd.f32 %v2667, %v2937
        %v2997 = vadd.f32 %v2669, %v2939
        %v2998 = vadd.f32 %v2672, %v2942
        %v2999 = vadd.f32 %v2674, %v2944
        %v3000 = vadd.f32 %v2677, %v2947
        %v3001 = vadd.f32 %v2679, %v2949
        %v3002 = vadd.f32 %v2682, %v2952
        %v3003 = vadd.f32 %v2684, %v2954
        %v3004 = vld [vmem:[#allocation2 + $0x8] sm:$0xc]
        %v3005 = vld [vmem:[#allocation2 + $0xc] sm:$0xf]
        %v3006 = vld [vmem:[#allocation2 + $0x10] sm:$0xf]
        %v3007 = vld [vmem:[#allocation2 + $0x14] sm:$0xf]
        %v3008 = vld [vmem:[#allocation2 + $0x18] sm:$0xf]
        %v3009 = vld [vmem:[#allocation2 + $0x1c] sm:$0xf]
        %v3010 = vld [vmem:[#allocation2 + $0x20] sm:$0xf]
        %v3011 = vld [vmem:[#allocation2 + $0x24] sm:$0xf]
        %v3012 = vld [vmem:[#allocation2 + $0x28] sm:$0xf]
        %v3013 = vld [vmem:[#allocation2 + $0x2c] sm:$0xf]
        %v3014 = vld [vmem:[#allocation2 + $0x30] sm:$0xf]
        %v3015 = vld [vmem:[#allocation2 + $0x34] sm:$0xf]
        %v3016 = vld [vmem:[#allocation2 + $0x38] sm:$0xf]
        %v3017 = vld [vmem:[#allocation2 + $0x3c] sm:$0xf]
        %v3018 = vld [vmem:[#allocation2 + $0x40] sm:$0xf]
        %v3019 = vld [vmem:[#allocation2 + $0x44] sm:$0xf]
        %v3020 = vld [vmem:[#allocation2 + $0x48] sm:$0xf]
        %v3021 = vld [vmem:[#allocation2 + $0x4c] sm:$0xf]
        %v3022 = vld [vmem:[#allocation2 + $0x50] sm:$0xf]
        %v3023 = vld [vmem:[#allocation2 + $0x54] sm:$0xf]
        %v3024 = vld [vmem:[#allocation2 + $0x58] sm:$0xf]
        %v3025 = vld [vmem:[#allocation2 + $0x5c] sm:$0xf]
        %v3026 = vld [vmem:[#allocation2 + $0x60] sm:$0xf]
        %v3027 = vld [vmem:[#allocation2 + $0x64] sm:$0xf]
        %v3028 = vld [vmem:[#allocation2 + $0x68] sm:$0xf]
        %v3029 = vld [vmem:[#allocation2 + $0x6c] sm:$0xf]
        %v3030 = vld [vmem:[#allocation2 + $0x70] sm:$0xf]
        %v3031 = vld [vmem:[#allocation2 + $0x74] sm:$0xf]
        %v3032 = vld [vmem:[#allocation2 + $0x78] sm:$0xf]
        %v3033 = vld [vmem:[#allocation2 + $0x7c] sm:$0xf]
        %v3034 = vld [vmem:[#allocation2 + $0x80] sm:$0xf]
        %v3035 = vld [vmem:[#allocation2 + $0x84] sm:$0xf]
        %v3036 = vld [vmem:[#allocation2 + $0x88] sm:$0xf]
        %v3037 = vld [vmem:[#allocation2 + $0x8c] sm:$0xf]
        %v3038 = vld [vmem:[#allocation2 + $0x90] sm:$0xf]
        %v3039 = vld [vmem:[#allocation2 + $0x94] sm:$0xf]
        %v3040 = vld [vmem:[#allocation2 + $0x98] sm:$0xf]
        %v3041 = vld [vmem:[#allocation2 + $0x9c] sm:$0xf]
        %v3042 = vld [vmem:[#allocation2 + $0xa0] sm:$0xf]
        %v3043 = vld [vmem:[#allocation2 + $0xa4] sm:$0xf]
        %v3044 = vld [vmem:[#allocation2 + $0xa8] sm:$0xf]
        %v3045 = vld [vmem:[#allocation2 + $0xac] sm:$0xf]
        %v3046 = vld [vmem:[#allocation2 + $0xb0] sm:$0xf]
        %v3047 = vld [vmem:[#allocation2 + $0xb4] sm:$0xf]
        %v3048 = vld [vmem:[#allocation2 + $0xb8] sm:$0xf]
        %v3049 = vld [vmem:[#allocation2 + $0xbc] sm:$0xf]
        %v3050 = vld [vmem:[#allocation2 + $0xc0] sm:$0xf]
        %v3051 = vld [vmem:[#allocation2 + $0xc4] sm:$0xf]
        %s3052 = scalar_lea.vmem [#allocation9], 192
        %v3053 = vld [vmem:[%s3052] sm:$0xf]
        %v3054 = vld [vmem:[%s3052 + $0x4] sm:$0xf]
        %v3055 = vld [vmem:[%s3052 + $0x8] sm:$0xf]
        %v3056 = vld [vmem:[%s3052 + $0xc] sm:$0xf]
        %v3057 = vld [vmem:[%s3052 + $0x10] sm:$0xf]
        %v3058 = vld [vmem:[%s3052 + $0x14] sm:$0xf]
        %v3059 = vld [vmem:[%s3052 + $0x18] sm:$0xf]
        %v3060 = vld [vmem:[%s3052 + $0x1c] sm:$0xf]
        %v3061 = vld [vmem:[%s3052 + $0x20] sm:$0xf]
        %v3062 = vld [vmem:[%s3052 + $0x24] sm:$0xf]
        %v3063 = vld [vmem:[%s3052 + $0x28] sm:$0xf]
        %v3064 = vld [vmem:[%s3052 + $0x2c] sm:$0xf]
        %v3065 = vld [vmem:[%s3052 + $0x30] sm:$0xf]
        %v3066 = vld [vmem:[%s3052 + $0x34] sm:$0xf]
        %v3067 = vld [vmem:[%s3052 + $0x38] sm:$0xf]
        %v3068 = vld [vmem:[%s3052 + $0x3c] sm:$0xf]
        %v3069 = vld [vmem:[#allocation2 + $0xc8] sm:$0x1]
        %s3070 = scalar_lea.vmem [#allocation9], 256
        %v3071 = vld [vmem:[%s3070] sm:$0xf]
        %v3072 = vld [vmem:[%s3070 + $0x4] sm:$0xf]
        %v3073 = vld [vmem:[%s3070 + $0x8] sm:$0xf]
        %v3074 = vld [vmem:[%s3070 + $0xc] sm:$0xf]
        %v3075 = vld [vmem:[%s3070 + $0x10] sm:$0xf]
        %v3076 = vld [vmem:[%s3070 + $0x14] sm:$0xf]
        %v3077 = vld [vmem:[%s3070 + $0x18] sm:$0xf]
        %v3078 = vld [vmem:[%s3070 + $0x1c] sm:$0xf]
        %v3079 = vld [vmem:[%s3070 + $0x20] sm:$0xf]
        %v3080 = vld [vmem:[%s3070 + $0x24] sm:$0xf]
        %v3081 = vld [vmem:[%s3070 + $0x28] sm:$0xf]
        %v3082 = vld [vmem:[%s3070 + $0x2c] sm:$0xf]
        %v3083 = vld [vmem:[%s3070 + $0x30] sm:$0xf]
        %v3084 = vld [vmem:[%s3070 + $0x34] sm:$0xf]
        %v3085 = vld [vmem:[%s3070 + $0x38] sm:$0xf]
        %v3086 = vld [vmem:[%s3070 + $0x3c] sm:$0xf]
        %v3136 = vunpack.c.l.b16 %v3004
        %v3137 = vunpack.c.l.b16 %v3005
        %v3138 = vunpack.c.l.b16 %v3006
        %v3139 = vunpack.c.l.b16 %v3007
        %v3140 = vunpack.c.l.b16 %v3008
        %v3141 = vunpack.c.l.b16 %v3009
        %v3142 = vunpack.c.l.b16 %v3010
        %v3143 = vunpack.c.l.b16 %v3011
        %v3144 = vunpack.c.l.b16 %v3012
        %v3145 = vunpack.c.l.b16 %v3013
        %v3146 = vunpack.c.l.b16 %v3014
        %v3147 = vunpack.c.l.b16 %v3015
        %v3148 = vunpack.c.l.b16 %v3016
        %v3149 = vunpack.c.l.b16 %v3017
        %v3150 = vunpack.c.l.b16 %v3018
        %v3151 = vunpack.c.l.b16 %v3019
        %v3152 = vunpack.c.l.b16 %v3020
        %v3153 = vunpack.c.l.b16 %v3021
        %v3154 = vunpack.c.l.b16 %v3022
        %v3155 = vunpack.c.l.b16 %v3023
        %v3156 = vunpack.c.l.b16 %v3024
        %v3157 = vunpack.c.l.b16 %v3025
        %v3158 = vunpack.c.l.b16 %v3026
        %v3159 = vunpack.c.l.b16 %v3027
        %v3160 = vunpack.c.l.b16 %v3028
        %v3161 = vunpack.c.l.b16 %v3029
        %v3162 = vunpack.c.l.b16 %v3030
        %v3163 = vunpack.c.l.b16 %v3031
        %v3164 = vunpack.c.l.b16 %v3032
        %v3165 = vunpack.c.l.b16 %v3033
        %v3166 = vunpack.c.l.b16 %v3034
        %v3167 = vunpack.c.l.b16 %v3035
        %v3168 = vunpack.c.l.b16 %v3036
        %v3169 = vunpack.c.l.b16 %v3037
        %v3170 = vunpack.c.l.b16 %v3038
        %v3171 = vunpack.c.l.b16 %v3039
        %v3172 = vunpack.c.l.b16 %v3040
        %v3173 = vunpack.c.l.b16 %v3041
        %v3174 = vunpack.c.l.b16 %v3042
        %v3175 = vunpack.c.l.b16 %v3043
        %v3176 = vunpack.c.l.b16 %v3044
        %v3177 = vunpack.c.l.b16 %v3045
        %v3178 = vunpack.c.l.b16 %v3046
        %v3179 = vunpack.c.l.b16 %v3047
        %v3180 = vunpack.c.l.b16 %v3048
        %v3181 = vunpack.c.l.b16 %v3049
        %v3182 = vunpack.c.l.b16 %v3050
        %v3183 = vunpack.c.l.b16 %v3051
        %v3184 = vunpack.c.l.b16 %v3069
        %v3185 = vpack.c.b16 %v3137, %v3136
        %v3186 = vpack.c.b16 %v3139, %v3138
        %v3187 = vpack.c.b16 %v3141, %v3140
        %v3188 = vpack.c.b16 %v3143, %v3142
        %v3189 = vpack.c.b16 %v3145, %v3144
        %v3190 = vpack.c.b16 %v3147, %v3146
        %v3191 = vpack.c.b16 %v3149, %v3148
        %v3192 = vpack.c.b16 %v3151, %v3150
        %v3193 = vpack.c.b16 %v3153, %v3152
        %v3194 = vpack.c.b16 %v3155, %v3154
        %v3195 = vpack.c.b16 %v3157, %v3156
        %v3196 = vpack.c.b16 %v3159, %v3158
        %v3197 = vpack.c.b16 %v3161, %v3160
        %v3198 = vpack.c.b16 %v3163, %v3162
        %v3199 = vpack.c.b16 %v3165, %v3164
        %v3200 = vpack.c.b16 %v3167, %v3166
        %v3201 = vpack.c.b16 %v3169, %v3168
        %v3202 = vpack.c.b16 %v3171, %v3170
        %v3203 = vpack.c.b16 %v3173, %v3172
        %v3204 = vpack.c.b16 %v3175, %v3174
        %v3205 = vpack.c.b16 %v3177, %v3176
        %v3206 = vpack.c.b16 %v3179, %v3178
        %v3207 = vpack.c.b16 %v3181, %v3180
        %v3208 = vpack.c.b16 %v3183, %v3182
        %v3209 = vpack.c.b16 %v3184, %v3184
        %vm3210 = vsmask.f32 5376
        %v3212 = vshrl.u32 %v3185, 16
        %v3214 = vrot.slane %v3212, 2
        %v3215 = vshll.u32 %v3185, 16
        %v3217 = vrot.slane %v3215, 3
        %v3218 = vor.u32 %v3214, %v3217
        %v3220 = vshrl.u32 %v3186, 16
        %v3222 = vrot.slane %v3220, 2
        %v3223 = vshll.u32 %v3186, 16
        %v3225 = vrot.slane %v3223, 3
        %v3226 = vor.u32 %v3222, %v3225
        %v3227 = vsel %vm3210, %v3218, %v3226
        %v3229 = vshrl.u32 %v3187, 16
        %v3231 = vrot.slane %v3229, 2
        %v3232 = vshll.u32 %v3187, 16
        %v3234 = vrot.slane %v3232, 3
        %v3235 = vor.u32 %v3231, %v3234
        %v3236 = vsel %vm3210, %v3226, %v3235
        %v3238 = vshrl.u32 %v3188, 16
        %v3240 = vrot.slane %v3238, 2
        %v3241 = vshll.u32 %v3188, 16
        %v3243 = vrot.slane %v3241, 3
        %v3244 = vor.u32 %v3240, %v3243
        %v3245 = vsel %vm3210, %v3235, %v3244
        %v3247 = vshrl.u32 %v3189, 16
        %v3249 = vrot.slane %v3247, 2
        %v3250 = vshll.u32 %v3189, 16
        %v3252 = vrot.slane %v3250, 3
        %v3253 = vor.u32 %v3249, %v3252
        %v3254 = vsel %vm3210, %v3244, %v3253
        %v3256 = vshrl.u32 %v3190, 16
        %v3258 = vrot.slane %v3256, 2
        %v3259 = vshll.u32 %v3190, 16
        %v3261 = vrot.slane %v3259, 3
        %v3262 = vor.u32 %v3258, %v3261
        %v3263 = vsel %vm3210, %v3253, %v3262
        %v3265 = vshrl.u32 %v3191, 16
        %v3267 = vrot.slane %v3265, 2
        %v3268 = vshll.u32 %v3191, 16
        %v3270 = vrot.slane %v3268, 3
        %v3271 = vor.u32 %v3267, %v3270
        %v3272 = vsel %vm3210, %v3262, %v3271
        %v3274 = vshrl.u32 %v3192, 16
        %v3276 = vrot.slane %v3274, 2
        %v3277 = vshll.u32 %v3192, 16
        %v3279 = vrot.slane %v3277, 3
        %v3280 = vor.u32 %v3276, %v3279
        %v3281 = vsel %vm3210, %v3271, %v3280
        %v3283 = vshrl.u32 %v3193, 16
        %v3285 = vrot.slane %v3283, 2
        %v3286 = vshll.u32 %v3193, 16
        %v3288 = vrot.slane %v3286, 3
        %v3289 = vor.u32 %v3285, %v3288
        %v3290 = vsel %vm3210, %v3280, %v3289
        %v3292 = vshrl.u32 %v3194, 16
        %v3294 = vrot.slane %v3292, 2
        %v3295 = vshll.u32 %v3194, 16
        %v3297 = vrot.slane %v3295, 3
        %v3298 = vor.u32 %v3294, %v3297
        %v3299 = vsel %vm3210, %v3289, %v3298
        %v3301 = vshrl.u32 %v3195, 16
        %v3303 = vrot.slane %v3301, 2
        %v3304 = vshll.u32 %v3195, 16
        %v3306 = vrot.slane %v3304, 3
        %v3307 = vor.u32 %v3303, %v3306
        %v3308 = vsel %vm3210, %v3298, %v3307
        %v3310 = vshrl.u32 %v3196, 16
        %v3312 = vrot.slane %v3310, 2
        %v3313 = vshll.u32 %v3196, 16
        %v3315 = vrot.slane %v3313, 3
        %v3316 = vor.u32 %v3312, %v3315
        %v3317 = vsel %vm3210, %v3307, %v3316
        %v3319 = vshrl.u32 %v3197, 16
        %v3321 = vrot.slane %v3319, 2
        %v3322 = vshll.u32 %v3197, 16
        %v3324 = vrot.slane %v3322, 3
        %v3325 = vor.u32 %v3321, %v3324
        %v3326 = vsel %vm3210, %v3316, %v3325
        %v3328 = vshrl.u32 %v3198, 16
        %v3330 = vrot.slane %v3328, 2
        %v3331 = vshll.u32 %v3198, 16
        %v3333 = vrot.slane %v3331, 3
        %v3334 = vor.u32 %v3330, %v3333
        %v3335 = vsel %vm3210, %v3325, %v3334
        %v3337 = vshrl.u32 %v3199, 16
        %v3339 = vrot.slane %v3337, 2
        %v3340 = vshll.u32 %v3199, 16
        %v3342 = vrot.slane %v3340, 3
        %v3343 = vor.u32 %v3339, %v3342
        %v3344 = vsel %vm3210, %v3334, %v3343
        %v3346 = vshrl.u32 %v3200, 16
        %v3348 = vrot.slane %v3346, 2
        %v3349 = vshll.u32 %v3200, 16
        %v3351 = vrot.slane %v3349, 3
        %v3352 = vor.u32 %v3348, %v3351
        %v3353 = vsel %vm3210, %v3343, %v3352
        %v3355 = vshrl.u32 %v3201, 16
        %v3357 = vrot.slane %v3355, 2
        %v3358 = vshll.u32 %v3201, 16
        %v3360 = vrot.slane %v3358, 3
        %v3361 = vor.u32 %v3357, %v3360
        %v3362 = vsel %vm3210, %v3352, %v3361
        %v3364 = vshrl.u32 %v3202, 16
        %v3366 = vrot.slane %v3364, 2
        %v3367 = vshll.u32 %v3202, 16
        %v3369 = vrot.slane %v3367, 3
        %v3370 = vor.u32 %v3366, %v3369
        %v3371 = vsel %vm3210, %v3361, %v3370
        %v3373 = vshrl.u32 %v3203, 16
        %v3375 = vrot.slane %v3373, 2
        %v3376 = vshll.u32 %v3203, 16
        %v3378 = vrot.slane %v3376, 3
        %v3379 = vor.u32 %v3375, %v3378
        %v3380 = vsel %vm3210, %v3370, %v3379
        %v3382 = vshrl.u32 %v3204, 16
        %v3384 = vrot.slane %v3382, 2
        %v3385 = vshll.u32 %v3204, 16
        %v3387 = vrot.slane %v3385, 3
        %v3388 = vor.u32 %v3384, %v3387
        %v3389 = vsel %vm3210, %v3379, %v3388
        %v3391 = vshrl.u32 %v3205, 16
        %v3393 = vrot.slane %v3391, 2
        %v3394 = vshll.u32 %v3205, 16
        %v3396 = vrot.slane %v3394, 3
        %v3397 = vor.u32 %v3393, %v3396
        %v3398 = vsel %vm3210, %v3388, %v3397
        %v3400 = vshrl.u32 %v3206, 16
        %v3402 = vrot.slane %v3400, 2
        %v3403 = vshll.u32 %v3206, 16
        %v3405 = vrot.slane %v3403, 3
        %v3406 = vor.u32 %v3402, %v3405
        %v3407 = vsel %vm3210, %v3397, %v3406
        %v3409 = vshrl.u32 %v3207, 16
        %v3411 = vrot.slane %v3409, 2
        %v3412 = vshll.u32 %v3207, 16
        %v3414 = vrot.slane %v3412, 3
        %v3415 = vor.u32 %v3411, %v3414
        %v3416 = vsel %vm3210, %v3406, %v3415
        %v3418 = vshrl.u32 %v3208, 16
        %v3420 = vrot.slane %v3418, 2
        %v3421 = vshll.u32 %v3208, 16
        %v3423 = vrot.slane %v3421, 3
        %v3424 = vor.u32 %v3420, %v3423
        %v3425 = vsel %vm3210, %v3415, %v3424
        %v3427 = vshll.u32 %v3209, 16
        %v3429 = vrot.slane %v3427, 3
        %v3430 = vsel %vm3210, %v3424, %v3429
        %v3471 = vunpack.c.l.b16 %v3071
        %v3472 = vunpack.c.l.b16 %v3072
        %v3473 = vunpack.c.l.b16 %v3073
        %v3474 = vunpack.c.l.b16 %v3074
        %v3475 = vunpack.c.l.b16 %v3075
        %v3476 = vunpack.c.l.b16 %v3076
        %v3477 = vunpack.c.l.b16 %v3077
        %v3478 = vunpack.c.l.b16 %v3078
        %v3479 = vunpack.c.l.b16 %v3079
        %v3480 = vunpack.c.l.b16 %v3080
        %v3481 = vunpack.c.l.b16 %v3081
        %v3482 = vunpack.c.l.b16 %v3082
        %v3483 = vunpack.c.l.b16 %v3083
        %v3484 = vunpack.c.l.b16 %v3084
        %v3485 = vunpack.c.l.b16 %v3085
        %v3486 = vunpack.c.l.b16 %v3086
        %v3487 = vpack.c.b16 %v3472, %v3471
        %v3488 = vpack.c.b16 %v3474, %v3473
        %v3489 = vpack.c.b16 %v3476, %v3475
        %v3490 = vpack.c.b16 %v3478, %v3477
        %v3491 = vpack.c.b16 %v3480, %v3479
        %v3492 = vpack.c.b16 %v3482, %v3481
        %v3493 = vpack.c.b16 %v3484, %v3483
        %v3494 = vpack.c.b16 %v3486, %v3485
        %3503 = vmatpush.bf16.msra.mxu0 %v3494
        %3504 = vmatpush.bf16.msra.mxu0 %v3493
        %3505 = vmatpush.bf16.msra.mxu0 %v3492
        %3506 = vmatpush.bf16.msra.mxu0 %v3491
        %3507 = vmatpush.bf16.msra.mxu0 %v3490
        %3508 = vmatpush.bf16.msra.mxu0 %v3489
        %3509 = vmatpush.bf16.msra.mxu0 %v3488
        %3510 = vmatpush.bf16.msra.mxu0 %v3487
        %3511 = vmatmul.bf16.gmra.mxu0 %v3227
        %v3512 = vpop.f32.mrf.mxu0
        %v3513 = vadd.f32 0.0, %v3512
        %v3514 = vpop.f32.mrf.mxu0
        %v3515 = vadd.f32 0.0, %v3514
        %3516 = vmatmul.bf16.gmra.mxu0 %v3236
        %v3517 = vpop.f32.mrf.mxu0
        %v3518 = vadd.f32 0.0, %v3517
        %v3519 = vpop.f32.mrf.mxu0
        %v3520 = vadd.f32 0.0, %v3519
        %3521 = vmatmul.bf16.gmra.mxu0 %v3245
        %v3522 = vpop.f32.mrf.mxu0
        %v3523 = vadd.f32 0.0, %v3522
        %v3524 = vpop.f32.mrf.mxu0
        %v3525 = vadd.f32 0.0, %v3524
        %3526 = vmatmul.bf16.gmra.mxu0 %v3254
        %v3527 = vpop.f32.mrf.mxu0
        %v3528 = vadd.f32 0.0, %v3527
        %v3529 = vpop.f32.mrf.mxu0
        %v3530 = vadd.f32 0.0, %v3529
        %3531 = vmatmul.bf16.gmra.mxu0 %v3263
        %v3532 = vpop.f32.mrf.mxu0
        %v3533 = vadd.f32 0.0, %v3532
        %v3534 = vpop.f32.mrf.mxu0
        %v3535 = vadd.f32 0.0, %v3534
        %3536 = vmatmul.bf16.gmra.mxu0 %v3272
        %v3537 = vpop.f32.mrf.mxu0
        %v3538 = vadd.f32 0.0, %v3537
        %v3539 = vpop.f32.mrf.mxu0
        %v3540 = vadd.f32 0.0, %v3539
        %3541 = vmatmul.bf16.gmra.mxu0 %v3281
        %v3542 = vpop.f32.mrf.mxu0
        %v3543 = vadd.f32 0.0, %v3542
        %v3544 = vpop.f32.mrf.mxu0
        %v3545 = vadd.f32 0.0, %v3544
        %3546 = vmatmul.bf16.gmra.mxu0 %v3290
        %v3547 = vpop.f32.mrf.mxu0
        %v3548 = vadd.f32 0.0, %v3547
        %v3549 = vpop.f32.mrf.mxu0
        %v3550 = vadd.f32 0.0, %v3549
        %3551 = vmatmul.bf16.gmra.mxu0 %v3299
        %v3552 = vpop.f32.mrf.mxu0
        %v3553 = vadd.f32 0.0, %v3552
        %v3554 = vpop.f32.mrf.mxu0
        %v3555 = vadd.f32 0.0, %v3554
        %3556 = vmatmul.bf16.gmra.mxu0 %v3308
        %v3557 = vpop.f32.mrf.mxu0
        %v3558 = vadd.f32 0.0, %v3557
        %v3559 = vpop.f32.mrf.mxu0
        %v3560 = vadd.f32 0.0, %v3559
        %3561 = vmatmul.bf16.gmra.mxu0 %v3317
        %v3562 = vpop.f32.mrf.mxu0
        %v3563 = vadd.f32 0.0, %v3562
        %v3564 = vpop.f32.mrf.mxu0
        %v3565 = vadd.f32 0.0, %v3564
        %3566 = vmatmul.bf16.gmra.mxu0 %v3326
        %v3567 = vpop.f32.mrf.mxu0
        %v3568 = vadd.f32 0.0, %v3567
        %v3569 = vpop.f32.mrf.mxu0
        %v3570 = vadd.f32 0.0, %v3569
        %3571 = vmatmul.bf16.gmra.mxu0 %v3335
        %v3572 = vpop.f32.mrf.mxu0
        %v3573 = vadd.f32 0.0, %v3572
        %v3574 = vpop.f32.mrf.mxu0
        %v3575 = vadd.f32 0.0, %v3574
        %3576 = vmatmul.bf16.gmra.mxu0 %v3344
        %v3577 = vpop.f32.mrf.mxu0
        %v3578 = vadd.f32 0.0, %v3577
        %v3579 = vpop.f32.mrf.mxu0
        %v3580 = vadd.f32 0.0, %v3579
        %3581 = vmatmul.bf16.gmra.mxu0 %v3353
        %v3582 = vpop.f32.mrf.mxu0
        %v3583 = vadd.f32 0.0, %v3582
        %v3584 = vpop.f32.mrf.mxu0
        %v3585 = vadd.f32 0.0, %v3584
        %3586 = vmatmul.bf16.gmra.mxu0 %v3362
        %v3587 = vpop.f32.mrf.mxu0
        %v3588 = vadd.f32 0.0, %v3587
        %v3589 = vpop.f32.mrf.mxu0
        %v3590 = vadd.f32 0.0, %v3589
        %3591 = vmatmul.bf16.gmra.mxu0 %v3371
        %v3592 = vpop.f32.mrf.mxu0
        %v3593 = vadd.f32 0.0, %v3592
        %v3594 = vpop.f32.mrf.mxu0
        %v3595 = vadd.f32 0.0, %v3594
        %3596 = vmatmul.bf16.gmra.mxu0 %v3380
        %v3597 = vpop.f32.mrf.mxu0
        %v3598 = vadd.f32 0.0, %v3597
        %v3599 = vpop.f32.mrf.mxu0
        %v3600 = vadd.f32 0.0, %v3599
        %3601 = vmatmul.bf16.gmra.mxu0 %v3389
        %v3602 = vpop.f32.mrf.mxu0
        %v3603 = vadd.f32 0.0, %v3602
        %v3604 = vpop.f32.mrf.mxu0
        %v3605 = vadd.f32 0.0, %v3604
        %3606 = vmatmul.bf16.gmra.mxu0 %v3398
        %v3607 = vpop.f32.mrf.mxu0
        %v3608 = vadd.f32 0.0, %v3607
        %v3609 = vpop.f32.mrf.mxu0
        %v3610 = vadd.f32 0.0, %v3609
        %3611 = vmatmul.bf16.gmra.mxu0 %v3407
        %v3612 = vpop.f32.mrf.mxu0
        %v3613 = vadd.f32 0.0, %v3612
        %v3614 = vpop.f32.mrf.mxu0
        %v3615 = vadd.f32 0.0, %v3614
        %3616 = vmatmul.bf16.gmra.mxu0 %v3416
        %v3617 = vpop.f32.mrf.mxu0
        %v3618 = vadd.f32 0.0, %v3617
        %v3619 = vpop.f32.mrf.mxu0
        %v3620 = vadd.f32 0.0, %v3619
        %3621 = vmatmul.bf16.gmra.mxu0 %v3425
        %v3622 = vpop.f32.mrf.mxu0
        %v3623 = vadd.f32 0.0, %v3622
        %v3624 = vpop.f32.mrf.mxu0
        %v3625 = vadd.f32 0.0, %v3624
        %3626 = vmatmul.bf16.gmra.mxu0 %v3430
        %v3627 = vpop.f32.mrf.mxu0
        %v3628 = vadd.f32 0.0, %v3627
        %v3629 = vpop.f32.mrf.mxu0
        %v3630 = vadd.f32 0.0, %v3629
        %3631 = vdwg.mxu0
        %vm3632 = vcmask 1045504
        %v3633 = vrot.slane %v3185, 2
        %v3634 = vrot.slane %v3186, 2
        %v3635 = vsel %vm3632, %v3633, %v3634
        %v3636 = vrot.slane %v3187, 2
        %v3637 = vsel %vm3632, %v3634, %v3636
        %v3638 = vrot.slane %v3188, 2
        %v3639 = vsel %vm3632, %v3636, %v3638
        %v3640 = vrot.slane %v3189, 2
        %v3641 = vsel %vm3632, %v3638, %v3640
        %v3642 = vrot.slane %v3190, 2
        %v3643 = vsel %vm3632, %v3640, %v3642
        %v3644 = vrot.slane %v3191, 2
        %v3645 = vsel %vm3632, %v3642, %v3644
        %v3646 = vrot.slane %v3192, 2
        %v3647 = vsel %vm3632, %v3644, %v3646
        %v3648 = vrot.slane %v3193, 2
        %v3649 = vsel %vm3632, %v3646, %v3648
        %v3650 = vrot.slane %v3194, 2
        %v3651 = vsel %vm3632, %v3648, %v3650
        %v3652 = vrot.slane %v3195, 2
        %v3653 = vsel %vm3632, %v3650, %v3652
        %v3654 = vrot.slane %v3196, 2
        %v3655 = vsel %vm3632, %v3652, %v3654
        %v3656 = vrot.slane %v3197, 2
        %v3657 = vsel %vm3632, %v3654, %v3656
        %v3658 = vrot.slane %v3198, 2
        %v3659 = vsel %vm3632, %v3656, %v3658
        %v3660 = vrot.slane %v3199, 2
        %v3661 = vsel %vm3632, %v3658, %v3660
        %v3662 = vrot.slane %v3200, 2
        %v3663 = vsel %vm3632, %v3660, %v3662
        %v3664 = vrot.slane %v3201, 2
        %v3665 = vsel %vm3632, %v3662, %v3664
        %v3666 = vrot.slane %v3202, 2
        %v3667 = vsel %vm3632, %v3664, %v3666
        %v3668 = vrot.slane %v3203, 2
        %v3669 = vsel %vm3632, %v3666, %v3668
        %v3670 = vrot.slane %v3204, 2
        %v3671 = vsel %vm3632, %v3668, %v3670
        %v3672 = vrot.slane %v3205, 2
        %v3673 = vsel %vm3632, %v3670, %v3672
        %v3674 = vrot.slane %v3206, 2
        %v3675 = vsel %vm3632, %v3672, %v3674
        %v3676 = vrot.slane %v3207, 2
        %v3677 = vsel %vm3632, %v3674, %v3676
        %v3678 = vrot.slane %v3208, 2
        %v3679 = vsel %vm3632, %v3676, %v3678
        %v3720 = vunpack.c.l.b16 %v3053
        %v3721 = vunpack.c.l.b16 %v3054
        %v3722 = vunpack.c.l.b16 %v3055
        %v3723 = vunpack.c.l.b16 %v3056
        %v3724 = vunpack.c.l.b16 %v3057
        %v3725 = vunpack.c.l.b16 %v3058
        %v3726 = vunpack.c.l.b16 %v3059
        %v3727 = vunpack.c.l.b16 %v3060
        %v3728 = vunpack.c.l.b16 %v3061
        %v3729 = vunpack.c.l.b16 %v3062
        %v3730 = vunpack.c.l.b16 %v3063
        %v3731 = vunpack.c.l.b16 %v3064
        %v3732 = vunpack.c.l.b16 %v3065
        %v3733 = vunpack.c.l.b16 %v3066
        %v3734 = vunpack.c.l.b16 %v3067
        %v3735 = vunpack.c.l.b16 %v3068
        %v3736 = vpack.c.b16 %v3721, %v3720
        %v3737 = vpack.c.b16 %v3723, %v3722
        %v3738 = vpack.c.b16 %v3725, %v3724
        %v3739 = vpack.c.b16 %v3727, %v3726
        %v3740 = vpack.c.b16 %v3729, %v3728
        %v3741 = vpack.c.b16 %v3731, %v3730
        %v3742 = vpack.c.b16 %v3733, %v3732
        %v3743 = vpack.c.b16 %v3735, %v3734
        %3752 = vmatpush.bf16.msra.mxu0 %v3743
        %3753 = vmatpush.bf16.msra.mxu0 %v3742
        %3754 = vmatpush.bf16.msra.mxu0 %v3741
        %3755 = vmatpush.bf16.msra.mxu0 %v3740
        %3756 = vmatpush.bf16.msra.mxu0 %v3739
        %3757 = vmatpush.bf16.msra.mxu0 %v3738
        %3758 = vmatpush.bf16.msra.mxu0 %v3737
        %3759 = vmatpush.bf16.msra.mxu0 %v3736
        %3760 = vmatmul.bf16.gmra.mxu0 %v3635
        %v3761 = vpop.f32.mrf.mxu0
        %v3762 = vadd.f32 %v3513, %v3761
        %v3763 = vpop.f32.mrf.mxu0
        %v3764 = vadd.f32 %v3515, %v3763
        %3765 = vmatmul.bf16.gmra.mxu0 %v3637
        %v3766 = vpop.f32.mrf.mxu0
        %v3767 = vadd.f32 %v3518, %v3766
        %v3768 = vpop.f32.mrf.mxu0
        %v3769 = vadd.f32 %v3520, %v3768
        %3770 = vmatmul.bf16.gmra.mxu0 %v3639
        %v3771 = vpop.f32.mrf.mxu0
        %v3772 = vadd.f32 %v3523, %v3771
        %v3773 = vpop.f32.mrf.mxu0
        %v3774 = vadd.f32 %v3525, %v3773
        %3775 = vmatmul.bf16.gmra.mxu0 %v3641
        %v3776 = vpop.f32.mrf.mxu0
        %v3777 = vadd.f32 %v3528, %v3776
        %v3778 = vpop.f32.mrf.mxu0
        %v3779 = vadd.f32 %v3530, %v3778
        %3780 = vmatmul.bf16.gmra.mxu0 %v3643
        %v3781 = vpop.f32.mrf.mxu0
        %v3782 = vadd.f32 %v3533, %v3781
        %v3783 = vpop.f32.mrf.mxu0
        %v3784 = vadd.f32 %v3535, %v3783
        %3785 = vmatmul.bf16.gmra.mxu0 %v3645
        %v3786 = vpop.f32.mrf.mxu0
        %v3787 = vadd.f32 %v3538, %v3786
        %v3788 = vpop.f32.mrf.mxu0
        %v3789 = vadd.f32 %v3540, %v3788
        %3790 = vmatmul.bf16.gmra.mxu0 %v3647
        %v3791 = vpop.f32.mrf.mxu0
        %v3792 = vadd.f32 %v3543, %v3791
        %v3793 = vpop.f32.mrf.mxu0
        %v3794 = vadd.f32 %v3545, %v3793
        %3795 = vmatmul.bf16.gmra.mxu0 %v3649
        %v3796 = vpop.f32.mrf.mxu0
        %v3797 = vadd.f32 %v3548, %v3796
        %v3798 = vpop.f32.mrf.mxu0
        %v3799 = vadd.f32 %v3550, %v3798
        %3800 = vmatmul.bf16.gmra.mxu0 %v3651
        %v3801 = vpop.f32.mrf.mxu0
        %v3802 = vadd.f32 %v3553, %v3801
        %v3803 = vpop.f32.mrf.mxu0
        %v3804 = vadd.f32 %v3555, %v3803
        %3805 = vmatmul.bf16.gmra.mxu0 %v3653
        %v3806 = vpop.f32.mrf.mxu0
        %v3807 = vadd.f32 %v3558, %v3806
        %v3808 = vpop.f32.mrf.mxu0
        %v3809 = vadd.f32 %v3560, %v3808
        %3810 = vmatmul.bf16.gmra.mxu0 %v3655
        %v3811 = vpop.f32.mrf.mxu0
        %v3812 = vadd.f32 %v3563, %v3811
        %v3813 = vpop.f32.mrf.mxu0
        %v3814 = vadd.f32 %v3565, %v3813
        %3815 = vmatmul.bf16.gmra.mxu0 %v3657
        %v3816 = vpop.f32.mrf.mxu0
        %v3817 = vadd.f32 %v3568, %v3816
        %v3818 = vpop.f32.mrf.mxu0
        %v3819 = vadd.f32 %v3570, %v3818
        %3820 = vmatmul.bf16.gmra.mxu0 %v3659
        %v3821 = vpop.f32.mrf.mxu0
        %v3822 = vadd.f32 %v3573, %v3821
        %v3823 = vpop.f32.mrf.mxu0
        %v3824 = vadd.f32 %v3575, %v3823
        %3825 = vmatmul.bf16.gmra.mxu0 %v3661
        %v3826 = vpop.f32.mrf.mxu0
        %v3827 = vadd.f32 %v3578, %v3826
        %v3828 = vpop.f32.mrf.mxu0
        %v3829 = vadd.f32 %v3580, %v3828
        %3830 = vmatmul.bf16.gmra.mxu0 %v3663
        %v3831 = vpop.f32.mrf.mxu0
        %v3832 = vadd.f32 %v3583, %v3831
        %v3833 = vpop.f32.mrf.mxu0
        %v3834 = vadd.f32 %v3585, %v3833
        %3835 = vmatmul.bf16.gmra.mxu0 %v3665
        %v3836 = vpop.f32.mrf.mxu0
        %v3837 = vadd.f32 %v3588, %v3836
        %v3838 = vpop.f32.mrf.mxu0
        %v3839 = vadd.f32 %v3590, %v3838
        %3840 = vmatmul.bf16.gmra.mxu0 %v3667
        %v3841 = vpop.f32.mrf.mxu0
        %v3842 = vadd.f32 %v3593, %v3841
        %v3843 = vpop.f32.mrf.mxu0
        %v3844 = vadd.f32 %v3595, %v3843
        %3845 = vmatmul.bf16.gmra.mxu0 %v3669
        %v3846 = vpop.f32.mrf.mxu0
        %v3847 = vadd.f32 %v3598, %v3846
        %v3848 = vpop.f32.mrf.mxu0
        %v3849 = vadd.f32 %v3600, %v3848
        %3850 = vmatmul.bf16.gmra.mxu0 %v3671
        %v3851 = vpop.f32.mrf.mxu0
        %v3852 = vadd.f32 %v3603, %v3851
        %v3853 = vpop.f32.mrf.mxu0
        %v3854 = vadd.f32 %v3605, %v3853
        %3855 = vmatmul.bf16.gmra.mxu0 %v3673
        %v3856 = vpop.f32.mrf.mxu0
        %v3857 = vadd.f32 %v3608, %v3856
        %v3858 = vpop.f32.mrf.mxu0
        %v3859 = vadd.f32 %v3610, %v3858
        %3860 = vmatmul.bf16.gmra.mxu0 %v3675
        %v3861 = vpop.f32.mrf.mxu0
        %v3862 = vadd.f32 %v3613, %v3861
        %v3863 = vpop.f32.mrf.mxu0
        %v3864 = vadd.f32 %v3615, %v3863
        %3865 = vmatmul.bf16.gmra.mxu0 %v3677
        %v3866 = vpop.f32.mrf.mxu0
        %v3867 = vadd.f32 %v3618, %v3866
        %v3868 = vpop.f32.mrf.mxu0
        %v3869 = vadd.f32 %v3620, %v3868
        %3870 = vmatmul.bf16.gmra.mxu0 %v3679
        %v3871 = vpop.f32.mrf.mxu0
        %v3872 = vadd.f32 %v3623, %v3871
        %v3873 = vpop.f32.mrf.mxu0
        %v3874 = vadd.f32 %v3625, %v3873
        %3875 = vmatmul.bf16.gmra.mxu0 %v3678
        %v3876 = vpop.f32.mrf.mxu0
        %v3877 = vadd.f32 %v3628, %v3876
        %v3878 = vpop.f32.mrf.mxu0
        %v3879 = vadd.f32 %v3630, %v3878
        %3880 = vdwg.mxu0
        %v3881 = vld [vmem:[#allocation2 + $0x8] sm:$0x8]
        %s3882 = scalar_lea.vmem [#allocation9], 320
        %v3883 = vld [vmem:[%s3882] sm:$0xf]
        %v3884 = vld [vmem:[%s3882 + $0x4] sm:$0xf]
        %v3885 = vld [vmem:[%s3882 + $0x8] sm:$0xf]
        %v3886 = vld [vmem:[%s3882 + $0xc] sm:$0xf]
        %v3887 = vld [vmem:[%s3882 + $0x10] sm:$0xf]
        %v3888 = vld [vmem:[%s3882 + $0x14] sm:$0xf]
        %v3889 = vld [vmem:[%s3882 + $0x18] sm:$0xf]
        %v3890 = vld [vmem:[%s3882 + $0x1c] sm:$0xf]
        %v3891 = vld [vmem:[%s3882 + $0x20] sm:$0xf]
        %v3892 = vld [vmem:[%s3882 + $0x24] sm:$0xf]
        %v3893 = vld [vmem:[%s3882 + $0x28] sm:$0xf]
        %v3894 = vld [vmem:[%s3882 + $0x2c] sm:$0xf]
        %v3895 = vld [vmem:[%s3882 + $0x30] sm:$0xf]
        %v3896 = vld [vmem:[%s3882 + $0x34] sm:$0xf]
        %v3897 = vld [vmem:[%s3882 + $0x38] sm:$0xf]
        %v3898 = vld [vmem:[%s3882 + $0x3c] sm:$0xf]
        %v3900 = vunpack.c.l.b16 %v3881
        %v3901 = vpack.c.b16 %v3137, %v3900
        %vm3902 = vcmask 1044480
        %v3903 = vrot.slane %v3901, 3
        %v3904 = vrot.slane %v3186, 3
        %v3905 = vsel %vm3902, %v3903, %v3904
        %v3906 = vrot.slane %v3187, 3
        %v3907 = vsel %vm3902, %v3904, %v3906
        %v3908 = vrot.slane %v3188, 3
        %v3909 = vsel %vm3902, %v3906, %v3908
        %v3910 = vrot.slane %v3189, 3
        %v3911 = vsel %vm3902, %v3908, %v3910
        %v3912 = vrot.slane %v3190, 3
        %v3913 = vsel %vm3902, %v3910, %v3912
        %v3914 = vrot.slane %v3191, 3
        %v3915 = vsel %vm3902, %v3912, %v3914
        %v3916 = vrot.slane %v3192, 3
        %v3917 = vsel %vm3902, %v3914, %v3916
        %v3918 = vrot.slane %v3193, 3
        %v3919 = vsel %vm3902, %v3916, %v3918
        %v3920 = vrot.slane %v3194, 3
        %v3921 = vsel %vm3902, %v3918, %v3920
        %v3922 = vrot.slane %v3195, 3
        %v3923 = vsel %vm3902, %v3920, %v3922
        %v3924 = vrot.slane %v3196, 3
        %v3925 = vsel %vm3902, %v3922, %v3924
        %v3926 = vrot.slane %v3197, 3
        %v3927 = vsel %vm3902, %v3924, %v3926
        %v3928 = vrot.slane %v3198, 3
        %v3929 = vsel %vm3902, %v3926, %v3928
        %v3930 = vrot.slane %v3199, 3
        %v3931 = vsel %vm3902, %v3928, %v3930
        %v3932 = vrot.slane %v3200, 3
        %v3933 = vsel %vm3902, %v3930, %v3932
        %v3934 = vrot.slane %v3201, 3
        %v3935 = vsel %vm3902, %v3932, %v3934
        %v3936 = vrot.slane %v3202, 3
        %v3937 = vsel %vm3902, %v3934, %v3936
        %v3938 = vrot.slane %v3203, 3
        %v3939 = vsel %vm3902, %v3936, %v3938
        %v3940 = vrot.slane %v3204, 3
        %v3941 = vsel %vm3902, %v3938, %v3940
        %v3942 = vrot.slane %v3205, 3
        %v3943 = vsel %vm3902, %v3940, %v3942
        %v3944 = vrot.slane %v3206, 3
        %v3945 = vsel %vm3902, %v3942, %v3944
        %v3946 = vrot.slane %v3207, 3
        %v3947 = vsel %vm3902, %v3944, %v3946
        %v3948 = vrot.slane %v3208, 3
        %v3949 = vsel %vm3902, %v3946, %v3948
        %v3950 = vrot.slane %v3209, 3
        %v3951 = vsel %vm3902, %v3948, %v3950
        %v3992 = vunpack.c.l.b16 %v3883
        %v3993 = vunpack.c.l.b16 %v3884
        %v3994 = vunpack.c.l.b16 %v3885
        %v3995 = vunpack.c.l.b16 %v3886
        %v3996 = vunpack.c.l.b16 %v3887
        %v3997 = vunpack.c.l.b16 %v3888
        %v3998 = vunpack.c.l.b16 %v3889
        %v3999 = vunpack.c.l.b16 %v3890
        %v4000 = vunpack.c.l.b16 %v3891
        %v4001 = vunpack.c.l.b16 %v3892
        %v4002 = vunpack.c.l.b16 %v3893
        %v4003 = vunpack.c.l.b16 %v3894
        %v4004 = vunpack.c.l.b16 %v3895
        %v4005 = vunpack.c.l.b16 %v3896
        %v4006 = vunpack.c.l.b16 %v3897
        %v4007 = vunpack.c.l.b16 %v3898
        %v4008 = vpack.c.b16 %v3993, %v3992
        %v4009 = vpack.c.b16 %v3995, %v3994
        %v4010 = vpack.c.b16 %v3997, %v3996
        %v4011 = vpack.c.b16 %v3999, %v3998
        %v4012 = vpack.c.b16 %v4001, %v4000
        %v4013 = vpack.c.b16 %v4003, %v4002
        %v4014 = vpack.c.b16 %v4005, %v4004
        %v4015 = vpack.c.b16 %v4007, %v4006
        %4024 = vmatpush.bf16.msra.mxu0 %v4015
        %4025 = vmatpush.bf16.msra.mxu0 %v4014
        %4026 = vmatpush.bf16.msra.mxu0 %v4013
        %4027 = vmatpush.bf16.msra.mxu0 %v4012
        %4028 = vmatpush.bf16.msra.mxu0 %v4011
        %4029 = vmatpush.bf16.msra.mxu0 %v4010
        %4030 = vmatpush.bf16.msra.mxu0 %v4009
        %4031 = vmatpush.bf16.msra.mxu0 %v4008
        %4032 = vmatmul.bf16.gmra.mxu0 %v3905
        %v4033 = vpop.f32.mrf.mxu0
        %v4034 = vadd.f32 0.0, %v4033
        %v4035 = vpop.f32.mrf.mxu0
        %v4036 = vadd.f32 0.0, %v4035
        %4037 = vmatmul.bf16.gmra.mxu0 %v3907
        %v4038 = vpop.f32.mrf.mxu0
        %v4039 = vadd.f32 0.0, %v4038
        %v4040 = vpop.f32.mrf.mxu0
        %v4041 = vadd.f32 0.0, %v4040
        %4042 = vmatmul.bf16.gmra.mxu0 %v3909
        %v4043 = vpop.f32.mrf.mxu0
        %v4044 = vadd.f32 0.0, %v4043
        %v4045 = vpop.f32.mrf.mxu0
        %v4046 = vadd.f32 0.0, %v4045
        %4047 = vmatmul.bf16.gmra.mxu0 %v3911
        %v4048 = vpop.f32.mrf.mxu0
        %v4049 = vadd.f32 0.0, %v4048
        %v4050 = vpop.f32.mrf.mxu0
        %v4051 = vadd.f32 0.0, %v4050
        %4052 = vmatmul.bf16.gmra.mxu0 %v3913
        %v4053 = vpop.f32.mrf.mxu0
        %v4054 = vadd.f32 0.0, %v4053
        %v4055 = vpop.f32.mrf.mxu0
        %v4056 = vadd.f32 0.0, %v4055
        %4057 = vmatmul.bf16.gmra.mxu0 %v3915
        %v4058 = vpop.f32.mrf.mxu0
        %v4059 = vadd.f32 0.0, %v4058
        %v4060 = vpop.f32.mrf.mxu0
        %v4061 = vadd.f32 0.0, %v4060
        %4062 = vmatmul.bf16.gmra.mxu0 %v3917
        %v4063 = vpop.f32.mrf.mxu0
        %v4064 = vadd.f32 0.0, %v4063
        %v4065 = vpop.f32.mrf.mxu0
        %v4066 = vadd.f32 0.0, %v4065
        %4067 = vmatmul.bf16.gmra.mxu0 %v3919
        %v4068 = vpop.f32.mrf.mxu0
        %v4069 = vadd.f32 0.0, %v4068
        %v4070 = vpop.f32.mrf.mxu0
        %v4071 = vadd.f32 0.0, %v4070
        %4072 = vmatmul.bf16.gmra.mxu0 %v3921
        %v4073 = vpop.f32.mrf.mxu0
        %v4074 = vadd.f32 0.0, %v4073
        %v4075 = vpop.f32.mrf.mxu0
        %v4076 = vadd.f32 0.0, %v4075
        %4077 = vmatmul.bf16.gmra.mxu0 %v3923
        %v4078 = vpop.f32.mrf.mxu0
        %v4079 = vadd.f32 0.0, %v4078
        %v4080 = vpop.f32.mrf.mxu0
        %v4081 = vadd.f32 0.0, %v4080
        %4082 = vmatmul.bf16.gmra.mxu0 %v3925
        %v4083 = vpop.f32.mrf.mxu0
        %v4084 = vadd.f32 0.0, %v4083
        %v4085 = vpop.f32.mrf.mxu0
        %v4086 = vadd.f32 0.0, %v4085
        %4087 = vmatmul.bf16.gmra.mxu0 %v3927
        %v4088 = vpop.f32.mrf.mxu0
        %v4089 = vadd.f32 0.0, %v4088
        %v4090 = vpop.f32.mrf.mxu0
        %v4091 = vadd.f32 0.0, %v4090
        %4092 = vmatmul.bf16.gmra.mxu0 %v3929
        %v4093 = vpop.f32.mrf.mxu0
        %v4094 = vadd.f32 0.0, %v4093
        %v4095 = vpop.f32.mrf.mxu0
        %v4096 = vadd.f32 0.0, %v4095
        %4097 = vmatmul.bf16.gmra.mxu0 %v3931
        %v4098 = vpop.f32.mrf.mxu0
        %v4099 = vadd.f32 0.0, %v4098
        %v4100 = vpop.f32.mrf.mxu0
        %v4101 = vadd.f32 0.0, %v4100
        %4102 = vmatmul.bf16.gmra.mxu0 %v3933
        %v4103 = vpop.f32.mrf.mxu0
        %v4104 = vadd.f32 0.0, %v4103
        %v4105 = vpop.f32.mrf.mxu0
        %v4106 = vadd.f32 0.0, %v4105
        %4107 = vmatmul.bf16.gmra.mxu0 %v3935
        %v4108 = vpop.f32.mrf.mxu0
        %v4109 = vadd.f32 0.0, %v4108
        %v4110 = vpop.f32.mrf.mxu0
        %v4111 = vadd.f32 0.0, %v4110
        %4112 = vmatmul.bf16.gmra.mxu0 %v3937
        %v4113 = vpop.f32.mrf.mxu0
        %v4114 = vadd.f32 0.0, %v4113
        %v4115 = vpop.f32.mrf.mxu0
        %v4116 = vadd.f32 0.0, %v4115
        %4117 = vmatmul.bf16.gmra.mxu0 %v3939
        %v4118 = vpop.f32.mrf.mxu0
        %v4119 = vadd.f32 0.0, %v4118
        %v4120 = vpop.f32.mrf.mxu0
        %v4121 = vadd.f32 0.0, %v4120
        %4122 = vmatmul.bf16.gmra.mxu0 %v3941
        %v4123 = vpop.f32.mrf.mxu0
        %v4124 = vadd.f32 0.0, %v4123
        %v4125 = vpop.f32.mrf.mxu0
        %v4126 = vadd.f32 0.0, %v4125
        %4127 = vmatmul.bf16.gmra.mxu0 %v3943
        %v4128 = vpop.f32.mrf.mxu0
        %v4129 = vadd.f32 0.0, %v4128
        %v4130 = vpop.f32.mrf.mxu0
        %v4131 = vadd.f32 0.0, %v4130
        %4132 = vmatmul.bf16.gmra.mxu0 %v3945
        %v4133 = vpop.f32.mrf.mxu0
        %v4134 = vadd.f32 0.0, %v4133
        %v4135 = vpop.f32.mrf.mxu0
        %v4136 = vadd.f32 0.0, %v4135
        %4137 = vmatmul.bf16.gmra.mxu0 %v3947
        %v4138 = vpop.f32.mrf.mxu0
        %v4139 = vadd.f32 0.0, %v4138
        %v4140 = vpop.f32.mrf.mxu0
        %v4141 = vadd.f32 0.0, %v4140
        %4142 = vmatmul.bf16.gmra.mxu0 %v3949
        %v4143 = vpop.f32.mrf.mxu0
        %v4144 = vadd.f32 0.0, %v4143
        %v4145 = vpop.f32.mrf.mxu0
        %v4146 = vadd.f32 0.0, %v4145
        %4147 = vmatmul.bf16.gmra.mxu0 %v3951
        %v4148 = vpop.f32.mrf.mxu0
        %v4149 = vadd.f32 0.0, %v4148
        %v4150 = vpop.f32.mrf.mxu0
        %v4151 = vadd.f32 0.0, %v4150
        %4152 = vdwg.mxu0
        %v4153 = vadd.f32 %v3762, %v4034
        %v4154 = vadd.f32 %v3764, %v4036
        %v4155 = vadd.f32 %v3767, %v4039
        %v4156 = vadd.f32 %v3769, %v4041
        %v4157 = vadd.f32 %v3772, %v4044
        %v4158 = vadd.f32 %v3774, %v4046
        %v4159 = vadd.f32 %v3777, %v4049
        %v4160 = vadd.f32 %v3779, %v4051
        %v4161 = vadd.f32 %v3782, %v4054
        %v4162 = vadd.f32 %v3784, %v4056
        %v4163 = vadd.f32 %v3787, %v4059
        %v4164 = vadd.f32 %v3789, %v4061
        %v4165 = vadd.f32 %v3792, %v4064
        %v4166 = vadd.f32 %v3794, %v4066
        %v4167 = vadd.f32 %v3797, %v4069
        %v4168 = vadd.f32 %v3799, %v4071
        %v4169 = vadd.f32 %v3802, %v4074
        %v4170 = vadd.f32 %v3804, %v4076
        %v4171 = vadd.f32 %v3807, %v4079
        %v4172 = vadd.f32 %v3809, %v4081
        %v4173 = vadd.f32 %v3812, %v4084
        %v4174 = vadd.f32 %v3814, %v4086
        %v4175 = vadd.f32 %v3817, %v4089
        %v4176 = vadd.f32 %v3819, %v4091
        %v4177 = vadd.f32 %v3822, %v4094
        %v4178 = vadd.f32 %v3824, %v4096
        %v4179 = vadd.f32 %v3827, %v4099
        %v4180 = vadd.f32 %v3829, %v4101
        %v4181 = vadd.f32 %v3832, %v4104
        %v4182 = vadd.f32 %v3834, %v4106
        %v4183 = vadd.f32 %v3837, %v4109
        %v4184 = vadd.f32 %v3839, %v4111
        %v4185 = vadd.f32 %v3842, %v4114
        %v4186 = vadd.f32 %v3844, %v4116
        %v4187 = vadd.f32 %v3847, %v4119
        %v4188 = vadd.f32 %v3849, %v4121
        %v4189 = vadd.f32 %v3852, %v4124
        %v4190 = vadd.f32 %v3854, %v4126
        %v4191 = vadd.f32 %v3857, %v4129
        %v4192 = vadd.f32 %v3859, %v4131
        %v4193 = vadd.f32 %v3862, %v4134
        %v4194 = vadd.f32 %v3864, %v4136
        %v4195 = vadd.f32 %v3867, %v4139
        %v4196 = vadd.f32 %v3869, %v4141
        %v4197 = vadd.f32 %v3872, %v4144
        %v4198 = vadd.f32 %v3874, %v4146
        %v4199 = vadd.f32 %v3877, %v4149
        %v4200 = vadd.f32 %v3879, %v4151
        %v4201 = vld [vmem:[#allocation2 + $0x14] sm:$0xf]
        %v4202 = vld [vmem:[#allocation2 + $0x18] sm:$0xf]
        %v4203 = vld [vmem:[#allocation2 + $0x1c] sm:$0xf]
        %v4204 = vld [vmem:[#allocation2 + $0x20] sm:$0xf]
        %v4205 = vld [vmem:[#allocation2 + $0x24] sm:$0xf]
        %v4206 = vld [vmem:[#allocation2 + $0x28] sm:$0xf]
        %v4207 = vld [vmem:[#allocation2 + $0x2c] sm:$0xf]
        %v4208 = vld [vmem:[#allocation2 + $0x30] sm:$0xf]
        %v4209 = vld [vmem:[#allocation2 + $0x34] sm:$0xf]
        %v4210 = vld [vmem:[#allocation2 + $0x38] sm:$0xf]
        %v4211 = vld [vmem:[#allocation2 + $0x3c] sm:$0xf]
        %v4212 = vld [vmem:[#allocation2 + $0x40] sm:$0xf]
        %v4213 = vld [vmem:[#allocation2 + $0x44] sm:$0xf]
        %v4214 = vld [vmem:[#allocation2 + $0x48] sm:$0xf]
        %v4215 = vld [vmem:[#allocation2 + $0x4c] sm:$0xf]
        %v4216 = vld [vmem:[#allocation2 + $0x50] sm:$0xf]
        %v4217 = vld [vmem:[#allocation2 + $0x54] sm:$0xf]
        %v4218 = vld [vmem:[#allocation2 + $0x58] sm:$0xf]
        %v4219 = vld [vmem:[#allocation2 + $0x5c] sm:$0xf]
        %v4220 = vld [vmem:[#allocation2 + $0x60] sm:$0xf]
        %v4221 = vld [vmem:[#allocation2 + $0x64] sm:$0xf]
        %v4222 = vld [vmem:[#allocation2 + $0x68] sm:$0xf]
        %v4223 = vld [vmem:[#allocation2 + $0x6c] sm:$0xf]
        %v4224 = vld [vmem:[#allocation2 + $0x70] sm:$0xf]
        %v4225 = vld [vmem:[#allocation2 + $0x74] sm:$0xf]
        %v4226 = vld [vmem:[#allocation2 + $0x78] sm:$0xf]
        %v4227 = vld [vmem:[#allocation2 + $0x7c] sm:$0xf]
        %v4228 = vld [vmem:[#allocation2 + $0x80] sm:$0xf]
        %v4229 = vld [vmem:[#allocation2 + $0x84] sm:$0xf]
        %v4230 = vld [vmem:[#allocation2 + $0x88] sm:$0xf]
        %v4231 = vld [vmem:[#allocation2 + $0x8c] sm:$0xf]
        %v4232 = vld [vmem:[#allocation2 + $0x90] sm:$0xf]
        %v4233 = vld [vmem:[#allocation2 + $0x94] sm:$0xf]
        %v4234 = vld [vmem:[#allocation2 + $0x98] sm:$0xf]
        %v4235 = vld [vmem:[#allocation2 + $0x9c] sm:$0xf]
        %v4236 = vld [vmem:[#allocation2 + $0xa0] sm:$0xf]
        %v4237 = vld [vmem:[#allocation2 + $0xa4] sm:$0xf]
        %v4238 = vld [vmem:[#allocation2 + $0xa8] sm:$0xf]
        %v4239 = vld [vmem:[#allocation2 + $0xac] sm:$0xf]
        %v4240 = vld [vmem:[#allocation2 + $0xb0] sm:$0xf]
        %v4241 = vld [vmem:[#allocation2 + $0xb4] sm:$0xf]
        %v4242 = vld [vmem:[#allocation2 + $0xb8] sm:$0xf]
        %v4243 = vld [vmem:[#allocation2 + $0xbc] sm:$0xf]
        %v4244 = vld [vmem:[#allocation2 + $0xc0] sm:$0xf]
        %v4245 = vld [vmem:[#allocation2 + $0xc4] sm:$0xf]
        %v4246 = vld [vmem:[#allocation2 + $0xc8] sm:$0xf]
        %v4247 = vld [vmem:[#allocation2 + $0xcc] sm:$0xf]
        %v4248 = vld [vmem:[#allocation2 + $0xd0] sm:$0x3]
        %s4249 = scalar_lea.vmem [#allocation9], 384
        %v4250 = vld [vmem:[%s4249] sm:$0xf]
        %v4251 = vld [vmem:[%s4249 + $0x4] sm:$0xf]
        %v4252 = vld [vmem:[%s4249 + $0x8] sm:$0xf]
        %v4253 = vld [vmem:[%s4249 + $0xc] sm:$0xf]
        %v4254 = vld [vmem:[%s4249 + $0x10] sm:$0xf]
        %v4255 = vld [vmem:[%s4249 + $0x14] sm:$0xf]
        %v4256 = vld [vmem:[%s4249 + $0x18] sm:$0xf]
        %v4257 = vld [vmem:[%s4249 + $0x1c] sm:$0xf]
        %v4258 = vld [vmem:[%s4249 + $0x20] sm:$0xf]
        %v4259 = vld [vmem:[%s4249 + $0x24] sm:$0xf]
        %v4260 = vld [vmem:[%s4249 + $0x28] sm:$0xf]
        %v4261 = vld [vmem:[%s4249 + $0x2c] sm:$0xf]
        %v4262 = vld [vmem:[%s4249 + $0x30] sm:$0xf]
        %v4263 = vld [vmem:[%s4249 + $0x34] sm:$0xf]
        %v4264 = vld [vmem:[%s4249 + $0x38] sm:$0xf]
        %v4265 = vld [vmem:[%s4249 + $0x3c] sm:$0xf]
        %v4266 = vld [vmem:[#allocation2 + $0xd0] sm:$0x7]
        %s4267 = scalar_lea.vmem [#allocation9], 448
        %v4268 = vld [vmem:[%s4267] sm:$0xf]
        %v4269 = vld [vmem:[%s4267 + $0x4] sm:$0xf]
        %v4270 = vld [vmem:[%s4267 + $0x8] sm:$0xf]
        %v4271 = vld [vmem:[%s4267 + $0xc] sm:$0xf]
        %v4272 = vld [vmem:[%s4267 + $0x10] sm:$0xf]
        %v4273 = vld [vmem:[%s4267 + $0x14] sm:$0xf]
        %v4274 = vld [vmem:[%s4267 + $0x18] sm:$0xf]
        %v4275 = vld [vmem:[%s4267 + $0x1c] sm:$0xf]
        %v4276 = vld [vmem:[%s4267 + $0x20] sm:$0xf]
        %v4277 = vld [vmem:[%s4267 + $0x24] sm:$0xf]
        %v4278 = vld [vmem:[%s4267 + $0x28] sm:$0xf]
        %v4279 = vld [vmem:[%s4267 + $0x2c] sm:$0xf]
        %v4280 = vld [vmem:[%s4267 + $0x30] sm:$0xf]
        %v4281 = vld [vmem:[%s4267 + $0x34] sm:$0xf]
        %v4282 = vld [vmem:[%s4267 + $0x38] sm:$0xf]
        %v4283 = vld [vmem:[%s4267 + $0x3c] sm:$0xf]
        %v4332 = vunpack.c.l.b16 %v4201
        %v4333 = vunpack.c.l.b16 %v4202
        %v4334 = vunpack.c.l.b16 %v4203
        %v4335 = vunpack.c.l.b16 %v4204
        %v4336 = vunpack.c.l.b16 %v4205
        %v4337 = vunpack.c.l.b16 %v4206
        %v4338 = vunpack.c.l.b16 %v4207
        %v4339 = vunpack.c.l.b16 %v4208
        %v4340 = vunpack.c.l.b16 %v4209
        %v4341 = vunpack.c.l.b16 %v4210
        %v4342 = vunpack.c.l.b16 %v4211
        %v4343 = vunpack.c.l.b16 %v4212
        %v4344 = vunpack.c.l.b16 %v4213
        %v4345 = vunpack.c.l.b16 %v4214
        %v4346 = vunpack.c.l.b16 %v4215
        %v4347 = vunpack.c.l.b16 %v4216
        %v4348 = vunpack.c.l.b16 %v4217
        %v4349 = vunpack.c.l.b16 %v4218
        %v4350 = vunpack.c.l.b16 %v4219
        %v4351 = vunpack.c.l.b16 %v4220
        %v4352 = vunpack.c.l.b16 %v4221
        %v4353 = vunpack.c.l.b16 %v4222
        %v4354 = vunpack.c.l.b16 %v4223
        %v4355 = vunpack.c.l.b16 %v4224
        %v4356 = vunpack.c.l.b16 %v4225
        %v4357 = vunpack.c.l.b16 %v4226
        %v4358 = vunpack.c.l.b16 %v4227
        %v4359 = vunpack.c.l.b16 %v4228
        %v4360 = vunpack.c.l.b16 %v4229
        %v4361 = vunpack.c.l.b16 %v4230
        %v4362 = vunpack.c.l.b16 %v4231
        %v4363 = vunpack.c.l.b16 %v4232
        %v4364 = vunpack.c.l.b16 %v4233
        %v4365 = vunpack.c.l.b16 %v4234
        %v4366 = vunpack.c.l.b16 %v4235
        %v4367 = vunpack.c.l.b16 %v4236
        %v4368 = vunpack.c.l.b16 %v4237
        %v4369 = vunpack.c.l.b16 %v4238
        %v4370 = vunpack.c.l.b16 %v4239
        %v4371 = vunpack.c.l.b16 %v4240
        %v4372 = vunpack.c.l.b16 %v4241
        %v4373 = vunpack.c.l.b16 %v4242
        %v4374 = vunpack.c.l.b16 %v4243
        %v4375 = vunpack.c.l.b16 %v4244
        %v4376 = vunpack.c.l.b16 %v4245
        %v4377 = vunpack.c.l.b16 %v4246
        %v4378 = vunpack.c.l.b16 %v4247
        %v4379 = vunpack.c.l.b16 %v4266
        %v4380 = vpack.c.b16 %v4333, %v4332
        %v4381 = vpack.c.b16 %v4335, %v4334
        %v4382 = vpack.c.b16 %v4337, %v4336
        %v4383 = vpack.c.b16 %v4339, %v4338
        %v4384 = vpack.c.b16 %v4341, %v4340
        %v4385 = vpack.c.b16 %v4343, %v4342
        %v4386 = vpack.c.b16 %v4345, %v4344
        %v4387 = vpack.c.b16 %v4347, %v4346
        %v4388 = vpack.c.b16 %v4349, %v4348
        %v4389 = vpack.c.b16 %v4351, %v4350
        %v4390 = vpack.c.b16 %v4353, %v4352
        %v4391 = vpack.c.b16 %v4355, %v4354
        %v4392 = vpack.c.b16 %v4357, %v4356
        %v4393 = vpack.c.b16 %v4359, %v4358
        %v4394 = vpack.c.b16 %v4361, %v4360
        %v4395 = vpack.c.b16 %v4363, %v4362
        %v4396 = vpack.c.b16 %v4365, %v4364
        %v4397 = vpack.c.b16 %v4367, %v4366
        %v4398 = vpack.c.b16 %v4369, %v4368
        %v4399 = vpack.c.b16 %v4371, %v4370
        %v4400 = vpack.c.b16 %v4373, %v4372
        %v4401 = vpack.c.b16 %v4375, %v4374
        %v4402 = vpack.c.b16 %v4377, %v4376
        %v4403 = vpack.c.b16 %v4379, %v4378
        %v4405 = vshrl.u32 %v4380, 16
        %v4407 = vshll.u32 %v4380, 16
        %v4409 = vrot.slane %v4407, 1
        %v4410 = vor.u32 %v4405, %v4409
        %v4412 = vshll.u32 %v4381, 16
        %v4414 = vrot.slane %v4412, 1
        %v4415 = vsel %vm2089, %v4410, %v4414
        %v4416 = vshrl.u32 %v4381, 16
        %v4418 = vor.u32 %v4416, %v4414
        %v4420 = vshll.u32 %v4382, 16
        %v4422 = vrot.slane %v4420, 1
        %v4423 = vsel %vm2089, %v4418, %v4422
        %v4424 = vshrl.u32 %v4382, 16
        %v4426 = vor.u32 %v4424, %v4422
        %v4428 = vshll.u32 %v4383, 16
        %v4430 = vrot.slane %v4428, 1
        %v4431 = vsel %vm2089, %v4426, %v4430
        %v4432 = vshrl.u32 %v4383, 16
        %v4434 = vor.u32 %v4432, %v4430
        %v4436 = vshll.u32 %v4384, 16
        %v4438 = vrot.slane %v4436, 1
        %v4439 = vsel %vm2089, %v4434, %v4438
        %v4440 = vshrl.u32 %v4384, 16
        %v4442 = vor.u32 %v4440, %v4438
        %v4444 = vshll.u32 %v4385, 16
        %v4446 = vrot.slane %v4444, 1
        %v4447 = vsel %vm2089, %v4442, %v4446
        %v4448 = vshrl.u32 %v4385, 16
        %v4450 = vor.u32 %v4448, %v4446
        %v4452 = vshll.u32 %v4386, 16
        %v4454 = vrot.slane %v4452, 1
        %v4455 = vsel %vm2089, %v4450, %v4454
        %v4456 = vshrl.u32 %v4386, 16
        %v4458 = vor.u32 %v4456, %v4454
        %v4460 = vshll.u32 %v4387, 16
        %v4462 = vrot.slane %v4460, 1
        %v4463 = vsel %vm2089, %v4458, %v4462
        %v4464 = vshrl.u32 %v4387, 16
        %v4466 = vor.u32 %v4464, %v4462
        %v4468 = vshll.u32 %v4388, 16
        %v4470 = vrot.slane %v4468, 1
        %v4471 = vsel %vm2089, %v4466, %v4470
        %v4472 = vshrl.u32 %v4388, 16
        %v4474 = vor.u32 %v4472, %v4470
        %v4476 = vshll.u32 %v4389, 16
        %v4478 = vrot.slane %v4476, 1
        %v4479 = vsel %vm2089, %v4474, %v4478
        %v4480 = vshrl.u32 %v4389, 16
        %v4482 = vor.u32 %v4480, %v4478
        %v4484 = vshll.u32 %v4390, 16
        %v4486 = vrot.slane %v4484, 1
        %v4487 = vsel %vm2089, %v4482, %v4486
        %v4488 = vshrl.u32 %v4390, 16
        %v4490 = vor.u32 %v4488, %v4486
        %v4492 = vshll.u32 %v4391, 16
        %v4494 = vrot.slane %v4492, 1
        %v4495 = vsel %vm2089, %v4490, %v4494
        %v4496 = vshrl.u32 %v4391, 16
        %v4498 = vor.u32 %v4496, %v4494
        %v4500 = vshll.u32 %v4392, 16
        %v4502 = vrot.slane %v4500, 1
        %v4503 = vsel %vm2089, %v4498, %v4502
        %v4504 = vshrl.u32 %v4392, 16
        %v4506 = vor.u32 %v4504, %v4502
        %v4508 = vshll.u32 %v4393, 16
        %v4510 = vrot.slane %v4508, 1
        %v4511 = vsel %vm2089, %v4506, %v4510
        %v4512 = vshrl.u32 %v4393, 16
        %v4514 = vor.u32 %v4512, %v4510
        %v4516 = vshll.u32 %v4394, 16
        %v4518 = vrot.slane %v4516, 1
        %v4519 = vsel %vm2089, %v4514, %v4518
        %v4520 = vshrl.u32 %v4394, 16
        %v4522 = vor.u32 %v4520, %v4518
        %v4524 = vshll.u32 %v4395, 16
        %v4526 = vrot.slane %v4524, 1
        %v4527 = vsel %vm2089, %v4522, %v4526
        %v4528 = vshrl.u32 %v4395, 16
        %v4530 = vor.u32 %v4528, %v4526
        %v4532 = vshll.u32 %v4396, 16
        %v4534 = vrot.slane %v4532, 1
        %v4535 = vsel %vm2089, %v4530, %v4534
        %v4536 = vshrl.u32 %v4396, 16
        %v4538 = vor.u32 %v4536, %v4534
        %v4540 = vshll.u32 %v4397, 16
        %v4542 = vrot.slane %v4540, 1
        %v4543 = vsel %vm2089, %v4538, %v4542
        %v4544 = vshrl.u32 %v4397, 16
        %v4546 = vor.u32 %v4544, %v4542
        %v4548 = vshll.u32 %v4398, 16
        %v4550 = vrot.slane %v4548, 1
        %v4551 = vsel %vm2089, %v4546, %v4550
        %v4552 = vshrl.u32 %v4398, 16
        %v4554 = vor.u32 %v4552, %v4550
        %v4556 = vshll.u32 %v4399, 16
        %v4558 = vrot.slane %v4556, 1
        %v4559 = vsel %vm2089, %v4554, %v4558
        %v4560 = vshrl.u32 %v4399, 16
        %v4562 = vor.u32 %v4560, %v4558
        %v4564 = vshll.u32 %v4400, 16
        %v4566 = vrot.slane %v4564, 1
        %v4567 = vsel %vm2089, %v4562, %v4566
        %v4568 = vshrl.u32 %v4400, 16
        %v4570 = vor.u32 %v4568, %v4566
        %v4572 = vshll.u32 %v4401, 16
        %v4574 = vrot.slane %v4572, 1
        %v4575 = vsel %vm2089, %v4570, %v4574
        %v4576 = vshrl.u32 %v4401, 16
        %v4578 = vor.u32 %v4576, %v4574
        %v4580 = vshll.u32 %v4402, 16
        %v4582 = vrot.slane %v4580, 1
        %v4583 = vsel %vm2089, %v4578, %v4582
        %v4584 = vshrl.u32 %v4402, 16
        %v4586 = vor.u32 %v4584, %v4582
        %v4588 = vshll.u32 %v4403, 16
        %v4590 = vrot.slane %v4588, 1
        %v4591 = vsel %vm2089, %v4586, %v4590
        %v4592 = vshrl.u32 %v4403, 16
        %v4594 = vor.u32 %v4592, %v4590
        %v4635 = vunpack.c.l.b16 %v4268
        %v4636 = vunpack.c.l.b16 %v4269
        %v4637 = vunpack.c.l.b16 %v4270
        %v4638 = vunpack.c.l.b16 %v4271
        %v4639 = vunpack.c.l.b16 %v4272
        %v4640 = vunpack.c.l.b16 %v4273
        %v4641 = vunpack.c.l.b16 %v4274
        %v4642 = vunpack.c.l.b16 %v4275
        %v4643 = vunpack.c.l.b16 %v4276
        %v4644 = vunpack.c.l.b16 %v4277
        %v4645 = vunpack.c.l.b16 %v4278
        %v4646 = vunpack.c.l.b16 %v4279
        %v4647 = vunpack.c.l.b16 %v4280
        %v4648 = vunpack.c.l.b16 %v4281
        %v4649 = vunpack.c.l.b16 %v4282
        %v4650 = vunpack.c.l.b16 %v4283
        %v4651 = vpack.c.b16 %v4636, %v4635
        %v4652 = vpack.c.b16 %v4638, %v4637
        %v4653 = vpack.c.b16 %v4640, %v4639
        %v4654 = vpack.c.b16 %v4642, %v4641
        %v4655 = vpack.c.b16 %v4644, %v4643
        %v4656 = vpack.c.b16 %v4646, %v4645
        %v4657 = vpack.c.b16 %v4648, %v4647
        %v4658 = vpack.c.b16 %v4650, %v4649
        %4667 = vmatpush.bf16.msra.mxu0 %v4658
        %4668 = vmatpush.bf16.msra.mxu0 %v4657
        %4669 = vmatpush.bf16.msra.mxu0 %v4656
        %4670 = vmatpush.bf16.msra.mxu0 %v4655
        %4671 = vmatpush.bf16.msra.mxu0 %v4654
        %4672 = vmatpush.bf16.msra.mxu0 %v4653
        %4673 = vmatpush.bf16.msra.mxu0 %v4652
        %4674 = vmatpush.bf16.msra.mxu0 %v4651
        %4675 = vmatmul.bf16.gmra.mxu0 %v4415
        %v4676 = vpop.f32.mrf.mxu0
        %v4677 = vadd.f32 0.0, %v4676
        %v4678 = vpop.f32.mrf.mxu0
        %v4679 = vadd.f32 0.0, %v4678
        %4680 = vmatmul.bf16.gmra.mxu0 %v4423
        %v4681 = vpop.f32.mrf.mxu0
        %v4682 = vadd.f32 0.0, %v4681
        %v4683 = vpop.f32.mrf.mxu0
        %v4684 = vadd.f32 0.0, %v4683
        %4685 = vmatmul.bf16.gmra.mxu0 %v4431
        %v4686 = vpop.f32.mrf.mxu0
        %v4687 = vadd.f32 0.0, %v4686
        %v4688 = vpop.f32.mrf.mxu0
        %v4689 = vadd.f32 0.0, %v4688
        %4690 = vmatmul.bf16.gmra.mxu0 %v4439
        %v4691 = vpop.f32.mrf.mxu0
        %v4692 = vadd.f32 0.0, %v4691
        %v4693 = vpop.f32.mrf.mxu0
        %v4694 = vadd.f32 0.0, %v4693
        %4695 = vmatmul.bf16.gmra.mxu0 %v4447
        %v4696 = vpop.f32.mrf.mxu0
        %v4697 = vadd.f32 0.0, %v4696
        %v4698 = vpop.f32.mrf.mxu0
        %v4699 = vadd.f32 0.0, %v4698
        %4700 = vmatmul.bf16.gmra.mxu0 %v4455
        %v4701 = vpop.f32.mrf.mxu0
        %v4702 = vadd.f32 0.0, %v4701
        %v4703 = vpop.f32.mrf.mxu0
        %v4704 = vadd.f32 0.0, %v4703
        %4705 = vmatmul.bf16.gmra.mxu0 %v4463
        %v4706 = vpop.f32.mrf.mxu0
        %v4707 = vadd.f32 0.0, %v4706
        %v4708 = vpop.f32.mrf.mxu0
        %v4709 = vadd.f32 0.0, %v4708
        %4710 = vmatmul.bf16.gmra.mxu0 %v4471
        %v4711 = vpop.f32.mrf.mxu0
        %v4712 = vadd.f32 0.0, %v4711
        %v4713 = vpop.f32.mrf.mxu0
        %v4714 = vadd.f32 0.0, %v4713
        %4715 = vmatmul.bf16.gmra.mxu0 %v4479
        %v4716 = vpop.f32.mrf.mxu0
        %v4717 = vadd.f32 0.0, %v4716
        %v4718 = vpop.f32.mrf.mxu0
        %v4719 = vadd.f32 0.0, %v4718
        %4720 = vmatmul.bf16.gmra.mxu0 %v4487
        %v4721 = vpop.f32.mrf.mxu0
        %v4722 = vadd.f32 0.0, %v4721
        %v4723 = vpop.f32.mrf.mxu0
        %v4724 = vadd.f32 0.0, %v4723
        %4725 = vmatmul.bf16.gmra.mxu0 %v4495
        %v4726 = vpop.f32.mrf.mxu0
        %v4727 = vadd.f32 0.0, %v4726
        %v4728 = vpop.f32.mrf.mxu0
        %v4729 = vadd.f32 0.0, %v4728
        %4730 = vmatmul.bf16.gmra.mxu0 %v4503
        %v4731 = vpop.f32.mrf.mxu0
        %v4732 = vadd.f32 0.0, %v4731
        %v4733 = vpop.f32.mrf.mxu0
        %v4734 = vadd.f32 0.0, %v4733
        %4735 = vmatmul.bf16.gmra.mxu0 %v4511
        %v4736 = vpop.f32.mrf.mxu0
        %v4737 = vadd.f32 0.0, %v4736
        %v4738 = vpop.f32.mrf.mxu0
        %v4739 = vadd.f32 0.0, %v4738
        %4740 = vmatmul.bf16.gmra.mxu0 %v4519
        %v4741 = vpop.f32.mrf.mxu0
        %v4742 = vadd.f32 0.0, %v4741
        %v4743 = vpop.f32.mrf.mxu0
        %v4744 = vadd.f32 0.0, %v4743
        %4745 = vmatmul.bf16.gmra.mxu0 %v4527
        %v4746 = vpop.f32.mrf.mxu0
        %v4747 = vadd.f32 0.0, %v4746
        %v4748 = vpop.f32.mrf.mxu0
        %v4749 = vadd.f32 0.0, %v4748
        %4750 = vmatmul.bf16.gmra.mxu0 %v4535
        %v4751 = vpop.f32.mrf.mxu0
        %v4752 = vadd.f32 0.0, %v4751
        %v4753 = vpop.f32.mrf.mxu0
        %v4754 = vadd.f32 0.0, %v4753
        %4755 = vmatmul.bf16.gmra.mxu0 %v4543
        %v4756 = vpop.f32.mrf.mxu0
        %v4757 = vadd.f32 0.0, %v4756
        %v4758 = vpop.f32.mrf.mxu0
        %v4759 = vadd.f32 0.0, %v4758
        %4760 = vmatmul.bf16.gmra.mxu0 %v4551
        %v4761 = vpop.f32.mrf.mxu0
        %v4762 = vadd.f32 0.0, %v4761
        %v4763 = vpop.f32.mrf.mxu0
        %v4764 = vadd.f32 0.0, %v4763
        %4765 = vmatmul.bf16.gmra.mxu0 %v4559
        %v4766 = vpop.f32.mrf.mxu0
        %v4767 = vadd.f32 0.0, %v4766
        %v4768 = vpop.f32.mrf.mxu0
        %v4769 = vadd.f32 0.0, %v4768
        %4770 = vmatmul.bf16.gmra.mxu0 %v4567
        %v4771 = vpop.f32.mrf.mxu0
        %v4772 = vadd.f32 0.0, %v4771
        %v4773 = vpop.f32.mrf.mxu0
        %v4774 = vadd.f32 0.0, %v4773
        %4775 = vmatmul.bf16.gmra.mxu0 %v4575
        %v4776 = vpop.f32.mrf.mxu0
        %v4777 = vadd.f32 0.0, %v4776
        %v4778 = vpop.f32.mrf.mxu0
        %v4779 = vadd.f32 0.0, %v4778
        %4780 = vmatmul.bf16.gmra.mxu0 %v4583
        %v4781 = vpop.f32.mrf.mxu0
        %v4782 = vadd.f32 0.0, %v4781
        %v4783 = vpop.f32.mrf.mxu0
        %v4784 = vadd.f32 0.0, %v4783
        %4785 = vmatmul.bf16.gmra.mxu0 %v4591
        %v4786 = vpop.f32.mrf.mxu0
        %v4787 = vadd.f32 0.0, %v4786
        %v4788 = vpop.f32.mrf.mxu0
        %v4789 = vadd.f32 0.0, %v4788
        %4790 = vmatmul.bf16.gmra.mxu0 %v4594
        %v4791 = vpop.f32.mrf.mxu0
        %v4792 = vadd.f32 0.0, %v4791
        %v4793 = vpop.f32.mrf.mxu0
        %v4794 = vadd.f32 0.0, %v4793
        %4795 = vdwg.mxu0
        %v4797 = vunpack.c.l.b16 %v4248
        %v4798 = vpack.c.b16 %v4797, %v4378
        %v4839 = vunpack.c.l.b16 %v4250
        %v4840 = vunpack.c.l.b16 %v4251
        %v4841 = vunpack.c.l.b16 %v4252
        %v4842 = vunpack.c.l.b16 %v4253
        %v4843 = vunpack.c.l.b16 %v4254
        %v4844 = vunpack.c.l.b16 %v4255
        %v4845 = vunpack.c.l.b16 %v4256
        %v4846 = vunpack.c.l.b16 %v4257
        %v4847 = vunpack.c.l.b16 %v4258
        %v4848 = vunpack.c.l.b16 %v4259
        %v4849 = vunpack.c.l.b16 %v4260
        %v4850 = vunpack.c.l.b16 %v4261
        %v4851 = vunpack.c.l.b16 %v4262
        %v4852 = vunpack.c.l.b16 %v4263
        %v4853 = vunpack.c.l.b16 %v4264
        %v4854 = vunpack.c.l.b16 %v4265
        %v4855 = vpack.c.b16 %v4840, %v4839
        %v4856 = vpack.c.b16 %v4842, %v4841
        %v4857 = vpack.c.b16 %v4844, %v4843
        %v4858 = vpack.c.b16 %v4846, %v4845
        %v4859 = vpack.c.b16 %v4848, %v4847
        %v4860 = vpack.c.b16 %v4850, %v4849
        %v4861 = vpack.c.b16 %v4852, %v4851
        %v4862 = vpack.c.b16 %v4854, %v4853
        %4871 = vmatpush.bf16.msra.mxu0 %v4862
        %4872 = vmatpush.bf16.msra.mxu0 %v4861
        %4873 = vmatpush.bf16.msra.mxu0 %v4860
        %4874 = vmatpush.bf16.msra.mxu0 %v4859
        %4875 = vmatpush.bf16.msra.mxu0 %v4858
        %4876 = vmatpush.bf16.msra.mxu0 %v4857
        %4877 = vmatpush.bf16.msra.mxu0 %v4856
        %4878 = vmatpush.bf16.msra.mxu0 %v4855
        %4879 = vmatmul.bf16.gmra.mxu0 %v4380
        %v4880 = vpop.f32.mrf.mxu0
        %v4881 = vadd.f32 %v4677, %v4880
        %v4882 = vpop.f32.mrf.mxu0
        %v4883 = vadd.f32 %v4679, %v4882
        %4884 = vmatmul.bf16.gmra.mxu0 %v4381
        %v4885 = vpop.f32.mrf.mxu0
        %v4886 = vadd.f32 %v4682, %v4885
        %v4887 = vpop.f32.mrf.mxu0
        %v4888 = vadd.f32 %v4684, %v4887
        %4889 = vmatmul.bf16.gmra.mxu0 %v4382
        %v4890 = vpop.f32.mrf.mxu0
        %v4891 = vadd.f32 %v4687, %v4890
        %v4892 = vpop.f32.mrf.mxu0
        %v4893 = vadd.f32 %v4689, %v4892
        %4894 = vmatmul.bf16.gmra.mxu0 %v4383
        %v4895 = vpop.f32.mrf.mxu0
        %v4896 = vadd.f32 %v4692, %v4895
        %v4897 = vpop.f32.mrf.mxu0
        %v4898 = vadd.f32 %v4694, %v4897
        %4899 = vmatmul.bf16.gmra.mxu0 %v4384
        %v4900 = vpop.f32.mrf.mxu0
        %v4901 = vadd.f32 %v4697, %v4900
        %v4902 = vpop.f32.mrf.mxu0
        %v4903 = vadd.f32 %v4699, %v4902
        %4904 = vmatmul.bf16.gmra.mxu0 %v4385
        %v4905 = vpop.f32.mrf.mxu0
        %v4906 = vadd.f32 %v4702, %v4905
        %v4907 = vpop.f32.mrf.mxu0
        %v4908 = vadd.f32 %v4704, %v4907
        %4909 = vmatmul.bf16.gmra.mxu0 %v4386
        %v4910 = vpop.f32.mrf.mxu0
        %v4911 = vadd.f32 %v4707, %v4910
        %v4912 = vpop.f32.mrf.mxu0
        %v4913 = vadd.f32 %v4709, %v4912
        %4914 = vmatmul.bf16.gmra.mxu0 %v4387
        %v4915 = vpop.f32.mrf.mxu0
        %v4916 = vadd.f32 %v4712, %v4915
        %v4917 = vpop.f32.mrf.mxu0
        %v4918 = vadd.f32 %v4714, %v4917
        %4919 = vmatmul.bf16.gmra.mxu0 %v4388
        %v4920 = vpop.f32.mrf.mxu0
        %v4921 = vadd.f32 %v4717, %v4920
        %v4922 = vpop.f32.mrf.mxu0
        %v4923 = vadd.f32 %v4719, %v4922
        %4924 = vmatmul.bf16.gmra.mxu0 %v4389
        %v4925 = vpop.f32.mrf.mxu0
        %v4926 = vadd.f32 %v4722, %v4925
        %v4927 = vpop.f32.mrf.mxu0
        %v4928 = vadd.f32 %v4724, %v4927
        %4929 = vmatmul.bf16.gmra.mxu0 %v4390
        %v4930 = vpop.f32.mrf.mxu0
        %v4931 = vadd.f32 %v4727, %v4930
        %v4932 = vpop.f32.mrf.mxu0
        %v4933 = vadd.f32 %v4729, %v4932
        %4934 = vmatmul.bf16.gmra.mxu0 %v4391
        %v4935 = vpop.f32.mrf.mxu0
        %v4936 = vadd.f32 %v4732, %v4935
        %v4937 = vpop.f32.mrf.mxu0
        %v4938 = vadd.f32 %v4734, %v4937
        %4939 = vmatmul.bf16.gmra.mxu0 %v4392
        %v4940 = vpop.f32.mrf.mxu0
        %v4941 = vadd.f32 %v4737, %v4940
        %v4942 = vpop.f32.mrf.mxu0
        %v4943 = vadd.f32 %v4739, %v4942
        %4944 = vmatmul.bf16.gmra.mxu0 %v4393
        %v4945 = vpop.f32.mrf.mxu0
        %v4946 = vadd.f32 %v4742, %v4945
        %v4947 = vpop.f32.mrf.mxu0
        %v4948 = vadd.f32 %v4744, %v4947
        %4949 = vmatmul.bf16.gmra.mxu0 %v4394
        %v4950 = vpop.f32.mrf.mxu0
        %v4951 = vadd.f32 %v4747, %v4950
        %v4952 = vpop.f32.mrf.mxu0
        %v4953 = vadd.f32 %v4749, %v4952
        %4954 = vmatmul.bf16.gmra.mxu0 %v4395
        %v4955 = vpop.f32.mrf.mxu0
        %v4956 = vadd.f32 %v4752, %v4955
        %v4957 = vpop.f32.mrf.mxu0
        %v4958 = vadd.f32 %v4754, %v4957
        %4959 = vmatmul.bf16.gmra.mxu0 %v4396
        %v4960 = vpop.f32.mrf.mxu0
        %v4961 = vadd.f32 %v4757, %v4960
        %v4962 = vpop.f32.mrf.mxu0
        %v4963 = vadd.f32 %v4759, %v4962
        %4964 = vmatmul.bf16.gmra.mxu0 %v4397
        %v4965 = vpop.f32.mrf.mxu0
        %v4966 = vadd.f32 %v4762, %v4965
        %v4967 = vpop.f32.mrf.mxu0
        %v4968 = vadd.f32 %v4764, %v4967
        %4969 = vmatmul.bf16.gmra.mxu0 %v4398
        %v4970 = vpop.f32.mrf.mxu0
        %v4971 = vadd.f32 %v4767, %v4970
        %v4972 = vpop.f32.mrf.mxu0
        %v4973 = vadd.f32 %v4769, %v4972
        %4974 = vmatmul.bf16.gmra.mxu0 %v4399
        %v4975 = vpop.f32.mrf.mxu0
        %v4976 = vadd.f32 %v4772, %v4975
        %v4977 = vpop.f32.mrf.mxu0
        %v4978 = vadd.f32 %v4774, %v4977
        %4979 = vmatmul.bf16.gmra.mxu0 %v4400
        %v4980 = vpop.f32.mrf.mxu0
        %v4981 = vadd.f32 %v4777, %v4980
        %v4982 = vpop.f32.mrf.mxu0
        %v4983 = vadd.f32 %v4779, %v4982
        %4984 = vmatmul.bf16.gmra.mxu0 %v4401
        %v4985 = vpop.f32.mrf.mxu0
        %v4986 = vadd.f32 %v4782, %v4985
        %v4987 = vpop.f32.mrf.mxu0
        %v4988 = vadd.f32 %v4784, %v4987
        %4989 = vmatmul.bf16.gmra.mxu0 %v4402
        %v4990 = vpop.f32.mrf.mxu0
        %v4991 = vadd.f32 %v4787, %v4990
        %v4992 = vpop.f32.mrf.mxu0
        %v4993 = vadd.f32 %v4789, %v4992
        %4994 = vmatmul.bf16.gmra.mxu0 %v4798
        %v4995 = vpop.f32.mrf.mxu0
        %v4996 = vadd.f32 %v4792, %v4995
        %v4997 = vpop.f32.mrf.mxu0
        %v4998 = vadd.f32 %v4794, %v4997
        %4999 = vdwg.mxu0
        %v5000 = vld [vmem:[#allocation2 + $0x14] sm:$0xe]
        %s5001 = scalar_lea.vmem [#allocation9], 512
        %v5002 = vld [vmem:[%s5001] sm:$0xf]
        %v5003 = vld [vmem:[%s5001 + $0x4] sm:$0xf]
        %v5004 = vld [vmem:[%s5001 + $0x8] sm:$0xf]
        %v5005 = vld [vmem:[%s5001 + $0xc] sm:$0xf]
        %v5006 = vld [vmem:[%s5001 + $0x10] sm:$0xf]
        %v5007 = vld [vmem:[%s5001 + $0x14] sm:$0xf]
        %v5008 = vld [vmem:[%s5001 + $0x18] sm:$0xf]
        %v5009 = vld [vmem:[%s5001 + $0x1c] sm:$0xf]
        %v5010 = vld [vmem:[%s5001 + $0x20] sm:$0xf]
        %v5011 = vld [vmem:[%s5001 + $0x24] sm:$0xf]
        %v5012 = vld [vmem:[%s5001 + $0x28] sm:$0xf]
        %v5013 = vld [vmem:[%s5001 + $0x2c] sm:$0xf]
        %v5014 = vld [vmem:[%s5001 + $0x30] sm:$0xf]
        %v5015 = vld [vmem:[%s5001 + $0x34] sm:$0xf]
        %v5016 = vld [vmem:[%s5001 + $0x38] sm:$0xf]
        %v5017 = vld [vmem:[%s5001 + $0x3c] sm:$0xf]
        %v5019 = vunpack.c.l.b16 %v5000
        %v5020 = vpack.c.b16 %v4333, %v5019
        %v5021 = vrot.slane %v5020, 1
        %v5022 = vrot.slane %v4381, 1
        %v5023 = vsel %vm2707, %v5021, %v5022
        %v5024 = vrot.slane %v4382, 1
        %v5025 = vsel %vm2707, %v5022, %v5024
        %v5026 = vrot.slane %v4383, 1
        %v5027 = vsel %vm2707, %v5024, %v5026
        %v5028 = vrot.slane %v4384, 1
        %v5029 = vsel %vm2707, %v5026, %v5028
        %v5030 = vrot.slane %v4385, 1
        %v5031 = vsel %vm2707, %v5028, %v5030
        %v5032 = vrot.slane %v4386, 1
        %v5033 = vsel %vm2707, %v5030, %v5032
        %v5034 = vrot.slane %v4387, 1
        %v5035 = vsel %vm2707, %v5032, %v5034
        %v5036 = vrot.slane %v4388, 1
        %v5037 = vsel %vm2707, %v5034, %v5036
        %v5038 = vrot.slane %v4389, 1
        %v5039 = vsel %vm2707, %v5036, %v5038
        %v5040 = vrot.slane %v4390, 1
        %v5041 = vsel %vm2707, %v5038, %v5040
        %v5042 = vrot.slane %v4391, 1
        %v5043 = vsel %vm2707, %v5040, %v5042
        %v5044 = vrot.slane %v4392, 1
        %v5045 = vsel %vm2707, %v5042, %v5044
        %v5046 = vrot.slane %v4393, 1
        %v5047 = vsel %vm2707, %v5044, %v5046
        %v5048 = vrot.slane %v4394, 1
        %v5049 = vsel %vm2707, %v5046, %v5048
        %v5050 = vrot.slane %v4395, 1
        %v5051 = vsel %vm2707, %v5048, %v5050
        %v5052 = vrot.slane %v4396, 1
        %v5053 = vsel %vm2707, %v5050, %v5052
        %v5054 = vrot.slane %v4397, 1
        %v5055 = vsel %vm2707, %v5052, %v5054
        %v5056 = vrot.slane %v4398, 1
        %v5057 = vsel %vm2707, %v5054, %v5056
        %v5058 = vrot.slane %v4399, 1
        %v5059 = vsel %vm2707, %v5056, %v5058
        %v5060 = vrot.slane %v4400, 1
        %v5061 = vsel %vm2707, %v5058, %v5060
        %v5062 = vrot.slane %v4401, 1
        %v5063 = vsel %vm2707, %v5060, %v5062
        %v5064 = vrot.slane %v4402, 1
        %v5065 = vsel %vm2707, %v5062, %v5064
        %v5066 = vrot.slane %v4403, 1
        %v5067 = vsel %vm2707, %v5064, %v5066
        %v5108 = vunpack.c.l.b16 %v5002
        %v5109 = vunpack.c.l.b16 %v5003
        %v5110 = vunpack.c.l.b16 %v5004
        %v5111 = vunpack.c.l.b16 %v5005
        %v5112 = vunpack.c.l.b16 %v5006
        %v5113 = vunpack.c.l.b16 %v5007
        %v5114 = vunpack.c.l.b16 %v5008
        %v5115 = vunpack.c.l.b16 %v5009
        %v5116 = vunpack.c.l.b16 %v5010
        %v5117 = vunpack.c.l.b16 %v5011
        %v5118 = vunpack.c.l.b16 %v5012
        %v5119 = vunpack.c.l.b16 %v5013
        %v5120 = vunpack.c.l.b16 %v5014
        %v5121 = vunpack.c.l.b16 %v5015
        %v5122 = vunpack.c.l.b16 %v5016
        %v5123 = vunpack.c.l.b16 %v5017
        %v5124 = vpack.c.b16 %v5109, %v5108
        %v5125 = vpack.c.b16 %v5111, %v5110
        %v5126 = vpack.c.b16 %v5113, %v5112
        %v5127 = vpack.c.b16 %v5115, %v5114
        %v5128 = vpack.c.b16 %v5117, %v5116
        %v5129 = vpack.c.b16 %v5119, %v5118
        %v5130 = vpack.c.b16 %v5121, %v5120
        %v5131 = vpack.c.b16 %v5123, %v5122
        %5140 = vmatpush.bf16.msra.mxu0 %v5131
        %5141 = vmatpush.bf16.msra.mxu0 %v5130
        %5142 = vmatpush.bf16.msra.mxu0 %v5129
        %5143 = vmatpush.bf16.msra.mxu0 %v5128
        %5144 = vmatpush.bf16.msra.mxu0 %v5127
        %5145 = vmatpush.bf16.msra.mxu0 %v5126
        %5146 = vmatpush.bf16.msra.mxu0 %v5125
        %5147 = vmatpush.bf16.msra.mxu0 %v5124
        %5148 = vmatmul.bf16.gmra.mxu0 %v5023
        %v5149 = vpop.f32.mrf.mxu0
        %v5150 = vadd.f32 0.0, %v5149
        %v5151 = vpop.f32.mrf.mxu0
        %v5152 = vadd.f32 0.0, %v5151
        %5153 = vmatmul.bf16.gmra.mxu0 %v5025
        %v5154 = vpop.f32.mrf.mxu0
        %v5155 = vadd.f32 0.0, %v5154
        %v5156 = vpop.f32.mrf.mxu0
        %v5157 = vadd.f32 0.0, %v5156
        %5158 = vmatmul.bf16.gmra.mxu0 %v5027
        %v5159 = vpop.f32.mrf.mxu0
        %v5160 = vadd.f32 0.0, %v5159
        %v5161 = vpop.f32.mrf.mxu0
        %v5162 = vadd.f32 0.0, %v5161
        %5163 = vmatmul.bf16.gmra.mxu0 %v5029
        %v5164 = vpop.f32.mrf.mxu0
        %v5165 = vadd.f32 0.0, %v5164
        %v5166 = vpop.f32.mrf.mxu0
        %v5167 = vadd.f32 0.0, %v5166
        %5168 = vmatmul.bf16.gmra.mxu0 %v5031
        %v5169 = vpop.f32.mrf.mxu0
        %v5170 = vadd.f32 0.0, %v5169
        %v5171 = vpop.f32.mrf.mxu0
        %v5172 = vadd.f32 0.0, %v5171
        %5173 = vmatmul.bf16.gmra.mxu0 %v5033
        %v5174 = vpop.f32.mrf.mxu0
        %v5175 = vadd.f32 0.0, %v5174
        %v5176 = vpop.f32.mrf.mxu0
        %v5177 = vadd.f32 0.0, %v5176
        %5178 = vmatmul.bf16.gmra.mxu0 %v5035
        %v5179 = vpop.f32.mrf.mxu0
        %v5180 = vadd.f32 0.0, %v5179
        %v5181 = vpop.f32.mrf.mxu0
        %v5182 = vadd.f32 0.0, %v5181
        %5183 = vmatmul.bf16.gmra.mxu0 %v5037
        %v5184 = vpop.f32.mrf.mxu0
        %v5185 = vadd.f32 0.0, %v5184
        %v5186 = vpop.f32.mrf.mxu0
        %v5187 = vadd.f32 0.0, %v5186
        %5188 = vmatmul.bf16.gmra.mxu0 %v5039
        %v5189 = vpop.f32.mrf.mxu0
        %v5190 = vadd.f32 0.0, %v5189
        %v5191 = vpop.f32.mrf.mxu0
        %v5192 = vadd.f32 0.0, %v5191
        %5193 = vmatmul.bf16.gmra.mxu0 %v5041
        %v5194 = vpop.f32.mrf.mxu0
        %v5195 = vadd.f32 0.0, %v5194
        %v5196 = vpop.f32.mrf.mxu0
        %v5197 = vadd.f32 0.0, %v5196
        %5198 = vmatmul.bf16.gmra.mxu0 %v5043
        %v5199 = vpop.f32.mrf.mxu0
        %v5200 = vadd.f32 0.0, %v5199
        %v5201 = vpop.f32.mrf.mxu0
        %v5202 = vadd.f32 0.0, %v5201
        %5203 = vmatmul.bf16.gmra.mxu0 %v5045
        %v5204 = vpop.f32.mrf.mxu0
        %v5205 = vadd.f32 0.0, %v5204
        %v5206 = vpop.f32.mrf.mxu0
        %v5207 = vadd.f32 0.0, %v5206
        %5208 = vmatmul.bf16.gmra.mxu0 %v5047
        %v5209 = vpop.f32.mrf.mxu0
        %v5210 = vadd.f32 0.0, %v5209
        %v5211 = vpop.f32.mrf.mxu0
        %v5212 = vadd.f32 0.0, %v5211
        %5213 = vmatmul.bf16.gmra.mxu0 %v5049
        %v5214 = vpop.f32.mrf.mxu0
        %v5215 = vadd.f32 0.0, %v5214
        %v5216 = vpop.f32.mrf.mxu0
        %v5217 = vadd.f32 0.0, %v5216
        %5218 = vmatmul.bf16.gmra.mxu0 %v5051
        %v5219 = vpop.f32.mrf.mxu0
        %v5220 = vadd.f32 0.0, %v5219
        %v5221 = vpop.f32.mrf.mxu0
        %v5222 = vadd.f32 0.0, %v5221
        %5223 = vmatmul.bf16.gmra.mxu0 %v5053
        %v5224 = vpop.f32.mrf.mxu0
        %v5225 = vadd.f32 0.0, %v5224
        %v5226 = vpop.f32.mrf.mxu0
        %v5227 = vadd.f32 0.0, %v5226
        %5228 = vmatmul.bf16.gmra.mxu0 %v5055
        %v5229 = vpop.f32.mrf.mxu0
        %v5230 = vadd.f32 0.0, %v5229
        %v5231 = vpop.f32.mrf.mxu0
        %v5232 = vadd.f32 0.0, %v5231
        %5233 = vmatmul.bf16.gmra.mxu0 %v5057
        %v5234 = vpop.f32.mrf.mxu0
        %v5235 = vadd.f32 0.0, %v5234
        %v5236 = vpop.f32.mrf.mxu0
        %v5237 = vadd.f32 0.0, %v5236
        %5238 = vmatmul.bf16.gmra.mxu0 %v5059
        %v5239 = vpop.f32.mrf.mxu0
        %v5240 = vadd.f32 0.0, %v5239
        %v5241 = vpop.f32.mrf.mxu0
        %v5242 = vadd.f32 0.0, %v5241
        %5243 = vmatmul.bf16.gmra.mxu0 %v5061
        %v5244 = vpop.f32.mrf.mxu0
        %v5245 = vadd.f32 0.0, %v5244
        %v5246 = vpop.f32.mrf.mxu0
        %v5247 = vadd.f32 0.0, %v5246
        %5248 = vmatmul.bf16.gmra.mxu0 %v5063
        %v5249 = vpop.f32.mrf.mxu0
        %v5250 = vadd.f32 0.0, %v5249
        %v5251 = vpop.f32.mrf.mxu0
        %v5252 = vadd.f32 0.0, %v5251
        %5253 = vmatmul.bf16.gmra.mxu0 %v5065
        %v5254 = vpop.f32.mrf.mxu0
        %v5255 = vadd.f32 0.0, %v5254
        %v5256 = vpop.f32.mrf.mxu0
        %v5257 = vadd.f32 0.0, %v5256
        %5258 = vmatmul.bf16.gmra.mxu0 %v5067
        %v5259 = vpop.f32.mrf.mxu0
        %v5260 = vadd.f32 0.0, %v5259
        %v5261 = vpop.f32.mrf.mxu0
        %v5262 = vadd.f32 0.0, %v5261
        %5263 = vmatmul.bf16.gmra.mxu0 %v5066
        %v5264 = vpop.f32.mrf.mxu0
        %v5265 = vadd.f32 0.0, %v5264
        %v5266 = vpop.f32.mrf.mxu0
        %v5267 = vadd.f32 0.0, %v5266
        %5268 = vdwg.mxu0
        %v5269 = vadd.f32 %v4881, %v5150
        %v5270 = vadd.f32 %v4883, %v5152
        %v5271 = vadd.f32 %v4886, %v5155
        %v5272 = vadd.f32 %v4888, %v5157
        %v5273 = vadd.f32 %v4891, %v5160
        %v5274 = vadd.f32 %v4893, %v5162
        %v5275 = vadd.f32 %v4896, %v5165
        %v5276 = vadd.f32 %v4898, %v5167
        %v5277 = vadd.f32 %v4901, %v5170
        %v5278 = vadd.f32 %v4903, %v5172
        %v5279 = vadd.f32 %v4906, %v5175
        %v5280 = vadd.f32 %v4908, %v5177
        %v5281 = vadd.f32 %v4911, %v5180
        %v5282 = vadd.f32 %v4913, %v5182
        %v5283 = vadd.f32 %v4916, %v5185
        %v5284 = vadd.f32 %v4918, %v5187
        %v5285 = vadd.f32 %v4921, %v5190
        %v5286 = vadd.f32 %v4923, %v5192
        %v5287 = vadd.f32 %v4926, %v5195
        %v5288 = vadd.f32 %v4928, %v5197
        %v5289 = vadd.f32 %v4931, %v5200
        %v5290 = vadd.f32 %v4933, %v5202
        %v5291 = vadd.f32 %v4936, %v5205
        %v5292 = vadd.f32 %v4938, %v5207
        %v5293 = vadd.f32 %v4941, %v5210
        %v5294 = vadd.f32 %v4943, %v5212
        %v5295 = vadd.f32 %v4946, %v5215
        %v5296 = vadd.f32 %v4948, %v5217
        %v5297 = vadd.f32 %v4951, %v5220
        %v5298 = vadd.f32 %v4953, %v5222
        %v5299 = vadd.f32 %v4956, %v5225
        %v5300 = vadd.f32 %v4958, %v5227
        %v5301 = vadd.f32 %v4961, %v5230
        %v5302 = vadd.f32 %v4963, %v5232
        %v5303 = vadd.f32 %v4966, %v5235
        %v5304 = vadd.f32 %v4968, %v5237
        %v5305 = vadd.f32 %v4971, %v5240
        %v5306 = vadd.f32 %v4973, %v5242
        %v5307 = vadd.f32 %v4976, %v5245
        %v5308 = vadd.f32 %v4978, %v5247
        %v5309 = vadd.f32 %v4981, %v5250
        %v5310 = vadd.f32 %v4983, %v5252
        %v5311 = vadd.f32 %v4986, %v5255
        %v5312 = vadd.f32 %v4988, %v5257
        %v5313 = vadd.f32 %v4991, %v5260
        %v5314 = vadd.f32 %v4993, %v5262
        %v5315 = vadd.f32 %v4996, %v5265
        %v5316 = vadd.f32 %v4998, %v5267
        %v5317 = vadd.f32 %v2956, %v4153
        %v5318 = vadd.f32 %v2957, %v4154
        %v5319 = vadd.f32 %v2958, %v4155
        %v5320 = vadd.f32 %v2959, %v4156
        %v5321 = vadd.f32 %v2960, %v4157
        %v5322 = vadd.f32 %v2961, %v4158
        %v5323 = vadd.f32 %v2962, %v4159
        %v5324 = vadd.f32 %v2963, %v4160
        %v5325 = vadd.f32 %v2964, %v4161
        %v5326 = vadd.f32 %v2965, %v4162
        %v5327 = vadd.f32 %v2966, %v4163
        %v5328 = vadd.f32 %v2967, %v4164
        %v5329 = vadd.f32 %v2968, %v4165
        %v5330 = vadd.f32 %v2969, %v4166
        %v5331 = vadd.f32 %v2970, %v4167
        %v5332 = vadd.f32 %v2971, %v4168
        %v5333 = vadd.f32 %v2972, %v4169
        %v5334 = vadd.f32 %v2973, %v4170
        %v5335 = vadd.f32 %v2974, %v4171
        %v5336 = vadd.f32 %v2975, %v4172
        %v5337 = vadd.f32 %v2976, %v4173
        %v5338 = vadd.f32 %v2977, %v4174
        %v5339 = vadd.f32 %v2978, %v4175
        %v5340 = vadd.f32 %v2979, %v4176
        %v5341 = vadd.f32 %v2980, %v4177
        %v5342 = vadd.f32 %v2981, %v4178
        %v5343 = vadd.f32 %v2982, %v4179
        %v5344 = vadd.f32 %v2983, %v4180
        %v5345 = vadd.f32 %v2984, %v4181
        %v5346 = vadd.f32 %v2985, %v4182
        %v5347 = vadd.f32 %v2986, %v4183
        %v5348 = vadd.f32 %v2987, %v4184
        %v5349 = vadd.f32 %v2988, %v4185
        %v5350 = vadd.f32 %v2989, %v4186
        %v5351 = vadd.f32 %v2990, %v4187
        %v5352 = vadd.f32 %v2991, %v4188
        %v5353 = vadd.f32 %v2992, %v4189
        %v5354 = vadd.f32 %v2993, %v4190
        %v5355 = vadd.f32 %v2994, %v4191
        %v5356 = vadd.f32 %v2995, %v4192
        %v5357 = vadd.f32 %v2996, %v4193
        %v5358 = vadd.f32 %v2997, %v4194
        %v5359 = vadd.f32 %v2998, %v4195
        %v5360 = vadd.f32 %v2999, %v4196
        %v5361 = vadd.f32 %v3000, %v4197
        %v5362 = vadd.f32 %v3001, %v4198
        %v5363 = vadd.f32 %v3002, %v4199
        %v5364 = vadd.f32 %v3003, %v4200
        %v5365 = vadd.f32 %v5317, %v5269
        %v5366 = vadd.f32 %v5318, %v5270
        %v5367 = vadd.f32 %v5319, %v5271
        %v5368 = vadd.f32 %v5320, %v5272
        %v5369 = vadd.f32 %v5321, %v5273
        %v5370 = vadd.f32 %v5322, %v5274
        %v5371 = vadd.f32 %v5323, %v5275
        %v5372 = vadd.f32 %v5324, %v5276
        %v5373 = vadd.f32 %v5325, %v5277
        %v5374 = vadd.f32 %v5326, %v5278
        %v5375 = vadd.f32 %v5327, %v5279
        %v5376 = vadd.f32 %v5328, %v5280
        %v5377 = vadd.f32 %v5329, %v5281
        %v5378 = vadd.f32 %v5330, %v5282
        %v5379 = vadd.f32 %v5331, %v5283
        %v5380 = vadd.f32 %v5332, %v5284
        %v5381 = vadd.f32 %v5333, %v5285
        %v5382 = vadd.f32 %v5334, %v5286
        %v5383 = vadd.f32 %v5335, %v5287
        %v5384 = vadd.f32 %v5336, %v5288
        %v5385 = vadd.f32 %v5337, %v5289
        %v5386 = vadd.f32 %v5338, %v5290
        %v5387 = vadd.f32 %v5339, %v5291
        %v5388 = vadd.f32 %v5340, %v5292
        %v5389 = vadd.f32 %v5341, %v5293
        %v5390 = vadd.f32 %v5342, %v5294
        %v5391 = vadd.f32 %v5343, %v5295
        %v5392 = vadd.f32 %v5344, %v5296
        %v5393 = vadd.f32 %v5345, %v5297
        %v5394 = vadd.f32 %v5346, %v5298
        %v5395 = vadd.f32 %v5347, %v5299
        %v5396 = vadd.f32 %v5348, %v5300
        %v5397 = vadd.f32 %v5349, %v5301
        %v5398 = vadd.f32 %v5350, %v5302
        %v5399 = vadd.f32 %v5351, %v5303
        %v5400 = vadd.f32 %v5352, %v5304
        %v5401 = vadd.f32 %v5353, %v5305
        %v5402 = vadd.f32 %v5354, %v5306
        %v5403 = vadd.f32 %v5355, %v5307
        %v5404 = vadd.f32 %v5356, %v5308
        %v5405 = vadd.f32 %v5357, %v5309
        %v5406 = vadd.f32 %v5358, %v5310
        %v5407 = vadd.f32 %v5359, %v5311
        %v5408 = vadd.f32 %v5360, %v5312
        %v5409 = vadd.f32 %v5361, %v5313
        %v5410 = vadd.f32 %v5362, %v5314
        %v5411 = vadd.f32 %v5363, %v5315
        %v5412 = vadd.f32 %v5364, %v5316
        %v5413 = vld [vmem:[%s4] sm:$0x1]
        %v5415 = vperm.slane %v5413, 0
        %v5417 = vadd.f32 %v5365, %v5415
        %v5418 = vadd.f32 %v5366, %v5415
        %v5419 = vadd.f32 %v5367, %v5415
        %v5420 = vadd.f32 %v5368, %v5415
        %v5421 = vadd.f32 %v5369, %v5415
        %v5422 = vadd.f32 %v5370, %v5415
        %v5423 = vadd.f32 %v5371, %v5415
        %v5424 = vadd.f32 %v5372, %v5415
        %v5425 = vadd.f32 %v5373, %v5415
        %v5426 = vadd.f32 %v5374, %v5415
        %v5427 = vadd.f32 %v5375, %v5415
        %v5428 = vadd.f32 %v5376, %v5415
        %v5429 = vadd.f32 %v5377, %v5415
        %v5430 = vadd.f32 %v5378, %v5415
        %v5431 = vadd.f32 %v5379, %v5415
        %v5432 = vadd.f32 %v5380, %v5415
        %v5433 = vadd.f32 %v5381, %v5415
        %v5434 = vadd.f32 %v5382, %v5415
        %v5435 = vadd.f32 %v5383, %v5415
        %v5436 = vadd.f32 %v5384, %v5415
        %v5437 = vadd.f32 %v5385, %v5415
        %v5438 = vadd.f32 %v5386, %v5415
        %v5439 = vadd.f32 %v5387, %v5415
        %v5440 = vadd.f32 %v5388, %v5415
        %v5441 = vadd.f32 %v5389, %v5415
        %v5442 = vadd.f32 %v5390, %v5415
        %v5443 = vadd.f32 %v5391, %v5415
        %v5444 = vadd.f32 %v5392, %v5415
        %v5445 = vadd.f32 %v5393, %v5415
        %v5446 = vadd.f32 %v5394, %v5415
        %v5447 = vadd.f32 %v5395, %v5415
        %v5448 = vadd.f32 %v5396, %v5415
        %v5449 = vadd.f32 %v5397, %v5415
        %v5450 = vadd.f32 %v5398, %v5415
        %v5451 = vadd.f32 %v5399, %v5415
        %v5452 = vadd.f32 %v5400, %v5415
        %v5453 = vadd.f32 %v5401, %v5415
        %v5454 = vadd.f32 %v5402, %v5415
        %v5455 = vadd.f32 %v5403, %v5415
        %v5456 = vadd.f32 %v5404, %v5415
        %v5457 = vadd.f32 %v5405, %v5415
        %v5458 = vadd.f32 %v5406, %v5415
        %v5459 = vadd.f32 %v5407, %v5415
        %v5460 = vadd.f32 %v5408, %v5415
        %v5461 = vadd.f32 %v5409, %v5415
        %v5462 = vadd.f32 %v5410, %v5415
        %v5463 = vadd.f32 %v5411, %v5415
        %v5464 = vadd.f32 %v5412, %v5415
        %v5465 = vmax.f32 %v5417, 0.0
        %v5466 = vmax.f32 %v5418, 0.0
        %v5467 = vmax.f32 %v5419, 0.0
        %v5468 = vmax.f32 %v5420, 0.0
        %v5469 = vmax.f32 %v5421, 0.0
        %v5470 = vmax.f32 %v5422, 0.0
        %v5471 = vmax.f32 %v5423, 0.0
        %v5472 = vmax.f32 %v5424, 0.0
        %v5473 = vmax.f32 %v5425, 0.0
        %v5474 = vmax.f32 %v5426, 0.0
        %v5475 = vmax.f32 %v5427, 0.0
        %v5476 = vmax.f32 %v5428, 0.0
        %v5477 = vmax.f32 %v5429, 0.0
        %v5478 = vmax.f32 %v5430, 0.0
        %v5479 = vmax.f32 %v5431, 0.0
        %v5480 = vmax.f32 %v5432, 0.0
        %v5481 = vmax.f32 %v5433, 0.0
        %v5482 = vmax.f32 %v5434, 0.0
        %v5483 = vmax.f32 %v5435, 0.0
        %v5484 = vmax.f32 %v5436, 0.0
        %v5485 = vmax.f32 %v5437, 0.0
        %v5486 = vmax.f32 %v5438, 0.0
        %v5487 = vmax.f32 %v5439, 0.0
        %v5488 = vmax.f32 %v5440, 0.0
        %v5489 = vmax.f32 %v5441, 0.0
        %v5490 = vmax.f32 %v5442, 0.0
        %v5491 = vmax.f32 %v5443, 0.0
        %v5492 = vmax.f32 %v5444, 0.0
        %v5493 = vmax.f32 %v5445, 0.0
        %v5494 = vmax.f32 %v5446, 0.0
        %v5495 = vmax.f32 %v5447, 0.0
        %v5496 = vmax.f32 %v5448, 0.0
        %v5497 = vmax.f32 %v5449, 0.0
        %v5498 = vmax.f32 %v5450, 0.0
        %v5499 = vmax.f32 %v5451, 0.0
        %v5500 = vmax.f32 %v5452, 0.0
        %v5501 = vmax.f32 %v5453, 0.0
        %v5502 = vmax.f32 %v5454, 0.0
        %v5503 = vmax.f32 %v5455, 0.0
        %v5504 = vmax.f32 %v5456, 0.0
        %v5505 = vmax.f32 %v5457, 0.0
        %v5506 = vmax.f32 %v5458, 0.0
        %v5507 = vmax.f32 %v5459, 0.0
        %v5508 = vmax.f32 %v5460, 0.0
        %v5509 = vmax.f32 %v5461, 0.0
        %v5510 = vmax.f32 %v5462, 0.0
        %v5511 = vmax.f32 %v5463, 0.0
        %v5512 = vmax.f32 %v5464, 0.0
        %vm5513 = vcmp.ge.f32.partialorder %v1172, 1.0
        %vm5514 = vcmp.ge.f32.partialorder %v1173, 1.0
        %vm5515 = vcmp.ge.f32.partialorder %v1174, 1.0
        %vm5516 = vcmp.ge.f32.partialorder %v1175, 1.0
        %vm5517 = vcmp.ge.f32.partialorder %v1176, 1.0
        %vm5518 = vcmp.ge.f32.partialorder %v1177, 1.0
        %vm5519 = vcmp.ge.f32.partialorder %v1178, 1.0
        %vm5520 = vcmp.ge.f32.partialorder %v1179, 1.0
        %vm5521 = vcmp.ge.f32.partialorder %v1180, 1.0
        %vm5522 = vcmp.ge.f32.partialorder %v1181, 1.0
        %vm5523 = vcmp.ge.f32.partialorder %v1182, 1.0
        %vm5524 = vcmp.ge.f32.partialorder %v1183, 1.0
        %vm5525 = vcmp.ge.f32.partialorder %v1184, 1.0
        %vm5526 = vcmp.ge.f32.partialorder %v1185, 1.0
        %vm5527 = vcmp.ge.f32.partialorder %v1186, 1.0
        %vm5528 = vcmp.ge.f32.partialorder %v1187, 1.0
        %vm5529 = vcmp.ge.f32.partialorder %v1188, 1.0
        %vm5530 = vcmp.ge.f32.partialorder %v1189, 1.0
        %vm5531 = vcmp.ge.f32.partialorder %v1190, 1.0
        %vm5532 = vcmp.ge.f32.partialorder %v1191, 1.0
        %vm5533 = vcmp.ge.f32.partialorder %v1192, 1.0
        %vm5534 = vcmp.ge.f32.partialorder %v1193, 1.0
        %vm5535 = vcmp.ge.f32.partialorder %v1194, 1.0
        %vm5536 = vcmp.ge.f32.partialorder %v1195, 1.0
        %vm5537 = vcmp.ge.f32.partialorder %v1196, 1.0
        %vm5538 = vcmp.ge.f32.partialorder %v1197, 1.0
        %vm5539 = vcmp.ge.f32.partialorder %v1198, 1.0
        %vm5540 = vcmp.ge.f32.partialorder %v1199, 1.0
        %vm5541 = vcmp.ge.f32.partialorder %v1200, 1.0
        %vm5542 = vcmp.ge.f32.partialorder %v1201, 1.0
        %vm5543 = vcmp.ge.f32.partialorder %v1202, 1.0
        %vm5544 = vcmp.ge.f32.partialorder %v1203, 1.0
        %vm5545 = vcmp.ge.f32.partialorder %v1204, 1.0
        %vm5546 = vcmp.ge.f32.partialorder %v1205, 1.0
        %vm5547 = vcmp.ge.f32.partialorder %v1206, 1.0
        %vm5548 = vcmp.ge.f32.partialorder %v1207, 1.0
        %vm5549 = vcmp.ge.f32.partialorder %v1208, 1.0
        %vm5550 = vcmp.ge.f32.partialorder %v1209, 1.0
        %vm5551 = vcmp.ge.f32.partialorder %v1210, 1.0
        %vm5552 = vcmp.ge.f32.partialorder %v1211, 1.0
        %vm5553 = vcmp.ge.f32.partialorder %v1212, 1.0
        %vm5554 = vcmp.ge.f32.partialorder %v1213, 1.0
        %vm5555 = vcmp.ge.f32.partialorder %v1214, 1.0
        %vm5556 = vcmp.ge.f32.partialorder %v1215, 1.0
        %vm5557 = vcmp.ge.f32.partialorder %v1216, 1.0
        %vm5558 = vcmp.ge.f32.partialorder %v1217, 1.0
        %vm5559 = vcmp.ge.f32.partialorder %v1218, 1.0
        %vm5560 = vcmp.ge.f32.partialorder %v1219, 1.0
        %vm5561 = vcmp.lt.f32.partialorder %v1172, 17.0
        %vm5562 = vcmp.lt.f32.partialorder %v1173, 17.0
        %vm5563 = vcmp.lt.f32.partialorder %v1174, 17.0
        %vm5564 = vcmp.lt.f32.partialorder %v1175, 17.0
        %vm5565 = vcmp.lt.f32.partialorder %v1176, 17.0
        %vm5566 = vcmp.lt.f32.partialorder %v1177, 17.0
        %vm5567 = vcmp.lt.f32.partialorder %v1178, 17.0
        %vm5568 = vcmp.lt.f32.partialorder %v1179, 17.0
        %vm5569 = vcmp.lt.f32.partialorder %v1180, 17.0
        %vm5570 = vcmp.lt.f32.partialorder %v1181, 17.0
        %vm5571 = vcmp.lt.f32.partialorder %v1182, 17.0
        %vm5572 = vcmp.lt.f32.partialorder %v1183, 17.0
        %vm5573 = vcmp.lt.f32.partialorder %v1184, 17.0
        %vm5574 = vcmp.lt.f32.partialorder %v1185, 17.0
        %vm5575 = vcmp.lt.f32.partialorder %v1186, 17.0
        %vm5576 = vcmp.lt.f32.partialorder %v1187, 17.0
        %vm5577 = vcmp.lt.f32.partialorder %v1188, 17.0
        %vm5578 = vcmp.lt.f32.partialorder %v1189, 17.0
        %vm5579 = vcmp.lt.f32.partialorder %v1190, 17.0
        %vm5580 = vcmp.lt.f32.partialorder %v1191, 17.0
        %vm5581 = vcmp.lt.f32.partialorder %v1192, 17.0
        %vm5582 = vcmp.lt.f32.partialorder %v1193, 17.0
        %vm5583 = vcmp.lt.f32.partialorder %v1194, 17.0
        %vm5584 = vcmp.lt.f32.partialorder %v1195, 17.0
        %vm5585 = vcmp.lt.f32.partialorder %v1196, 17.0
        %vm5586 = vcmp.lt.f32.partialorder %v1197, 17.0
        %vm5587 = vcmp.lt.f32.partialorder %v1198, 17.0
        %vm5588 = vcmp.lt.f32.partialorder %v1199, 17.0
        %vm5589 = vcmp.lt.f32.partialorder %v1200, 17.0
        %vm5590 = vcmp.lt.f32.partialorder %v1201, 17.0
        %vm5591 = vcmp.lt.f32.partialorder %v1202, 17.0
        %vm5592 = vcmp.lt.f32.partialorder %v1203, 17.0
        %vm5593 = vcmp.lt.f32.partialorder %v1204, 17.0
        %vm5594 = vcmp.lt.f32.partialorder %v1205, 17.0
        %vm5595 = vcmp.lt.f32.partialorder %v1206, 17.0
        %vm5596 = vcmp.lt.f32.partialorder %v1207, 17.0
        %vm5597 = vcmp.lt.f32.partialorder %v1208, 17.0
        %vm5598 = vcmp.lt.f32.partialorder %v1209, 17.0
        %vm5599 = vcmp.lt.f32.partialorder %v1210, 17.0
        %vm5600 = vcmp.lt.f32.partialorder %v1211, 17.0
        %vm5601 = vcmp.lt.f32.partialorder %v1212, 17.0
        %vm5602 = vcmp.lt.f32.partialorder %v1213, 17.0
        %vm5603 = vcmp.lt.f32.partialorder %v1214, 17.0
        %vm5604 = vcmp.lt.f32.partialorder %v1215, 17.0
        %vm5605 = vcmp.lt.f32.partialorder %v1216, 17.0
        %vm5606 = vcmp.lt.f32.partialorder %v1217, 17.0
        %vm5607 = vcmp.lt.f32.partialorder %v1218, 17.0
        %vm5608 = vcmp.lt.f32.partialorder %v1219, 17.0
        %vm5609 = vmand %vm5513, %vm5561
        %vm5610 = vmand %vm5514, %vm5562
        %vm5611 = vmand %vm5515, %vm5563
        %vm5612 = vmand %vm5516, %vm5564
        %vm5613 = vmand %vm5517, %vm5565
        %vm5614 = vmand %vm5518, %vm5566
        %vm5615 = vmand %vm5519, %vm5567
        %vm5616 = vmand %vm5520, %vm5568
        %vm5617 = vmand %vm5521, %vm5569
        %vm5618 = vmand %vm5522, %vm5570
        %vm5619 = vmand %vm5523, %vm5571
        %vm5620 = vmand %vm5524, %vm5572
        %vm5621 = vmand %vm5525, %vm5573
        %vm5622 = vmand %vm5526, %vm5574
        %vm5623 = vmand %vm5527, %vm5575
        %vm5624 = vmand %vm5528, %vm5576
        %vm5625 = vmand %vm5529, %vm5577
        %vm5626 = vmand %vm5530, %vm5578
        %vm5627 = vmand %vm5531, %vm5579
        %vm5628 = vmand %vm5532, %vm5580
        %vm5629 = vmand %vm5533, %vm5581
        %vm5630 = vmand %vm5534, %vm5582
        %vm5631 = vmand %vm5535, %vm5583
        %vm5632 = vmand %vm5536, %vm5584
        %vm5633 = vmand %vm5537, %vm5585
        %vm5634 = vmand %vm5538, %vm5586
        %vm5635 = vmand %vm5539, %vm5587
        %vm5636 = vmand %vm5540, %vm5588
        %vm5637 = vmand %vm5541, %vm5589
        %vm5638 = vmand %vm5542, %vm5590
        %vm5639 = vmand %vm5543, %vm5591
        %vm5640 = vmand %vm5544, %vm5592
        %vm5641 = vmand %vm5545, %vm5593
        %vm5642 = vmand %vm5546, %vm5594
        %vm5643 = vmand %vm5547, %vm5595
        %vm5644 = vmand %vm5548, %vm5596
        %vm5645 = vmand %vm5549, %vm5597
        %vm5646 = vmand %vm5550, %vm5598
        %vm5647 = vmand %vm5551, %vm5599
        %vm5648 = vmand %vm5552, %vm5600
        %vm5649 = vmand %vm5553, %vm5601
        %vm5650 = vmand %vm5554, %vm5602
        %vm5651 = vmand %vm5555, %vm5603
        %vm5652 = vmand %vm5556, %vm5604
        %vm5653 = vmand %vm5557, %vm5605
        %vm5654 = vmand %vm5558, %vm5606
        %vm5655 = vmand %vm5559, %vm5607
        %vm5656 = vmand %vm5560, %vm5608
        %vm5657 = vcmp.ge.f32.partialorder %v897, 20.0
        %vm5658 = vcmp.ge.f32.partialorder %v898, 20.0
        %vm5659 = vcmp.ge.f32.partialorder %v899, 20.0
        %vm5660 = vcmp.ge.f32.partialorder %v900, 20.0
        %vm5661 = vcmp.ge.f32.partialorder %v901, 20.0
        %vm5662 = vcmp.ge.f32.partialorder %v902, 20.0
        %vm5663 = vcmp.ge.f32.partialorder %v903, 20.0
        %vm5664 = vcmp.ge.f32.partialorder %v904, 20.0
        %vm5665 = vcmp.ge.f32.partialorder %v905, 20.0
        %vm5666 = vcmp.ge.f32.partialorder %v906, 20.0
        %vm5667 = vcmp.ge.f32.partialorder %v907, 20.0
        %vm5668 = vcmp.ge.f32.partialorder %v908, 20.0
        %vm5669 = vcmp.ge.f32.partialorder %v909, 20.0
        %vm5670 = vcmp.ge.f32.partialorder %v910, 20.0
        %vm5671 = vcmp.ge.f32.partialorder %v911, 20.0
        %vm5672 = vcmp.ge.f32.partialorder %v912, 20.0
        %vm5673 = vcmp.ge.f32.partialorder %v913, 20.0
        %vm5674 = vcmp.ge.f32.partialorder %v914, 20.0
        %vm5675 = vcmp.ge.f32.partialorder %v915, 20.0
        %vm5676 = vcmp.ge.f32.partialorder %v916, 20.0
        %vm5677 = vcmp.ge.f32.partialorder %v917, 20.0
        %vm5678 = vcmp.ge.f32.partialorder %v918, 20.0
        %vm5679 = vcmp.ge.f32.partialorder %v919, 20.0
        %vm5680 = vcmp.ge.f32.partialorder %v920, 20.0
        %vm5681 = vcmp.ge.f32.partialorder %v921, 20.0
        %vm5682 = vcmp.ge.f32.partialorder %v922, 20.0
        %vm5683 = vcmp.ge.f32.partialorder %v923, 20.0
        %vm5684 = vcmp.ge.f32.partialorder %v924, 20.0
        %vm5685 = vcmp.ge.f32.partialorder %v925, 20.0
        %vm5686 = vcmp.ge.f32.partialorder %v926, 20.0
        %vm5687 = vcmp.ge.f32.partialorder %v927, 20.0
        %vm5688 = vcmp.ge.f32.partialorder %v928, 20.0
        %vm5689 = vcmp.ge.f32.partialorder %v929, 20.0
        %vm5690 = vcmp.ge.f32.partialorder %v930, 20.0
        %vm5691 = vcmp.ge.f32.partialorder %v931, 20.0
        %vm5692 = vcmp.ge.f32.partialorder %v932, 20.0
        %vm5693 = vcmp.ge.f32.partialorder %v933, 20.0
        %vm5694 = vcmp.ge.f32.partialorder %v934, 20.0
        %vm5695 = vcmp.ge.f32.partialorder %v935, 20.0
        %vm5696 = vcmp.ge.f32.partialorder %v936, 20.0
        %vm5697 = vcmp.ge.f32.partialorder %v937, 20.0
        %vm5698 = vcmp.ge.f32.partialorder %v938, 20.0
        %vm5699 = vcmp.ge.f32.partialorder %v939, 20.0
        %vm5700 = vcmp.ge.f32.partialorder %v940, 20.0
        %vm5701 = vcmp.ge.f32.partialorder %v941, 20.0
        %vm5702 = vcmp.ge.f32.partialorder %v942, 20.0
        %vm5703 = vcmp.ge.f32.partialorder %v943, 20.0
        %vm5704 = vcmp.ge.f32.partialorder %v944, 20.0
        %vm5705 = vmand %vm5609, %vm5657
        %vm5706 = vmand %vm5610, %vm5658
        %vm5707 = vmand %vm5611, %vm5659
        %vm5708 = vmand %vm5612, %vm5660
        %vm5709 = vmand %vm5613, %vm5661
        %vm5710 = vmand %vm5614, %vm5662
        %vm5711 = vmand %vm5615, %vm5663
        %vm5712 = vmand %vm5616, %vm5664
        %vm5713 = vmand %vm5617, %vm5665
        %vm5714 = vmand %vm5618, %vm5666
        %vm5715 = vmand %vm5619, %vm5667
        %vm5716 = vmand %vm5620, %vm5668
        %vm5717 = vmand %vm5621, %vm5669
        %vm5718 = vmand %vm5622, %vm5670
        %vm5719 = vmand %vm5623, %vm5671
        %vm5720 = vmand %vm5624, %vm5672
        %vm5721 = vmand %vm5625, %vm5673
        %vm5722 = vmand %vm5626, %vm5674
        %vm5723 = vmand %vm5627, %vm5675
        %vm5724 = vmand %vm5628, %vm5676
        %vm5725 = vmand %vm5629, %vm5677
        %vm5726 = vmand %vm5630, %vm5678
        %vm5727 = vmand %vm5631, %vm5679
        %vm5728 = vmand %vm5632, %vm5680
        %vm5729 = vmand %vm5633, %vm5681
        %vm5730 = vmand %vm5634, %vm5682
        %vm5731 = vmand %vm5635, %vm5683
        %vm5732 = vmand %vm5636, %vm5684
        %vm5733 = vmand %vm5637, %vm5685
        %vm5734 = vmand %vm5638, %vm5686
        %vm5735 = vmand %vm5639, %vm5687
        %vm5736 = vmand %vm5640, %vm5688
        %vm5737 = vmand %vm5641, %vm5689
        %vm5738 = vmand %vm5642, %vm5690
        %vm5739 = vmand %vm5643, %vm5691
        %vm5740 = vmand %vm5644, %vm5692
        %vm5741 = vmand %vm5645, %vm5693
        %vm5742 = vmand %vm5646, %vm5694
        %vm5743 = vmand %vm5647, %vm5695
        %vm5744 = vmand %vm5648, %vm5696
        %vm5745 = vmand %vm5649, %vm5697
        %vm5746 = vmand %vm5650, %vm5698
        %vm5747 = vmand %vm5651, %vm5699
        %vm5748 = vmand %vm5652, %vm5700
        %vm5749 = vmand %vm5653, %vm5701
        %vm5750 = vmand %vm5654, %vm5702
        %vm5751 = vmand %vm5655, %vm5703
        %vm5752 = vmand %vm5656, %vm5704
        %vm5753 = vcmp.lt.f32.partialorder %v897, 340.0
        %vm5754 = vcmp.lt.f32.partialorder %v898, 340.0
        %vm5755 = vcmp.lt.f32.partialorder %v899, 340.0
        %vm5756 = vcmp.lt.f32.partialorder %v900, 340.0
        %vm5757 = vcmp.lt.f32.partialorder %v901, 340.0
        %vm5758 = vcmp.lt.f32.partialorder %v902, 340.0
        %vm5759 = vcmp.lt.f32.partialorder %v903, 340.0
        %vm5760 = vcmp.lt.f32.partialorder %v904, 340.0
        %vm5761 = vcmp.lt.f32.partialorder %v905, 340.0
        %vm5762 = vcmp.lt.f32.partialorder %v906, 340.0
        %vm5763 = vcmp.lt.f32.partialorder %v907, 340.0
        %vm5764 = vcmp.lt.f32.partialorder %v908, 340.0
        %vm5765 = vcmp.lt.f32.partialorder %v909, 340.0
        %vm5766 = vcmp.lt.f32.partialorder %v910, 340.0
        %vm5767 = vcmp.lt.f32.partialorder %v911, 340.0
        %vm5768 = vcmp.lt.f32.partialorder %v912, 340.0
        %vm5769 = vcmp.lt.f32.partialorder %v913, 340.0
        %vm5770 = vcmp.lt.f32.partialorder %v914, 340.0
        %vm5771 = vcmp.lt.f32.partialorder %v915, 340.0
        %vm5772 = vcmp.lt.f32.partialorder %v916, 340.0
        %vm5773 = vcmp.lt.f32.partialorder %v917, 340.0
        %vm5774 = vcmp.lt.f32.partialorder %v918, 340.0
        %vm5775 = vcmp.lt.f32.partialorder %v919, 340.0
        %vm5776 = vcmp.lt.f32.partialorder %v920, 340.0
        %vm5777 = vcmp.lt.f32.partialorder %v921, 340.0
        %vm5778 = vcmp.lt.f32.partialorder %v922, 340.0
        %vm5779 = vcmp.lt.f32.partialorder %v923, 340.0
        %vm5780 = vcmp.lt.f32.partialorder %v924, 340.0
        %vm5781 = vcmp.lt.f32.partialorder %v925, 340.0
        %vm5782 = vcmp.lt.f32.partialorder %v926, 340.0
        %vm5783 = vcmp.lt.f32.partialorder %v927, 340.0
        %vm5784 = vcmp.lt.f32.partialorder %v928, 340.0
        %vm5785 = vcmp.lt.f32.partialorder %v929, 340.0
        %vm5786 = vcmp.lt.f32.partialorder %v930, 340.0
        %vm5787 = vcmp.lt.f32.partialorder %v931, 340.0
        %vm5788 = vcmp.lt.f32.partialorder %v932, 340.0
        %vm5789 = vcmp.lt.f32.partialorder %v933, 340.0
        %vm5790 = vcmp.lt.f32.partialorder %v934, 340.0
        %vm5791 = vcmp.lt.f32.partialorder %v935, 340.0
        %vm5792 = vcmp.lt.f32.partialorder %v936, 340.0
        %vm5793 = vcmp.lt.f32.partialorder %v937, 340.0
        %vm5794 = vcmp.lt.f32.partialorder %v938, 340.0
        %vm5795 = vcmp.lt.f32.partialorder %v939, 340.0
        %vm5796 = vcmp.lt.f32.partialorder %v940, 340.0
        %vm5797 = vcmp.lt.f32.partialorder %v941, 340.0
        %vm5798 = vcmp.lt.f32.partialorder %v942, 340.0
        %vm5799 = vcmp.lt.f32.partialorder %v943, 340.0
        %vm5800 = vcmp.lt.f32.partialorder %v944, 340.0
        %vm5801 = vmand %vm5705, %vm5753
        %vm5802 = vmand %vm5706, %vm5754
        %vm5803 = vmand %vm5707, %vm5755
        %vm5804 = vmand %vm5708, %vm5756
        %vm5805 = vmand %vm5709, %vm5757
        %vm5806 = vmand %vm5710, %vm5758
        %vm5807 = vmand %vm5711, %vm5759
        %vm5808 = vmand %vm5712, %vm5760
        %vm5809 = vmand %vm5713, %vm5761
        %vm5810 = vmand %vm5714, %vm5762
        %vm5811 = vmand %vm5715, %vm5763
        %vm5812 = vmand %vm5716, %vm5764
        %vm5813 = vmand %vm5717, %vm5765
        %vm5814 = vmand %vm5718, %vm5766
        %vm5815 = vmand %vm5719, %vm5767
        %vm5816 = vmand %vm5720, %vm5768
        %vm5817 = vmand %vm5721, %vm5769
        %vm5818 = vmand %vm5722, %vm5770
        %vm5819 = vmand %vm5723, %vm5771
        %vm5820 = vmand %vm5724, %vm5772
        %vm5821 = vmand %vm5725, %vm5773
        %vm5822 = vmand %vm5726, %vm5774
        %vm5823 = vmand %vm5727, %vm5775
        %vm5824 = vmand %vm5728, %vm5776
        %vm5825 = vmand %vm5729, %vm5777
        %vm5826 = vmand %vm5730, %vm5778
        %vm5827 = vmand %vm5731, %vm5779
        %vm5828 = vmand %vm5732, %vm5780
        %vm5829 = vmand %vm5733, %vm5781
        %vm5830 = vmand %vm5734, %vm5782
        %vm5831 = vmand %vm5735, %vm5783
        %vm5832 = vmand %vm5736, %vm5784
        %vm5833 = vmand %vm5737, %vm5785
        %vm5834 = vmand %vm5738, %vm5786
        %vm5835 = vmand %vm5739, %vm5787
        %vm5836 = vmand %vm5740, %vm5788
        %vm5837 = vmand %vm5741, %vm5789
        %vm5838 = vmand %vm5742, %vm5790
        %vm5839 = vmand %vm5743, %vm5791
        %vm5840 = vmand %vm5744, %vm5792
        %vm5841 = vmand %vm5745, %vm5793
        %vm5842 = vmand %vm5746, %vm5794
        %vm5843 = vmand %vm5747, %vm5795
        %vm5844 = vmand %vm5748, %vm5796
        %vm5845 = vmand %vm5749, %vm5797
        %vm5846 = vmand %vm5750, %vm5798
        %vm5847 = vmand %vm5751, %vm5799
        %vm5848 = vmand %vm5752, %vm5800
        %v5849 = vsel %vm5801, 1, 0
        %v5850 = vsel %vm5802, 1, 0
        %v5851 = vsel %vm5803, 1, 0
        %v5852 = vsel %vm5804, 1, 0
        %v5853 = vsel %vm5805, 1, 0
        %v5854 = vsel %vm5806, 1, 0
        %v5855 = vsel %vm5807, 1, 0
        %v5856 = vsel %vm5808, 1, 0
        %v5857 = vsel %vm5809, 1, 0
        %v5858 = vsel %vm5810, 1, 0
        %v5859 = vsel %vm5811, 1, 0
        %v5860 = vsel %vm5812, 1, 0
        %v5861 = vsel %vm5813, 1, 0
        %v5862 = vsel %vm5814, 1, 0
        %v5863 = vsel %vm5815, 1, 0
        %v5864 = vsel %vm5816, 1, 0
        %v5865 = vsel %vm5817, 1, 0
        %v5866 = vsel %vm5818, 1, 0
        %v5867 = vsel %vm5819, 1, 0
        %v5868 = vsel %vm5820, 1, 0
        %v5869 = vsel %vm5821, 1, 0
        %v5870 = vsel %vm5822, 1, 0
        %v5871 = vsel %vm5823, 1, 0
        %v5872 = vsel %vm5824, 1, 0
        %v5873 = vsel %vm5825, 1, 0
        %v5874 = vsel %vm5826, 1, 0
        %v5875 = vsel %vm5827, 1, 0
        %v5876 = vsel %vm5828, 1, 0
        %v5877 = vsel %vm5829, 1, 0
        %v5878 = vsel %vm5830, 1, 0
        %v5879 = vsel %vm5831, 1, 0
        %v5880 = vsel %vm5832, 1, 0
        %v5881 = vsel %vm5833, 1, 0
        %v5882 = vsel %vm5834, 1, 0
        %v5883 = vsel %vm5835, 1, 0
        %v5884 = vsel %vm5836, 1, 0
        %v5885 = vsel %vm5837, 1, 0
        %v5886 = vsel %vm5838, 1, 0
        %v5887 = vsel %vm5839, 1, 0
        %v5888 = vsel %vm5840, 1, 0
        %v5889 = vsel %vm5841, 1, 0
        %v5890 = vsel %vm5842, 1, 0
        %v5891 = vsel %vm5843, 1, 0
        %v5892 = vsel %vm5844, 1, 0
        %v5893 = vsel %vm5845, 1, 0
        %v5894 = vsel %vm5846, 1, 0
        %v5895 = vsel %vm5847, 1, 0
        %v5896 = vsel %vm5848, 1, 0
        %vm5897 = vcmp.eq.s32.totalorder %v5849, 1
        %vm5898 = vcmp.eq.s32.totalorder %v5850, 1
        %vm5899 = vcmp.eq.s32.totalorder %v5851, 1
        %vm5900 = vcmp.eq.s32.totalorder %v5852, 1
        %vm5901 = vcmp.eq.s32.totalorder %v5853, 1
        %vm5902 = vcmp.eq.s32.totalorder %v5854, 1
        %vm5903 = vcmp.eq.s32.totalorder %v5855, 1
        %vm5904 = vcmp.eq.s32.totalorder %v5856, 1
        %vm5905 = vcmp.eq.s32.totalorder %v5857, 1
        %vm5906 = vcmp.eq.s32.totalorder %v5858, 1
        %vm5907 = vcmp.eq.s32.totalorder %v5859, 1
        %vm5908 = vcmp.eq.s32.totalorder %v5860, 1
        %vm5909 = vcmp.eq.s32.totalorder %v5861, 1
        %vm5910 = vcmp.eq.s32.totalorder %v5862, 1
        %vm5911 = vcmp.eq.s32.totalorder %v5863, 1
        %vm5912 = vcmp.eq.s32.totalorder %v5864, 1
        %vm5913 = vcmp.eq.s32.totalorder %v5865, 1
        %vm5914 = vcmp.eq.s32.totalorder %v5866, 1
        %vm5915 = vcmp.eq.s32.totalorder %v5867, 1
        %vm5916 = vcmp.eq.s32.totalorder %v5868, 1
        %vm5917 = vcmp.eq.s32.totalorder %v5869, 1
        %vm5918 = vcmp.eq.s32.totalorder %v5870, 1
        %vm5919 = vcmp.eq.s32.totalorder %v5871, 1
        %vm5920 = vcmp.eq.s32.totalorder %v5872, 1
        %vm5921 = vcmp.eq.s32.totalorder %v5873, 1
        %vm5922 = vcmp.eq.s32.totalorder %v5874, 1
        %vm5923 = vcmp.eq.s32.totalorder %v5875, 1
        %vm5924 = vcmp.eq.s32.totalorder %v5876, 1
        %vm5925 = vcmp.eq.s32.totalorder %v5877, 1
        %vm5926 = vcmp.eq.s32.totalorder %v5878, 1
        %vm5927 = vcmp.eq.s32.totalorder %v5879, 1
        %vm5928 = vcmp.eq.s32.totalorder %v5880, 1
        %vm5929 = vcmp.eq.s32.totalorder %v5881, 1
        %vm5930 = vcmp.eq.s32.totalorder %v5882, 1
        %vm5931 = vcmp.eq.s32.totalorder %v5883, 1
        %vm5932 = vcmp.eq.s32.totalorder %v5884, 1
        %vm5933 = vcmp.eq.s32.totalorder %v5885, 1
        %vm5934 = vcmp.eq.s32.totalorder %v5886, 1
        %vm5935 = vcmp.eq.s32.totalorder %v5887, 1
        %vm5936 = vcmp.eq.s32.totalorder %v5888, 1
        %vm5937 = vcmp.eq.s32.totalorder %v5889, 1
        %vm5938 = vcmp.eq.s32.totalorder %v5890, 1
        %vm5939 = vcmp.eq.s32.totalorder %v5891, 1
        %vm5940 = vcmp.eq.s32.totalorder %v5892, 1
        %vm5941 = vcmp.eq.s32.totalorder %v5893, 1
        %vm5942 = vcmp.eq.s32.totalorder %v5894, 1
        %vm5943 = vcmp.eq.s32.totalorder %v5895, 1
        %vm5944 = vcmp.eq.s32.totalorder %v5896, 1
        %v5945 = vsel %vm5897, %v5465, 0.0
        %v5946 = vsel %vm5898, %v5466, 0.0
        %v5947 = vsel %vm5899, %v5467, 0.0
        %v5948 = vsel %vm5900, %v5468, 0.0
        %v5949 = vsel %vm5901, %v5469, 0.0
        %v5950 = vsel %vm5902, %v5470, 0.0
        %v5951 = vsel %vm5903, %v5471, 0.0
        %v5952 = vsel %vm5904, %v5472, 0.0
        %v5953 = vsel %vm5905, %v5473, 0.0
        %v5954 = vsel %vm5906, %v5474, 0.0
        %v5955 = vsel %vm5907, %v5475, 0.0
        %v5956 = vsel %vm5908, %v5476, 0.0
        %v5957 = vsel %vm5909, %v5477, 0.0
        %v5958 = vsel %vm5910, %v5478, 0.0
        %v5959 = vsel %vm5911, %v5479, 0.0
        %v5960 = vsel %vm5912, %v5480, 0.0
        %v5961 = vsel %vm5913, %v5481, 0.0
        %v5962 = vsel %vm5914, %v5482, 0.0
        %v5963 = vsel %vm5915, %v5483, 0.0
        %v5964 = vsel %vm5916, %v5484, 0.0
        %v5965 = vsel %vm5917, %v5485, 0.0
        %v5966 = vsel %vm5918, %v5486, 0.0
        %v5967 = vsel %vm5919, %v5487, 0.0
        %v5968 = vsel %vm5920, %v5488, 0.0
        %v5969 = vsel %vm5921, %v5489, 0.0
        %v5970 = vsel %vm5922, %v5490, 0.0
        %v5971 = vsel %vm5923, %v5491, 0.0
        %v5972 = vsel %vm5924, %v5492, 0.0
        %v5973 = vsel %vm5925, %v5493, 0.0
        %v5974 = vsel %vm5926, %v5494, 0.0
        %v5975 = vsel %vm5927, %v5495, 0.0
        %v5976 = vsel %vm5928, %v5496, 0.0
        %v5977 = vsel %vm5929, %v5497, 0.0
        %v5978 = vsel %vm5930, %v5498, 0.0
        %v5979 = vsel %vm5931, %v5499, 0.0
        %v5980 = vsel %vm5932, %v5500, 0.0
        %v5981 = vsel %vm5933, %v5501, 0.0
        %v5982 = vsel %vm5934, %v5502, 0.0
        %v5983 = vsel %vm5935, %v5503, 0.0
        %v5984 = vsel %vm5936, %v5504, 0.0
        %v5985 = vsel %vm5937, %v5505, 0.0
        %v5986 = vsel %vm5938, %v5506, 0.0
        %v5987 = vsel %vm5939, %v5507, 0.0
        %v5988 = vsel %vm5940, %v5508, 0.0
        %v5989 = vsel %vm5941, %v5509, 0.0
        %v5990 = vsel %vm5942, %v5510, 0.0
        %v5991 = vsel %vm5943, %v5511, 0.0
        %v5992 = vsel %vm5944, %v5512, 0.0
        %v5993 = vpack.c.bf16 %v5945, %v5945
        %v5994 = vpack.c.bf16 %v5946, %v5946
        %v5995 = vpack.c.bf16 %v5947, %v5947
        %v5996 = vpack.c.bf16 %v5948, %v5948
        %v5997 = vpack.c.bf16 %v5949, %v5949
        %v5998 = vpack.c.bf16 %v5950, %v5950
        %v5999 = vpack.c.bf16 %v5951, %v5951
        %v6000 = vpack.c.bf16 %v5952, %v5952
        %v6001 = vpack.c.bf16 %v5953, %v5953
        %v6002 = vpack.c.bf16 %v5954, %v5954
        %v6003 = vpack.c.bf16 %v5955, %v5955
        %v6004 = vpack.c.bf16 %v5956, %v5956
        %v6005 = vpack.c.bf16 %v5957, %v5957
        %v6006 = vpack.c.bf16 %v5958, %v5958
        %v6007 = vpack.c.bf16 %v5959, %v5959
        %v6008 = vpack.c.bf16 %v5960, %v5960
        %v6009 = vpack.c.bf16 %v5961, %v5961
        %v6010 = vpack.c.bf16 %v5962, %v5962
        %v6011 = vpack.c.bf16 %v5963, %v5963
        %v6012 = vpack.c.bf16 %v5964, %v5964
        %v6013 = vpack.c.bf16 %v5965, %v5965
        %v6014 = vpack.c.bf16 %v5966, %v5966
        %v6015 = vpack.c.bf16 %v5967, %v5967
        %v6016 = vpack.c.bf16 %v5968, %v5968
        %v6017 = vpack.c.bf16 %v5969, %v5969
        %v6018 = vpack.c.bf16 %v5970, %v5970
        %v6019 = vpack.c.bf16 %v5971, %v5971
        %v6020 = vpack.c.bf16 %v5972, %v5972
        %v6021 = vpack.c.bf16 %v5973, %v5973
        %v6022 = vpack.c.bf16 %v5974, %v5974
        %v6023 = vpack.c.bf16 %v5975, %v5975
        %v6024 = vpack.c.bf16 %v5976, %v5976
        %v6025 = vpack.c.bf16 %v5977, %v5977
        %v6026 = vpack.c.bf16 %v5978, %v5978
        %v6027 = vpack.c.bf16 %v5979, %v5979
        %v6028 = vpack.c.bf16 %v5980, %v5980
        %v6029 = vpack.c.bf16 %v5981, %v5981
        %v6030 = vpack.c.bf16 %v5982, %v5982
        %v6031 = vpack.c.bf16 %v5983, %v5983
        %v6032 = vpack.c.bf16 %v5984, %v5984
        %v6033 = vpack.c.bf16 %v5985, %v5985
        %v6034 = vpack.c.bf16 %v5986, %v5986
        %v6035 = vpack.c.bf16 %v5987, %v5987
        %v6036 = vpack.c.bf16 %v5988, %v5988
        %v6037 = vpack.c.bf16 %v5989, %v5989
        %v6038 = vpack.c.bf16 %v5990, %v5990
        %v6039 = vpack.c.bf16 %v5991, %v5991
        %v6040 = vpack.c.bf16 %v5992, %v5992
        %6041 = vst [vmem:[#allocation3] sm:$0xf] %v5993
        %6042 = vst [vmem:[#allocation3 + $0x4] sm:$0xf] %v5994
        %6043 = vst [vmem:[#allocation3 + $0x8] sm:$0xf] %v5995
        %6044 = vst [vmem:[#allocation3 + $0xc] sm:$0xf] %v5996
        %6045 = vst [vmem:[#allocation3 + $0x10] sm:$0xf] %v5997
        %6046 = vst [vmem:[#allocation3 + $0x14] sm:$0xf] %v5998
        %6047 = vst [vmem:[#allocation3 + $0x18] sm:$0xf] %v5999
        %6048 = vst [vmem:[#allocation3 + $0x1c] sm:$0xf] %v6000
        %6049 = vst [vmem:[#allocation3 + $0x20] sm:$0xf] %v6001
        %6050 = vst [vmem:[#allocation3 + $0x24] sm:$0xf] %v6002
        %6051 = vst [vmem:[#allocation3 + $0x28] sm:$0xf] %v6003
        %6052 = vst [vmem:[#allocation3 + $0x2c] sm:$0xf] %v6004
        %6053 = vst [vmem:[#allocation3 + $0x30] sm:$0xf] %v6005
        %6054 = vst [vmem:[#allocation3 + $0x34] sm:$0xf] %v6006
        %6055 = vst [vmem:[#allocation3 + $0x38] sm:$0xf] %v6007
        %6056 = vst [vmem:[#allocation3 + $0x3c] sm:$0xf] %v6008
        %6057 = vst [vmem:[#allocation3 + $0x40] sm:$0xf] %v6009
        %6058 = vst [vmem:[#allocation3 + $0x44] sm:$0xf] %v6010
        %6059 = vst [vmem:[#allocation3 + $0x48] sm:$0xf] %v6011
        %6060 = vst [vmem:[#allocation3 + $0x4c] sm:$0xf] %v6012
        %6061 = vst [vmem:[#allocation3 + $0x50] sm:$0xf] %v6013
        %6062 = vst [vmem:[#allocation3 + $0x54] sm:$0xf] %v6014
        %6063 = vst [vmem:[#allocation3 + $0x58] sm:$0xf] %v6015
        %6064 = vst [vmem:[#allocation3 + $0x5c] sm:$0xf] %v6016
        %6065 = vst [vmem:[#allocation3 + $0x60] sm:$0xf] %v6017
        %6066 = vst [vmem:[#allocation3 + $0x64] sm:$0xf] %v6018
        %6067 = vst [vmem:[#allocation3 + $0x68] sm:$0xf] %v6019
        %6068 = vst [vmem:[#allocation3 + $0x6c] sm:$0xf] %v6020
        %6069 = vst [vmem:[#allocation3 + $0x70] sm:$0xf] %v6021
        %6070 = vst [vmem:[#allocation3 + $0x74] sm:$0xf] %v6022
        %6071 = vst [vmem:[#allocation3 + $0x78] sm:$0xf] %v6023
        %6072 = vst [vmem:[#allocation3 + $0x7c] sm:$0xf] %v6024
        %6073 = vst [vmem:[#allocation3 + $0x80] sm:$0xf] %v6025
        %6074 = vst [vmem:[#allocation3 + $0x84] sm:$0xf] %v6026
        %6075 = vst [vmem:[#allocation3 + $0x88] sm:$0xf] %v6027
        %6076 = vst [vmem:[#allocation3 + $0x8c] sm:$0xf] %v6028
        %6077 = vst [vmem:[#allocation3 + $0x90] sm:$0xf] %v6029
        %6078 = vst [vmem:[#allocation3 + $0x94] sm:$0xf] %v6030
        %6079 = vst [vmem:[#allocation3 + $0x98] sm:$0xf] %v6031
        %6080 = vst [vmem:[#allocation3 + $0x9c] sm:$0xf] %v6032
        %6081 = vst [vmem:[#allocation3 + $0xa0] sm:$0xf] %v6033
        %6082 = vst [vmem:[#allocation3 + $0xa4] sm:$0xf] %v6034
        %6083 = vst [vmem:[#allocation3 + $0xa8] sm:$0xf] %v6035
        %6084 = vst [vmem:[#allocation3 + $0xac] sm:$0xf] %v6036
        %6085 = vst [vmem:[#allocation3 + $0xb0] sm:$0xf] %v6037
        %6086 = vst [vmem:[#allocation3 + $0xb4] sm:$0xf] %v6038
        %6087 = vst [vmem:[#allocation3 + $0xb8] sm:$0xf] %v6039
        %6088 = vst [vmem:[#allocation3 + $0xbc] sm:$0x3] %v6040
        %v6089 = vld [vmem:[#allocation3] sm:$0xf]
        %v6090 = vld [vmem:[#allocation3 + $0x4] sm:$0xf]
        %v6091 = vld [vmem:[#allocation3 + $0x8] sm:$0xf]
        %v6092 = vld [vmem:[#allocation3 + $0xc] sm:$0xf]
        %v6093 = vld [vmem:[#allocation3 + $0x10] sm:$0xf]
        %v6094 = vld [vmem:[#allocation3 + $0x14] sm:$0xf]
        %v6095 = vld [vmem:[#allocation3 + $0x18] sm:$0xf]
        %v6096 = vld [vmem:[#allocation3 + $0x1c] sm:$0xf]
        %v6097 = vld [vmem:[#allocation3 + $0x20] sm:$0xf]
        %v6098 = vld [vmem:[#allocation3 + $0x24] sm:$0xf]
        %v6099 = vld [vmem:[#allocation3 + $0x28] sm:$0xf]
        %v6100 = vld [vmem:[#allocation3 + $0x2c] sm:$0xf]
        %v6101 = vld [vmem:[#allocation3 + $0x30] sm:$0xf]
        %v6102 = vld [vmem:[#allocation3 + $0x34] sm:$0xf]
        %v6103 = vld [vmem:[#allocation3 + $0x38] sm:$0xf]
        %v6104 = vld [vmem:[#allocation3 + $0x3c] sm:$0xf]
        %v6105 = vld [vmem:[#allocation3 + $0x40] sm:$0xf]
        %v6106 = vld [vmem:[#allocation3 + $0x44] sm:$0xf]
        %v6107 = vld [vmem:[#allocation3 + $0x48] sm:$0xf]
        %v6108 = vld [vmem:[#allocation3 + $0x4c] sm:$0xf]
        %v6109 = vld [vmem:[#allocation3 + $0x50] sm:$0xf]
        %v6110 = vld [vmem:[#allocation3 + $0x54] sm:$0xf]
        %v6111 = vld [vmem:[#allocation3 + $0x58] sm:$0xf]
        %v6112 = vld [vmem:[#allocation3 + $0x5c] sm:$0xf]
        %v6113 = vld [vmem:[#allocation3 + $0x60] sm:$0xf]
        %v6114 = vld [vmem:[#allocation3 + $0x64] sm:$0xf]
        %v6115 = vld [vmem:[#allocation3 + $0x68] sm:$0xf]
        %v6116 = vld [vmem:[#allocation3 + $0x6c] sm:$0xf]
        %v6117 = vld [vmem:[#allocation3 + $0x70] sm:$0xf]
        %v6118 = vld [vmem:[#allocation3 + $0x74] sm:$0xf]
        %v6119 = vld [vmem:[#allocation3 + $0x78] sm:$0xf]
        %v6120 = vld [vmem:[#allocation3 + $0x7c] sm:$0xf]
        %v6121 = vld [vmem:[#allocation3 + $0x80] sm:$0xf]
        %v6122 = vld [vmem:[#allocation3 + $0x84] sm:$0xf]
        %v6123 = vld [vmem:[#allocation3 + $0x88] sm:$0xf]
        %v6124 = vld [vmem:[#allocation3 + $0x8c] sm:$0xf]
        %v6125 = vld [vmem:[#allocation3 + $0x90] sm:$0xf]
        %v6126 = vld [vmem:[#allocation3 + $0x94] sm:$0xf]
        %v6127 = vld [vmem:[#allocation3 + $0x98] sm:$0xf]
        %v6128 = vld [vmem:[#allocation3 + $0x9c] sm:$0xf]
        %v6129 = vld [vmem:[#allocation10] sm:$0xf]
        %v6130 = vld [vmem:[#allocation10 + $0x4] sm:$0xf]
        %v6131 = vld [vmem:[#allocation10 + $0x8] sm:$0xf]
        %v6132 = vld [vmem:[#allocation10 + $0xc] sm:$0xf]
        %v6133 = vld [vmem:[#allocation10 + $0x10] sm:$0xf]
        %v6134 = vld [vmem:[#allocation10 + $0x14] sm:$0xf]
        %v6135 = vld [vmem:[#allocation10 + $0x18] sm:$0xf]
        %v6136 = vld [vmem:[#allocation10 + $0x1c] sm:$0xf]
        %v6137 = vld [vmem:[#allocation10 + $0x20] sm:$0xf]
        %v6138 = vld [vmem:[#allocation10 + $0x24] sm:$0xf]
        %v6139 = vld [vmem:[#allocation10 + $0x28] sm:$0xf]
        %v6140 = vld [vmem:[#allocation10 + $0x2c] sm:$0xf]
        %v6141 = vld [vmem:[#allocation10 + $0x30] sm:$0xf]
        %v6142 = vld [vmem:[#allocation10 + $0x34] sm:$0xf]
        %v6143 = vld [vmem:[#allocation10 + $0x38] sm:$0xf]
        %v6144 = vld [vmem:[#allocation10 + $0x3c] sm:$0xf]
        %v6145 = vld [vmem:[#allocation3 + $0xa0] sm:$0x1]
        %s6146 = scalar_lea.vmem [#allocation10], 64
        %v6147 = vld [vmem:[%s6146] sm:$0xf]
        %v6148 = vld [vmem:[%s6146 + $0x4] sm:$0xf]
        %v6149 = vld [vmem:[%s6146 + $0x8] sm:$0xf]
        %v6150 = vld [vmem:[%s6146 + $0xc] sm:$0xf]
        %v6151 = vld [vmem:[%s6146 + $0x10] sm:$0xf]
        %v6152 = vld [vmem:[%s6146 + $0x14] sm:$0xf]
        %v6153 = vld [vmem:[%s6146 + $0x18] sm:$0xf]
        %v6154 = vld [vmem:[%s6146 + $0x1c] sm:$0xf]
        %v6155 = vld [vmem:[%s6146 + $0x20] sm:$0xf]
        %v6156 = vld [vmem:[%s6146 + $0x24] sm:$0xf]
        %v6157 = vld [vmem:[%s6146 + $0x28] sm:$0xf]
        %v6158 = vld [vmem:[%s6146 + $0x2c] sm:$0xf]
        %v6159 = vld [vmem:[%s6146 + $0x30] sm:$0xf]
        %v6160 = vld [vmem:[%s6146 + $0x34] sm:$0xf]
        %v6161 = vld [vmem:[%s6146 + $0x38] sm:$0xf]
        %v6162 = vld [vmem:[%s6146 + $0x3c] sm:$0xf]
        %v6204 = vunpack.c.l.b16 %v6089
        %v6205 = vunpack.c.l.b16 %v6090
        %v6206 = vunpack.c.l.b16 %v6091
        %v6207 = vunpack.c.l.b16 %v6092
        %v6208 = vunpack.c.l.b16 %v6093
        %v6209 = vunpack.c.l.b16 %v6094
        %v6210 = vunpack.c.l.b16 %v6095
        %v6211 = vunpack.c.l.b16 %v6096
        %v6212 = vunpack.c.l.b16 %v6097
        %v6213 = vunpack.c.l.b16 %v6098
        %v6214 = vunpack.c.l.b16 %v6099
        %v6215 = vunpack.c.l.b16 %v6100
        %v6216 = vunpack.c.l.b16 %v6101
        %v6217 = vunpack.c.l.b16 %v6102
        %v6218 = vunpack.c.l.b16 %v6103
        %v6219 = vunpack.c.l.b16 %v6104
        %v6220 = vunpack.c.l.b16 %v6105
        %v6221 = vunpack.c.l.b16 %v6106
        %v6222 = vunpack.c.l.b16 %v6107
        %v6223 = vunpack.c.l.b16 %v6108
        %v6224 = vunpack.c.l.b16 %v6109
        %v6225 = vunpack.c.l.b16 %v6110
        %v6226 = vunpack.c.l.b16 %v6111
        %v6227 = vunpack.c.l.b16 %v6112
        %v6228 = vunpack.c.l.b16 %v6113
        %v6229 = vunpack.c.l.b16 %v6114
        %v6230 = vunpack.c.l.b16 %v6115
        %v6231 = vunpack.c.l.b16 %v6116
        %v6232 = vunpack.c.l.b16 %v6117
        %v6233 = vunpack.c.l.b16 %v6118
        %v6234 = vunpack.c.l.b16 %v6119
        %v6235 = vunpack.c.l.b16 %v6120
        %v6236 = vunpack.c.l.b16 %v6121
        %v6237 = vunpack.c.l.b16 %v6122
        %v6238 = vunpack.c.l.b16 %v6123
        %v6239 = vunpack.c.l.b16 %v6124
        %v6240 = vunpack.c.l.b16 %v6125
        %v6241 = vunpack.c.l.b16 %v6126
        %v6242 = vunpack.c.l.b16 %v6127
        %v6243 = vunpack.c.l.b16 %v6128
        %v6244 = vunpack.c.l.b16 %v6145
        %v6245 = vpack.c.b16 %v6205, %v6204
        %v6246 = vpack.c.b16 %v6207, %v6206
        %v6247 = vpack.c.b16 %v6209, %v6208
        %v6248 = vpack.c.b16 %v6211, %v6210
        %v6249 = vpack.c.b16 %v6213, %v6212
        %v6250 = vpack.c.b16 %v6215, %v6214
        %v6251 = vpack.c.b16 %v6217, %v6216
        %v6252 = vpack.c.b16 %v6219, %v6218
        %v6253 = vpack.c.b16 %v6221, %v6220
        %v6254 = vpack.c.b16 %v6223, %v6222
        %v6255 = vpack.c.b16 %v6225, %v6224
        %v6256 = vpack.c.b16 %v6227, %v6226
        %v6257 = vpack.c.b16 %v6229, %v6228
        %v6258 = vpack.c.b16 %v6231, %v6230
        %v6259 = vpack.c.b16 %v6233, %v6232
        %v6260 = vpack.c.b16 %v6235, %v6234
        %v6261 = vpack.c.b16 %v6237, %v6236
        %v6262 = vpack.c.b16 %v6239, %v6238
        %v6263 = vpack.c.b16 %v6241, %v6240
        %v6264 = vpack.c.b16 %v6243, %v6242
        %v6265 = vpack.c.b16 %v6244, %v6244
        %v6267 = vshrl.u32 %v6245, 16
        %v6269 = vshll.u32 %v6245, 16
        %v6271 = vrot.slane %v6269, 1
        %v6272 = vor.u32 %v6267, %v6271
        %v6274 = vshll.u32 %v6246, 16
        %v6276 = vrot.slane %v6274, 1
        %v6277 = vsel %vm2089, %v6272, %v6276
        %v6278 = vshrl.u32 %v6246, 16
        %v6280 = vor.u32 %v6278, %v6276
        %v6282 = vshll.u32 %v6247, 16
        %v6284 = vrot.slane %v6282, 1
        %v6285 = vsel %vm2089, %v6280, %v6284
        %v6286 = vshrl.u32 %v6247, 16
        %v6288 = vor.u32 %v6286, %v6284
        %v6290 = vshll.u32 %v6248, 16
        %v6292 = vrot.slane %v6290, 1
        %v6293 = vsel %vm2089, %v6288, %v6292
        %v6294 = vshrl.u32 %v6248, 16
        %v6296 = vor.u32 %v6294, %v6292
        %v6298 = vshll.u32 %v6249, 16
        %v6300 = vrot.slane %v6298, 1
        %v6301 = vsel %vm2089, %v6296, %v6300
        %v6302 = vshrl.u32 %v6249, 16
        %v6304 = vor.u32 %v6302, %v6300
        %v6306 = vshll.u32 %v6250, 16
        %v6308 = vrot.slane %v6306, 1
        %v6309 = vsel %vm2089, %v6304, %v6308
        %v6310 = vshrl.u32 %v6250, 16
        %v6312 = vor.u32 %v6310, %v6308
        %v6314 = vshll.u32 %v6251, 16
        %v6316 = vrot.slane %v6314, 1
        %v6317 = vsel %vm2089, %v6312, %v6316
        %v6318 = vshrl.u32 %v6251, 16
        %v6320 = vor.u32 %v6318, %v6316
        %v6322 = vshll.u32 %v6252, 16
        %v6324 = vrot.slane %v6322, 1
        %v6325 = vsel %vm2089, %v6320, %v6324
        %v6326 = vshrl.u32 %v6252, 16
        %v6328 = vor.u32 %v6326, %v6324
        %v6330 = vshll.u32 %v6253, 16
        %v6332 = vrot.slane %v6330, 1
        %v6333 = vsel %vm2089, %v6328, %v6332
        %v6334 = vshrl.u32 %v6253, 16
        %v6336 = vor.u32 %v6334, %v6332
        %v6338 = vshll.u32 %v6254, 16
        %v6340 = vrot.slane %v6338, 1
        %v6341 = vsel %vm2089, %v6336, %v6340
        %v6342 = vshrl.u32 %v6254, 16
        %v6344 = vor.u32 %v6342, %v6340
        %v6346 = vshll.u32 %v6255, 16
        %v6348 = vrot.slane %v6346, 1
        %v6349 = vsel %vm2089, %v6344, %v6348
        %v6350 = vshrl.u32 %v6255, 16
        %v6352 = vor.u32 %v6350, %v6348
        %v6354 = vshll.u32 %v6256, 16
        %v6356 = vrot.slane %v6354, 1
        %v6357 = vsel %vm2089, %v6352, %v6356
        %v6358 = vshrl.u32 %v6256, 16
        %v6360 = vor.u32 %v6358, %v6356
        %v6362 = vshll.u32 %v6257, 16
        %v6364 = vrot.slane %v6362, 1
        %v6365 = vsel %vm2089, %v6360, %v6364
        %v6366 = vshrl.u32 %v6257, 16
        %v6368 = vor.u32 %v6366, %v6364
        %v6370 = vshll.u32 %v6258, 16
        %v6372 = vrot.slane %v6370, 1
        %v6373 = vsel %vm2089, %v6368, %v6372
        %v6374 = vshrl.u32 %v6258, 16
        %v6376 = vor.u32 %v6374, %v6372
        %v6378 = vshll.u32 %v6259, 16
        %v6380 = vrot.slane %v6378, 1
        %v6381 = vsel %vm2089, %v6376, %v6380
        %v6382 = vshrl.u32 %v6259, 16
        %v6384 = vor.u32 %v6382, %v6380
        %v6386 = vshll.u32 %v6260, 16
        %v6388 = vrot.slane %v6386, 1
        %v6389 = vsel %vm2089, %v6384, %v6388
        %v6390 = vshrl.u32 %v6260, 16
        %v6392 = vor.u32 %v6390, %v6388
        %v6394 = vshll.u32 %v6261, 16
        %v6396 = vrot.slane %v6394, 1
        %v6397 = vsel %vm2089, %v6392, %v6396
        %v6398 = vshrl.u32 %v6261, 16
        %v6400 = vor.u32 %v6398, %v6396
        %v6402 = vshll.u32 %v6262, 16
        %v6404 = vrot.slane %v6402, 1
        %v6405 = vsel %vm2089, %v6400, %v6404
        %v6406 = vshrl.u32 %v6262, 16
        %v6408 = vor.u32 %v6406, %v6404
        %v6410 = vshll.u32 %v6263, 16
        %v6412 = vrot.slane %v6410, 1
        %v6413 = vsel %vm2089, %v6408, %v6412
        %v6414 = vshrl.u32 %v6263, 16
        %v6416 = vor.u32 %v6414, %v6412
        %v6418 = vshll.u32 %v6264, 16
        %v6420 = vrot.slane %v6418, 1
        %v6421 = vsel %vm2089, %v6416, %v6420
        %v6422 = vshrl.u32 %v6264, 16
        %v6424 = vor.u32 %v6422, %v6420
        %v6426 = vshll.u32 %v6265, 16
        %v6428 = vrot.slane %v6426, 1
        %v6429 = vsel %vm2089, %v6424, %v6428
        %v6466 = vunpack.c.l.b16 %v6147
        %v6467 = vunpack.c.l.b16 %v6148
        %v6468 = vunpack.c.l.b16 %v6149
        %v6469 = vunpack.c.l.b16 %v6150
        %v6470 = vunpack.c.l.b16 %v6151
        %v6471 = vunpack.c.l.b16 %v6152
        %v6472 = vunpack.c.l.b16 %v6153
        %v6473 = vunpack.c.l.b16 %v6154
        %v6474 = vunpack.c.l.b16 %v6155
        %v6475 = vunpack.c.l.b16 %v6156
        %v6476 = vunpack.c.l.b16 %v6157
        %v6477 = vunpack.c.l.b16 %v6158
        %v6478 = vunpack.c.l.b16 %v6159
        %v6479 = vunpack.c.l.b16 %v6160
        %v6480 = vunpack.c.l.b16 %v6161
        %v6481 = vunpack.c.l.b16 %v6162
        %v6482 = vpack.c.b16 %v6467, %v6466
        %v6483 = vpack.c.b16 %v6469, %v6468
        %v6484 = vpack.c.b16 %v6471, %v6470
        %v6485 = vpack.c.b16 %v6473, %v6472
        %v6486 = vpack.c.b16 %v6475, %v6474
        %v6487 = vpack.c.b16 %v6477, %v6476
        %v6488 = vpack.c.b16 %v6479, %v6478
        %v6489 = vpack.c.b16 %v6481, %v6480
        %6498 = vmatpush.bf16.msra.mxu0 %v6489
        %6499 = vmatpush.bf16.msra.mxu0 %v6488
        %6500 = vmatpush.bf16.msra.mxu0 %v6487
        %6501 = vmatpush.bf16.msra.mxu0 %v6486
        %6502 = vmatpush.bf16.msra.mxu0 %v6485
        %6503 = vmatpush.bf16.msra.mxu0 %v6484
        %6504 = vmatpush.bf16.msra.mxu0 %v6483
        %6505 = vmatpush.bf16.msra.mxu0 %v6482
        %6506 = vmatmul.bf16.gmra.mxu0 %v6277
        %v6507 = vpop.f32.mrf.mxu0
        %v6508 = vadd.f32 0.0, %v6507
        %v6509 = vpop.f32.mrf.mxu0
        %v6510 = vadd.f32 0.0, %v6509
        %6511 = vmatmul.bf16.gmra.mxu0 %v6285
        %v6512 = vpop.f32.mrf.mxu0
        %v6513 = vadd.f32 0.0, %v6512
        %v6514 = vpop.f32.mrf.mxu0
        %v6515 = vadd.f32 0.0, %v6514
        %6516 = vmatmul.bf16.gmra.mxu0 %v6293
        %v6517 = vpop.f32.mrf.mxu0
        %v6518 = vadd.f32 0.0, %v6517
        %v6519 = vpop.f32.mrf.mxu0
        %v6520 = vadd.f32 0.0, %v6519
        %6521 = vmatmul.bf16.gmra.mxu0 %v6301
        %v6522 = vpop.f32.mrf.mxu0
        %v6523 = vadd.f32 0.0, %v6522
        %v6524 = vpop.f32.mrf.mxu0
        %v6525 = vadd.f32 0.0, %v6524
        %6526 = vmatmul.bf16.gmra.mxu0 %v6309
        %v6527 = vpop.f32.mrf.mxu0
        %v6528 = vadd.f32 0.0, %v6527
        %v6529 = vpop.f32.mrf.mxu0
        %v6530 = vadd.f32 0.0, %v6529
        %6531 = vmatmul.bf16.gmra.mxu0 %v6317
        %v6532 = vpop.f32.mrf.mxu0
        %v6533 = vadd.f32 0.0, %v6532
        %v6534 = vpop.f32.mrf.mxu0
        %v6535 = vadd.f32 0.0, %v6534
        %6536 = vmatmul.bf16.gmra.mxu0 %v6325
        %v6537 = vpop.f32.mrf.mxu0
        %v6538 = vadd.f32 0.0, %v6537
        %v6539 = vpop.f32.mrf.mxu0
        %v6540 = vadd.f32 0.0, %v6539
        %6541 = vmatmul.bf16.gmra.mxu0 %v6333
        %v6542 = vpop.f32.mrf.mxu0
        %v6543 = vadd.f32 0.0, %v6542
        %v6544 = vpop.f32.mrf.mxu0
        %v6545 = vadd.f32 0.0, %v6544
        %6546 = vmatmul.bf16.gmra.mxu0 %v6341
        %v6547 = vpop.f32.mrf.mxu0
        %v6548 = vadd.f32 0.0, %v6547
        %v6549 = vpop.f32.mrf.mxu0
        %v6550 = vadd.f32 0.0, %v6549
        %6551 = vmatmul.bf16.gmra.mxu0 %v6349
        %v6552 = vpop.f32.mrf.mxu0
        %v6553 = vadd.f32 0.0, %v6552
        %v6554 = vpop.f32.mrf.mxu0
        %v6555 = vadd.f32 0.0, %v6554
        %6556 = vmatmul.bf16.gmra.mxu0 %v6357
        %v6557 = vpop.f32.mrf.mxu0
        %v6558 = vadd.f32 0.0, %v6557
        %v6559 = vpop.f32.mrf.mxu0
        %v6560 = vadd.f32 0.0, %v6559
        %6561 = vmatmul.bf16.gmra.mxu0 %v6365
        %v6562 = vpop.f32.mrf.mxu0
        %v6563 = vadd.f32 0.0, %v6562
        %v6564 = vpop.f32.mrf.mxu0
        %v6565 = vadd.f32 0.0, %v6564
        %6566 = vmatmul.bf16.gmra.mxu0 %v6373
        %v6567 = vpop.f32.mrf.mxu0
        %v6568 = vadd.f32 0.0, %v6567
        %v6569 = vpop.f32.mrf.mxu0
        %v6570 = vadd.f32 0.0, %v6569
        %6571 = vmatmul.bf16.gmra.mxu0 %v6381
        %v6572 = vpop.f32.mrf.mxu0
        %v6573 = vadd.f32 0.0, %v6572
        %v6574 = vpop.f32.mrf.mxu0
        %v6575 = vadd.f32 0.0, %v6574
        %6576 = vmatmul.bf16.gmra.mxu0 %v6389
        %v6577 = vpop.f32.mrf.mxu0
        %v6578 = vadd.f32 0.0, %v6577
        %v6579 = vpop.f32.mrf.mxu0
        %v6580 = vadd.f32 0.0, %v6579
        %6581 = vmatmul.bf16.gmra.mxu0 %v6397
        %v6582 = vpop.f32.mrf.mxu0
        %v6583 = vadd.f32 0.0, %v6582
        %v6584 = vpop.f32.mrf.mxu0
        %v6585 = vadd.f32 0.0, %v6584
        %6586 = vmatmul.bf16.gmra.mxu0 %v6405
        %v6587 = vpop.f32.mrf.mxu0
        %v6588 = vadd.f32 0.0, %v6587
        %v6589 = vpop.f32.mrf.mxu0
        %v6590 = vadd.f32 0.0, %v6589
        %6591 = vmatmul.bf16.gmra.mxu0 %v6413
        %v6592 = vpop.f32.mrf.mxu0
        %v6593 = vadd.f32 0.0, %v6592
        %v6594 = vpop.f32.mrf.mxu0
        %v6595 = vadd.f32 0.0, %v6594
        %6596 = vmatmul.bf16.gmra.mxu0 %v6421
        %v6597 = vpop.f32.mrf.mxu0
        %v6598 = vadd.f32 0.0, %v6597
        %v6599 = vpop.f32.mrf.mxu0
        %v6600 = vadd.f32 0.0, %v6599
        %6601 = vmatmul.bf16.gmra.mxu0 %v6429
        %v6602 = vpop.f32.mrf.mxu0
        %v6603 = vadd.f32 0.0, %v6602
        %v6604 = vpop.f32.mrf.mxu0
        %v6605 = vadd.f32 0.0, %v6604
        %6606 = vdwg.mxu0
        %v6643 = vunpack.c.l.b16 %v6129
        %v6644 = vunpack.c.l.b16 %v6130
        %v6645 = vunpack.c.l.b16 %v6131
        %v6646 = vunpack.c.l.b16 %v6132
        %v6647 = vunpack.c.l.b16 %v6133
        %v6648 = vunpack.c.l.b16 %v6134
        %v6649 = vunpack.c.l.b16 %v6135
        %v6650 = vunpack.c.l.b16 %v6136
        %v6651 = vunpack.c.l.b16 %v6137
        %v6652 = vunpack.c.l.b16 %v6138
        %v6653 = vunpack.c.l.b16 %v6139
        %v6654 = vunpack.c.l.b16 %v6140
        %v6655 = vunpack.c.l.b16 %v6141
        %v6656 = vunpack.c.l.b16 %v6142
        %v6657 = vunpack.c.l.b16 %v6143
        %v6658 = vunpack.c.l.b16 %v6144
        %v6659 = vpack.c.b16 %v6644, %v6643
        %v6660 = vpack.c.b16 %v6646, %v6645
        %v6661 = vpack.c.b16 %v6648, %v6647
        %v6662 = vpack.c.b16 %v6650, %v6649
        %v6663 = vpack.c.b16 %v6652, %v6651
        %v6664 = vpack.c.b16 %v6654, %v6653
        %v6665 = vpack.c.b16 %v6656, %v6655
        %v6666 = vpack.c.b16 %v6658, %v6657
        %6675 = vmatpush.bf16.msra.mxu0 %v6666
        %6676 = vmatpush.bf16.msra.mxu0 %v6665
        %6677 = vmatpush.bf16.msra.mxu0 %v6664
        %6678 = vmatpush.bf16.msra.mxu0 %v6663
        %6679 = vmatpush.bf16.msra.mxu0 %v6662
        %6680 = vmatpush.bf16.msra.mxu0 %v6661
        %6681 = vmatpush.bf16.msra.mxu0 %v6660
        %6682 = vmatpush.bf16.msra.mxu0 %v6659
        %6683 = vmatmul.bf16.gmra.mxu0 %v6245
        %v6684 = vpop.f32.mrf.mxu0
        %v6685 = vadd.f32 %v6508, %v6684
        %v6686 = vpop.f32.mrf.mxu0
        %v6687 = vadd.f32 %v6510, %v6686
        %6688 = vmatmul.bf16.gmra.mxu0 %v6246
        %v6689 = vpop.f32.mrf.mxu0
        %v6690 = vadd.f32 %v6513, %v6689
        %v6691 = vpop.f32.mrf.mxu0
        %v6692 = vadd.f32 %v6515, %v6691
        %6693 = vmatmul.bf16.gmra.mxu0 %v6247
        %v6694 = vpop.f32.mrf.mxu0
        %v6695 = vadd.f32 %v6518, %v6694
        %v6696 = vpop.f32.mrf.mxu0
        %v6697 = vadd.f32 %v6520, %v6696
        %6698 = vmatmul.bf16.gmra.mxu0 %v6248
        %v6699 = vpop.f32.mrf.mxu0
        %v6700 = vadd.f32 %v6523, %v6699
        %v6701 = vpop.f32.mrf.mxu0
        %v6702 = vadd.f32 %v6525, %v6701
        %6703 = vmatmul.bf16.gmra.mxu0 %v6249
        %v6704 = vpop.f32.mrf.mxu0
        %v6705 = vadd.f32 %v6528, %v6704
        %v6706 = vpop.f32.mrf.mxu0
        %v6707 = vadd.f32 %v6530, %v6706
        %6708 = vmatmul.bf16.gmra.mxu0 %v6250
        %v6709 = vpop.f32.mrf.mxu0
        %v6710 = vadd.f32 %v6533, %v6709
        %v6711 = vpop.f32.mrf.mxu0
        %v6712 = vadd.f32 %v6535, %v6711
        %6713 = vmatmul.bf16.gmra.mxu0 %v6251
        %v6714 = vpop.f32.mrf.mxu0
        %v6715 = vadd.f32 %v6538, %v6714
        %v6716 = vpop.f32.mrf.mxu0
        %v6717 = vadd.f32 %v6540, %v6716
        %6718 = vmatmul.bf16.gmra.mxu0 %v6252
        %v6719 = vpop.f32.mrf.mxu0
        %v6720 = vadd.f32 %v6543, %v6719
        %v6721 = vpop.f32.mrf.mxu0
        %v6722 = vadd.f32 %v6545, %v6721
        %6723 = vmatmul.bf16.gmra.mxu0 %v6253
        %v6724 = vpop.f32.mrf.mxu0
        %v6725 = vadd.f32 %v6548, %v6724
        %v6726 = vpop.f32.mrf.mxu0
        %v6727 = vadd.f32 %v6550, %v6726
        %6728 = vmatmul.bf16.gmra.mxu0 %v6254
        %v6729 = vpop.f32.mrf.mxu0
        %v6730 = vadd.f32 %v6553, %v6729
        %v6731 = vpop.f32.mrf.mxu0
        %v6732 = vadd.f32 %v6555, %v6731
        %6733 = vmatmul.bf16.gmra.mxu0 %v6255
        %v6734 = vpop.f32.mrf.mxu0
        %v6735 = vadd.f32 %v6558, %v6734
        %v6736 = vpop.f32.mrf.mxu0
        %v6737 = vadd.f32 %v6560, %v6736
        %6738 = vmatmul.bf16.gmra.mxu0 %v6256
        %v6739 = vpop.f32.mrf.mxu0
        %v6740 = vadd.f32 %v6563, %v6739
        %v6741 = vpop.f32.mrf.mxu0
        %v6742 = vadd.f32 %v6565, %v6741
        %6743 = vmatmul.bf16.gmra.mxu0 %v6257
        %v6744 = vpop.f32.mrf.mxu0
        %v6745 = vadd.f32 %v6568, %v6744
        %v6746 = vpop.f32.mrf.mxu0
        %v6747 = vadd.f32 %v6570, %v6746
        %6748 = vmatmul.bf16.gmra.mxu0 %v6258
        %v6749 = vpop.f32.mrf.mxu0
        %v6750 = vadd.f32 %v6573, %v6749
        %v6751 = vpop.f32.mrf.mxu0
        %v6752 = vadd.f32 %v6575, %v6751
        %6753 = vmatmul.bf16.gmra.mxu0 %v6259
        %v6754 = vpop.f32.mrf.mxu0
        %v6755 = vadd.f32 %v6578, %v6754
        %v6756 = vpop.f32.mrf.mxu0
        %v6757 = vadd.f32 %v6580, %v6756
        %6758 = vmatmul.bf16.gmra.mxu0 %v6260
        %v6759 = vpop.f32.mrf.mxu0
        %v6760 = vadd.f32 %v6583, %v6759
        %v6761 = vpop.f32.mrf.mxu0
        %v6762 = vadd.f32 %v6585, %v6761
        %6763 = vmatmul.bf16.gmra.mxu0 %v6261
        %v6764 = vpop.f32.mrf.mxu0
        %v6765 = vadd.f32 %v6588, %v6764
        %v6766 = vpop.f32.mrf.mxu0
        %v6767 = vadd.f32 %v6590, %v6766
        %6768 = vmatmul.bf16.gmra.mxu0 %v6262
        %v6769 = vpop.f32.mrf.mxu0
        %v6770 = vadd.f32 %v6593, %v6769
        %v6771 = vpop.f32.mrf.mxu0
        %v6772 = vadd.f32 %v6595, %v6771
        %6773 = vmatmul.bf16.gmra.mxu0 %v6263
        %v6774 = vpop.f32.mrf.mxu0
        %v6775 = vadd.f32 %v6598, %v6774
        %v6776 = vpop.f32.mrf.mxu0
        %v6777 = vadd.f32 %v6600, %v6776
        %6778 = vmatmul.bf16.gmra.mxu0 %v6264
        %v6779 = vpop.f32.mrf.mxu0
        %v6780 = vadd.f32 %v6603, %v6779
        %v6781 = vpop.f32.mrf.mxu0
        %v6782 = vadd.f32 %v6605, %v6781
        %6783 = vdwg.mxu0
        %v6784 = vld [vmem:[#allocation3] sm:$0xe]
        %s6785 = scalar_lea.vmem [#allocation10], 128
        %v6786 = vld [vmem:[%s6785] sm:$0xf]
        %v6787 = vld [vmem:[%s6785 + $0x4] sm:$0xf]
        %v6788 = vld [vmem:[%s6785 + $0x8] sm:$0xf]
        %v6789 = vld [vmem:[%s6785 + $0xc] sm:$0xf]
        %v6790 = vld [vmem:[%s6785 + $0x10] sm:$0xf]
        %v6791 = vld [vmem:[%s6785 + $0x14] sm:$0xf]
        %v6792 = vld [vmem:[%s6785 + $0x18] sm:$0xf]
        %v6793 = vld [vmem:[%s6785 + $0x1c] sm:$0xf]
        %v6794 = vld [vmem:[%s6785 + $0x20] sm:$0xf]
        %v6795 = vld [vmem:[%s6785 + $0x24] sm:$0xf]
        %v6796 = vld [vmem:[%s6785 + $0x28] sm:$0xf]
        %v6797 = vld [vmem:[%s6785 + $0x2c] sm:$0xf]
        %v6798 = vld [vmem:[%s6785 + $0x30] sm:$0xf]
        %v6799 = vld [vmem:[%s6785 + $0x34] sm:$0xf]
        %v6800 = vld [vmem:[%s6785 + $0x38] sm:$0xf]
        %v6801 = vld [vmem:[%s6785 + $0x3c] sm:$0xf]
        %v6803 = vunpack.c.l.b16 %v6784
        %v6804 = vpack.c.b16 %v6205, %v6803
        %v6805 = vrot.slane %v6804, 1
        %v6806 = vrot.slane %v6246, 1
        %v6807 = vsel %vm2707, %v6805, %v6806
        %v6808 = vrot.slane %v6247, 1
        %v6809 = vsel %vm2707, %v6806, %v6808
        %v6810 = vrot.slane %v6248, 1
        %v6811 = vsel %vm2707, %v6808, %v6810
        %v6812 = vrot.slane %v6249, 1
        %v6813 = vsel %vm2707, %v6810, %v6812
        %v6814 = vrot.slane %v6250, 1
        %v6815 = vsel %vm2707, %v6812, %v6814
        %v6816 = vrot.slane %v6251, 1
        %v6817 = vsel %vm2707, %v6814, %v6816
        %v6818 = vrot.slane %v6252, 1
        %v6819 = vsel %vm2707, %v6816, %v6818
        %v6820 = vrot.slane %v6253, 1
        %v6821 = vsel %vm2707, %v6818, %v6820
        %v6822 = vrot.slane %v6254, 1
        %v6823 = vsel %vm2707, %v6820, %v6822
        %v6824 = vrot.slane %v6255, 1
        %v6825 = vsel %vm2707, %v6822, %v6824
        %v6826 = vrot.slane %v6256, 1
        %v6827 = vsel %vm2707, %v6824, %v6826
        %v6828 = vrot.slane %v6257, 1
        %v6829 = vsel %vm2707, %v6826, %v6828
        %v6830 = vrot.slane %v6258, 1
        %v6831 = vsel %vm2707, %v6828, %v6830
        %v6832 = vrot.slane %v6259, 1
        %v6833 = vsel %vm2707, %v6830, %v6832
        %v6834 = vrot.slane %v6260, 1
        %v6835 = vsel %vm2707, %v6832, %v6834
        %v6836 = vrot.slane %v6261, 1
        %v6837 = vsel %vm2707, %v6834, %v6836
        %v6838 = vrot.slane %v6262, 1
        %v6839 = vsel %vm2707, %v6836, %v6838
        %v6840 = vrot.slane %v6263, 1
        %v6841 = vsel %vm2707, %v6838, %v6840
        %v6842 = vrot.slane %v6264, 1
        %v6843 = vsel %vm2707, %v6840, %v6842
        %v6844 = vrot.slane %v6265, 1
        %v6845 = vsel %vm2707, %v6842, %v6844
        %v6882 = vunpack.c.l.b16 %v6786
        %v6883 = vunpack.c.l.b16 %v6787
        %v6884 = vunpack.c.l.b16 %v6788
        %v6885 = vunpack.c.l.b16 %v6789
        %v6886 = vunpack.c.l.b16 %v6790
        %v6887 = vunpack.c.l.b16 %v6791
        %v6888 = vunpack.c.l.b16 %v6792
        %v6889 = vunpack.c.l.b16 %v6793
        %v6890 = vunpack.c.l.b16 %v6794
        %v6891 = vunpack.c.l.b16 %v6795
        %v6892 = vunpack.c.l.b16 %v6796
        %v6893 = vunpack.c.l.b16 %v6797
        %v6894 = vunpack.c.l.b16 %v6798
        %v6895 = vunpack.c.l.b16 %v6799
        %v6896 = vunpack.c.l.b16 %v6800
        %v6897 = vunpack.c.l.b16 %v6801
        %v6898 = vpack.c.b16 %v6883, %v6882
        %v6899 = vpack.c.b16 %v6885, %v6884
        %v6900 = vpack.c.b16 %v6887, %v6886
        %v6901 = vpack.c.b16 %v6889, %v6888
        %v6902 = vpack.c.b16 %v6891, %v6890
        %v6903 = vpack.c.b16 %v6893, %v6892
        %v6904 = vpack.c.b16 %v6895, %v6894
        %v6905 = vpack.c.b16 %v6897, %v6896
        %6914 = vmatpush.bf16.msra.mxu0 %v6905
        %6915 = vmatpush.bf16.msra.mxu0 %v6904
        %6916 = vmatpush.bf16.msra.mxu0 %v6903
        %6917 = vmatpush.bf16.msra.mxu0 %v6902
        %6918 = vmatpush.bf16.msra.mxu0 %v6901
        %6919 = vmatpush.bf16.msra.mxu0 %v6900
        %6920 = vmatpush.bf16.msra.mxu0 %v6899
        %6921 = vmatpush.bf16.msra.mxu0 %v6898
        %6922 = vmatmul.bf16.gmra.mxu0 %v6807
        %v6923 = vpop.f32.mrf.mxu0
        %v6924 = vadd.f32 0.0, %v6923
        %v6925 = vpop.f32.mrf.mxu0
        %v6926 = vadd.f32 0.0, %v6925
        %6927 = vmatmul.bf16.gmra.mxu0 %v6809
        %v6928 = vpop.f32.mrf.mxu0
        %v6929 = vadd.f32 0.0, %v6928
        %v6930 = vpop.f32.mrf.mxu0
        %v6931 = vadd.f32 0.0, %v6930
        %6932 = vmatmul.bf16.gmra.mxu0 %v6811
        %v6933 = vpop.f32.mrf.mxu0
        %v6934 = vadd.f32 0.0, %v6933
        %v6935 = vpop.f32.mrf.mxu0
        %v6936 = vadd.f32 0.0, %v6935
        %6937 = vmatmul.bf16.gmra.mxu0 %v6813
        %v6938 = vpop.f32.mrf.mxu0
        %v6939 = vadd.f32 0.0, %v6938
        %v6940 = vpop.f32.mrf.mxu0
        %v6941 = vadd.f32 0.0, %v6940
        %6942 = vmatmul.bf16.gmra.mxu0 %v6815
        %v6943 = vpop.f32.mrf.mxu0
        %v6944 = vadd.f32 0.0, %v6943
        %v6945 = vpop.f32.mrf.mxu0
        %v6946 = vadd.f32 0.0, %v6945
        %6947 = vmatmul.bf16.gmra.mxu0 %v6817
        %v6948 = vpop.f32.mrf.mxu0
        %v6949 = vadd.f32 0.0, %v6948
        %v6950 = vpop.f32.mrf.mxu0
        %v6951 = vadd.f32 0.0, %v6950
        %6952 = vmatmul.bf16.gmra.mxu0 %v6819
        %v6953 = vpop.f32.mrf.mxu0
        %v6954 = vadd.f32 0.0, %v6953
        %v6955 = vpop.f32.mrf.mxu0
        %v6956 = vadd.f32 0.0, %v6955
        %6957 = vmatmul.bf16.gmra.mxu0 %v6821
        %v6958 = vpop.f32.mrf.mxu0
        %v6959 = vadd.f32 0.0, %v6958
        %v6960 = vpop.f32.mrf.mxu0
        %v6961 = vadd.f32 0.0, %v6960
        %6962 = vmatmul.bf16.gmra.mxu0 %v6823
        %v6963 = vpop.f32.mrf.mxu0
        %v6964 = vadd.f32 0.0, %v6963
        %v6965 = vpop.f32.mrf.mxu0
        %v6966 = vadd.f32 0.0, %v6965
        %6967 = vmatmul.bf16.gmra.mxu0 %v6825
        %v6968 = vpop.f32.mrf.mxu0
        %v6969 = vadd.f32 0.0, %v6968
        %v6970 = vpop.f32.mrf.mxu0
        %v6971 = vadd.f32 0.0, %v6970
        %6972 = vmatmul.bf16.gmra.mxu0 %v6827
        %v6973 = vpop.f32.mrf.mxu0
        %v6974 = vadd.f32 0.0, %v6973
        %v6975 = vpop.f32.mrf.mxu0
        %v6976 = vadd.f32 0.0, %v6975
        %6977 = vmatmul.bf16.gmra.mxu0 %v6829
        %v6978 = vpop.f32.mrf.mxu0
        %v6979 = vadd.f32 0.0, %v6978
        %v6980 = vpop.f32.mrf.mxu0
        %v6981 = vadd.f32 0.0, %v6980
        %6982 = vmatmul.bf16.gmra.mxu0 %v6831
        %v6983 = vpop.f32.mrf.mxu0
        %v6984 = vadd.f32 0.0, %v6983
        %v6985 = vpop.f32.mrf.mxu0
        %v6986 = vadd.f32 0.0, %v6985
        %6987 = vmatmul.bf16.gmra.mxu0 %v6833
        %v6988 = vpop.f32.mrf.mxu0
        %v6989 = vadd.f32 0.0, %v6988
        %v6990 = vpop.f32.mrf.mxu0
        %v6991 = vadd.f32 0.0, %v6990
        %6992 = vmatmul.bf16.gmra.mxu0 %v6835
        %v6993 = vpop.f32.mrf.mxu0
        %v6994 = vadd.f32 0.0, %v6993
        %v6995 = vpop.f32.mrf.mxu0
        %v6996 = vadd.f32 0.0, %v6995
        %6997 = vmatmul.bf16.gmra.mxu0 %v6837
        %v6998 = vpop.f32.mrf.mxu0
        %v6999 = vadd.f32 0.0, %v6998
        %v7000 = vpop.f32.mrf.mxu0
        %v7001 = vadd.f32 0.0, %v7000
        %7002 = vmatmul.bf16.gmra.mxu0 %v6839
        %v7003 = vpop.f32.mrf.mxu0
        %v7004 = vadd.f32 0.0, %v7003
        %v7005 = vpop.f32.mrf.mxu0
        %v7006 = vadd.f32 0.0, %v7005
        %7007 = vmatmul.bf16.gmra.mxu0 %v6841
        %v7008 = vpop.f32.mrf.mxu0
        %v7009 = vadd.f32 0.0, %v7008
        %v7010 = vpop.f32.mrf.mxu0
        %v7011 = vadd.f32 0.0, %v7010
        %7012 = vmatmul.bf16.gmra.mxu0 %v6843
        %v7013 = vpop.f32.mrf.mxu0
        %v7014 = vadd.f32 0.0, %v7013
        %v7015 = vpop.f32.mrf.mxu0
        %v7016 = vadd.f32 0.0, %v7015
        %7017 = vmatmul.bf16.gmra.mxu0 %v6845
        %v7018 = vpop.f32.mrf.mxu0
        %v7019 = vadd.f32 0.0, %v7018
        %v7020 = vpop.f32.mrf.mxu0
        %v7021 = vadd.f32 0.0, %v7020
        %7022 = vdwg.mxu0
        %v7023 = vadd.f32 %v6685, %v6924
        %v7024 = vadd.f32 %v6687, %v6926
        %v7025 = vadd.f32 %v6690, %v6929
        %v7026 = vadd.f32 %v6692, %v6931
        %v7027 = vadd.f32 %v6695, %v6934
        %v7028 = vadd.f32 %v6697, %v6936
        %v7029 = vadd.f32 %v6700, %v6939
        %v7030 = vadd.f32 %v6702, %v6941
        %v7031 = vadd.f32 %v6705, %v6944
        %v7032 = vadd.f32 %v6707, %v6946
        %v7033 = vadd.f32 %v6710, %v6949
        %v7034 = vadd.f32 %v6712, %v6951
        %v7035 = vadd.f32 %v6715, %v6954
        %v7036 = vadd.f32 %v6717, %v6956
        %v7037 = vadd.f32 %v6720, %v6959
        %v7038 = vadd.f32 %v6722, %v6961
        %v7039 = vadd.f32 %v6725, %v6964
        %v7040 = vadd.f32 %v6727, %v6966
        %v7041 = vadd.f32 %v6730, %v6969
        %v7042 = vadd.f32 %v6732, %v6971
        %v7043 = vadd.f32 %v6735, %v6974
        %v7044 = vadd.f32 %v6737, %v6976
        %v7045 = vadd.f32 %v6740, %v6979
        %v7046 = vadd.f32 %v6742, %v6981
        %v7047 = vadd.f32 %v6745, %v6984
        %v7048 = vadd.f32 %v6747, %v6986
        %v7049 = vadd.f32 %v6750, %v6989
        %v7050 = vadd.f32 %v6752, %v6991
        %v7051 = vadd.f32 %v6755, %v6994
        %v7052 = vadd.f32 %v6757, %v6996
        %v7053 = vadd.f32 %v6760, %v6999
        %v7054 = vadd.f32 %v6762, %v7001
        %v7055 = vadd.f32 %v6765, %v7004
        %v7056 = vadd.f32 %v6767, %v7006
        %v7057 = vadd.f32 %v6770, %v7009
        %v7058 = vadd.f32 %v6772, %v7011
        %v7059 = vadd.f32 %v6775, %v7014
        %v7060 = vadd.f32 %v6777, %v7016
        %v7061 = vadd.f32 %v6780, %v7019
        %v7062 = vadd.f32 %v6782, %v7021
        %v7063 = vld [vmem:[#allocation3 + $0x8] sm:$0xc]
        %v7064 = vld [vmem:[#allocation3 + $0xc] sm:$0xf]
        %v7065 = vld [vmem:[#allocation3 + $0x10] sm:$0xf]
        %v7066 = vld [vmem:[#allocation3 + $0x14] sm:$0xf]
        %v7067 = vld [vmem:[#allocation3 + $0x18] sm:$0xf]
        %v7068 = vld [vmem:[#allocation3 + $0x1c] sm:$0xf]
        %v7069 = vld [vmem:[#allocation3 + $0x20] sm:$0xf]
        %v7070 = vld [vmem:[#allocation3 + $0x24] sm:$0xf]
        %v7071 = vld [vmem:[#allocation3 + $0x28] sm:$0xf]
        %v7072 = vld [vmem:[#allocation3 + $0x2c] sm:$0xf]
        %v7073 = vld [vmem:[#allocation3 + $0x30] sm:$0xf]
        %v7074 = vld [vmem:[#allocation3 + $0x34] sm:$0xf]
        %v7075 = vld [vmem:[#allocation3 + $0x38] sm:$0xf]
        %v7076 = vld [vmem:[#allocation3 + $0x3c] sm:$0xf]
        %v7077 = vld [vmem:[#allocation3 + $0x40] sm:$0xf]
        %v7078 = vld [vmem:[#allocation3 + $0x44] sm:$0xf]
        %v7079 = vld [vmem:[#allocation3 + $0x48] sm:$0xf]
        %v7080 = vld [vmem:[#allocation3 + $0x4c] sm:$0xf]
        %v7081 = vld [vmem:[#allocation3 + $0x50] sm:$0xf]
        %v7082 = vld [vmem:[#allocation3 + $0x54] sm:$0xf]
        %v7083 = vld [vmem:[#allocation3 + $0x58] sm:$0xf]
        %v7084 = vld [vmem:[#allocation3 + $0x5c] sm:$0xf]
        %v7085 = vld [vmem:[#allocation3 + $0x60] sm:$0xf]
        %v7086 = vld [vmem:[#allocation3 + $0x64] sm:$0xf]
        %v7087 = vld [vmem:[#allocation3 + $0x68] sm:$0xf]
        %v7088 = vld [vmem:[#allocation3 + $0x6c] sm:$0xf]
        %v7089 = vld [vmem:[#allocation3 + $0x70] sm:$0xf]
        %v7090 = vld [vmem:[#allocation3 + $0x74] sm:$0xf]
        %v7091 = vld [vmem:[#allocation3 + $0x78] sm:$0xf]
        %v7092 = vld [vmem:[#allocation3 + $0x7c] sm:$0xf]
        %v7093 = vld [vmem:[#allocation3 + $0x80] sm:$0xf]
        %v7094 = vld [vmem:[#allocation3 + $0x84] sm:$0xf]
        %v7095 = vld [vmem:[#allocation3 + $0x88] sm:$0xf]
        %v7096 = vld [vmem:[#allocation3 + $0x8c] sm:$0xf]
        %v7097 = vld [vmem:[#allocation3 + $0x90] sm:$0xf]
        %v7098 = vld [vmem:[#allocation3 + $0x94] sm:$0xf]
        %v7099 = vld [vmem:[#allocation3 + $0x98] sm:$0xf]
        %v7100 = vld [vmem:[#allocation3 + $0x9c] sm:$0xf]
        %v7101 = vld [vmem:[#allocation3 + $0xa0] sm:$0xf]
        %v7102 = vld [vmem:[#allocation3 + $0xa4] sm:$0xf]
        %v7103 = vld [vmem:[#allocation3 + $0xa8] sm:$0x3]
        %s7104 = scalar_lea.vmem [#allocation10], 192
        %v7105 = vld [vmem:[%s7104] sm:$0xf]
        %v7106 = vld [vmem:[%s7104 + $0x4] sm:$0xf]
        %v7107 = vld [vmem:[%s7104 + $0x8] sm:$0xf]
        %v7108 = vld [vmem:[%s7104 + $0xc] sm:$0xf]
        %v7109 = vld [vmem:[%s7104 + $0x10] sm:$0xf]
        %v7110 = vld [vmem:[%s7104 + $0x14] sm:$0xf]
        %v7111 = vld [vmem:[%s7104 + $0x18] sm:$0xf]
        %v7112 = vld [vmem:[%s7104 + $0x1c] sm:$0xf]
        %v7113 = vld [vmem:[%s7104 + $0x20] sm:$0xf]
        %v7114 = vld [vmem:[%s7104 + $0x24] sm:$0xf]
        %v7115 = vld [vmem:[%s7104 + $0x28] sm:$0xf]
        %v7116 = vld [vmem:[%s7104 + $0x2c] sm:$0xf]
        %v7117 = vld [vmem:[%s7104 + $0x30] sm:$0xf]
        %v7118 = vld [vmem:[%s7104 + $0x34] sm:$0xf]
        %v7119 = vld [vmem:[%s7104 + $0x38] sm:$0xf]
        %v7120 = vld [vmem:[%s7104 + $0x3c] sm:$0xf]
        %v7121 = vld [vmem:[#allocation3 + $0xa8] sm:$0x7]
        %s7122 = scalar_lea.vmem [#allocation10], 256
        %v7123 = vld [vmem:[%s7122] sm:$0xf]
        %v7124 = vld [vmem:[%s7122 + $0x4] sm:$0xf]
        %v7125 = vld [vmem:[%s7122 + $0x8] sm:$0xf]
        %v7126 = vld [vmem:[%s7122 + $0xc] sm:$0xf]
        %v7127 = vld [vmem:[%s7122 + $0x10] sm:$0xf]
        %v7128 = vld [vmem:[%s7122 + $0x14] sm:$0xf]
        %v7129 = vld [vmem:[%s7122 + $0x18] sm:$0xf]
        %v7130 = vld [vmem:[%s7122 + $0x1c] sm:$0xf]
        %v7131 = vld [vmem:[%s7122 + $0x20] sm:$0xf]
        %v7132 = vld [vmem:[%s7122 + $0x24] sm:$0xf]
        %v7133 = vld [vmem:[%s7122 + $0x28] sm:$0xf]
        %v7134 = vld [vmem:[%s7122 + $0x2c] sm:$0xf]
        %v7135 = vld [vmem:[%s7122 + $0x30] sm:$0xf]
        %v7136 = vld [vmem:[%s7122 + $0x34] sm:$0xf]
        %v7137 = vld [vmem:[%s7122 + $0x38] sm:$0xf]
        %v7138 = vld [vmem:[%s7122 + $0x3c] sm:$0xf]
        %v7180 = vunpack.c.l.b16 %v7063
        %v7181 = vunpack.c.l.b16 %v7064
        %v7182 = vunpack.c.l.b16 %v7065
        %v7183 = vunpack.c.l.b16 %v7066
        %v7184 = vunpack.c.l.b16 %v7067
        %v7185 = vunpack.c.l.b16 %v7068
        %v7186 = vunpack.c.l.b16 %v7069
        %v7187 = vunpack.c.l.b16 %v7070
        %v7188 = vunpack.c.l.b16 %v7071
        %v7189 = vunpack.c.l.b16 %v7072
        %v7190 = vunpack.c.l.b16 %v7073
        %v7191 = vunpack.c.l.b16 %v7074
        %v7192 = vunpack.c.l.b16 %v7075
        %v7193 = vunpack.c.l.b16 %v7076
        %v7194 = vunpack.c.l.b16 %v7077
        %v7195 = vunpack.c.l.b16 %v7078
        %v7196 = vunpack.c.l.b16 %v7079
        %v7197 = vunpack.c.l.b16 %v7080
        %v7198 = vunpack.c.l.b16 %v7081
        %v7199 = vunpack.c.l.b16 %v7082
        %v7200 = vunpack.c.l.b16 %v7083
        %v7201 = vunpack.c.l.b16 %v7084
        %v7202 = vunpack.c.l.b16 %v7085
        %v7203 = vunpack.c.l.b16 %v7086
        %v7204 = vunpack.c.l.b16 %v7087
        %v7205 = vunpack.c.l.b16 %v7088
        %v7206 = vunpack.c.l.b16 %v7089
        %v7207 = vunpack.c.l.b16 %v7090
        %v7208 = vunpack.c.l.b16 %v7091
        %v7209 = vunpack.c.l.b16 %v7092
        %v7210 = vunpack.c.l.b16 %v7093
        %v7211 = vunpack.c.l.b16 %v7094
        %v7212 = vunpack.c.l.b16 %v7095
        %v7213 = vunpack.c.l.b16 %v7096
        %v7214 = vunpack.c.l.b16 %v7097
        %v7215 = vunpack.c.l.b16 %v7098
        %v7216 = vunpack.c.l.b16 %v7099
        %v7217 = vunpack.c.l.b16 %v7100
        %v7218 = vunpack.c.l.b16 %v7101
        %v7219 = vunpack.c.l.b16 %v7102
        %v7220 = vunpack.c.l.b16 %v7121
        %v7221 = vpack.c.b16 %v7181, %v7180
        %v7222 = vpack.c.b16 %v7183, %v7182
        %v7223 = vpack.c.b16 %v7185, %v7184
        %v7224 = vpack.c.b16 %v7187, %v7186
        %v7225 = vpack.c.b16 %v7189, %v7188
        %v7226 = vpack.c.b16 %v7191, %v7190
        %v7227 = vpack.c.b16 %v7193, %v7192
        %v7228 = vpack.c.b16 %v7195, %v7194
        %v7229 = vpack.c.b16 %v7197, %v7196
        %v7230 = vpack.c.b16 %v7199, %v7198
        %v7231 = vpack.c.b16 %v7201, %v7200
        %v7232 = vpack.c.b16 %v7203, %v7202
        %v7233 = vpack.c.b16 %v7205, %v7204
        %v7234 = vpack.c.b16 %v7207, %v7206
        %v7235 = vpack.c.b16 %v7209, %v7208
        %v7236 = vpack.c.b16 %v7211, %v7210
        %v7237 = vpack.c.b16 %v7213, %v7212
        %v7238 = vpack.c.b16 %v7215, %v7214
        %v7239 = vpack.c.b16 %v7217, %v7216
        %v7240 = vpack.c.b16 %v7219, %v7218
        %v7241 = vpack.c.b16 %v7220, %v7220
        %v7243 = vshrl.u32 %v7221, 16
        %v7245 = vrot.slane %v7243, 2
        %v7246 = vshll.u32 %v7221, 16
        %v7248 = vrot.slane %v7246, 3
        %v7249 = vor.u32 %v7245, %v7248
        %v7251 = vshrl.u32 %v7222, 16
        %v7253 = vrot.slane %v7251, 2
        %v7254 = vshll.u32 %v7222, 16
        %v7256 = vrot.slane %v7254, 3
        %v7257 = vor.u32 %v7253, %v7256
        %v7258 = vsel %vm3210, %v7249, %v7257
        %v7260 = vshrl.u32 %v7223, 16
        %v7262 = vrot.slane %v7260, 2
        %v7263 = vshll.u32 %v7223, 16
        %v7265 = vrot.slane %v7263, 3
        %v7266 = vor.u32 %v7262, %v7265
        %v7267 = vsel %vm3210, %v7257, %v7266
        %v7269 = vshrl.u32 %v7224, 16
        %v7271 = vrot.slane %v7269, 2
        %v7272 = vshll.u32 %v7224, 16
        %v7274 = vrot.slane %v7272, 3
        %v7275 = vor.u32 %v7271, %v7274
        %v7276 = vsel %vm3210, %v7266, %v7275
        %v7278 = vshrl.u32 %v7225, 16
        %v7280 = vrot.slane %v7278, 2
        %v7281 = vshll.u32 %v7225, 16
        %v7283 = vrot.slane %v7281, 3
        %v7284 = vor.u32 %v7280, %v7283
        %v7285 = vsel %vm3210, %v7275, %v7284
        %v7287 = vshrl.u32 %v7226, 16
        %v7289 = vrot.slane %v7287, 2
        %v7290 = vshll.u32 %v7226, 16
        %v7292 = vrot.slane %v7290, 3
        %v7293 = vor.u32 %v7289, %v7292
        %v7294 = vsel %vm3210, %v7284, %v7293
        %v7296 = vshrl.u32 %v7227, 16
        %v7298 = vrot.slane %v7296, 2
        %v7299 = vshll.u32 %v7227, 16
        %v7301 = vrot.slane %v7299, 3
        %v7302 = vor.u32 %v7298, %v7301
        %v7303 = vsel %vm3210, %v7293, %v7302
        %v7305 = vshrl.u32 %v7228, 16
        %v7307 = vrot.slane %v7305, 2
        %v7308 = vshll.u32 %v7228, 16
        %v7310 = vrot.slane %v7308, 3
        %v7311 = vor.u32 %v7307, %v7310
        %v7312 = vsel %vm3210, %v7302, %v7311
        %v7314 = vshrl.u32 %v7229, 16
        %v7316 = vrot.slane %v7314, 2
        %v7317 = vshll.u32 %v7229, 16
        %v7319 = vrot.slane %v7317, 3
        %v7320 = vor.u32 %v7316, %v7319
        %v7321 = vsel %vm3210, %v7311, %v7320
        %v7323 = vshrl.u32 %v7230, 16
        %v7325 = vrot.slane %v7323, 2
        %v7326 = vshll.u32 %v7230, 16
        %v7328 = vrot.slane %v7326, 3
        %v7329 = vor.u32 %v7325, %v7328
        %v7330 = vsel %vm3210, %v7320, %v7329
        %v7332 = vshrl.u32 %v7231, 16
        %v7334 = vrot.slane %v7332, 2
        %v7335 = vshll.u32 %v7231, 16
        %v7337 = vrot.slane %v7335, 3
        %v7338 = vor.u32 %v7334, %v7337
        %v7339 = vsel %vm3210, %v7329, %v7338
        %v7341 = vshrl.u32 %v7232, 16
        %v7343 = vrot.slane %v7341, 2
        %v7344 = vshll.u32 %v7232, 16
        %v7346 = vrot.slane %v7344, 3
        %v7347 = vor.u32 %v7343, %v7346
        %v7348 = vsel %vm3210, %v7338, %v7347
        %v7350 = vshrl.u32 %v7233, 16
        %v7352 = vrot.slane %v7350, 2
        %v7353 = vshll.u32 %v7233, 16
        %v7355 = vrot.slane %v7353, 3
        %v7356 = vor.u32 %v7352, %v7355
        %v7357 = vsel %vm3210, %v7347, %v7356
        %v7359 = vshrl.u32 %v7234, 16
        %v7361 = vrot.slane %v7359, 2
        %v7362 = vshll.u32 %v7234, 16
        %v7364 = vrot.slane %v7362, 3
        %v7365 = vor.u32 %v7361, %v7364
        %v7366 = vsel %vm3210, %v7356, %v7365
        %v7368 = vshrl.u32 %v7235, 16
        %v7370 = vrot.slane %v7368, 2
        %v7371 = vshll.u32 %v7235, 16
        %v7373 = vrot.slane %v7371, 3
        %v7374 = vor.u32 %v7370, %v7373
        %v7375 = vsel %vm3210, %v7365, %v7374
        %v7377 = vshrl.u32 %v7236, 16
        %v7379 = vrot.slane %v7377, 2
        %v7380 = vshll.u32 %v7236, 16
        %v7382 = vrot.slane %v7380, 3
        %v7383 = vor.u32 %v7379, %v7382
        %v7384 = vsel %vm3210, %v7374, %v7383
        %v7386 = vshrl.u32 %v7237, 16
        %v7388 = vrot.slane %v7386, 2
        %v7389 = vshll.u32 %v7237, 16
        %v7391 = vrot.slane %v7389, 3
        %v7392 = vor.u32 %v7388, %v7391
        %v7393 = vsel %vm3210, %v7383, %v7392
        %v7395 = vshrl.u32 %v7238, 16
        %v7397 = vrot.slane %v7395, 2
        %v7398 = vshll.u32 %v7238, 16
        %v7400 = vrot.slane %v7398, 3
        %v7401 = vor.u32 %v7397, %v7400
        %v7402 = vsel %vm3210, %v7392, %v7401
        %v7404 = vshrl.u32 %v7239, 16
        %v7406 = vrot.slane %v7404, 2
        %v7407 = vshll.u32 %v7239, 16
        %v7409 = vrot.slane %v7407, 3
        %v7410 = vor.u32 %v7406, %v7409
        %v7411 = vsel %vm3210, %v7401, %v7410
        %v7413 = vshrl.u32 %v7240, 16
        %v7415 = vrot.slane %v7413, 2
        %v7416 = vshll.u32 %v7240, 16
        %v7418 = vrot.slane %v7416, 3
        %v7419 = vor.u32 %v7415, %v7418
        %v7420 = vsel %vm3210, %v7410, %v7419
        %v7422 = vshrl.u32 %v7241, 16
        %v7424 = vrot.slane %v7422, 2
        %v7425 = vshll.u32 %v7241, 16
        %v7427 = vrot.slane %v7425, 3
        %v7428 = vor.u32 %v7424, %v7427
        %v7429 = vsel %vm3210, %v7419, %v7428
        %v7466 = vunpack.c.l.b16 %v7123
        %v7467 = vunpack.c.l.b16 %v7124
        %v7468 = vunpack.c.l.b16 %v7125
        %v7469 = vunpack.c.l.b16 %v7126
        %v7470 = vunpack.c.l.b16 %v7127
        %v7471 = vunpack.c.l.b16 %v7128
        %v7472 = vunpack.c.l.b16 %v7129
        %v7473 = vunpack.c.l.b16 %v7130
        %v7474 = vunpack.c.l.b16 %v7131
        %v7475 = vunpack.c.l.b16 %v7132
        %v7476 = vunpack.c.l.b16 %v7133
        %v7477 = vunpack.c.l.b16 %v7134
        %v7478 = vunpack.c.l.b16 %v7135
        %v7479 = vunpack.c.l.b16 %v7136
        %v7480 = vunpack.c.l.b16 %v7137
        %v7481 = vunpack.c.l.b16 %v7138
        %v7482 = vpack.c.b16 %v7467, %v7466
        %v7483 = vpack.c.b16 %v7469, %v7468
        %v7484 = vpack.c.b16 %v7471, %v7470
        %v7485 = vpack.c.b16 %v7473, %v7472
        %v7486 = vpack.c.b16 %v7475, %v7474
        %v7487 = vpack.c.b16 %v7477, %v7476
        %v7488 = vpack.c.b16 %v7479, %v7478
        %v7489 = vpack.c.b16 %v7481, %v7480
        %7498 = vmatpush.bf16.msra.mxu0 %v7489
        %7499 = vmatpush.bf16.msra.mxu0 %v7488
        %7500 = vmatpush.bf16.msra.mxu0 %v7487
        %7501 = vmatpush.bf16.msra.mxu0 %v7486
        %7502 = vmatpush.bf16.msra.mxu0 %v7485
        %7503 = vmatpush.bf16.msra.mxu0 %v7484
        %7504 = vmatpush.bf16.msra.mxu0 %v7483
        %7505 = vmatpush.bf16.msra.mxu0 %v7482
        %7506 = vmatmul.bf16.gmra.mxu0 %v7258
        %v7507 = vpop.f32.mrf.mxu0
        %v7508 = vadd.f32 0.0, %v7507
        %v7509 = vpop.f32.mrf.mxu0
        %v7510 = vadd.f32 0.0, %v7509
        %7511 = vmatmul.bf16.gmra.mxu0 %v7267
        %v7512 = vpop.f32.mrf.mxu0
        %v7513 = vadd.f32 0.0, %v7512
        %v7514 = vpop.f32.mrf.mxu0
        %v7515 = vadd.f32 0.0, %v7514
        %7516 = vmatmul.bf16.gmra.mxu0 %v7276
        %v7517 = vpop.f32.mrf.mxu0
        %v7518 = vadd.f32 0.0, %v7517
        %v7519 = vpop.f32.mrf.mxu0
        %v7520 = vadd.f32 0.0, %v7519
        %7521 = vmatmul.bf16.gmra.mxu0 %v7285
        %v7522 = vpop.f32.mrf.mxu0
        %v7523 = vadd.f32 0.0, %v7522
        %v7524 = vpop.f32.mrf.mxu0
        %v7525 = vadd.f32 0.0, %v7524
        %7526 = vmatmul.bf16.gmra.mxu0 %v7294
        %v7527 = vpop.f32.mrf.mxu0
        %v7528 = vadd.f32 0.0, %v7527
        %v7529 = vpop.f32.mrf.mxu0
        %v7530 = vadd.f32 0.0, %v7529
        %7531 = vmatmul.bf16.gmra.mxu0 %v7303
        %v7532 = vpop.f32.mrf.mxu0
        %v7533 = vadd.f32 0.0, %v7532
        %v7534 = vpop.f32.mrf.mxu0
        %v7535 = vadd.f32 0.0, %v7534
        %7536 = vmatmul.bf16.gmra.mxu0 %v7312
        %v7537 = vpop.f32.mrf.mxu0
        %v7538 = vadd.f32 0.0, %v7537
        %v7539 = vpop.f32.mrf.mxu0
        %v7540 = vadd.f32 0.0, %v7539
        %7541 = vmatmul.bf16.gmra.mxu0 %v7321
        %v7542 = vpop.f32.mrf.mxu0
        %v7543 = vadd.f32 0.0, %v7542
        %v7544 = vpop.f32.mrf.mxu0
        %v7545 = vadd.f32 0.0, %v7544
        %7546 = vmatmul.bf16.gmra.mxu0 %v7330
        %v7547 = vpop.f32.mrf.mxu0
        %v7548 = vadd.f32 0.0, %v7547
        %v7549 = vpop.f32.mrf.mxu0
        %v7550 = vadd.f32 0.0, %v7549
        %7551 = vmatmul.bf16.gmra.mxu0 %v7339
        %v7552 = vpop.f32.mrf.mxu0
        %v7553 = vadd.f32 0.0, %v7552
        %v7554 = vpop.f32.mrf.mxu0
        %v7555 = vadd.f32 0.0, %v7554
        %7556 = vmatmul.bf16.gmra.mxu0 %v7348
        %v7557 = vpop.f32.mrf.mxu0
        %v7558 = vadd.f32 0.0, %v7557
        %v7559 = vpop.f32.mrf.mxu0
        %v7560 = vadd.f32 0.0, %v7559
        %7561 = vmatmul.bf16.gmra.mxu0 %v7357
        %v7562 = vpop.f32.mrf.mxu0
        %v7563 = vadd.f32 0.0, %v7562
        %v7564 = vpop.f32.mrf.mxu0
        %v7565 = vadd.f32 0.0, %v7564
        %7566 = vmatmul.bf16.gmra.mxu0 %v7366
        %v7567 = vpop.f32.mrf.mxu0
        %v7568 = vadd.f32 0.0, %v7567
        %v7569 = vpop.f32.mrf.mxu0
        %v7570 = vadd.f32 0.0, %v7569
        %7571 = vmatmul.bf16.gmra.mxu0 %v7375
        %v7572 = vpop.f32.mrf.mxu0
        %v7573 = vadd.f32 0.0, %v7572
        %v7574 = vpop.f32.mrf.mxu0
        %v7575 = vadd.f32 0.0, %v7574
        %7576 = vmatmul.bf16.gmra.mxu0 %v7384
        %v7577 = vpop.f32.mrf.mxu0
        %v7578 = vadd.f32 0.0, %v7577
        %v7579 = vpop.f32.mrf.mxu0
        %v7580 = vadd.f32 0.0, %v7579
        %7581 = vmatmul.bf16.gmra.mxu0 %v7393
        %v7582 = vpop.f32.mrf.mxu0
        %v7583 = vadd.f32 0.0, %v7582
        %v7584 = vpop.f32.mrf.mxu0
        %v7585 = vadd.f32 0.0, %v7584
        %7586 = vmatmul.bf16.gmra.mxu0 %v7402
        %v7587 = vpop.f32.mrf.mxu0
        %v7588 = vadd.f32 0.0, %v7587
        %v7589 = vpop.f32.mrf.mxu0
        %v7590 = vadd.f32 0.0, %v7589
        %7591 = vmatmul.bf16.gmra.mxu0 %v7411
        %v7592 = vpop.f32.mrf.mxu0
        %v7593 = vadd.f32 0.0, %v7592
        %v7594 = vpop.f32.mrf.mxu0
        %v7595 = vadd.f32 0.0, %v7594
        %7596 = vmatmul.bf16.gmra.mxu0 %v7420
        %v7597 = vpop.f32.mrf.mxu0
        %v7598 = vadd.f32 0.0, %v7597
        %v7599 = vpop.f32.mrf.mxu0
        %v7600 = vadd.f32 0.0, %v7599
        %7601 = vmatmul.bf16.gmra.mxu0 %v7429
        %v7602 = vpop.f32.mrf.mxu0
        %v7603 = vadd.f32 0.0, %v7602
        %v7604 = vpop.f32.mrf.mxu0
        %v7605 = vadd.f32 0.0, %v7604
        %7606 = vdwg.mxu0
        %v7608 = vunpack.c.l.b16 %v7103
        %v7609 = vpack.c.b16 %v7608, %v7608
        %v7610 = vrot.slane %v7221, 2
        %v7611 = vrot.slane %v7222, 2
        %v7612 = vsel %vm3632, %v7610, %v7611
        %v7613 = vrot.slane %v7223, 2
        %v7614 = vsel %vm3632, %v7611, %v7613
        %v7615 = vrot.slane %v7224, 2
        %v7616 = vsel %vm3632, %v7613, %v7615
        %v7617 = vrot.slane %v7225, 2
        %v7618 = vsel %vm3632, %v7615, %v7617
        %v7619 = vrot.slane %v7226, 2
        %v7620 = vsel %vm3632, %v7617, %v7619
        %v7621 = vrot.slane %v7227, 2
        %v7622 = vsel %vm3632, %v7619, %v7621
        %v7623 = vrot.slane %v7228, 2
        %v7624 = vsel %vm3632, %v7621, %v7623
        %v7625 = vrot.slane %v7229, 2
        %v7626 = vsel %vm3632, %v7623, %v7625
        %v7627 = vrot.slane %v7230, 2
        %v7628 = vsel %vm3632, %v7625, %v7627
        %v7629 = vrot.slane %v7231, 2
        %v7630 = vsel %vm3632, %v7627, %v7629
        %v7631 = vrot.slane %v7232, 2
        %v7632 = vsel %vm3632, %v7629, %v7631
        %v7633 = vrot.slane %v7233, 2
        %v7634 = vsel %vm3632, %v7631, %v7633
        %v7635 = vrot.slane %v7234, 2
        %v7636 = vsel %vm3632, %v7633, %v7635
        %v7637 = vrot.slane %v7235, 2
        %v7638 = vsel %vm3632, %v7635, %v7637
        %v7639 = vrot.slane %v7236, 2
        %v7640 = vsel %vm3632, %v7637, %v7639
        %v7641 = vrot.slane %v7237, 2
        %v7642 = vsel %vm3632, %v7639, %v7641
        %v7643 = vrot.slane %v7238, 2
        %v7644 = vsel %vm3632, %v7641, %v7643
        %v7645 = vrot.slane %v7239, 2
        %v7646 = vsel %vm3632, %v7643, %v7645
        %v7647 = vrot.slane %v7240, 2
        %v7648 = vsel %vm3632, %v7645, %v7647
        %v7649 = vrot.slane %v7609, 2
        %v7650 = vsel %vm3632, %v7647, %v7649
        %v7687 = vunpack.c.l.b16 %v7105
        %v7688 = vunpack.c.l.b16 %v7106
        %v7689 = vunpack.c.l.b16 %v7107
        %v7690 = vunpack.c.l.b16 %v7108
        %v7691 = vunpack.c.l.b16 %v7109
        %v7692 = vunpack.c.l.b16 %v7110
        %v7693 = vunpack.c.l.b16 %v7111
        %v7694 = vunpack.c.l.b16 %v7112
        %v7695 = vunpack.c.l.b16 %v7113
        %v7696 = vunpack.c.l.b16 %v7114
        %v7697 = vunpack.c.l.b16 %v7115
        %v7698 = vunpack.c.l.b16 %v7116
        %v7699 = vunpack.c.l.b16 %v7117
        %v7700 = vunpack.c.l.b16 %v7118
        %v7701 = vunpack.c.l.b16 %v7119
        %v7702 = vunpack.c.l.b16 %v7120
        %v7703 = vpack.c.b16 %v7688, %v7687
        %v7704 = vpack.c.b16 %v7690, %v7689
        %v7705 = vpack.c.b16 %v7692, %v7691
        %v7706 = vpack.c.b16 %v7694, %v7693
        %v7707 = vpack.c.b16 %v7696, %v7695
        %v7708 = vpack.c.b16 %v7698, %v7697
        %v7709 = vpack.c.b16 %v7700, %v7699
        %v7710 = vpack.c.b16 %v7702, %v7701
        %7719 = vmatpush.bf16.msra.mxu0 %v7710
        %7720 = vmatpush.bf16.msra.mxu0 %v7709
        %7721 = vmatpush.bf16.msra.mxu0 %v7708
        %7722 = vmatpush.bf16.msra.mxu0 %v7707
        %7723 = vmatpush.bf16.msra.mxu0 %v7706
        %7724 = vmatpush.bf16.msra.mxu0 %v7705
        %7725 = vmatpush.bf16.msra.mxu0 %v7704
        %7726 = vmatpush.bf16.msra.mxu0 %v7703
        %7727 = vmatmul.bf16.gmra.mxu0 %v7612
        %v7728 = vpop.f32.mrf.mxu0
        %v7729 = vadd.f32 %v7508, %v7728
        %v7730 = vpop.f32.mrf.mxu0
        %v7731 = vadd.f32 %v7510, %v7730
        %7732 = vmatmul.bf16.gmra.mxu0 %v7614
        %v7733 = vpop.f32.mrf.mxu0
        %v7734 = vadd.f32 %v7513, %v7733
        %v7735 = vpop.f32.mrf.mxu0
        %v7736 = vadd.f32 %v7515, %v7735
        %7737 = vmatmul.bf16.gmra.mxu0 %v7616
        %v7738 = vpop.f32.mrf.mxu0
        %v7739 = vadd.f32 %v7518, %v7738
        %v7740 = vpop.f32.mrf.mxu0
        %v7741 = vadd.f32 %v7520, %v7740
        %7742 = vmatmul.bf16.gmra.mxu0 %v7618
        %v7743 = vpop.f32.mrf.mxu0
        %v7744 = vadd.f32 %v7523, %v7743
        %v7745 = vpop.f32.mrf.mxu0
        %v7746 = vadd.f32 %v7525, %v7745
        %7747 = vmatmul.bf16.gmra.mxu0 %v7620
        %v7748 = vpop.f32.mrf.mxu0
        %v7749 = vadd.f32 %v7528, %v7748
        %v7750 = vpop.f32.mrf.mxu0
        %v7751 = vadd.f32 %v7530, %v7750
        %7752 = vmatmul.bf16.gmra.mxu0 %v7622
        %v7753 = vpop.f32.mrf.mxu0
        %v7754 = vadd.f32 %v7533, %v7753
        %v7755 = vpop.f32.mrf.mxu0
        %v7756 = vadd.f32 %v7535, %v7755
        %7757 = vmatmul.bf16.gmra.mxu0 %v7624
        %v7758 = vpop.f32.mrf.mxu0
        %v7759 = vadd.f32 %v7538, %v7758
        %v7760 = vpop.f32.mrf.mxu0
        %v7761 = vadd.f32 %v7540, %v7760
        %7762 = vmatmul.bf16.gmra.mxu0 %v7626
        %v7763 = vpop.f32.mrf.mxu0
        %v7764 = vadd.f32 %v7543, %v7763
        %v7765 = vpop.f32.mrf.mxu0
        %v7766 = vadd.f32 %v7545, %v7765
        %7767 = vmatmul.bf16.gmra.mxu0 %v7628
        %v7768 = vpop.f32.mrf.mxu0
        %v7769 = vadd.f32 %v7548, %v7768
        %v7770 = vpop.f32.mrf.mxu0
        %v7771 = vadd.f32 %v7550, %v7770
        %7772 = vmatmul.bf16.gmra.mxu0 %v7630
        %v7773 = vpop.f32.mrf.mxu0
        %v7774 = vadd.f32 %v7553, %v7773
        %v7775 = vpop.f32.mrf.mxu0
        %v7776 = vadd.f32 %v7555, %v7775
        %7777 = vmatmul.bf16.gmra.mxu0 %v7632
        %v7778 = vpop.f32.mrf.mxu0
        %v7779 = vadd.f32 %v7558, %v7778
        %v7780 = vpop.f32.mrf.mxu0
        %v7781 = vadd.f32 %v7560, %v7780
        %7782 = vmatmul.bf16.gmra.mxu0 %v7634
        %v7783 = vpop.f32.mrf.mxu0
        %v7784 = vadd.f32 %v7563, %v7783
        %v7785 = vpop.f32.mrf.mxu0
        %v7786 = vadd.f32 %v7565, %v7785
        %7787 = vmatmul.bf16.gmra.mxu0 %v7636
        %v7788 = vpop.f32.mrf.mxu0
        %v7789 = vadd.f32 %v7568, %v7788
        %v7790 = vpop.f32.mrf.mxu0
        %v7791 = vadd.f32 %v7570, %v7790
        %7792 = vmatmul.bf16.gmra.mxu0 %v7638
        %v7793 = vpop.f32.mrf.mxu0
        %v7794 = vadd.f32 %v7573, %v7793
        %v7795 = vpop.f32.mrf.mxu0
        %v7796 = vadd.f32 %v7575, %v7795
        %7797 = vmatmul.bf16.gmra.mxu0 %v7640
        %v7798 = vpop.f32.mrf.mxu0
        %v7799 = vadd.f32 %v7578, %v7798
        %v7800 = vpop.f32.mrf.mxu0
        %v7801 = vadd.f32 %v7580, %v7800
        %7802 = vmatmul.bf16.gmra.mxu0 %v7642
        %v7803 = vpop.f32.mrf.mxu0
        %v7804 = vadd.f32 %v7583, %v7803
        %v7805 = vpop.f32.mrf.mxu0
        %v7806 = vadd.f32 %v7585, %v7805
        %7807 = vmatmul.bf16.gmra.mxu0 %v7644
        %v7808 = vpop.f32.mrf.mxu0
        %v7809 = vadd.f32 %v7588, %v7808
        %v7810 = vpop.f32.mrf.mxu0
        %v7811 = vadd.f32 %v7590, %v7810
        %7812 = vmatmul.bf16.gmra.mxu0 %v7646
        %v7813 = vpop.f32.mrf.mxu0
        %v7814 = vadd.f32 %v7593, %v7813
        %v7815 = vpop.f32.mrf.mxu0
        %v7816 = vadd.f32 %v7595, %v7815
        %7817 = vmatmul.bf16.gmra.mxu0 %v7648
        %v7818 = vpop.f32.mrf.mxu0
        %v7819 = vadd.f32 %v7598, %v7818
        %v7820 = vpop.f32.mrf.mxu0
        %v7821 = vadd.f32 %v7600, %v7820
        %7822 = vmatmul.bf16.gmra.mxu0 %v7650
        %v7823 = vpop.f32.mrf.mxu0
        %v7824 = vadd.f32 %v7603, %v7823
        %v7825 = vpop.f32.mrf.mxu0
        %v7826 = vadd.f32 %v7605, %v7825
        %7827 = vdwg.mxu0
        %v7828 = vld [vmem:[#allocation3 + $0x8] sm:$0x8]
        %s7829 = scalar_lea.vmem [#allocation10], 320
        %v7830 = vld [vmem:[%s7829] sm:$0xf]
        %v7831 = vld [vmem:[%s7829 + $0x4] sm:$0xf]
        %v7832 = vld [vmem:[%s7829 + $0x8] sm:$0xf]
        %v7833 = vld [vmem:[%s7829 + $0xc] sm:$0xf]
        %v7834 = vld [vmem:[%s7829 + $0x10] sm:$0xf]
        %v7835 = vld [vmem:[%s7829 + $0x14] sm:$0xf]
        %v7836 = vld [vmem:[%s7829 + $0x18] sm:$0xf]
        %v7837 = vld [vmem:[%s7829 + $0x1c] sm:$0xf]
        %v7838 = vld [vmem:[%s7829 + $0x20] sm:$0xf]
        %v7839 = vld [vmem:[%s7829 + $0x24] sm:$0xf]
        %v7840 = vld [vmem:[%s7829 + $0x28] sm:$0xf]
        %v7841 = vld [vmem:[%s7829 + $0x2c] sm:$0xf]
        %v7842 = vld [vmem:[%s7829 + $0x30] sm:$0xf]
        %v7843 = vld [vmem:[%s7829 + $0x34] sm:$0xf]
        %v7844 = vld [vmem:[%s7829 + $0x38] sm:$0xf]
        %v7845 = vld [vmem:[%s7829 + $0x3c] sm:$0xf]
        %v7847 = vunpack.c.l.b16 %v7828
        %v7848 = vpack.c.b16 %v7181, %v7847
        %v7849 = vrot.slane %v7848, 3
        %v7850 = vrot.slane %v7222, 3
        %v7851 = vsel %vm3902, %v7849, %v7850
        %v7852 = vrot.slane %v7223, 3
        %v7853 = vsel %vm3902, %v7850, %v7852
        %v7854 = vrot.slane %v7224, 3
        %v7855 = vsel %vm3902, %v7852, %v7854
        %v7856 = vrot.slane %v7225, 3
        %v7857 = vsel %vm3902, %v7854, %v7856
        %v7858 = vrot.slane %v7226, 3
        %v7859 = vsel %vm3902, %v7856, %v7858
        %v7860 = vrot.slane %v7227, 3
        %v7861 = vsel %vm3902, %v7858, %v7860
        %v7862 = vrot.slane %v7228, 3
        %v7863 = vsel %vm3902, %v7860, %v7862
        %v7864 = vrot.slane %v7229, 3
        %v7865 = vsel %vm3902, %v7862, %v7864
        %v7866 = vrot.slane %v7230, 3
        %v7867 = vsel %vm3902, %v7864, %v7866
        %v7868 = vrot.slane %v7231, 3
        %v7869 = vsel %vm3902, %v7866, %v7868
        %v7870 = vrot.slane %v7232, 3
        %v7871 = vsel %vm3902, %v7868, %v7870
        %v7872 = vrot.slane %v7233, 3
        %v7873 = vsel %vm3902, %v7870, %v7872
        %v7874 = vrot.slane %v7234, 3
        %v7875 = vsel %vm3902, %v7872, %v7874
        %v7876 = vrot.slane %v7235, 3
        %v7877 = vsel %vm3902, %v7874, %v7876
        %v7878 = vrot.slane %v7236, 3
        %v7879 = vsel %vm3902, %v7876, %v7878
        %v7880 = vrot.slane %v7237, 3
        %v7881 = vsel %vm3902, %v7878, %v7880
        %v7882 = vrot.slane %v7238, 3
        %v7883 = vsel %vm3902, %v7880, %v7882
        %v7884 = vrot.slane %v7239, 3
        %v7885 = vsel %vm3902, %v7882, %v7884
        %v7886 = vrot.slane %v7240, 3
        %v7887 = vsel %vm3902, %v7884, %v7886
        %v7888 = vrot.slane %v7241, 3
        %v7889 = vsel %vm3902, %v7886, %v7888
        %v7926 = vunpack.c.l.b16 %v7830
        %v7927 = vunpack.c.l.b16 %v7831
        %v7928 = vunpack.c.l.b16 %v7832
        %v7929 = vunpack.c.l.b16 %v7833
        %v7930 = vunpack.c.l.b16 %v7834
        %v7931 = vunpack.c.l.b16 %v7835
        %v7932 = vunpack.c.l.b16 %v7836
        %v7933 = vunpack.c.l.b16 %v7837
        %v7934 = vunpack.c.l.b16 %v7838
        %v7935 = vunpack.c.l.b16 %v7839
        %v7936 = vunpack.c.l.b16 %v7840
        %v7937 = vunpack.c.l.b16 %v7841
        %v7938 = vunpack.c.l.b16 %v7842
        %v7939 = vunpack.c.l.b16 %v7843
        %v7940 = vunpack.c.l.b16 %v7844
        %v7941 = vunpack.c.l.b16 %v7845
        %v7942 = vpack.c.b16 %v7927, %v7926
        %v7943 = vpack.c.b16 %v7929, %v7928
        %v7944 = vpack.c.b16 %v7931, %v7930
        %v7945 = vpack.c.b16 %v7933, %v7932
        %v7946 = vpack.c.b16 %v7935, %v7934
        %v7947 = vpack.c.b16 %v7937, %v7936
        %v7948 = vpack.c.b16 %v7939, %v7938
        %v7949 = vpack.c.b16 %v7941, %v7940
        %7958 = vmatpush.bf16.msra.mxu0 %v7949
        %7959 = vmatpush.bf16.msra.mxu0 %v7948
        %7960 = vmatpush.bf16.msra.mxu0 %v7947
        %7961 = vmatpush.bf16.msra.mxu0 %v7946
        %7962 = vmatpush.bf16.msra.mxu0 %v7945
        %7963 = vmatpush.bf16.msra.mxu0 %v7944
        %7964 = vmatpush.bf16.msra.mxu0 %v7943
        %7965 = vmatpush.bf16.msra.mxu0 %v7942
        %7966 = vmatmul.bf16.gmra.mxu0 %v7851
        %v7967 = vpop.f32.mrf.mxu0
        %v7968 = vadd.f32 0.0, %v7967
        %v7969 = vpop.f32.mrf.mxu0
        %v7970 = vadd.f32 0.0, %v7969
        %7971 = vmatmul.bf16.gmra.mxu0 %v7853
        %v7972 = vpop.f32.mrf.mxu0
        %v7973 = vadd.f32 0.0, %v7972
        %v7974 = vpop.f32.mrf.mxu0
        %v7975 = vadd.f32 0.0, %v7974
        %7976 = vmatmul.bf16.gmra.mxu0 %v7855
        %v7977 = vpop.f32.mrf.mxu0
        %v7978 = vadd.f32 0.0, %v7977
        %v7979 = vpop.f32.mrf.mxu0
        %v7980 = vadd.f32 0.0, %v7979
        %7981 = vmatmul.bf16.gmra.mxu0 %v7857
        %v7982 = vpop.f32.mrf.mxu0
        %v7983 = vadd.f32 0.0, %v7982
        %v7984 = vpop.f32.mrf.mxu0
        %v7985 = vadd.f32 0.0, %v7984
        %7986 = vmatmul.bf16.gmra.mxu0 %v7859
        %v7987 = vpop.f32.mrf.mxu0
        %v7988 = vadd.f32 0.0, %v7987
        %v7989 = vpop.f32.mrf.mxu0
        %v7990 = vadd.f32 0.0, %v7989
        %7991 = vmatmul.bf16.gmra.mxu0 %v7861
        %v7992 = vpop.f32.mrf.mxu0
        %v7993 = vadd.f32 0.0, %v7992
        %v7994 = vpop.f32.mrf.mxu0
        %v7995 = vadd.f32 0.0, %v7994
        %7996 = vmatmul.bf16.gmra.mxu0 %v7863
        %v7997 = vpop.f32.mrf.mxu0
        %v7998 = vadd.f32 0.0, %v7997
        %v7999 = vpop.f32.mrf.mxu0
        %v8000 = vadd.f32 0.0, %v7999
        %8001 = vmatmul.bf16.gmra.mxu0 %v7865
        %v8002 = vpop.f32.mrf.mxu0
        %v8003 = vadd.f32 0.0, %v8002
        %v8004 = vpop.f32.mrf.mxu0
        %v8005 = vadd.f32 0.0, %v8004
        %8006 = vmatmul.bf16.gmra.mxu0 %v7867
        %v8007 = vpop.f32.mrf.mxu0
        %v8008 = vadd.f32 0.0, %v8007
        %v8009 = vpop.f32.mrf.mxu0
        %v8010 = vadd.f32 0.0, %v8009
        %8011 = vmatmul.bf16.gmra.mxu0 %v7869
        %v8012 = vpop.f32.mrf.mxu0
        %v8013 = vadd.f32 0.0, %v8012
        %v8014 = vpop.f32.mrf.mxu0
        %v8015 = vadd.f32 0.0, %v8014
        %8016 = vmatmul.bf16.gmra.mxu0 %v7871
        %v8017 = vpop.f32.mrf.mxu0
        %v8018 = vadd.f32 0.0, %v8017
        %v8019 = vpop.f32.mrf.mxu0
        %v8020 = vadd.f32 0.0, %v8019
        %8021 = vmatmul.bf16.gmra.mxu0 %v7873
        %v8022 = vpop.f32.mrf.mxu0
        %v8023 = vadd.f32 0.0, %v8022
        %v8024 = vpop.f32.mrf.mxu0
        %v8025 = vadd.f32 0.0, %v8024
        %8026 = vmatmul.bf16.gmra.mxu0 %v7875
        %v8027 = vpop.f32.mrf.mxu0
        %v8028 = vadd.f32 0.0, %v8027
        %v8029 = vpop.f32.mrf.mxu0
        %v8030 = vadd.f32 0.0, %v8029
        %8031 = vmatmul.bf16.gmra.mxu0 %v7877
        %v8032 = vpop.f32.mrf.mxu0
        %v8033 = vadd.f32 0.0, %v8032
        %v8034 = vpop.f32.mrf.mxu0
        %v8035 = vadd.f32 0.0, %v8034
        %8036 = vmatmul.bf16.gmra.mxu0 %v7879
        %v8037 = vpop.f32.mrf.mxu0
        %v8038 = vadd.f32 0.0, %v8037
        %v8039 = vpop.f32.mrf.mxu0
        %v8040 = vadd.f32 0.0, %v8039
        %8041 = vmatmul.bf16.gmra.mxu0 %v7881
        %v8042 = vpop.f32.mrf.mxu0
        %v8043 = vadd.f32 0.0, %v8042
        %v8044 = vpop.f32.mrf.mxu0
        %v8045 = vadd.f32 0.0, %v8044
        %8046 = vmatmul.bf16.gmra.mxu0 %v7883
        %v8047 = vpop.f32.mrf.mxu0
        %v8048 = vadd.f32 0.0, %v8047
        %v8049 = vpop.f32.mrf.mxu0
        %v8050 = vadd.f32 0.0, %v8049
        %8051 = vmatmul.bf16.gmra.mxu0 %v7885
        %v8052 = vpop.f32.mrf.mxu0
        %v8053 = vadd.f32 0.0, %v8052
        %v8054 = vpop.f32.mrf.mxu0
        %v8055 = vadd.f32 0.0, %v8054
        %8056 = vmatmul.bf16.gmra.mxu0 %v7887
        %v8057 = vpop.f32.mrf.mxu0
        %v8058 = vadd.f32 0.0, %v8057
        %v8059 = vpop.f32.mrf.mxu0
        %v8060 = vadd.f32 0.0, %v8059
        %8061 = vmatmul.bf16.gmra.mxu0 %v7889
        %v8062 = vpop.f32.mrf.mxu0
        %v8063 = vadd.f32 0.0, %v8062
        %v8064 = vpop.f32.mrf.mxu0
        %v8065 = vadd.f32 0.0, %v8064
        %8066 = vdwg.mxu0
        %v8067 = vadd.f32 %v7729, %v7968
        %v8068 = vadd.f32 %v7731, %v7970
        %v8069 = vadd.f32 %v7734, %v7973
        %v8070 = vadd.f32 %v7736, %v7975
        %v8071 = vadd.f32 %v7739, %v7978
        %v8072 = vadd.f32 %v7741, %v7980
        %v8073 = vadd.f32 %v7744, %v7983
        %v8074 = vadd.f32 %v7746, %v7985
        %v8075 = vadd.f32 %v7749, %v7988
        %v8076 = vadd.f32 %v7751, %v7990
        %v8077 = vadd.f32 %v7754, %v7993
        %v8078 = vadd.f32 %v7756, %v7995
        %v8079 = vadd.f32 %v7759, %v7998
        %v8080 = vadd.f32 %v7761, %v8000
        %v8081 = vadd.f32 %v7764, %v8003
        %v8082 = vadd.f32 %v7766, %v8005
        %v8083 = vadd.f32 %v7769, %v8008
        %v8084 = vadd.f32 %v7771, %v8010
        %v8085 = vadd.f32 %v7774, %v8013
        %v8086 = vadd.f32 %v7776, %v8015
        %v8087 = vadd.f32 %v7779, %v8018
        %v8088 = vadd.f32 %v7781, %v8020
        %v8089 = vadd.f32 %v7784, %v8023
        %v8090 = vadd.f32 %v7786, %v8025
        %v8091 = vadd.f32 %v7789, %v8028
        %v8092 = vadd.f32 %v7791, %v8030
        %v8093 = vadd.f32 %v7794, %v8033
        %v8094 = vadd.f32 %v7796, %v8035
        %v8095 = vadd.f32 %v7799, %v8038
        %v8096 = vadd.f32 %v7801, %v8040
        %v8097 = vadd.f32 %v7804, %v8043
        %v8098 = vadd.f32 %v7806, %v8045
        %v8099 = vadd.f32 %v7809, %v8048
        %v8100 = vadd.f32 %v7811, %v8050
        %v8101 = vadd.f32 %v7814, %v8053
        %v8102 = vadd.f32 %v7816, %v8055
        %v8103 = vadd.f32 %v7819, %v8058
        %v8104 = vadd.f32 %v7821, %v8060
        %v8105 = vadd.f32 %v7824, %v8063
        %v8106 = vadd.f32 %v7826, %v8065
        %v8107 = vld [vmem:[#allocation3 + $0x14] sm:$0xf]
        %v8108 = vld [vmem:[#allocation3 + $0x18] sm:$0xf]
        %v8109 = vld [vmem:[#allocation3 + $0x1c] sm:$0xf]
        %v8110 = vld [vmem:[#allocation3 + $0x20] sm:$0xf]
        %v8111 = vld [vmem:[#allocation3 + $0x24] sm:$0xf]
        %v8112 = vld [vmem:[#allocation3 + $0x28] sm:$0xf]
        %v8113 = vld [vmem:[#allocation3 + $0x2c] sm:$0xf]
        %v8114 = vld [vmem:[#allocation3 + $0x30] sm:$0xf]
        %v8115 = vld [vmem:[#allocation3 + $0x34] sm:$0xf]
        %v8116 = vld [vmem:[#allocation3 + $0x38] sm:$0xf]
        %v8117 = vld [vmem:[#allocation3 + $0x3c] sm:$0xf]
        %v8118 = vld [vmem:[#allocation3 + $0x40] sm:$0xf]
        %v8119 = vld [vmem:[#allocation3 + $0x44] sm:$0xf]
        %v8120 = vld [vmem:[#allocation3 + $0x48] sm:$0xf]
        %v8121 = vld [vmem:[#allocation3 + $0x4c] sm:$0xf]
        %v8122 = vld [vmem:[#allocation3 + $0x50] sm:$0xf]
        %v8123 = vld [vmem:[#allocation3 + $0x54] sm:$0xf]
        %v8124 = vld [vmem:[#allocation3 + $0x58] sm:$0xf]
        %v8125 = vld [vmem:[#allocation3 + $0x5c] sm:$0xf]
        %v8126 = vld [vmem:[#allocation3 + $0x60] sm:$0xf]
        %v8127 = vld [vmem:[#allocation3 + $0x64] sm:$0xf]
        %v8128 = vld [vmem:[#allocation3 + $0x68] sm:$0xf]
        %v8129 = vld [vmem:[#allocation3 + $0x6c] sm:$0xf]
        %v8130 = vld [vmem:[#allocation3 + $0x70] sm:$0xf]
        %v8131 = vld [vmem:[#allocation3 + $0x74] sm:$0xf]
        %v8132 = vld [vmem:[#allocation3 + $0x78] sm:$0xf]
        %v8133 = vld [vmem:[#allocation3 + $0x7c] sm:$0xf]
        %v8134 = vld [vmem:[#allocation3 + $0x80] sm:$0xf]
        %v8135 = vld [vmem:[#allocation3 + $0x84] sm:$0xf]
        %v8136 = vld [vmem:[#allocation3 + $0x88] sm:$0xf]
        %v8137 = vld [vmem:[#allocation3 + $0x8c] sm:$0xf]
        %v8138 = vld [vmem:[#allocation3 + $0x90] sm:$0xf]
        %v8139 = vld [vmem:[#allocation3 + $0x94] sm:$0xf]
        %v8140 = vld [vmem:[#allocation3 + $0x98] sm:$0xf]
        %v8141 = vld [vmem:[#allocation3 + $0x9c] sm:$0xf]
        %v8142 = vld [vmem:[#allocation3 + $0xa0] sm:$0xf]
        %v8143 = vld [vmem:[#allocation3 + $0xa4] sm:$0xf]
        %v8144 = vld [vmem:[#allocation3 + $0xa8] sm:$0xf]
        %v8145 = vld [vmem:[#allocation3 + $0xac] sm:$0xf]
        %v8146 = vld [vmem:[#allocation3 + $0xb0] sm:$0xf]
        %s8147 = scalar_lea.vmem [#allocation10], 384
        %v8148 = vld [vmem:[%s8147] sm:$0xf]
        %v8149 = vld [vmem:[%s8147 + $0x4] sm:$0xf]
        %v8150 = vld [vmem:[%s8147 + $0x8] sm:$0xf]
        %v8151 = vld [vmem:[%s8147 + $0xc] sm:$0xf]
        %v8152 = vld [vmem:[%s8147 + $0x10] sm:$0xf]
        %v8153 = vld [vmem:[%s8147 + $0x14] sm:$0xf]
        %v8154 = vld [vmem:[%s8147 + $0x18] sm:$0xf]
        %v8155 = vld [vmem:[%s8147 + $0x1c] sm:$0xf]
        %v8156 = vld [vmem:[%s8147 + $0x20] sm:$0xf]
        %v8157 = vld [vmem:[%s8147 + $0x24] sm:$0xf]
        %v8158 = vld [vmem:[%s8147 + $0x28] sm:$0xf]
        %v8159 = vld [vmem:[%s8147 + $0x2c] sm:$0xf]
        %v8160 = vld [vmem:[%s8147 + $0x30] sm:$0xf]
        %v8161 = vld [vmem:[%s8147 + $0x34] sm:$0xf]
        %v8162 = vld [vmem:[%s8147 + $0x38] sm:$0xf]
        %v8163 = vld [vmem:[%s8147 + $0x3c] sm:$0xf]
        %v8164 = vld [vmem:[#allocation3 + $0xb4] sm:$0x1]
        %s8165 = scalar_lea.vmem [#allocation10], 448
        %v8166 = vld [vmem:[%s8165] sm:$0xf]
        %v8167 = vld [vmem:[%s8165 + $0x4] sm:$0xf]
        %v8168 = vld [vmem:[%s8165 + $0x8] sm:$0xf]
        %v8169 = vld [vmem:[%s8165 + $0xc] sm:$0xf]
        %v8170 = vld [vmem:[%s8165 + $0x10] sm:$0xf]
        %v8171 = vld [vmem:[%s8165 + $0x14] sm:$0xf]
        %v8172 = vld [vmem:[%s8165 + $0x18] sm:$0xf]
        %v8173 = vld [vmem:[%s8165 + $0x1c] sm:$0xf]
        %v8174 = vld [vmem:[%s8165 + $0x20] sm:$0xf]
        %v8175 = vld [vmem:[%s8165 + $0x24] sm:$0xf]
        %v8176 = vld [vmem:[%s8165 + $0x28] sm:$0xf]
        %v8177 = vld [vmem:[%s8165 + $0x2c] sm:$0xf]
        %v8178 = vld [vmem:[%s8165 + $0x30] sm:$0xf]
        %v8179 = vld [vmem:[%s8165 + $0x34] sm:$0xf]
        %v8180 = vld [vmem:[%s8165 + $0x38] sm:$0xf]
        %v8181 = vld [vmem:[%s8165 + $0x3c] sm:$0xf]
        %v8223 = vunpack.c.l.b16 %v8107
        %v8224 = vunpack.c.l.b16 %v8108
        %v8225 = vunpack.c.l.b16 %v8109
        %v8226 = vunpack.c.l.b16 %v8110
        %v8227 = vunpack.c.l.b16 %v8111
        %v8228 = vunpack.c.l.b16 %v8112
        %v8229 = vunpack.c.l.b16 %v8113
        %v8230 = vunpack.c.l.b16 %v8114
        %v8231 = vunpack.c.l.b16 %v8115
        %v8232 = vunpack.c.l.b16 %v8116
        %v8233 = vunpack.c.l.b16 %v8117
        %v8234 = vunpack.c.l.b16 %v8118
        %v8235 = vunpack.c.l.b16 %v8119
        %v8236 = vunpack.c.l.b16 %v8120
        %v8237 = vunpack.c.l.b16 %v8121
        %v8238 = vunpack.c.l.b16 %v8122
        %v8239 = vunpack.c.l.b16 %v8123
        %v8240 = vunpack.c.l.b16 %v8124
        %v8241 = vunpack.c.l.b16 %v8125
        %v8242 = vunpack.c.l.b16 %v8126
        %v8243 = vunpack.c.l.b16 %v8127
        %v8244 = vunpack.c.l.b16 %v8128
        %v8245 = vunpack.c.l.b16 %v8129
        %v8246 = vunpack.c.l.b16 %v8130
        %v8247 = vunpack.c.l.b16 %v8131
        %v8248 = vunpack.c.l.b16 %v8132
        %v8249 = vunpack.c.l.b16 %v8133
        %v8250 = vunpack.c.l.b16 %v8134
        %v8251 = vunpack.c.l.b16 %v8135
        %v8252 = vunpack.c.l.b16 %v8136
        %v8253 = vunpack.c.l.b16 %v8137
        %v8254 = vunpack.c.l.b16 %v8138
        %v8255 = vunpack.c.l.b16 %v8139
        %v8256 = vunpack.c.l.b16 %v8140
        %v8257 = vunpack.c.l.b16 %v8141
        %v8258 = vunpack.c.l.b16 %v8142
        %v8259 = vunpack.c.l.b16 %v8143
        %v8260 = vunpack.c.l.b16 %v8144
        %v8261 = vunpack.c.l.b16 %v8145
        %v8262 = vunpack.c.l.b16 %v8146
        %v8263 = vunpack.c.l.b16 %v8164
        %v8264 = vpack.c.b16 %v8224, %v8223
        %v8265 = vpack.c.b16 %v8226, %v8225
        %v8266 = vpack.c.b16 %v8228, %v8227
        %v8267 = vpack.c.b16 %v8230, %v8229
        %v8268 = vpack.c.b16 %v8232, %v8231
        %v8269 = vpack.c.b16 %v8234, %v8233
        %v8270 = vpack.c.b16 %v8236, %v8235
        %v8271 = vpack.c.b16 %v8238, %v8237
        %v8272 = vpack.c.b16 %v8240, %v8239
        %v8273 = vpack.c.b16 %v8242, %v8241
        %v8274 = vpack.c.b16 %v8244, %v8243
        %v8275 = vpack.c.b16 %v8246, %v8245
        %v8276 = vpack.c.b16 %v8248, %v8247
        %v8277 = vpack.c.b16 %v8250, %v8249
        %v8278 = vpack.c.b16 %v8252, %v8251
        %v8279 = vpack.c.b16 %v8254, %v8253
        %v8280 = vpack.c.b16 %v8256, %v8255
        %v8281 = vpack.c.b16 %v8258, %v8257
        %v8282 = vpack.c.b16 %v8260, %v8259
        %v8283 = vpack.c.b16 %v8262, %v8261
        %v8284 = vpack.c.b16 %v8263, %v8263
        %v8286 = vshrl.u32 %v8264, 16
        %v8288 = vshll.u32 %v8264, 16
        %v8290 = vrot.slane %v8288, 1
        %v8291 = vor.u32 %v8286, %v8290
        %v8293 = vshll.u32 %v8265, 16
        %v8295 = vrot.slane %v8293, 1
        %v8296 = vsel %vm2089, %v8291, %v8295
        %v8297 = vshrl.u32 %v8265, 16
        %v8299 = vor.u32 %v8297, %v8295
        %v8301 = vshll.u32 %v8266, 16
        %v8303 = vrot.slane %v8301, 1
        %v8304 = vsel %vm2089, %v8299, %v8303
        %v8305 = vshrl.u32 %v8266, 16
        %v8307 = vor.u32 %v8305, %v8303
        %v8309 = vshll.u32 %v8267, 16
        %v8311 = vrot.slane %v8309, 1
        %v8312 = vsel %vm2089, %v8307, %v8311
        %v8313 = vshrl.u32 %v8267, 16
        %v8315 = vor.u32 %v8313, %v8311
        %v8317 = vshll.u32 %v8268, 16
        %v8319 = vrot.slane %v8317, 1
        %v8320 = vsel %vm2089, %v8315, %v8319
        %v8321 = vshrl.u32 %v8268, 16
        %v8323 = vor.u32 %v8321, %v8319
        %v8325 = vshll.u32 %v8269, 16
        %v8327 = vrot.slane %v8325, 1
        %v8328 = vsel %vm2089, %v8323, %v8327
        %v8329 = vshrl.u32 %v8269, 16
        %v8331 = vor.u32 %v8329, %v8327
        %v8333 = vshll.u32 %v8270, 16
        %v8335 = vrot.slane %v8333, 1
        %v8336 = vsel %vm2089, %v8331, %v8335
        %v8337 = vshrl.u32 %v8270, 16
        %v8339 = vor.u32 %v8337, %v8335
        %v8341 = vshll.u32 %v8271, 16
        %v8343 = vrot.slane %v8341, 1
        %v8344 = vsel %vm2089, %v8339, %v8343
        %v8345 = vshrl.u32 %v8271, 16
        %v8347 = vor.u32 %v8345, %v8343
        %v8349 = vshll.u32 %v8272, 16
        %v8351 = vrot.slane %v8349, 1
        %v8352 = vsel %vm2089, %v8347, %v8351
        %v8353 = vshrl.u32 %v8272, 16
        %v8355 = vor.u32 %v8353, %v8351
        %v8357 = vshll.u32 %v8273, 16
        %v8359 = vrot.slane %v8357, 1
        %v8360 = vsel %vm2089, %v8355, %v8359
        %v8361 = vshrl.u32 %v8273, 16
        %v8363 = vor.u32 %v8361, %v8359
        %v8365 = vshll.u32 %v8274, 16
        %v8367 = vrot.slane %v8365, 1
        %v8368 = vsel %vm2089, %v8363, %v8367
        %v8369 = vshrl.u32 %v8274, 16
        %v8371 = vor.u32 %v8369, %v8367
        %v8373 = vshll.u32 %v8275, 16
        %v8375 = vrot.slane %v8373, 1
        %v8376 = vsel %vm2089, %v8371, %v8375
        %v8377 = vshrl.u32 %v8275, 16
        %v8379 = vor.u32 %v8377, %v8375
        %v8381 = vshll.u32 %v8276, 16
        %v8383 = vrot.slane %v8381, 1
        %v8384 = vsel %vm2089, %v8379, %v8383
        %v8385 = vshrl.u32 %v8276, 16
        %v8387 = vor.u32 %v8385, %v8383
        %v8389 = vshll.u32 %v8277, 16
        %v8391 = vrot.slane %v8389, 1
        %v8392 = vsel %vm2089, %v8387, %v8391
        %v8393 = vshrl.u32 %v8277, 16
        %v8395 = vor.u32 %v8393, %v8391
        %v8397 = vshll.u32 %v8278, 16
        %v8399 = vrot.slane %v8397, 1
        %v8400 = vsel %vm2089, %v8395, %v8399
        %v8401 = vshrl.u32 %v8278, 16
        %v8403 = vor.u32 %v8401, %v8399
        %v8405 = vshll.u32 %v8279, 16
        %v8407 = vrot.slane %v8405, 1
        %v8408 = vsel %vm2089, %v8403, %v8407
        %v8409 = vshrl.u32 %v8279, 16
        %v8411 = vor.u32 %v8409, %v8407
        %v8413 = vshll.u32 %v8280, 16
        %v8415 = vrot.slane %v8413, 1
        %v8416 = vsel %vm2089, %v8411, %v8415
        %v8417 = vshrl.u32 %v8280, 16
        %v8419 = vor.u32 %v8417, %v8415
        %v8421 = vshll.u32 %v8281, 16
        %v8423 = vrot.slane %v8421, 1
        %v8424 = vsel %vm2089, %v8419, %v8423
        %v8425 = vshrl.u32 %v8281, 16
        %v8427 = vor.u32 %v8425, %v8423
        %v8429 = vshll.u32 %v8282, 16
        %v8431 = vrot.slane %v8429, 1
        %v8432 = vsel %vm2089, %v8427, %v8431
        %v8433 = vshrl.u32 %v8282, 16
        %v8435 = vor.u32 %v8433, %v8431
        %v8437 = vshll.u32 %v8283, 16
        %v8439 = vrot.slane %v8437, 1
        %v8440 = vsel %vm2089, %v8435, %v8439
        %v8441 = vshrl.u32 %v8283, 16
        %v8443 = vor.u32 %v8441, %v8439
        %v8445 = vshll.u32 %v8284, 16
        %v8447 = vrot.slane %v8445, 1
        %v8448 = vsel %vm2089, %v8443, %v8447
        %v8485 = vunpack.c.l.b16 %v8166
        %v8486 = vunpack.c.l.b16 %v8167
        %v8487 = vunpack.c.l.b16 %v8168
        %v8488 = vunpack.c.l.b16 %v8169
        %v8489 = vunpack.c.l.b16 %v8170
        %v8490 = vunpack.c.l.b16 %v8171
        %v8491 = vunpack.c.l.b16 %v8172
        %v8492 = vunpack.c.l.b16 %v8173
        %v8493 = vunpack.c.l.b16 %v8174
        %v8494 = vunpack.c.l.b16 %v8175
        %v8495 = vunpack.c.l.b16 %v8176
        %v8496 = vunpack.c.l.b16 %v8177
        %v8497 = vunpack.c.l.b16 %v8178
        %v8498 = vunpack.c.l.b16 %v8179
        %v8499 = vunpack.c.l.b16 %v8180
        %v8500 = vunpack.c.l.b16 %v8181
        %v8501 = vpack.c.b16 %v8486, %v8485
        %v8502 = vpack.c.b16 %v8488, %v8487
        %v8503 = vpack.c.b16 %v8490, %v8489
        %v8504 = vpack.c.b16 %v8492, %v8491
        %v8505 = vpack.c.b16 %v8494, %v8493
        %v8506 = vpack.c.b16 %v8496, %v8495
        %v8507 = vpack.c.b16 %v8498, %v8497
        %v8508 = vpack.c.b16 %v8500, %v8499
        %8517 = vmatpush.bf16.msra.mxu0 %v8508
        %8518 = vmatpush.bf16.msra.mxu0 %v8507
        %8519 = vmatpush.bf16.msra.mxu0 %v8506
        %8520 = vmatpush.bf16.msra.mxu0 %v8505
        %8521 = vmatpush.bf16.msra.mxu0 %v8504
        %8522 = vmatpush.bf16.msra.mxu0 %v8503
        %8523 = vmatpush.bf16.msra.mxu0 %v8502
        %8524 = vmatpush.bf16.msra.mxu0 %v8501
        %8525 = vmatmul.bf16.gmra.mxu0 %v8296
        %v8526 = vpop.f32.mrf.mxu0
        %v8527 = vadd.f32 0.0, %v8526
        %v8528 = vpop.f32.mrf.mxu0
        %v8529 = vadd.f32 0.0, %v8528
        %8530 = vmatmul.bf16.gmra.mxu0 %v8304
        %v8531 = vpop.f32.mrf.mxu0
        %v8532 = vadd.f32 0.0, %v8531
        %v8533 = vpop.f32.mrf.mxu0
        %v8534 = vadd.f32 0.0, %v8533
        %8535 = vmatmul.bf16.gmra.mxu0 %v8312
        %v8536 = vpop.f32.mrf.mxu0
        %v8537 = vadd.f32 0.0, %v8536
        %v8538 = vpop.f32.mrf.mxu0
        %v8539 = vadd.f32 0.0, %v8538
        %8540 = vmatmul.bf16.gmra.mxu0 %v8320
        %v8541 = vpop.f32.mrf.mxu0
        %v8542 = vadd.f32 0.0, %v8541
        %v8543 = vpop.f32.mrf.mxu0
        %v8544 = vadd.f32 0.0, %v8543
        %8545 = vmatmul.bf16.gmra.mxu0 %v8328
        %v8546 = vpop.f32.mrf.mxu0
        %v8547 = vadd.f32 0.0, %v8546
        %v8548 = vpop.f32.mrf.mxu0
        %v8549 = vadd.f32 0.0, %v8548
        %8550 = vmatmul.bf16.gmra.mxu0 %v8336
        %v8551 = vpop.f32.mrf.mxu0
        %v8552 = vadd.f32 0.0, %v8551
        %v8553 = vpop.f32.mrf.mxu0
        %v8554 = vadd.f32 0.0, %v8553
        %8555 = vmatmul.bf16.gmra.mxu0 %v8344
        %v8556 = vpop.f32.mrf.mxu0
        %v8557 = vadd.f32 0.0, %v8556
        %v8558 = vpop.f32.mrf.mxu0
        %v8559 = vadd.f32 0.0, %v8558
        %8560 = vmatmul.bf16.gmra.mxu0 %v8352
        %v8561 = vpop.f32.mrf.mxu0
        %v8562 = vadd.f32 0.0, %v8561
        %v8563 = vpop.f32.mrf.mxu0
        %v8564 = vadd.f32 0.0, %v8563
        %8565 = vmatmul.bf16.gmra.mxu0 %v8360
        %v8566 = vpop.f32.mrf.mxu0
        %v8567 = vadd.f32 0.0, %v8566
        %v8568 = vpop.f32.mrf.mxu0
        %v8569 = vadd.f32 0.0, %v8568
        %8570 = vmatmul.bf16.gmra.mxu0 %v8368
        %v8571 = vpop.f32.mrf.mxu0
        %v8572 = vadd.f32 0.0, %v8571
        %v8573 = vpop.f32.mrf.mxu0
        %v8574 = vadd.f32 0.0, %v8573
        %8575 = vmatmul.bf16.gmra.mxu0 %v8376
        %v8576 = vpop.f32.mrf.mxu0
        %v8577 = vadd.f32 0.0, %v8576
        %v8578 = vpop.f32.mrf.mxu0
        %v8579 = vadd.f32 0.0, %v8578
        %8580 = vmatmul.bf16.gmra.mxu0 %v8384
        %v8581 = vpop.f32.mrf.mxu0
        %v8582 = vadd.f32 0.0, %v8581
        %v8583 = vpop.f32.mrf.mxu0
        %v8584 = vadd.f32 0.0, %v8583
        %8585 = vmatmul.bf16.gmra.mxu0 %v8392
        %v8586 = vpop.f32.mrf.mxu0
        %v8587 = vadd.f32 0.0, %v8586
        %v8588 = vpop.f32.mrf.mxu0
        %v8589 = vadd.f32 0.0, %v8588
        %8590 = vmatmul.bf16.gmra.mxu0 %v8400
        %v8591 = vpop.f32.mrf.mxu0
        %v8592 = vadd.f32 0.0, %v8591
        %v8593 = vpop.f32.mrf.mxu0
        %v8594 = vadd.f32 0.0, %v8593
        %8595 = vmatmul.bf16.gmra.mxu0 %v8408
        %v8596 = vpop.f32.mrf.mxu0
        %v8597 = vadd.f32 0.0, %v8596
        %v8598 = vpop.f32.mrf.mxu0
        %v8599 = vadd.f32 0.0, %v8598
        %8600 = vmatmul.bf16.gmra.mxu0 %v8416
        %v8601 = vpop.f32.mrf.mxu0
        %v8602 = vadd.f32 0.0, %v8601
        %v8603 = vpop.f32.mrf.mxu0
        %v8604 = vadd.f32 0.0, %v8603
        %8605 = vmatmul.bf16.gmra.mxu0 %v8424
        %v8606 = vpop.f32.mrf.mxu0
        %v8607 = vadd.f32 0.0, %v8606
        %v8608 = vpop.f32.mrf.mxu0
        %v8609 = vadd.f32 0.0, %v8608
        %8610 = vmatmul.bf16.gmra.mxu0 %v8432
        %v8611 = vpop.f32.mrf.mxu0
        %v8612 = vadd.f32 0.0, %v8611
        %v8613 = vpop.f32.mrf.mxu0
        %v8614 = vadd.f32 0.0, %v8613
        %8615 = vmatmul.bf16.gmra.mxu0 %v8440
        %v8616 = vpop.f32.mrf.mxu0
        %v8617 = vadd.f32 0.0, %v8616
        %v8618 = vpop.f32.mrf.mxu0
        %v8619 = vadd.f32 0.0, %v8618
        %8620 = vmatmul.bf16.gmra.mxu0 %v8448
        %v8621 = vpop.f32.mrf.mxu0
        %v8622 = vadd.f32 0.0, %v8621
        %v8623 = vpop.f32.mrf.mxu0
        %v8624 = vadd.f32 0.0, %v8623
        %8625 = vdwg.mxu0
        %v8662 = vunpack.c.l.b16 %v8148
        %v8663 = vunpack.c.l.b16 %v8149
        %v8664 = vunpack.c.l.b16 %v8150
        %v8665 = vunpack.c.l.b16 %v8151
        %v8666 = vunpack.c.l.b16 %v8152
        %v8667 = vunpack.c.l.b16 %v8153
        %v8668 = vunpack.c.l.b16 %v8154
        %v8669 = vunpack.c.l.b16 %v8155
        %v8670 = vunpack.c.l.b16 %v8156
        %v8671 = vunpack.c.l.b16 %v8157
        %v8672 = vunpack.c.l.b16 %v8158
        %v8673 = vunpack.c.l.b16 %v8159
        %v8674 = vunpack.c.l.b16 %v8160
        %v8675 = vunpack.c.l.b16 %v8161
        %v8676 = vunpack.c.l.b16 %v8162
        %v8677 = vunpack.c.l.b16 %v8163
        %v8678 = vpack.c.b16 %v8663, %v8662
        %v8679 = vpack.c.b16 %v8665, %v8664
        %v8680 = vpack.c.b16 %v8667, %v8666
        %v8681 = vpack.c.b16 %v8669, %v8668
        %v8682 = vpack.c.b16 %v8671, %v8670
        %v8683 = vpack.c.b16 %v8673, %v8672
        %v8684 = vpack.c.b16 %v8675, %v8674
        %v8685 = vpack.c.b16 %v8677, %v8676
        %8694 = vmatpush.bf16.msra.mxu0 %v8685
        %8695 = vmatpush.bf16.msra.mxu0 %v8684
        %8696 = vmatpush.bf16.msra.mxu0 %v8683
        %8697 = vmatpush.bf16.msra.mxu0 %v8682
        %8698 = vmatpush.bf16.msra.mxu0 %v8681
        %8699 = vmatpush.bf16.msra.mxu0 %v8680
        %8700 = vmatpush.bf16.msra.mxu0 %v8679
        %8701 = vmatpush.bf16.msra.mxu0 %v8678
        %8702 = vmatmul.bf16.gmra.mxu0 %v8264
        %v8703 = vpop.f32.mrf.mxu0
        %v8704 = vadd.f32 %v8527, %v8703
        %v8705 = vpop.f32.mrf.mxu0
        %v8706 = vadd.f32 %v8529, %v8705
        %8707 = vmatmul.bf16.gmra.mxu0 %v8265
        %v8708 = vpop.f32.mrf.mxu0
        %v8709 = vadd.f32 %v8532, %v8708
        %v8710 = vpop.f32.mrf.mxu0
        %v8711 = vadd.f32 %v8534, %v8710
        %8712 = vmatmul.bf16.gmra.mxu0 %v8266
        %v8713 = vpop.f32.mrf.mxu0
        %v8714 = vadd.f32 %v8537, %v8713
        %v8715 = vpop.f32.mrf.mxu0
        %v8716 = vadd.f32 %v8539, %v8715
        %8717 = vmatmul.bf16.gmra.mxu0 %v8267
        %v8718 = vpop.f32.mrf.mxu0
        %v8719 = vadd.f32 %v8542, %v8718
        %v8720 = vpop.f32.mrf.mxu0
        %v8721 = vadd.f32 %v8544, %v8720
        %8722 = vmatmul.bf16.gmra.mxu0 %v8268
        %v8723 = vpop.f32.mrf.mxu0
        %v8724 = vadd.f32 %v8547, %v8723
        %v8725 = vpop.f32.mrf.mxu0
        %v8726 = vadd.f32 %v8549, %v8725
        %8727 = vmatmul.bf16.gmra.mxu0 %v8269
        %v8728 = vpop.f32.mrf.mxu0
        %v8729 = vadd.f32 %v8552, %v8728
        %v8730 = vpop.f32.mrf.mxu0
        %v8731 = vadd.f32 %v8554, %v8730
        %8732 = vmatmul.bf16.gmra.mxu0 %v8270
        %v8733 = vpop.f32.mrf.mxu0
        %v8734 = vadd.f32 %v8557, %v8733
        %v8735 = vpop.f32.mrf.mxu0
        %v8736 = vadd.f32 %v8559, %v8735
        %8737 = vmatmul.bf16.gmra.mxu0 %v8271
        %v8738 = vpop.f32.mrf.mxu0
        %v8739 = vadd.f32 %v8562, %v8738
        %v8740 = vpop.f32.mrf.mxu0
        %v8741 = vadd.f32 %v8564, %v8740
        %8742 = vmatmul.bf16.gmra.mxu0 %v8272
        %v8743 = vpop.f32.mrf.mxu0
        %v8744 = vadd.f32 %v8567, %v8743
        %v8745 = vpop.f32.mrf.mxu0
        %v8746 = vadd.f32 %v8569, %v8745
        %8747 = vmatmul.bf16.gmra.mxu0 %v8273
        %v8748 = vpop.f32.mrf.mxu0
        %v8749 = vadd.f32 %v8572, %v8748
        %v8750 = vpop.f32.mrf.mxu0
        %v8751 = vadd.f32 %v8574, %v8750
        %8752 = vmatmul.bf16.gmra.mxu0 %v8274
        %v8753 = vpop.f32.mrf.mxu0
        %v8754 = vadd.f32 %v8577, %v8753
        %v8755 = vpop.f32.mrf.mxu0
        %v8756 = vadd.f32 %v8579, %v8755
        %8757 = vmatmul.bf16.gmra.mxu0 %v8275
        %v8758 = vpop.f32.mrf.mxu0
        %v8759 = vadd.f32 %v8582, %v8758
        %v8760 = vpop.f32.mrf.mxu0
        %v8761 = vadd.f32 %v8584, %v8760
        %8762 = vmatmul.bf16.gmra.mxu0 %v8276
        %v8763 = vpop.f32.mrf.mxu0
        %v8764 = vadd.f32 %v8587, %v8763
        %v8765 = vpop.f32.mrf.mxu0
        %v8766 = vadd.f32 %v8589, %v8765
        %8767 = vmatmul.bf16.gmra.mxu0 %v8277
        %v8768 = vpop.f32.mrf.mxu0
        %v8769 = vadd.f32 %v8592, %v8768
        %v8770 = vpop.f32.mrf.mxu0
        %v8771 = vadd.f32 %v8594, %v8770
        %8772 = vmatmul.bf16.gmra.mxu0 %v8278
        %v8773 = vpop.f32.mrf.mxu0
        %v8774 = vadd.f32 %v8597, %v8773
        %v8775 = vpop.f32.mrf.mxu0
        %v8776 = vadd.f32 %v8599, %v8775
        %8777 = vmatmul.bf16.gmra.mxu0 %v8279
        %v8778 = vpop.f32.mrf.mxu0
        %v8779 = vadd.f32 %v8602, %v8778
        %v8780 = vpop.f32.mrf.mxu0
        %v8781 = vadd.f32 %v8604, %v8780
        %8782 = vmatmul.bf16.gmra.mxu0 %v8280
        %v8783 = vpop.f32.mrf.mxu0
        %v8784 = vadd.f32 %v8607, %v8783
        %v8785 = vpop.f32.mrf.mxu0
        %v8786 = vadd.f32 %v8609, %v8785
        %8787 = vmatmul.bf16.gmra.mxu0 %v8281
        %v8788 = vpop.f32.mrf.mxu0
        %v8789 = vadd.f32 %v8612, %v8788
        %v8790 = vpop.f32.mrf.mxu0
        %v8791 = vadd.f32 %v8614, %v8790
        %8792 = vmatmul.bf16.gmra.mxu0 %v8282
        %v8793 = vpop.f32.mrf.mxu0
        %v8794 = vadd.f32 %v8617, %v8793
        %v8795 = vpop.f32.mrf.mxu0
        %v8796 = vadd.f32 %v8619, %v8795
        %8797 = vmatmul.bf16.gmra.mxu0 %v8283
        %v8798 = vpop.f32.mrf.mxu0
        %v8799 = vadd.f32 %v8622, %v8798
        %v8800 = vpop.f32.mrf.mxu0
        %v8801 = vadd.f32 %v8624, %v8800
        %8802 = vdwg.mxu0
        %v8803 = vld [vmem:[#allocation3 + $0x14] sm:$0xe]
        %s8804 = scalar_lea.vmem [#allocation10], 512
        %v8805 = vld [vmem:[%s8804] sm:$0xf]
        %v8806 = vld [vmem:[%s8804 + $0x4] sm:$0xf]
        %v8807 = vld [vmem:[%s8804 + $0x8] sm:$0xf]
        %v8808 = vld [vmem:[%s8804 + $0xc] sm:$0xf]
        %v8809 = vld [vmem:[%s8804 + $0x10] sm:$0xf]
        %v8810 = vld [vmem:[%s8804 + $0x14] sm:$0xf]
        %v8811 = vld [vmem:[%s8804 + $0x18] sm:$0xf]
        %v8812 = vld [vmem:[%s8804 + $0x1c] sm:$0xf]
        %v8813 = vld [vmem:[%s8804 + $0x20] sm:$0xf]
        %v8814 = vld [vmem:[%s8804 + $0x24] sm:$0xf]
        %v8815 = vld [vmem:[%s8804 + $0x28] sm:$0xf]
        %v8816 = vld [vmem:[%s8804 + $0x2c] sm:$0xf]
        %v8817 = vld [vmem:[%s8804 + $0x30] sm:$0xf]
        %v8818 = vld [vmem:[%s8804 + $0x34] sm:$0xf]
        %v8819 = vld [vmem:[%s8804 + $0x38] sm:$0xf]
        %v8820 = vld [vmem:[%s8804 + $0x3c] sm:$0xf]
        %v8822 = vunpack.c.l.b16 %v8803
        %v8823 = vpack.c.b16 %v8224, %v8822
        %v8824 = vrot.slane %v8823, 1
        %v8825 = vrot.slane %v8265, 1
        %v8826 = vsel %vm2707, %v8824, %v8825
        %v8827 = vrot.slane %v8266, 1
        %v8828 = vsel %vm2707, %v8825, %v8827
        %v8829 = vrot.slane %v8267, 1
        %v8830 = vsel %vm2707, %v8827, %v8829
        %v8831 = vrot.slane %v8268, 1
        %v8832 = vsel %vm2707, %v8829, %v8831
        %v8833 = vrot.slane %v8269, 1
        %v8834 = vsel %vm2707, %v8831, %v8833
        %v8835 = vrot.slane %v8270, 1
        %v8836 = vsel %vm2707, %v8833, %v8835
        %v8837 = vrot.slane %v8271, 1
        %v8838 = vsel %vm2707, %v8835, %v8837
        %v8839 = vrot.slane %v8272, 1
        %v8840 = vsel %vm2707, %v8837, %v8839
        %v8841 = vrot.slane %v8273, 1
        %v8842 = vsel %vm2707, %v8839, %v8841
        %v8843 = vrot.slane %v8274, 1
        %v8844 = vsel %vm2707, %v8841, %v8843
        %v8845 = vrot.slane %v8275, 1
        %v8846 = vsel %vm2707, %v8843, %v8845
        %v8847 = vrot.slane %v8276, 1
        %v8848 = vsel %vm2707, %v8845, %v8847
        %v8849 = vrot.slane %v8277, 1
        %v8850 = vsel %vm2707, %v8847, %v8849
        %v8851 = vrot.slane %v8278, 1
        %v8852 = vsel %vm2707, %v8849, %v8851
        %v8853 = vrot.slane %v8279, 1
        %v8854 = vsel %vm2707, %v8851, %v8853
        %v8855 = vrot.slane %v8280, 1
        %v8856 = vsel %vm2707, %v8853, %v8855
        %v8857 = vrot.slane %v8281, 1
        %v8858 = vsel %vm2707, %v8855, %v8857
        %v8859 = vrot.slane %v8282, 1
        %v8860 = vsel %vm2707, %v8857, %v8859
        %v8861 = vrot.slane %v8283, 1
        %v8862 = vsel %vm2707, %v8859, %v8861
        %v8863 = vrot.slane %v8284, 1
        %v8864 = vsel %vm2707, %v8861, %v8863
        %v8901 = vunpack.c.l.b16 %v8805
        %v8902 = vunpack.c.l.b16 %v8806
        %v8903 = vunpack.c.l.b16 %v8807
        %v8904 = vunpack.c.l.b16 %v8808
        %v8905 = vunpack.c.l.b16 %v8809
        %v8906 = vunpack.c.l.b16 %v8810
        %v8907 = vunpack.c.l.b16 %v8811
        %v8908 = vunpack.c.l.b16 %v8812
        %v8909 = vunpack.c.l.b16 %v8813
        %v8910 = vunpack.c.l.b16 %v8814
        %v8911 = vunpack.c.l.b16 %v8815
        %v8912 = vunpack.c.l.b16 %v8816
        %v8913 = vunpack.c.l.b16 %v8817
        %v8914 = vunpack.c.l.b16 %v8818
        %v8915 = vunpack.c.l.b16 %v8819
        %v8916 = vunpack.c.l.b16 %v8820
        %v8917 = vpack.c.b16 %v8902, %v8901
        %v8918 = vpack.c.b16 %v8904, %v8903
        %v8919 = vpack.c.b16 %v8906, %v8905
        %v8920 = vpack.c.b16 %v8908, %v8907
        %v8921 = vpack.c.b16 %v8910, %v8909
        %v8922 = vpack.c.b16 %v8912, %v8911
        %v8923 = vpack.c.b16 %v8914, %v8913
        %v8924 = vpack.c.b16 %v8916, %v8915
        %8933 = vmatpush.bf16.msra.mxu0 %v8924
        %8934 = vmatpush.bf16.msra.mxu0 %v8923
        %8935 = vmatpush.bf16.msra.mxu0 %v8922
        %8936 = vmatpush.bf16.msra.mxu0 %v8921
        %8937 = vmatpush.bf16.msra.mxu0 %v8920
        %8938 = vmatpush.bf16.msra.mxu0 %v8919
        %8939 = vmatpush.bf16.msra.mxu0 %v8918
        %8940 = vmatpush.bf16.msra.mxu0 %v8917
        %8941 = vmatmul.bf16.gmra.mxu0 %v8826
        %v8942 = vpop.f32.mrf.mxu0
        %v8943 = vadd.f32 0.0, %v8942
        %v8944 = vpop.f32.mrf.mxu0
        %v8945 = vadd.f32 0.0, %v8944
        %8946 = vmatmul.bf16.gmra.mxu0 %v8828
        %v8947 = vpop.f32.mrf.mxu0
        %v8948 = vadd.f32 0.0, %v8947
        %v8949 = vpop.f32.mrf.mxu0
        %v8950 = vadd.f32 0.0, %v8949
        %8951 = vmatmul.bf16.gmra.mxu0 %v8830
        %v8952 = vpop.f32.mrf.mxu0
        %v8953 = vadd.f32 0.0, %v8952
        %v8954 = vpop.f32.mrf.mxu0
        %v8955 = vadd.f32 0.0, %v8954
        %8956 = vmatmul.bf16.gmra.mxu0 %v8832
        %v8957 = vpop.f32.mrf.mxu0
        %v8958 = vadd.f32 0.0, %v8957
        %v8959 = vpop.f32.mrf.mxu0
        %v8960 = vadd.f32 0.0, %v8959
        %8961 = vmatmul.bf16.gmra.mxu0 %v8834
        %v8962 = vpop.f32.mrf.mxu0
        %v8963 = vadd.f32 0.0, %v8962
        %v8964 = vpop.f32.mrf.mxu0
        %v8965 = vadd.f32 0.0, %v8964
        %8966 = vmatmul.bf16.gmra.mxu0 %v8836
        %v8967 = vpop.f32.mrf.mxu0
        %v8968 = vadd.f32 0.0, %v8967
        %v8969 = vpop.f32.mrf.mxu0
        %v8970 = vadd.f32 0.0, %v8969
        %8971 = vmatmul.bf16.gmra.mxu0 %v8838
        %v8972 = vpop.f32.mrf.mxu0
        %v8973 = vadd.f32 0.0, %v8972
        %v8974 = vpop.f32.mrf.mxu0
        %v8975 = vadd.f32 0.0, %v8974
        %8976 = vmatmul.bf16.gmra.mxu0 %v8840
        %v8977 = vpop.f32.mrf.mxu0
        %v8978 = vadd.f32 0.0, %v8977
        %v8979 = vpop.f32.mrf.mxu0
        %v8980 = vadd.f32 0.0, %v8979
        %8981 = vmatmul.bf16.gmra.mxu0 %v8842
        %v8982 = vpop.f32.mrf.mxu0
        %v8983 = vadd.f32 0.0, %v8982
        %v8984 = vpop.f32.mrf.mxu0
        %v8985 = vadd.f32 0.0, %v8984
        %8986 = vmatmul.bf16.gmra.mxu0 %v8844
        %v8987 = vpop.f32.mrf.mxu0
        %v8988 = vadd.f32 0.0, %v8987
        %v8989 = vpop.f32.mrf.mxu0
        %v8990 = vadd.f32 0.0, %v8989
        %8991 = vmatmul.bf16.gmra.mxu0 %v8846
        %v8992 = vpop.f32.mrf.mxu0
        %v8993 = vadd.f32 0.0, %v8992
        %v8994 = vpop.f32.mrf.mxu0
        %v8995 = vadd.f32 0.0, %v8994
        %8996 = vmatmul.bf16.gmra.mxu0 %v8848
        %v8997 = vpop.f32.mrf.mxu0
        %v8998 = vadd.f32 0.0, %v8997
        %v8999 = vpop.f32.mrf.mxu0
        %v9000 = vadd.f32 0.0, %v8999
        %9001 = vmatmul.bf16.gmra.mxu0 %v8850
        %v9002 = vpop.f32.mrf.mxu0
        %v9003 = vadd.f32 0.0, %v9002
        %v9004 = vpop.f32.mrf.mxu0
        %v9005 = vadd.f32 0.0, %v9004
        %9006 = vmatmul.bf16.gmra.mxu0 %v8852
        %v9007 = vpop.f32.mrf.mxu0
        %v9008 = vadd.f32 0.0, %v9007
        %v9009 = vpop.f32.mrf.mxu0
        %v9010 = vadd.f32 0.0, %v9009
        %9011 = vmatmul.bf16.gmra.mxu0 %v8854
        %v9012 = vpop.f32.mrf.mxu0
        %v9013 = vadd.f32 0.0, %v9012
        %v9014 = vpop.f32.mrf.mxu0
        %v9015 = vadd.f32 0.0, %v9014
        %9016 = vmatmul.bf16.gmra.mxu0 %v8856
        %v9017 = vpop.f32.mrf.mxu0
        %v9018 = vadd.f32 0.0, %v9017
        %v9019 = vpop.f32.mrf.mxu0
        %v9020 = vadd.f32 0.0, %v9019
        %9021 = vmatmul.bf16.gmra.mxu0 %v8858
        %v9022 = vpop.f32.mrf.mxu0
        %v9023 = vadd.f32 0.0, %v9022
        %v9024 = vpop.f32.mrf.mxu0
        %v9025 = vadd.f32 0.0, %v9024
        %9026 = vmatmul.bf16.gmra.mxu0 %v8860
        %v9027 = vpop.f32.mrf.mxu0
        %v9028 = vadd.f32 0.0, %v9027
        %v9029 = vpop.f32.mrf.mxu0
        %v9030 = vadd.f32 0.0, %v9029
        %9031 = vmatmul.bf16.gmra.mxu0 %v8862
        %v9032 = vpop.f32.mrf.mxu0
        %v9033 = vadd.f32 0.0, %v9032
        %v9034 = vpop.f32.mrf.mxu0
        %v9035 = vadd.f32 0.0, %v9034
        %9036 = vmatmul.bf16.gmra.mxu0 %v8864
        %v9037 = vpop.f32.mrf.mxu0
        %v9038 = vadd.f32 0.0, %v9037
        %v9039 = vpop.f32.mrf.mxu0
        %v9040 = vadd.f32 0.0, %v9039
        %9041 = vdwg.mxu0
        %v9042 = vadd.f32 %v8704, %v8943
        %v9043 = vadd.f32 %v8706, %v8945
        %v9044 = vadd.f32 %v8709, %v8948
        %v9045 = vadd.f32 %v8711, %v8950
        %v9046 = vadd.f32 %v8714, %v8953
        %v9047 = vadd.f32 %v8716, %v8955
        %v9048 = vadd.f32 %v8719, %v8958
        %v9049 = vadd.f32 %v8721, %v8960
        %v9050 = vadd.f32 %v8724, %v8963
        %v9051 = vadd.f32 %v8726, %v8965
        %v9052 = vadd.f32 %v8729, %v8968
        %v9053 = vadd.f32 %v8731, %v8970
        %v9054 = vadd.f32 %v8734, %v8973
        %v9055 = vadd.f32 %v8736, %v8975
        %v9056 = vadd.f32 %v8739, %v8978
        %v9057 = vadd.f32 %v8741, %v8980
        %v9058 = vadd.f32 %v8744, %v8983
        %v9059 = vadd.f32 %v8746, %v8985
        %v9060 = vadd.f32 %v8749, %v8988
        %v9061 = vadd.f32 %v8751, %v8990
        %v9062 = vadd.f32 %v8754, %v8993
        %v9063 = vadd.f32 %v8756, %v8995
        %v9064 = vadd.f32 %v8759, %v8998
        %v9065 = vadd.f32 %v8761, %v9000
        %v9066 = vadd.f32 %v8764, %v9003
        %v9067 = vadd.f32 %v8766, %v9005
        %v9068 = vadd.f32 %v8769, %v9008
        %v9069 = vadd.f32 %v8771, %v9010
        %v9070 = vadd.f32 %v8774, %v9013
        %v9071 = vadd.f32 %v8776, %v9015
        %v9072 = vadd.f32 %v8779, %v9018
        %v9073 = vadd.f32 %v8781, %v9020
        %v9074 = vadd.f32 %v8784, %v9023
        %v9075 = vadd.f32 %v8786, %v9025
        %v9076 = vadd.f32 %v8789, %v9028
        %v9077 = vadd.f32 %v8791, %v9030
        %v9078 = vadd.f32 %v8794, %v9033
        %v9079 = vadd.f32 %v8796, %v9035
        %v9080 = vadd.f32 %v8799, %v9038
        %v9081 = vadd.f32 %v8801, %v9040
        %v9082 = vadd.f32 %v7023, %v8067
        %v9083 = vadd.f32 %v7024, %v8068
        %v9084 = vadd.f32 %v7025, %v8069
        %v9085 = vadd.f32 %v7026, %v8070
        %v9086 = vadd.f32 %v7027, %v8071
        %v9087 = vadd.f32 %v7028, %v8072
        %v9088 = vadd.f32 %v7029, %v8073
        %v9089 = vadd.f32 %v7030, %v8074
        %v9090 = vadd.f32 %v7031, %v8075
        %v9091 = vadd.f32 %v7032, %v8076
        %v9092 = vadd.f32 %v7033, %v8077
        %v9093 = vadd.f32 %v7034, %v8078
        %v9094 = vadd.f32 %v7035, %v8079
        %v9095 = vadd.f32 %v7036, %v8080
        %v9096 = vadd.f32 %v7037, %v8081
        %v9097 = vadd.f32 %v7038, %v8082
        %v9098 = vadd.f32 %v7039, %v8083
        %v9099 = vadd.f32 %v7040, %v8084
        %v9100 = vadd.f32 %v7041, %v8085
        %v9101 = vadd.f32 %v7042, %v8086
        %v9102 = vadd.f32 %v7043, %v8087
        %v9103 = vadd.f32 %v7044, %v8088
        %v9104 = vadd.f32 %v7045, %v8089
        %v9105 = vadd.f32 %v7046, %v8090
        %v9106 = vadd.f32 %v7047, %v8091
        %v9107 = vadd.f32 %v7048, %v8092
        %v9108 = vadd.f32 %v7049, %v8093
        %v9109 = vadd.f32 %v7050, %v8094
        %v9110 = vadd.f32 %v7051, %v8095
        %v9111 = vadd.f32 %v7052, %v8096
        %v9112 = vadd.f32 %v7053, %v8097
        %v9113 = vadd.f32 %v7054, %v8098
        %v9114 = vadd.f32 %v7055, %v8099
        %v9115 = vadd.f32 %v7056, %v8100
        %v9116 = vadd.f32 %v7057, %v8101
        %v9117 = vadd.f32 %v7058, %v8102
        %v9118 = vadd.f32 %v7059, %v8103
        %v9119 = vadd.f32 %v7060, %v8104
        %v9120 = vadd.f32 %v7061, %v8105
        %v9121 = vadd.f32 %v7062, %v8106
        %v9122 = vadd.f32 %v9082, %v9042
        %v9123 = vadd.f32 %v9083, %v9043
        %v9124 = vadd.f32 %v9084, %v9044
        %v9125 = vadd.f32 %v9085, %v9045
        %v9126 = vadd.f32 %v9086, %v9046
        %v9127 = vadd.f32 %v9087, %v9047
        %v9128 = vadd.f32 %v9088, %v9048
        %v9129 = vadd.f32 %v9089, %v9049
        %v9130 = vadd.f32 %v9090, %v9050
        %v9131 = vadd.f32 %v9091, %v9051
        %v9132 = vadd.f32 %v9092, %v9052
        %v9133 = vadd.f32 %v9093, %v9053
        %v9134 = vadd.f32 %v9094, %v9054
        %v9135 = vadd.f32 %v9095, %v9055
        %v9136 = vadd.f32 %v9096, %v9056
        %v9137 = vadd.f32 %v9097, %v9057
        %v9138 = vadd.f32 %v9098, %v9058
        %v9139 = vadd.f32 %v9099, %v9059
        %v9140 = vadd.f32 %v9100, %v9060
        %v9141 = vadd.f32 %v9101, %v9061
        %v9142 = vadd.f32 %v9102, %v9062
        %v9143 = vadd.f32 %v9103, %v9063
        %v9144 = vadd.f32 %v9104, %v9064
        %v9145 = vadd.f32 %v9105, %v9065
        %v9146 = vadd.f32 %v9106, %v9066
        %v9147 = vadd.f32 %v9107, %v9067
        %v9148 = vadd.f32 %v9108, %v9068
        %v9149 = vadd.f32 %v9109, %v9069
        %v9150 = vadd.f32 %v9110, %v9070
        %v9151 = vadd.f32 %v9111, %v9071
        %v9152 = vadd.f32 %v9112, %v9072
        %v9153 = vadd.f32 %v9113, %v9073
        %v9154 = vadd.f32 %v9114, %v9074
        %v9155 = vadd.f32 %v9115, %v9075
        %v9156 = vadd.f32 %v9116, %v9076
        %v9157 = vadd.f32 %v9117, %v9077
        %v9158 = vadd.f32 %v9118, %v9078
        %v9159 = vadd.f32 %v9119, %v9079
        %v9160 = vadd.f32 %v9120, %v9080
        %v9161 = vadd.f32 %v9121, %v9081
        %v9162 = vld [vmem:[%s6] sm:$0x1]
        %v9164 = vperm.slane %v9162, 0
        %v9166 = vadd.f32 %v9122, %v9164
        %v9167 = vadd.f32 %v9123, %v9164
        %v9168 = vadd.f32 %v9124, %v9164
        %v9169 = vadd.f32 %v9125, %v9164
        %v9170 = vadd.f32 %v9126, %v9164
        %v9171 = vadd.f32 %v9127, %v9164
        %v9172 = vadd.f32 %v9128, %v9164
        %v9173 = vadd.f32 %v9129, %v9164
        %v9174 = vadd.f32 %v9130, %v9164
        %v9175 = vadd.f32 %v9131, %v9164
        %v9176 = vadd.f32 %v9132, %v9164
        %v9177 = vadd.f32 %v9133, %v9164
        %v9178 = vadd.f32 %v9134, %v9164
        %v9179 = vadd.f32 %v9135, %v9164
        %v9180 = vadd.f32 %v9136, %v9164
        %v9181 = vadd.f32 %v9137, %v9164
        %v9182 = vadd.f32 %v9138, %v9164
        %v9183 = vadd.f32 %v9139, %v9164
        %v9184 = vadd.f32 %v9140, %v9164
        %v9185 = vadd.f32 %v9141, %v9164
        %v9186 = vadd.f32 %v9142, %v9164
        %v9187 = vadd.f32 %v9143, %v9164
        %v9188 = vadd.f32 %v9144, %v9164
        %v9189 = vadd.f32 %v9145, %v9164
        %v9190 = vadd.f32 %v9146, %v9164
        %v9191 = vadd.f32 %v9147, %v9164
        %v9192 = vadd.f32 %v9148, %v9164
        %v9193 = vadd.f32 %v9149, %v9164
        %v9194 = vadd.f32 %v9150, %v9164
        %v9195 = vadd.f32 %v9151, %v9164
        %v9196 = vadd.f32 %v9152, %v9164
        %v9197 = vadd.f32 %v9153, %v9164
        %v9198 = vadd.f32 %v9154, %v9164
        %v9199 = vadd.f32 %v9155, %v9164
        %v9200 = vadd.f32 %v9156, %v9164
        %v9201 = vadd.f32 %v9157, %v9164
        %v9202 = vadd.f32 %v9158, %v9164
        %v9203 = vadd.f32 %v9159, %v9164
        %v9204 = vadd.f32 %v9160, %v9164
        %v9205 = vadd.f32 %v9161, %v9164
        %v9206 = vmax.f32 %v9166, 0.0
        %v9207 = vmax.f32 %v9167, 0.0
        %v9208 = vmax.f32 %v9168, 0.0
        %v9209 = vmax.f32 %v9169, 0.0
        %v9210 = vmax.f32 %v9170, 0.0
        %v9211 = vmax.f32 %v9171, 0.0
        %v9212 = vmax.f32 %v9172, 0.0
        %v9213 = vmax.f32 %v9173, 0.0
        %v9214 = vmax.f32 %v9174, 0.0
        %v9215 = vmax.f32 %v9175, 0.0
        %v9216 = vmax.f32 %v9176, 0.0
        %v9217 = vmax.f32 %v9177, 0.0
        %v9218 = vmax.f32 %v9178, 0.0
        %v9219 = vmax.f32 %v9179, 0.0
        %v9220 = vmax.f32 %v9180, 0.0
        %v9221 = vmax.f32 %v9181, 0.0
        %v9222 = vmax.f32 %v9182, 0.0
        %v9223 = vmax.f32 %v9183, 0.0
        %v9224 = vmax.f32 %v9184, 0.0
        %v9225 = vmax.f32 %v9185, 0.0
        %v9226 = vmax.f32 %v9186, 0.0
        %v9227 = vmax.f32 %v9187, 0.0
        %v9228 = vmax.f32 %v9188, 0.0
        %v9229 = vmax.f32 %v9189, 0.0
        %v9230 = vmax.f32 %v9190, 0.0
        %v9231 = vmax.f32 %v9191, 0.0
        %v9232 = vmax.f32 %v9192, 0.0
        %v9233 = vmax.f32 %v9193, 0.0
        %v9234 = vmax.f32 %v9194, 0.0
        %v9235 = vmax.f32 %v9195, 0.0
        %v9236 = vmax.f32 %v9196, 0.0
        %v9237 = vmax.f32 %v9197, 0.0
        %v9238 = vmax.f32 %v9198, 0.0
        %v9239 = vmax.f32 %v9199, 0.0
        %v9240 = vmax.f32 %v9200, 0.0
        %v9241 = vmax.f32 %v9201, 0.0
        %v9242 = vmax.f32 %v9202, 0.0
        %v9243 = vmax.f32 %v9203, 0.0
        %v9244 = vmax.f32 %v9204, 0.0
        %v9245 = vmax.f32 %v9205, 0.0
        %v9246 = vpack.c.bf16 %v9206, %v9206
        %v9247 = vpack.c.bf16 %v9207, %v9207
        %v9248 = vpack.c.bf16 %v9208, %v9208
        %v9249 = vpack.c.bf16 %v9209, %v9209
        %v9250 = vpack.c.bf16 %v9210, %v9210
        %v9251 = vpack.c.bf16 %v9211, %v9211
        %v9252 = vpack.c.bf16 %v9212, %v9212
        %v9253 = vpack.c.bf16 %v9213, %v9213
        %v9254 = vpack.c.bf16 %v9214, %v9214
        %v9255 = vpack.c.bf16 %v9215, %v9215
        %v9256 = vpack.c.bf16 %v9216, %v9216
        %v9257 = vpack.c.bf16 %v9217, %v9217
        %v9258 = vpack.c.bf16 %v9218, %v9218
        %v9259 = vpack.c.bf16 %v9219, %v9219
        %v9260 = vpack.c.bf16 %v9220, %v9220
        %v9261 = vpack.c.bf16 %v9221, %v9221
        %v9262 = vpack.c.bf16 %v9222, %v9222
        %v9263 = vpack.c.bf16 %v9223, %v9223
        %v9264 = vpack.c.bf16 %v9224, %v9224
        %v9265 = vpack.c.bf16 %v9225, %v9225
        %v9266 = vpack.c.bf16 %v9226, %v9226
        %v9267 = vpack.c.bf16 %v9227, %v9227
        %v9268 = vpack.c.bf16 %v9228, %v9228
        %v9269 = vpack.c.bf16 %v9229, %v9229
        %v9270 = vpack.c.bf16 %v9230, %v9230
        %v9271 = vpack.c.bf16 %v9231, %v9231
        %v9272 = vpack.c.bf16 %v9232, %v9232
        %v9273 = vpack.c.bf16 %v9233, %v9233
        %v9274 = vpack.c.bf16 %v9234, %v9234
        %v9275 = vpack.c.bf16 %v9235, %v9235
        %v9276 = vpack.c.bf16 %v9236, %v9236
        %v9277 = vpack.c.bf16 %v9237, %v9237
        %v9278 = vpack.c.bf16 %v9238, %v9238
        %v9279 = vpack.c.bf16 %v9239, %v9239
        %v9280 = vpack.c.bf16 %v9240, %v9240
        %v9281 = vpack.c.bf16 %v9241, %v9241
        %v9282 = vpack.c.bf16 %v9242, %v9242
        %v9283 = vpack.c.bf16 %v9243, %v9243
        %v9284 = vpack.c.bf16 %v9244, %v9244
        %v9285 = vpack.c.bf16 %v9245, %v9245
        %9286 = vst [vmem:[%s348] sm:$0xf] %v9246
        %9287 = vst [vmem:[%s348 + $0x4] sm:$0xf] %v9247
        %9288 = vst [vmem:[%s348 + $0x8] sm:$0xf] %v9248
        %9289 = vst [vmem:[%s348 + $0xc] sm:$0xf] %v9249
        %9290 = vst [vmem:[%s348 + $0x10] sm:$0xf] %v9250
        %9291 = vst [vmem:[%s348 + $0x14] sm:$0xf] %v9251
        %9292 = vst [vmem:[%s348 + $0x18] sm:$0xf] %v9252
        %9293 = vst [vmem:[%s348 + $0x1c] sm:$0xf] %v9253
        %9294 = vst [vmem:[%s348 + $0x20] sm:$0xf] %v9254
        %9295 = vst [vmem:[%s348 + $0x24] sm:$0xf] %v9255
        %9296 = vst [vmem:[%s348 + $0x28] sm:$0xf] %v9256
        %9297 = vst [vmem:[%s348 + $0x2c] sm:$0xf] %v9257
        %9298 = vst [vmem:[%s348 + $0x30] sm:$0xf] %v9258
        %9299 = vst [vmem:[%s348 + $0x34] sm:$0xf] %v9259
        %9300 = vst [vmem:[%s348 + $0x38] sm:$0xf] %v9260
        %9301 = vst [vmem:[%s348 + $0x3c] sm:$0xf] %v9261
        %9302 = vst [vmem:[%s348 + $0x40] sm:$0xf] %v9262
        %9303 = vst [vmem:[%s348 + $0x44] sm:$0xf] %v9263
        %9304 = vst [vmem:[%s348 + $0x48] sm:$0xf] %v9264
        %9305 = vst [vmem:[%s348 + $0x4c] sm:$0xf] %v9265
        %9306 = vst [vmem:[%s348 + $0x50] sm:$0xf] %v9266
        %9307 = vst [vmem:[%s348 + $0x54] sm:$0xf] %v9267
        %9308 = vst [vmem:[%s348 + $0x58] sm:$0xf] %v9268
        %9309 = vst [vmem:[%s348 + $0x5c] sm:$0xf] %v9269
        %9310 = vst [vmem:[%s348 + $0x60] sm:$0xf] %v9270
        %9311 = vst [vmem:[%s348 + $0x64] sm:$0xf] %v9271
        %9312 = vst [vmem:[%s348 + $0x68] sm:$0xf] %v9272
        %9313 = vst [vmem:[%s348 + $0x6c] sm:$0xf] %v9273
        %9314 = vst [vmem:[%s348 + $0x70] sm:$0xf] %v9274
        %9315 = vst [vmem:[%s348 + $0x74] sm:$0xf] %v9275
        %9316 = vst [vmem:[%s348 + $0x78] sm:$0xf] %v9276
        %9317 = vst [vmem:[%s348 + $0x7c] sm:$0xf] %v9277
        %9318 = vst [vmem:[%s348 + $0x80] sm:$0xf] %v9278
        %9319 = vst [vmem:[%s348 + $0x84] sm:$0xf] %v9279
        %9320 = vst [vmem:[%s348 + $0x88] sm:$0xf] %v9280
        %9321 = vst [vmem:[%s348 + $0x8c] sm:$0xf] %v9281
        %9322 = vst [vmem:[%s348 + $0x90] sm:$0xf] %v9282
        %9323 = vst [vmem:[%s348 + $0x94] sm:$0xf] %v9283
        %9324 = vst [vmem:[%s348 + $0x98] sm:$0xf] %v9284
        %9325 = vst [vmem:[%s348 + $0x9c] sm:$0xf] %v9285
        %s9326 = sand.u32 %s186, 1
        %s9327 = scalar_lea.sflag [#allocation6], %s9326
        %s9328 = sand.u32 %s186, 1
        %s9329 = smul.addr %s9328, 160
        %s9330 = scalar_lea.vmem [#allocation12], %s9329
        // Predicated region
        $region65: #{tpu_custom_call.1} parent=47 // pred_check
          %p9331 = pneg %p196
        $region66: #{tpu_custom_call.1} parent=47 // pred_check_branch
          %9333 = sbr.rel (%p9331) target = $region68
        $region67: #{tpu_custom_call.1} parent=47 // pred_region
          %9335 = vsyncadd %s9327, 0
          %s9336 = smul.addr %s26, 40
          %s9337 = smul.addr %s9336, 4
          %s9338 = scalar_lea.hbm %s7, %s9337
          %s9339 = sshll.u32 %s9330, 4
          %s9340 = int_to_ptr.vmem [resolvable:$true] %s9339
          %s9341 = sshll.u32 %s9338, 4
          %s9342 = int_to_ptr.hbm [resolvable:$true] %s9341
          %9347 = dma.vmem_to_hbm [thread:$0]  %s9340, 2560, %s9342, %s9327, 64, 64, 4
        $region68: #{tpu_custom_call.1} parent=47 // pred_fallthru
          _
      $region48: #{tpu_custom_call.1} parent=5 // pred_fallthru
        _
      %p9348 = scmp.le.s32.totalorder 2, %s21
      // Predicated region
      $region69: #{tpu_custom_call.1} parent=5 // pred_check
        %p9349 = pneg %p9348
      $region70: #{tpu_custom_call.1} parent=5 // pred_check_branch
        %9351 = sbr.rel (%p9349) target = $region72
      $region71: #{tpu_custom_call.1} parent=5 // pred_region
        %s9352 = ssub.s32 %s21, 2
        // Predicated region
        $region73: #{tpu_custom_call.1} parent=71 // pred_check
          %p9353 = pneg %p202
        $region74: #{tpu_custom_call.1} parent=71 // pred_check_branch
          %9355 = sbr.rel (%p9353) target = $region76
        $region75: #{tpu_custom_call.1} parent=71 // pred_region
          %s9356 = sand.u32 %s187, 1
          %s9357 = scalar_lea.sflag [#allocation6], %s9356
          %s9358 = sand.u32 %s187, 1
          %s9359 = smul.addr %s9358, 160
          %s9360 = scalar_lea.vmem [#allocation12], %s9359
          %9362 = dma.done %s9357, 2560
        $region76: #{tpu_custom_call.1} parent=71 // pred_fallthru
          _
      $region72: #{tpu_custom_call.1} parent=5 // pred_fallthru
        _
    $region6: #{tpu_custom_call.1} parent=1 // loop_footer
      %s25 = sadd.s32 1, %s21
    $region7: #{tpu_custom_call.1} parent=1 // loop_footer_branch
      %20 = sbr.rel target = $region3
    $region8: #{tpu_custom_call.1} parent=1 // loop_exit
      _
    %9363 = vsyncpa [#allocation5], 1
    %s9364 = scalar_lea.sflag [#allocation5], 1
    %9365 = vsyncpa %s9364, 1
    %9366 = vsyncpa [#allocation8], 1
    %9367 = vsyncpa [#allocation11], 1
    %9368 = vsyncpa [#allocation6], 1
    %s9369 = scalar_lea.sflag [#allocation6], 1
    %9370 = vsyncpa %s9369, 1

</llo_original>
